<compile_context>
chip_gen: v6e
topology: v6e:2x2x1
jax: 0.10.0
libtpu: 0.0.40
codegen_flags: <defaults>
</compile_context>

<pallas_src>
import numpy as np

import jax
import jax.numpy as jnp
from jax import lax
from jax.experimental import pallas as pl
from jax.experimental.pallas import tpu as pltpu

LATENT_PAD = 128  # lane-dense head width per half (mu | logvar)


# ----------------------------- static helpers (host side) -----------------------------

def _conv_meta(input_res, strides):
    """Per conv layer: (Hp, Wp, stride, OH, OW) for square inputs, k=3, pad=1."""
    metas = []
    res = input_res
    for s in strides:
        hp = wp = res + 2
        oh = ow = (res - 1) // s + 1
        metas.append((hp, wp, s, oh, ow))
        res = oh
    return metas


def _build_sel(hp, wp, stride, oh, ow, pad_out):
    """0/1 matrix: gathers valid conv outputs out of the shift-add result Z (Mz rows)
    and scatters them into the next layer's zero-padded flattened buffer
    (or, for the last layer, into (oh*ow) position-major rows)."""
    mz = hp * wp - (2 * wp + 2)
    rows = (oh + 2) * (ow + 2) if pad_out else oh * ow
    sel = np.zeros((rows, mz), np.float32)
    for r in range(oh):
        for c in range(ow):
            src = stride * r * wp + stride * c
            dst = ((r + 1) * (ow + 2) + (c + 1)) if pad_out else (r * ow + c)
            sel[dst, src] = 1.0
    return sel


def _vmem_limit_bytes():
    """Generation-aware VMEM budget: ~3/4 of physical (48 MiB v7x, 96 MiB v5e/v6e)."""
    try:
        cap = int(pltpu.get_tpu_info().vmem_capacity_bytes)
        return int(min(96 * 2**20, (cap * 3) // 4))
    except Exception:
        return 32 * 2**20


# --------------------------------- parameter packing ---------------------------------

def prepare_vae(params, *, input_res, latent_dim):
    """Convert torch-layout params into kernel-ready operands + static metadata."""
    convs = [params["input_conv"]] + list(params["encoder"])
    strides = [1] + [2] * len(params["encoder"])
    relus = [False] + [True] * len(params["encoder"])   # TODO(synk): DownConv assumption
    metas = _conv_meta(input_res, strides)

    layer_ops, kernel_meta, act_shapes = [], [], []
    for idx, ((w, b), (hp, wp, s, oh, ow)) in enumerate(zip(convs, metas)):
        cout, cin, kh, kw = w.shape
        assert (kh, kw) == (3, 3)
        # tap t = i*3 + j  ->  (Cin, Cout) matrix
        w_taps = jnp.transpose(w, (2, 3, 1, 0)).reshape(9, cin, cout).astype(jnp.bfloat16)
        bias = b.reshape(1, cout).astype(jnp.float32)
        last = idx == len(convs) - 1
        sel = jnp.asarray(_build_sel(hp, wp, s, oh, ow, pad_out=not last),
                          dtype=jnp.bfloat16)
        layer_ops += [w_taps, bias, sel]
        kernel_meta.append((wp, relus[idx]))
        act_shapes.append((sel.shape[0], cout))

    oh_l, ow_l = metas[-1][3], metas[-1][4]
    n_pos = oh_l * ow_l
    c_last = convs[-1][0].shape[0]
    lat = latent_dim

    mu_w, mu_b = params["extract_mu"]
    lv_w, lv_b = params["extract_logvar"]
    assert mu_w.shape == (lat, c_last * n_pos)
    # torch flatten order is (c, oh, ow) = c*n_pos + p; re-key rows to (position, channel).
    w_head = jnp.zeros((n_pos, c_last, 2 * LATENT_PAD), jnp.float32)
    w_head = w_head.at[:, :, :lat].set(
        jnp.transpose(mu_w.reshape(lat, c_last, n_pos), (2, 1, 0)))
    w_head = w_head.at[:, :, LATENT_PAD:LATENT_PAD + lat].set(
        jnp.transpose(lv_w.reshape(lat, c_last, n_pos), (2, 1, 0)))
    w_head = w_head.astype(jnp.bfloat16)
    b_head = (jnp.zeros((1, 2 * LATENT_PAD), jnp.float32)
              .at[0, :lat].set(mu_b.astype(jnp.float32))
              .at[0, LATENT_PAD:LATENT_PAD + lat].set(lv_b.astype(jnp.float32)))

    in_buf_shape = (metas[0][0] * metas[0][1], convs[0][0].shape[1])  # (Hp*Wp, 3)

    return dict(layer_ops=layer_ops, kernel_meta=tuple(kernel_meta),
                scratch_shapes=(in_buf_shape,) + tuple(act_shapes),
                w_head=w_head, b_head=b_head, n_pos=n_pos, latent_dim=lat)


# ------------------------------------ Pallas kernel ------------------------------------

def _make_kernel(kernel_meta, n_pos, latent_pad):
    n_layers = len(kernel_meta)
    n_in = 1 + 3 * n_layers + 3

    def kernel(*refs):
        a_ref = refs[0]
        layer_refs = refs[1:1 + 3 * n_layers]
        w_head_ref, b_head_ref, eps_ref = refs[1 + 3 * n_layers:n_in]
        z_ref, mu_ref, lv_ref = refs[n_in:n_in + 3]
        bufs = refs[n_in + 3:]                      # n_layers + 1 VMEM activation buffers

        bufs[0][...] = a_ref[0]                     # per-sample padded, flattened NHWC input

        for l in range(n_layers):
            w_ref, b_ref, sel_ref = layer_refs[3 * l:3 * l + 3]
            wp, relu = kernel_meta[l]
            m_in = bufs[l].shape[0]
            mz = m_in - (2 * wp + 2)

            acc = None
            for t in range(9):                      # 3x3 taps: shift-and-accumulate matmuls
                i, j = divmod(t, 3)
                off = i * wp + j
                lhs = bufs[l][off:off + mz, :]      # (mz, Cin) bf16
                y = jnp.dot(lhs, w_ref[t], preferred_element_type=jnp.float32)
                acc = y if acc is None else acc + y
            acc = acc + b_ref[...]
            if relu:
                acc = jnp.maximum(acc, 0.0)
            # gather valid outputs (stride folded in) + scatter into next padded buffer
            bufs[l + 1][...] = jnp.dot(
                sel_ref[...], acc.astype(jnp.bfloat16),
                preferred_element_type=jnp.float32).astype(bufs[l + 1].dtype)

        # fused mu/logvar projection (weights already permuted to (position, channel) order)
        head = None
        for p in range(n_pos):
            row = bufs[-1][p:p + 1, :]              # (1, C_last)
            y = jnp.dot(row, w_head_ref[p], preferred_element_type=jnp.float32)
            head = y if head is None else head + y
        head = head + b_head_ref[...]               # (1, 2*latent_pad)

        mu = head[:, :latent_pad]
        lv = head[:, latent_pad:]
        z = mu + jnp.exp(0.5 * lv) * eps_ref[...]   # reparameterize (eps broadcast over batch)
        z_ref[0] = z
        mu_ref[0] = mu
        lv_ref[0] = lv

    return kernel


# ------------------------------------ forward wrapper ------------------------------------

def make_vae_forward(prep):
    kernel_meta = prep["kernel_meta"]
    scratch_meta = prep["scratch_shapes"]
    n_pos = prep["n_pos"]
    lat = prep["latent_dim"]
    layer_ops = prep["layer_ops"]
    w_head, b_head = prep["w_head"], prep["b_head"]
    kernel = _make_kernel(kernel_meta, n_pos, LATENT_PAD)
    vmem_limit = _vmem_limit_bytes()

    def _const_map(nd):
        return lambda n: (0,) * nd

    def forward(x_nchw, eps):
        batch = x_nchw.shape[0]
        # NHWC, spatial pad=1, flatten each sample's padded image to (Hp*Wp, Cin)
        x = jnp.transpose(x_nchw, (0, 2, 3, 1))
        x = jnp.pad(x, ((0, 0), (1, 1), (1, 1), (0, 0)))
        a0 = x.reshape(batch, x.shape[1] * x.shape[2], x.shape[3]).astype(jnp.bfloat16)
        eps_pad = jnp.zeros((1, LATENT_PAD), jnp.float32).at[0, :lat].set(
            eps.astype(jnp.float32))

        operands = [a0, *layer_ops, w_head, b_head, eps_pad]
        in_specs = [pl.BlockSpec((1,) + a0.shape[1:], lambda n: (n, 0, 0))]
        for op in operands[1:]:
            in_specs.append(pl.BlockSpec(op.shape, _const_map(op.ndim)))

        out_spec = pl.BlockSpec((1, 1, LATENT_PAD), lambda n: (n, 0, 0))
        out_shape = [jax.ShapeDtypeStruct((batch, 1, LATENT_PAD), jnp.float32)] * 3

        z, mu, lv = pl.pallas_call(
            kernel,
            out_shape=out_shape,
            grid=(batch,),
            in_specs=in_specs,
            out_specs=[out_spec, out_spec, out_spec],
            scratch_shapes=[pltpu.VMEM(s, jnp.bfloat16) for s in scratch_meta],
            compiler_params=pltpu.CompilerParams(
                dimension_semantics=("parallel",),
                vmem_limit_bytes=vmem_limit,
            ),
        )(*operands)
        return z[:, 0, :lat], mu[:, 0, :lat], lv[:, 0, :lat]

    return jax.jit(forward)


# ------------------------------- pure-JAX reference (f32) -------------------------------

def _reference_heads(params, x_nchw):
    def conv(x, w, b, stride):
        dn = lax.conv_dimension_numbers(x.shape, w.shape, ("NCHW", "OIHW", "NCHW"))
        y = lax.conv_general_dilated(x, w, (stride, stride), ((1, 1), (1, 1)),
                                     dimension_numbers=dn)
        return y + b.reshape(1, -1, 1, 1)

    w, b = params["input_conv"]
    h = conv(x_nchw, w, b, 1)
    for (w, b) in params["encoder"]:
        h = jnp.maximum(conv(h, w, b, 2), 0.0)
    flat = h.reshape(h.shape[0], -1)
    mu_w, mu_b = params["extract_mu"]
    lv_w, lv_b = params["extract_logvar"]
    return flat @ mu_w.T + mu_b, flat @ lv_w.T + lv_b


# ------------------------------------------ main ------------------------------------------

if __name__ == "__main__":
    latent_dim = 8
    base_channels = 8
    multipliers = (1, 2)
    input_res = 16
    batch = 2

    root = jax.random.PRNGKey(0)
    k_conv, k_enc, k_lin, k_data, k_eps = jax.random.split(root, 5)

    def conv_init(key, cout, cin):
        kw_, kb_ = jax.random.split(key)
        w = jax.random.normal(kw_, (cout, cin, 3, 3), jnp.float32) / np.sqrt(cin * 9.0)
        b = 0.01 * jax.random.normal(kb_, (cout,), jnp.float32)
        return w, b

    params = {"input_conv": conv_init(k_conv, base_channels, 3)}
    enc, prev = [], base_channels
    for mkey, m in zip(jax.random.split(k_enc, len(multipliers)), multipliers):
        enc.append(conv_init(mkey, base_channels * m, prev))
        prev = base_channels * m
    params["encoder"] = enc

    out_res = input_res // (2 ** len(multipliers))
    flat_dim = prev * out_res * out_res
    lk = jax.random.split(k_lin, 4)
    params["extract_mu"] = (
        jax.random.normal(lk[0], (latent_dim, flat_dim), jnp.float32) / np.sqrt(flat_dim),
        0.01 * jax.random.normal(lk[1], (latent_dim,), jnp.float32))
    params["extract_logvar"] = (
        jax.random.normal(lk[2], (latent_dim, flat_dim), jnp.float32) / np.sqrt(flat_dim),
        0.01 * jax.random.normal(lk[3], (latent_dim,), jnp.float32))

    x = jax.random.normal(k_data, (batch, 3, input_res, input_res), jnp.float32)
    # torch.randn(latent_dim): one noise vector broadcast over the batch (matches reference)
    eps = jax.random.normal(k_eps, (latent_dim,), jnp.float32)

    prep = prepare_vae(params, input_res=input_res, latent_dim=latent_dim)
    forward = make_vae_forward(prep)

    z, mu, logvar = forward(x, eps)
    jax.block_until_ready((z, mu, logvar))

    assert z.shape == (batch, latent_dim)
    assert mu.shape == (batch, latent_dim)
    assert logvar.shape == (batch, latent_dim)

    # sanity check against a pure-JAX f32 reference (loose bound: kernel compute is bf16)
    mu_r, lv_r = _reference_heads(params, x)
    z_r = mu_r + jnp.exp(0.5 * lv_r) * eps[None, :]
    err = max(float(jnp.max(jnp.abs(mu - mu_r))),
              float(jnp.max(jnp.abs(logvar - lv_r))),
              float(jnp.max(jnp.abs(z - z_r))))
    assert err < 0.2, f"mismatch vs reference: max abs err = {err}"
    assert bool(jnp.all(jnp.isfinite(z)))

    print("KERNEL_OK")
</pallas_src>

<mosaic_0001>
module attributes {stable_mosaic.version = 11 : i64} {
  func.func @kernel(%arg0: i32, %arg1: memref<1x324x3xbf16, #tpu.memory_space<vmem>>, %arg2: memref<9x3x8xbf16, #tpu.memory_space<vmem>>, %arg3: memref<1x8xf32, #tpu.memory_space<vmem>>, %arg4: memref<324x286xbf16, #tpu.memory_space<vmem>>, %arg5: memref<9x8x8xbf16, #tpu.memory_space<vmem>>, %arg6: memref<1x8xf32, #tpu.memory_space<vmem>>, %arg7: memref<100x286xbf16, #tpu.memory_space<vmem>>, %arg8: memref<9x8x16xbf16, #tpu.memory_space<vmem>>, %arg9: memref<1x16xf32, #tpu.memory_space<vmem>>, %arg10: memref<16x78xbf16, #tpu.memory_space<vmem>>, %arg11: memref<16x16x256xbf16, #tpu.memory_space<vmem>>, %arg12: memref<1x256xf32, #tpu.memory_space<vmem>>, %arg13: memref<1x128xf32, #tpu.memory_space<vmem>>, %arg14: memref<1x1x128xf32, #tpu.memory_space<vmem>>, %arg15: memref<1x1x128xf32, #tpu.memory_space<vmem>>, %arg16: memref<1x1x128xf32, #tpu.memory_space<vmem>>, %arg17: memref<324x3xbf16, #tpu.memory_space<vmem>>, %arg18: memref<324x8xbf16, #tpu.memory_space<vmem>>, %arg19: memref<100x8xbf16, #tpu.memory_space<vmem>>, %arg20: memref<16x16xbf16, #tpu.memory_space<vmem>>) attributes {dimension_semantics = [#tpu.dimension_semantics<parallel>], iteration_bounds = array<i64: 2>, scalar_prefetch = 0 : i64, scratch_operands = 4 : i64, tpu.core_type = #tpu.core_type<tc>, window_params = [{transform_indices = @transform_0, window_bounds = array<i64: 1, 324, 3>}, {pipeline_mode = #tpu.pipeline_mode<synchronous>, transform_indices = @transform_1, window_bounds = array<i64: 9, 3, 8>}, {pipeline_mode = #tpu.pipeline_mode<synchronous>, transform_indices = @transform_2, window_bounds = array<i64: 1, 8>}, {pipeline_mode = #tpu.pipeline_mode<synchronous>, transform_indices = @transform_3, window_bounds = array<i64: 324, 286>}, {pipeline_mode = #tpu.pipeline_mode<synchronous>, transform_indices = @transform_4, window_bounds = array<i64: 9, 8, 8>}, {pipeline_mode = #tpu.pipeline_mode<synchronous>, transform_indices = @transform_5, window_bounds = array<i64: 1, 8>}, {pipeline_mode = #tpu.pipeline_mode<synchronous>, transform_indices = @transform_6, window_bounds = array<i64: 100, 286>}, {pipeline_mode = #tpu.pipeline_mode<synchronous>, transform_indices = @transform_7, window_bounds = array<i64: 9, 8, 16>}, {pipeline_mode = #tpu.pipeline_mode<synchronous>, transform_indices = @transform_8, window_bounds = array<i64: 1, 16>}, {pipeline_mode = #tpu.pipeline_mode<synchronous>, transform_indices = @transform_9, window_bounds = array<i64: 16, 78>}, {pipeline_mode = #tpu.pipeline_mode<synchronous>, transform_indices = @transform_10, window_bounds = array<i64: 16, 16, 256>}, {pipeline_mode = #tpu.pipeline_mode<synchronous>, transform_indices = @transform_11, window_bounds = array<i64: 1, 256>}, {pipeline_mode = #tpu.pipeline_mode<synchronous>, transform_indices = @transform_12, window_bounds = array<i64: 1, 128>}, {transform_indices = @transform_13, window_bounds = array<i64: 1, 1, 128>}, {transform_indices = @transform_14, window_bounds = array<i64: 1, 1, 128>}, {transform_indices = @transform_15, window_bounds = array<i64: 1, 1, 128>}]} {
    %c0 = arith.constant 0 : index
    %c0_0 = arith.constant 0 : index
    %c0_1 = arith.constant 0 : index
    %0 = vector.load %arg1[%c0, %c0_0, %c0_1] : memref<1x324x3xbf16, #tpu.memory_space<vmem>>, vector<1x324x3xbf16>
    %1 = vector.shape_cast %0 : vector<1x324x3xbf16> to vector<324x3xbf16>
    %c0_2 = arith.constant 0 : index
    %c0_3 = arith.constant 0 : index
    %2 = vector.load %arg17[%c0_2, %c0_3] : memref<324x3xbf16, #tpu.memory_space<vmem>>, vector<324x3xbf16>
    tpu.vector_store %arg17[%c0_2, %c0_3], %1 {strides = array<i32>} : memref<324x3xbf16, #tpu.memory_space<vmem>>, vector<324x3xbf16>,
    %c0_4 = arith.constant 0 : index
    %c0_5 = arith.constant 0 : index
    %3 = vector.load %arg17[%c0_4, %c0_5] : memref<324x3xbf16, #tpu.memory_space<vmem>>, vector<286x3xbf16>
    %c0_6 = arith.constant 0 : index
    %c0_7 = arith.constant 0 : index
    %c0_8 = arith.constant 0 : index
    %4 = vector.load %arg2[%c0_6, %c0_7, %c0_8] : memref<9x3x8xbf16, #tpu.memory_space<vmem>>, vector<1x3x8xbf16>
    %5 = vector.shape_cast %4 : vector<1x3x8xbf16> to vector<3x8xbf16>
    %cst = arith.constant dense<0.000000e+00> : vector<286x8xf32>
    %6 = tpu.matmul %3, %5, %cst {dimension_numbers = #tpu.dot_dimension_numbers<[1], [0], [0], [1], [0, 0, 1, 1], [], []>} : vector<286x3xbf16>, vector<3x8xbf16>, vector<286x8xf32> -> vector<286x8xf32>
    %c1 = arith.constant 1 : index
    %c0_9 = arith.constant 0 : index
    %7 = vector.load %arg17[%c1, %c0_9] : memref<324x3xbf16, #tpu.memory_space<vmem>>, vector<286x3xbf16>
    %c1_10 = arith.constant 1 : index
    %c0_11 = arith.constant 0 : index
    %c0_12 = arith.constant 0 : index
    %8 = vector.load %arg2[%c1_10, %c0_11, %c0_12] : memref<9x3x8xbf16, #tpu.memory_space<vmem>>, vector<1x3x8xbf16>
    %9 = vector.shape_cast %8 : vector<1x3x8xbf16> to vector<3x8xbf16>
    %cst_13 = arith.constant dense<0.000000e+00> : vector<286x8xf32>
    %10 = tpu.matmul %7, %9, %cst_13 {dimension_numbers = #tpu.dot_dimension_numbers<[1], [0], [0], [1], [0, 0, 1, 1], [], []>} : vector<286x3xbf16>, vector<3x8xbf16>, vector<286x8xf32> -> vector<286x8xf32>
    %11 = arith.addf %6, %10 : vector<286x8xf32>
    %c2 = arith.constant 2 : index
    %c0_14 = arith.constant 0 : index
    %12 = vector.load %arg17[%c2, %c0_14] : memref<324x3xbf16, #tpu.memory_space<vmem>>, vector<286x3xbf16>
    %c2_15 = arith.constant 2 : index
    %c0_16 = arith.constant 0 : index
    %c0_17 = arith.constant 0 : index
    %13 = vector.load %arg2[%c2_15, %c0_16, %c0_17] : memref<9x3x8xbf16, #tpu.memory_space<vmem>>, vector<1x3x8xbf16>
    %14 = vector.shape_cast %13 : vector<1x3x8xbf16> to vector<3x8xbf16>
    %cst_18 = arith.constant dense<0.000000e+00> : vector<286x8xf32>
    %15 = tpu.matmul %12, %14, %cst_18 {dimension_numbers = #tpu.dot_dimension_numbers<[1], [0], [0], [1], [0, 0, 1, 1], [], []>} : vector<286x3xbf16>, vector<3x8xbf16>, vector<286x8xf32> -> vector<286x8xf32>
    %16 = arith.addf %11, %15 : vector<286x8xf32>
    %c18 = arith.constant 18 : index
    %c0_19 = arith.constant 0 : index
    %17 = vector.load %arg17[%c18, %c0_19] : memref<324x3xbf16, #tpu.memory_space<vmem>>, vector<286x3xbf16>
    %c3 = arith.constant 3 : index
    %c0_20 = arith.constant 0 : index
    %c0_21 = arith.constant 0 : index
    %18 = vector.load %arg2[%c3, %c0_20, %c0_21] : memref<9x3x8xbf16, #tpu.memory_space<vmem>>, vector<1x3x8xbf16>
    %19 = vector.shape_cast %18 : vector<1x3x8xbf16> to vector<3x8xbf16>
    %cst_22 = arith.constant dense<0.000000e+00> : vector<286x8xf32>
    %20 = tpu.matmul %17, %19, %cst_22 {dimension_numbers = #tpu.dot_dimension_numbers<[1], [0], [0], [1], [0, 0, 1, 1], [], []>} : vector<286x3xbf16>, vector<3x8xbf16>, vector<286x8xf32> -> vector<286x8xf32>
    %21 = arith.addf %16, %20 : vector<286x8xf32>
    %c19 = arith.constant 19 : index
    %c0_23 = arith.constant 0 : index
    %22 = vector.load %arg17[%c19, %c0_23] : memref<324x3xbf16, #tpu.memory_space<vmem>>, vector<286x3xbf16>
    %c4 = arith.constant 4 : index
    %c0_24 = arith.constant 0 : index
    %c0_25 = arith.constant 0 : index
    %23 = vector.load %arg2[%c4, %c0_24, %c0_25] : memref<9x3x8xbf16, #tpu.memory_space<vmem>>, vector<1x3x8xbf16>
    %24 = vector.shape_cast %23 : vector<1x3x8xbf16> to vector<3x8xbf16>
    %cst_26 = arith.constant dense<0.000000e+00> : vector<286x8xf32>
    %25 = tpu.matmul %22, %24, %cst_26 {dimension_numbers = #tpu.dot_dimension_numbers<[1], [0], [0], [1], [0, 0, 1, 1], [], []>} : vector<286x3xbf16>, vector<3x8xbf16>, vector<286x8xf32> -> vector<286x8xf32>
    %26 = arith.addf %21, %25 : vector<286x8xf32>
    %c20 = arith.constant 20 : index
    %c0_27 = arith.constant 0 : index
    %27 = vector.load %arg17[%c20, %c0_27] : memref<324x3xbf16, #tpu.memory_space<vmem>>, vector<286x3xbf16>
    %c5 = arith.constant 5 : index
    %c0_28 = arith.constant 0 : index
    %c0_29 = arith.constant 0 : index
    %28 = vector.load %arg2[%c5, %c0_28, %c0_29] : memref<9x3x8xbf16, #tpu.memory_space<vmem>>, vector<1x3x8xbf16>
    %29 = vector.shape_cast %28 : vector<1x3x8xbf16> to vector<3x8xbf16>
    %cst_30 = arith.constant dense<0.000000e+00> : vector<286x8xf32>
    %30 = tpu.matmul %27, %29, %cst_30 {dimension_numbers = #tpu.dot_dimension_numbers<[1], [0], [0], [1], [0, 0, 1, 1], [], []>} : vector<286x3xbf16>, vector<3x8xbf16>, vector<286x8xf32> -> vector<286x8xf32>
    %31 = arith.addf %26, %30 : vector<286x8xf32>
    %c36 = arith.constant 36 : index
    %c0_31 = arith.constant 0 : index
    %32 = vector.load %arg17[%c36, %c0_31] : memref<324x3xbf16, #tpu.memory_space<vmem>>, vector<286x3xbf16>
    %c6 = arith.constant 6 : index
    %c0_32 = arith.constant 0 : index
    %c0_33 = arith.constant 0 : index
    %33 = vector.load %arg2[%c6, %c0_32, %c0_33] : memref<9x3x8xbf16, #tpu.memory_space<vmem>>, vector<1x3x8xbf16>
    %34 = vector.shape_cast %33 : vector<1x3x8xbf16> to vector<3x8xbf16>
    %cst_34 = arith.constant dense<0.000000e+00> : vector<286x8xf32>
    %35 = tpu.matmul %32, %34, %cst_34 {dimension_numbers = #tpu.dot_dimension_numbers<[1], [0], [0], [1], [0, 0, 1, 1], [], []>} : vector<286x3xbf16>, vector<3x8xbf16>, vector<286x8xf32> -> vector<286x8xf32>
    %36 = arith.addf %31, %35 : vector<286x8xf32>
    %c37 = arith.constant 37 : index
    %c0_35 = arith.constant 0 : index
    %37 = vector.load %arg17[%c37, %c0_35] : memref<324x3xbf16, #tpu.memory_space<vmem>>, vector<286x3xbf16>
    %c7 = arith.constant 7 : index
    %c0_36 = arith.constant 0 : index
    %c0_37 = arith.constant 0 : index
    %38 = vector.load %arg2[%c7, %c0_36, %c0_37] : memref<9x3x8xbf16, #tpu.memory_space<vmem>>, vector<1x3x8xbf16>
    %39 = vector.shape_cast %38 : vector<1x3x8xbf16> to vector<3x8xbf16>
    %cst_38 = arith.constant dense<0.000000e+00> : vector<286x8xf32>
    %40 = tpu.matmul %37, %39, %cst_38 {dimension_numbers = #tpu.dot_dimension_numbers<[1], [0], [0], [1], [0, 0, 1, 1], [], []>} : vector<286x3xbf16>, vector<3x8xbf16>, vector<286x8xf32> -> vector<286x8xf32>
    %41 = arith.addf %36, %40 : vector<286x8xf32>
    %c38 = arith.constant 38 : index
    %c0_39 = arith.constant 0 : index
    %42 = vector.load %arg17[%c38, %c0_39] : memref<324x3xbf16, #tpu.memory_space<vmem>>, vector<286x3xbf16>
    %c8 = arith.constant 8 : index
    %c0_40 = arith.constant 0 : index
    %c0_41 = arith.constant 0 : index
    %43 = vector.load %arg2[%c8, %c0_40, %c0_41] : memref<9x3x8xbf16, #tpu.memory_space<vmem>>, vector<1x3x8xbf16>
    %44 = vector.shape_cast %43 : vector<1x3x8xbf16> to vector<3x8xbf16>
    %cst_42 = arith.constant dense<0.000000e+00> : vector<286x8xf32>
    %45 = tpu.matmul %42, %44, %cst_42 {dimension_numbers = #tpu.dot_dimension_numbers<[1], [0], [0], [1], [0, 0, 1, 1], [], []>} : vector<286x3xbf16>, vector<3x8xbf16>, vector<286x8xf32> -> vector<286x8xf32>
    %46 = arith.addf %41, %45 : vector<286x8xf32>
    %c0_43 = arith.constant 0 : index
    %c0_44 = arith.constant 0 : index
    %47 = vector.load %arg3[%c0_43, %c0_44] : memref<1x8xf32, #tpu.memory_space<vmem>>, vector<1x8xf32>
    %48 = vector.broadcast %47 : vector<1x8xf32> to vector<286x8xf32>
    %49 = arith.addf %46, %48 : vector<286x8xf32>
    %c0_45 = arith.constant 0 : index
    %c0_46 = arith.constant 0 : index
    %50 = vector.load %arg4[%c0_45, %c0_46] : memref<324x286xbf16, #tpu.memory_space<vmem>>, vector<324x286xbf16>
    %51 = arith.truncf %49 : vector<286x8xf32> to vector<286x8xbf16>
    %cst_47 = arith.constant dense<0.000000e+00> : vector<324x8xf32>
    %52 = tpu.matmul %50, %51, %cst_47 {dimension_numbers = #tpu.dot_dimension_numbers<[1], [0], [0], [1], [0, 0, 1, 1], [], []>} : vector<324x286xbf16>, vector<286x8xbf16>, vector<324x8xf32> -> vector<324x8xf32>
    %53 = arith.truncf %52 : vector<324x8xf32> to vector<324x8xbf16>
    %c0_48 = arith.constant 0 : index
    %c0_49 = arith.constant 0 : index
    %54 = vector.load %arg18[%c0_48, %c0_49] : memref<324x8xbf16, #tpu.memory_space<vmem>>, vector<324x8xbf16>
    tpu.vector_store %arg18[%c0_48, %c0_49], %53 {strides = array<i32>} : memref<324x8xbf16, #tpu.memory_space<vmem>>, vector<324x8xbf16>,
    %c0_50 = arith.constant 0 : index
    %c0_51 = arith.constant 0 : index
    %55 = vector.load %arg18[%c0_50, %c0_51] : memref<324x8xbf16, #tpu.memory_space<vmem>>, vector<286x8xbf16>
    %c0_52 = arith.constant 0 : index
    %c0_53 = arith.constant 0 : index
    %c0_54 = arith.constant 0 : index
    %56 = vector.load %arg5[%c0_52, %c0_53, %c0_54] : memref<9x8x8xbf16, #tpu.memory_space<vmem>>, vector<1x8x8xbf16>
    %57 = vector.shape_cast %56 : vector<1x8x8xbf16> to vector<8x8xbf16>
    %cst_55 = arith.constant dense<0.000000e+00> : vector<286x8xf32>
    %58 = tpu.matmul %55, %57, %cst_55 {dimension_numbers = #tpu.dot_dimension_numbers<[1], [0], [0], [1], [0, 0, 1, 1], [], []>} : vector<286x8xbf16>, vector<8x8xbf16>, vector<286x8xf32> -> vector<286x8xf32>
    %c1_56 = arith.constant 1 : index
    %c0_57 = arith.constant 0 : index
    %59 = vector.load %arg18[%c1_56, %c0_57] : memref<324x8xbf16, #tpu.memory_space<vmem>>, vector<286x8xbf16>
    %c1_58 = arith.constant 1 : index
    %c0_59 = arith.constant 0 : index
    %c0_60 = arith.constant 0 : index
    %60 = vector.load %arg5[%c1_58, %c0_59, %c0_60] : memref<9x8x8xbf16, #tpu.memory_space<vmem>>, vector<1x8x8xbf16>
    %61 = vector.shape_cast %60 : vector<1x8x8xbf16> to vector<8x8xbf16>
    %cst_61 = arith.constant dense<0.000000e+00> : vector<286x8xf32>
    %62 = tpu.matmul %59, %61, %cst_61 {dimension_numbers = #tpu.dot_dimension_numbers<[1], [0], [0], [1], [0, 0, 1, 1], [], []>} : vector<286x8xbf16>, vector<8x8xbf16>, vector<286x8xf32> -> vector<286x8xf32>
    %63 = arith.addf %58, %62 : vector<286x8xf32>
    %c2_62 = arith.constant 2 : index
    %c0_63 = arith.constant 0 : index
    %64 = vector.load %arg18[%c2_62, %c0_63] : memref<324x8xbf16, #tpu.memory_space<vmem>>, vector<286x8xbf16>
    %c2_64 = arith.constant 2 : index
    %c0_65 = arith.constant 0 : index
    %c0_66 = arith.constant 0 : index
    %65 = vector.load %arg5[%c2_64, %c0_65, %c0_66] : memref<9x8x8xbf16, #tpu.memory_space<vmem>>, vector<1x8x8xbf16>
    %66 = vector.shape_cast %65 : vector<1x8x8xbf16> to vector<8x8xbf16>
    %cst_67 = arith.constant dense<0.000000e+00> : vector<286x8xf32>
    %67 = tpu.matmul %64, %66, %cst_67 {dimension_numbers = #tpu.dot_dimension_numbers<[1], [0], [0], [1], [0, 0, 1, 1], [], []>} : vector<286x8xbf16>, vector<8x8xbf16>, vector<286x8xf32> -> vector<286x8xf32>
    %68 = arith.addf %63, %67 : vector<286x8xf32>
    %c18_68 = arith.constant 18 : index
    %c0_69 = arith.constant 0 : index
    %69 = vector.load %arg18[%c18_68, %c0_69] : memref<324x8xbf16, #tpu.memory_space<vmem>>, vector<286x8xbf16>
    %c3_70 = arith.constant 3 : index
    %c0_71 = arith.constant 0 : index
    %c0_72 = arith.constant 0 : index
    %70 = vector.load %arg5[%c3_70, %c0_71, %c0_72] : memref<9x8x8xbf16, #tpu.memory_space<vmem>>, vector<1x8x8xbf16>
    %71 = vector.shape_cast %70 : vector<1x8x8xbf16> to vector<8x8xbf16>
    %cst_73 = arith.constant dense<0.000000e+00> : vector<286x8xf32>
    %72 = tpu.matmul %69, %71, %cst_73 {dimension_numbers = #tpu.dot_dimension_numbers<[1], [0], [0], [1], [0, 0, 1, 1], [], []>} : vector<286x8xbf16>, vector<8x8xbf16>, vector<286x8xf32> -> vector<286x8xf32>
    %73 = arith.addf %68, %72 : vector<286x8xf32>
    %c19_74 = arith.constant 19 : index
    %c0_75 = arith.constant 0 : index
    %74 = vector.load %arg18[%c19_74, %c0_75] : memref<324x8xbf16, #tpu.memory_space<vmem>>, vector<286x8xbf16>
    %c4_76 = arith.constant 4 : index
    %c0_77 = arith.constant 0 : index
    %c0_78 = arith.constant 0 : index
    %75 = vector.load %arg5[%c4_76, %c0_77, %c0_78] : memref<9x8x8xbf16, #tpu.memory_space<vmem>>, vector<1x8x8xbf16>
    %76 = vector.shape_cast %75 : vector<1x8x8xbf16> to vector<8x8xbf16>
    %cst_79 = arith.constant dense<0.000000e+00> : vector<286x8xf32>
    %77 = tpu.matmul %74, %76, %cst_79 {dimension_numbers = #tpu.dot_dimension_numbers<[1], [0], [0], [1], [0, 0, 1, 1], [], []>} : vector<286x8xbf16>, vector<8x8xbf16>, vector<286x8xf32> -> vector<286x8xf32>
    %78 = arith.addf %73, %77 : vector<286x8xf32>
    %c20_80 = arith.constant 20 : index
    %c0_81 = arith.constant 0 : index
    %79 = vector.load %arg18[%c20_80, %c0_81] : memref<324x8xbf16, #tpu.memory_space<vmem>>, vector<286x8xbf16>
    %c5_82 = arith.constant 5 : index
    %c0_83 = arith.constant 0 : index
    %c0_84 = arith.constant 0 : index
    %80 = vector.load %arg5[%c5_82, %c0_83, %c0_84] : memref<9x8x8xbf16, #tpu.memory_space<vmem>>, vector<1x8x8xbf16>
    %81 = vector.shape_cast %80 : vector<1x8x8xbf16> to vector<8x8xbf16>
    %cst_85 = arith.constant dense<0.000000e+00> : vector<286x8xf32>
    %82 = tpu.matmul %79, %81, %cst_85 {dimension_numbers = #tpu.dot_dimension_numbers<[1], [0], [0], [1], [0, 0, 1, 1], [], []>} : vector<286x8xbf16>, vector<8x8xbf16>, vector<286x8xf32> -> vector<286x8xf32>
    %83 = arith.addf %78, %82 : vector<286x8xf32>
    %c36_86 = arith.constant 36 : index
    %c0_87 = arith.constant 0 : index
    %84 = vector.load %arg18[%c36_86, %c0_87] : memref<324x8xbf16, #tpu.memory_space<vmem>>, vector<286x8xbf16>
    %c6_88 = arith.constant 6 : index
    %c0_89 = arith.constant 0 : index
    %c0_90 = arith.constant 0 : index
    %85 = vector.load %arg5[%c6_88, %c0_89, %c0_90] : memref<9x8x8xbf16, #tpu.memory_space<vmem>>, vector<1x8x8xbf16>
    %86 = vector.shape_cast %85 : vector<1x8x8xbf16> to vector<8x8xbf16>
    %cst_91 = arith.constant dense<0.000000e+00> : vector<286x8xf32>
    %87 = tpu.matmul %84, %86, %cst_91 {dimension_numbers = #tpu.dot_dimension_numbers<[1], [0], [0], [1], [0, 0, 1, 1], [], []>} : vector<286x8xbf16>, vector<8x8xbf16>, vector<286x8xf32> -> vector<286x8xf32>
    %88 = arith.addf %83, %87 : vector<286x8xf32>
    %c37_92 = arith.constant 37 : index
    %c0_93 = arith.constant 0 : index
    %89 = vector.load %arg18[%c37_92, %c0_93] : memref<324x8xbf16, #tpu.memory_space<vmem>>, vector<286x8xbf16>
    %c7_94 = arith.constant 7 : index
    %c0_95 = arith.constant 0 : index
    %c0_96 = arith.constant 0 : index
    %90 = vector.load %arg5[%c7_94, %c0_95, %c0_96] : memref<9x8x8xbf16, #tpu.memory_space<vmem>>, vector<1x8x8xbf16>
    %91 = vector.shape_cast %90 : vector<1x8x8xbf16> to vector<8x8xbf16>
    %cst_97 = arith.constant dense<0.000000e+00> : vector<286x8xf32>
    %92 = tpu.matmul %89, %91, %cst_97 {dimension_numbers = #tpu.dot_dimension_numbers<[1], [0], [0], [1], [0, 0, 1, 1], [], []>} : vector<286x8xbf16>, vector<8x8xbf16>, vector<286x8xf32> -> vector<286x8xf32>
    %93 = arith.addf %88, %92 : vector<286x8xf32>
    %c38_98 = arith.constant 38 : index
    %c0_99 = arith.constant 0 : index
    %94 = vector.load %arg18[%c38_98, %c0_99] : memref<324x8xbf16, #tpu.memory_space<vmem>>, vector<286x8xbf16>
    %c8_100 = arith.constant 8 : index
    %c0_101 = arith.constant 0 : index
    %c0_102 = arith.constant 0 : index
    %95 = vector.load %arg5[%c8_100, %c0_101, %c0_102] : memref<9x8x8xbf16, #tpu.memory_space<vmem>>, vector<1x8x8xbf16>
    %96 = vector.shape_cast %95 : vector<1x8x8xbf16> to vector<8x8xbf16>
    %cst_103 = arith.constant dense<0.000000e+00> : vector<286x8xf32>
    %97 = tpu.matmul %94, %96, %cst_103 {dimension_numbers = #tpu.dot_dimension_numbers<[1], [0], [0], [1], [0, 0, 1, 1], [], []>} : vector<286x8xbf16>, vector<8x8xbf16>, vector<286x8xf32> -> vector<286x8xf32>
    %98 = arith.addf %93, %97 : vector<286x8xf32>
    %c0_104 = arith.constant 0 : index
    %c0_105 = arith.constant 0 : index
    %99 = vector.load %arg6[%c0_104, %c0_105] : memref<1x8xf32, #tpu.memory_space<vmem>>, vector<1x8xf32>
    %100 = vector.broadcast %99 : vector<1x8xf32> to vector<286x8xf32>
    %101 = arith.addf %98, %100 : vector<286x8xf32>
    %cst_106 = arith.constant 0.000000e+00 : f32
    %102 = vector.broadcast %cst_106 : f32 to vector<286x8xf32>
    %103 = arith.maximumf %101, %102 : vector<286x8xf32>
    %c0_107 = arith.constant 0 : index
    %c0_108 = arith.constant 0 : index
    %104 = vector.load %arg7[%c0_107, %c0_108] : memref<100x286xbf16, #tpu.memory_space<vmem>>, vector<100x286xbf16>
    %105 = arith.truncf %103 : vector<286x8xf32> to vector<286x8xbf16>
    %cst_109 = arith.constant dense<0.000000e+00> : vector<100x8xf32>
    %106 = tpu.matmul %104, %105, %cst_109 {dimension_numbers = #tpu.dot_dimension_numbers<[1], [0], [0], [1], [0, 0, 1, 1], [], []>} : vector<100x286xbf16>, vector<286x8xbf16>, vector<100x8xf32> -> vector<100x8xf32>
    %107 = arith.truncf %106 : vector<100x8xf32> to vector<100x8xbf16>
    %c0_110 = arith.constant 0 : index
    %c0_111 = arith.constant 0 : index
    %108 = vector.load %arg19[%c0_110, %c0_111] : memref<100x8xbf16, #tpu.memory_space<vmem>>, vector<100x8xbf16>
    tpu.vector_store %arg19[%c0_110, %c0_111], %107 {strides = array<i32>} : memref<100x8xbf16, #tpu.memory_space<vmem>>, vector<100x8xbf16>,
    %c0_112 = arith.constant 0 : index
    %c0_113 = arith.constant 0 : index
    %109 = vector.load %arg19[%c0_112, %c0_113] : memref<100x8xbf16, #tpu.memory_space<vmem>>, vector<78x8xbf16>
    %c0_114 = arith.constant 0 : index
    %c0_115 = arith.constant 0 : index
    %c0_116 = arith.constant 0 : index
    %110 = vector.load %arg8[%c0_114, %c0_115, %c0_116] : memref<9x8x16xbf16, #tpu.memory_space<vmem>>, vector<1x8x16xbf16>
    %111 = vector.shape_cast %110 : vector<1x8x16xbf16> to vector<8x16xbf16>
    %cst_117 = arith.constant dense<0.000000e+00> : vector<78x16xf32>
    %112 = tpu.matmul %109, %111, %cst_117 {dimension_numbers = #tpu.dot_dimension_numbers<[1], [0], [0], [1], [0, 0, 1, 1], [], []>} : vector<78x8xbf16>, vector<8x16xbf16>, vector<78x16xf32> -> vector<78x16xf32>
    %c1_118 = arith.constant 1 : index
    %c0_119 = arith.constant 0 : index
    %113 = vector.load %arg19[%c1_118, %c0_119] : memref<100x8xbf16, #tpu.memory_space<vmem>>, vector<78x8xbf16>
    %c1_120 = arith.constant 1 : index
    %c0_121 = arith.constant 0 : index
    %c0_122 = arith.constant 0 : index
    %114 = vector.load %arg8[%c1_120, %c0_121, %c0_122] : memref<9x8x16xbf16, #tpu.memory_space<vmem>>, vector<1x8x16xbf16>
    %115 = vector.shape_cast %114 : vector<1x8x16xbf16> to vector<8x16xbf16>
    %cst_123 = arith.constant dense<0.000000e+00> : vector<78x16xf32>
    %116 = tpu.matmul %113, %115, %cst_123 {dimension_numbers = #tpu.dot_dimension_numbers<[1], [0], [0], [1], [0, 0, 1, 1], [], []>} : vector<78x8xbf16>, vector<8x16xbf16>, vector<78x16xf32> -> vector<78x16xf32>
    %117 = arith.addf %112, %116 : vector<78x16xf32>
    %c2_124 = arith.constant 2 : index
    %c0_125 = arith.constant 0 : index
    %118 = vector.load %arg19[%c2_124, %c0_125] : memref<100x8xbf16, #tpu.memory_space<vmem>>, vector<78x8xbf16>
    %c2_126 = arith.constant 2 : index
    %c0_127 = arith.constant 0 : index
    %c0_128 = arith.constant 0 : index
    %119 = vector.load %arg8[%c2_126, %c0_127, %c0_128] : memref<9x8x16xbf16, #tpu.memory_space<vmem>>, vector<1x8x16xbf16>
    %120 = vector.shape_cast %119 : vector<1x8x16xbf16> to vector<8x16xbf16>
    %cst_129 = arith.constant dense<0.000000e+00> : vector<78x16xf32>
    %121 = tpu.matmul %118, %120, %cst_129 {dimension_numbers = #tpu.dot_dimension_numbers<[1], [0], [0], [1], [0, 0, 1, 1], [], []>} : vector<78x8xbf16>, vector<8x16xbf16>, vector<78x16xf32> -> vector<78x16xf32>
    %122 = arith.addf %117, %121 : vector<78x16xf32>
    %c10 = arith.constant 10 : index
    %c0_130 = arith.constant 0 : index
    %123 = vector.load %arg19[%c10, %c0_130] : memref<100x8xbf16, #tpu.memory_space<vmem>>, vector<78x8xbf16>
    %c3_131 = arith.constant 3 : index
    %c0_132 = arith.constant 0 : index
    %c0_133 = arith.constant 0 : index
    %124 = vector.load %arg8[%c3_131, %c0_132, %c0_133] : memref<9x8x16xbf16, #tpu.memory_space<vmem>>, vector<1x8x16xbf16>
    %125 = vector.shape_cast %124 : vector<1x8x16xbf16> to vector<8x16xbf16>
    %cst_134 = arith.constant dense<0.000000e+00> : vector<78x16xf32>
    %126 = tpu.matmul %123, %125, %cst_134 {dimension_numbers = #tpu.dot_dimension_numbers<[1], [0], [0], [1], [0, 0, 1, 1], [], []>} : vector<78x8xbf16>, vector<8x16xbf16>, vector<78x16xf32> -> vector<78x16xf32>
    %127 = arith.addf %122, %126 : vector<78x16xf32>
    %c11 = arith.constant 11 : index
    %c0_135 = arith.constant 0 : index
    %128 = vector.load %arg19[%c11, %c0_135] : memref<100x8xbf16, #tpu.memory_space<vmem>>, vector<78x8xbf16>
    %c4_136 = arith.constant 4 : index
    %c0_137 = arith.constant 0 : index
    %c0_138 = arith.constant 0 : index
    %129 = vector.load %arg8[%c4_136, %c0_137, %c0_138] : memref<9x8x16xbf16, #tpu.memory_space<vmem>>, vector<1x8x16xbf16>
    %130 = vector.shape_cast %129 : vector<1x8x16xbf16> to vector<8x16xbf16>
    %cst_139 = arith.constant dense<0.000000e+00> : vector<78x16xf32>
    %131 = tpu.matmul %128, %130, %cst_139 {dimension_numbers = #tpu.dot_dimension_numbers<[1], [0], [0], [1], [0, 0, 1, 1], [], []>} : vector<78x8xbf16>, vector<8x16xbf16>, vector<78x16xf32> -> vector<78x16xf32>
    %132 = arith.addf %127, %131 : vector<78x16xf32>
    %c12 = arith.constant 12 : index
    %c0_140 = arith.constant 0 : index
    %133 = vector.load %arg19[%c12, %c0_140] : memref<100x8xbf16, #tpu.memory_space<vmem>>, vector<78x8xbf16>
    %c5_141 = arith.constant 5 : index
    %c0_142 = arith.constant 0 : index
    %c0_143 = arith.constant 0 : index
    %134 = vector.load %arg8[%c5_141, %c0_142, %c0_143] : memref<9x8x16xbf16, #tpu.memory_space<vmem>>, vector<1x8x16xbf16>
    %135 = vector.shape_cast %134 : vector<1x8x16xbf16> to vector<8x16xbf16>
    %cst_144 = arith.constant dense<0.000000e+00> : vector<78x16xf32>
    %136 = tpu.matmul %133, %135, %cst_144 {dimension_numbers = #tpu.dot_dimension_numbers<[1], [0], [0], [1], [0, 0, 1, 1], [], []>} : vector<78x8xbf16>, vector<8x16xbf16>, vector<78x16xf32> -> vector<78x16xf32>
    %137 = arith.addf %132, %136 : vector<78x16xf32>
    %c20_145 = arith.constant 20 : index
    %c0_146 = arith.constant 0 : index
    %138 = vector.load %arg19[%c20_145, %c0_146] : memref<100x8xbf16, #tpu.memory_space<vmem>>, vector<78x8xbf16>
    %c6_147 = arith.constant 6 : index
    %c0_148 = arith.constant 0 : index
    %c0_149 = arith.constant 0 : index
    %139 = vector.load %arg8[%c6_147, %c0_148, %c0_149] : memref<9x8x16xbf16, #tpu.memory_space<vmem>>, vector<1x8x16xbf16>
    %140 = vector.shape_cast %139 : vector<1x8x16xbf16> to vector<8x16xbf16>
    %cst_150 = arith.constant dense<0.000000e+00> : vector<78x16xf32>
    %141 = tpu.matmul %138, %140, %cst_150 {dimension_numbers = #tpu.dot_dimension_numbers<[1], [0], [0], [1], [0, 0, 1, 1], [], []>} : vector<78x8xbf16>, vector<8x16xbf16>, vector<78x16xf32> -> vector<78x16xf32>
    %142 = arith.addf %137, %141 : vector<78x16xf32>
    %c21 = arith.constant 21 : index
    %c0_151 = arith.constant 0 : index
    %143 = vector.load %arg19[%c21, %c0_151] : memref<100x8xbf16, #tpu.memory_space<vmem>>, vector<78x8xbf16>
    %c7_152 = arith.constant 7 : index
    %c0_153 = arith.constant 0 : index
    %c0_154 = arith.constant 0 : index
    %144 = vector.load %arg8[%c7_152, %c0_153, %c0_154] : memref<9x8x16xbf16, #tpu.memory_space<vmem>>, vector<1x8x16xbf16>
    %145 = vector.shape_cast %144 : vector<1x8x16xbf16> to vector<8x16xbf16>
    %cst_155 = arith.constant dense<0.000000e+00> : vector<78x16xf32>
    %146 = tpu.matmul %143, %145, %cst_155 {dimension_numbers = #tpu.dot_dimension_numbers<[1], [0], [0], [1], [0, 0, 1, 1], [], []>} : vector<78x8xbf16>, vector<8x16xbf16>, vector<78x16xf32> -> vector<78x16xf32>
    %147 = arith.addf %142, %146 : vector<78x16xf32>
    %c22 = arith.constant 22 : index
    %c0_156 = arith.constant 0 : index
    %148 = vector.load %arg19[%c22, %c0_156] : memref<100x8xbf16, #tpu.memory_space<vmem>>, vector<78x8xbf16>
    %c8_157 = arith.constant 8 : index
    %c0_158 = arith.constant 0 : index
    %c0_159 = arith.constant 0 : index
    %149 = vector.load %arg8[%c8_157, %c0_158, %c0_159] : memref<9x8x16xbf16, #tpu.memory_space<vmem>>, vector<1x8x16xbf16>
    %150 = vector.shape_cast %149 : vector<1x8x16xbf16> to vector<8x16xbf16>
    %cst_160 = arith.constant dense<0.000000e+00> : vector<78x16xf32>
    %151 = tpu.matmul %148, %150, %cst_160 {dimension_numbers = #tpu.dot_dimension_numbers<[1], [0], [0], [1], [0, 0, 1, 1], [], []>} : vector<78x8xbf16>, vector<8x16xbf16>, vector<78x16xf32> -> vector<78x16xf32>
    %152 = arith.addf %147, %151 : vector<78x16xf32>
    %c0_161 = arith.constant 0 : index
    %c0_162 = arith.constant 0 : index
    %153 = vector.load %arg9[%c0_161, %c0_162] : memref<1x16xf32, #tpu.memory_space<vmem>>, vector<1x16xf32>
    %154 = vector.broadcast %153 : vector<1x16xf32> to vector<78x16xf32>
    %155 = arith.addf %152, %154 : vector<78x16xf32>
    %cst_163 = arith.constant 0.000000e+00 : f32
    %156 = vector.broadcast %cst_163 : f32 to vector<78x16xf32>
    %157 = arith.maximumf %155, %156 : vector<78x16xf32>
    %c0_164 = arith.constant 0 : index
    %c0_165 = arith.constant 0 : index
    %158 = vector.load %arg10[%c0_164, %c0_165] : memref<16x78xbf16, #tpu.memory_space<vmem>>, vector<16x78xbf16>
    %159 = arith.truncf %157 : vector<78x16xf32> to vector<78x16xbf16>
    %cst_166 = arith.constant dense<0.000000e+00> : vector<16x16xf32>
    %160 = tpu.matmul %158, %159, %cst_166 {dimension_numbers = #tpu.dot_dimension_numbers<[1], [0], [0], [1], [0, 0, 1, 1], [], []>} : vector<16x78xbf16>, vector<78x16xbf16>, vector<16x16xf32> -> vector<16x16xf32>
    %161 = arith.truncf %160 : vector<16x16xf32> to vector<16x16xbf16>
    %c0_167 = arith.constant 0 : index
    %c0_168 = arith.constant 0 : index
    %162 = vector.load %arg20[%c0_167, %c0_168] : memref<16x16xbf16, #tpu.memory_space<vmem>>, vector<16x16xbf16>
    tpu.vector_store %arg20[%c0_167, %c0_168], %161 {strides = array<i32>} : memref<16x16xbf16, #tpu.memory_space<vmem>>, vector<16x16xbf16>,
    %c0_169 = arith.constant 0 : index
    %c0_170 = arith.constant 0 : index
    %163 = vector.load %arg20[%c0_169, %c0_170] : memref<16x16xbf16, #tpu.memory_space<vmem>>, vector<1x16xbf16>
    %c0_171 = arith.constant 0 : index
    %c0_172 = arith.constant 0 : index
    %c0_173 = arith.constant 0 : index
    %164 = vector.load %arg11[%c0_171, %c0_172, %c0_173] : memref<16x16x256xbf16, #tpu.memory_space<vmem>>, vector<1x16x256xbf16>
    %165 = vector.shape_cast %164 : vector<1x16x256xbf16> to vector<16x256xbf16>
    %cst_174 = arith.constant dense<0.000000e+00> : vector<1x256xf32>
    %166 = tpu.matmul %163, %165, %cst_174 {dimension_numbers = #tpu.dot_dimension_numbers<[1], [0], [0], [1], [0, 0, 1, 1], [], []>} : vector<1x16xbf16>, vector<16x256xbf16>, vector<1x256xf32> -> vector<1x256xf32>
    %c1_175 = arith.constant 1 : index
    %c0_176 = arith.constant 0 : index
    %167 = vector.load %arg20[%c1_175, %c0_176] : memref<16x16xbf16, #tpu.memory_space<vmem>>, vector<1x16xbf16>
    %c1_177 = arith.constant 1 : index
    %c0_178 = arith.constant 0 : index
    %c0_179 = arith.constant 0 : index
    %168 = vector.load %arg11[%c1_177, %c0_178, %c0_179] : memref<16x16x256xbf16, #tpu.memory_space<vmem>>, vector<1x16x256xbf16>
    %169 = vector.shape_cast %168 : vector<1x16x256xbf16> to vector<16x256xbf16>
    %cst_180 = arith.constant dense<0.000000e+00> : vector<1x256xf32>
    %170 = tpu.matmul %167, %169, %cst_180 {dimension_numbers = #tpu.dot_dimension_numbers<[1], [0], [0], [1], [0, 0, 1, 1], [], []>} : vector<1x16xbf16>, vector<16x256xbf16>, vector<1x256xf32> -> vector<1x256xf32>
    %171 = arith.addf %166, %170 : vector<1x256xf32>
    %c2_181 = arith.constant 2 : index
    %c0_182 = arith.constant 0 : index
    %172 = vector.load %arg20[%c2_181, %c0_182] : memref<16x16xbf16, #tpu.memory_space<vmem>>, vector<1x16xbf16>
    %c2_183 = arith.constant 2 : index
    %c0_184 = arith.constant 0 : index
    %c0_185 = arith.constant 0 : index
    %173 = vector.load %arg11[%c2_183, %c0_184, %c0_185] : memref<16x16x256xbf16, #tpu.memory_space<vmem>>, vector<1x16x256xbf16>
    %174 = vector.shape_cast %173 : vector<1x16x256xbf16> to vector<16x256xbf16>
    %cst_186 = arith.constant dense<0.000000e+00> : vector<1x256xf32>
    %175 = tpu.matmul %172, %174, %cst_186 {dimension_numbers = #tpu.dot_dimension_numbers<[1], [0], [0], [1], [0, 0, 1, 1], [], []>} : vector<1x16xbf16>, vector<16x256xbf16>, vector<1x256xf32> -> vector<1x256xf32>
    %176 = arith.addf %171, %175 : vector<1x256xf32>
    %c3_187 = arith.constant 3 : index
    %c0_188 = arith.constant 0 : index
    %177 = vector.load %arg20[%c3_187, %c0_188] : memref<16x16xbf16, #tpu.memory_space<vmem>>, vector<1x16xbf16>
    %c3_189 = arith.constant 3 : index
    %c0_190 = arith.constant 0 : index
    %c0_191 = arith.constant 0 : index
    %178 = vector.load %arg11[%c3_189, %c0_190, %c0_191] : memref<16x16x256xbf16, #tpu.memory_space<vmem>>, vector<1x16x256xbf16>
    %179 = vector.shape_cast %178 : vector<1x16x256xbf16> to vector<16x256xbf16>
    %cst_192 = arith.constant dense<0.000000e+00> : vector<1x256xf32>
    %180 = tpu.matmul %177, %179, %cst_192 {dimension_numbers = #tpu.dot_dimension_numbers<[1], [0], [0], [1], [0, 0, 1, 1], [], []>} : vector<1x16xbf16>, vector<16x256xbf16>, vector<1x256xf32> -> vector<1x256xf32>
    %181 = arith.addf %176, %180 : vector<1x256xf32>
    %c4_193 = arith.constant 4 : index
    %c0_194 = arith.constant 0 : index
    %182 = vector.load %arg20[%c4_193, %c0_194] : memref<16x16xbf16, #tpu.memory_space<vmem>>, vector<1x16xbf16>
    %c4_195 = arith.constant 4 : index
    %c0_196 = arith.constant 0 : index
    %c0_197 = arith.constant 0 : index
    %183 = vector.load %arg11[%c4_195, %c0_196, %c0_197] : memref<16x16x256xbf16, #tpu.memory_space<vmem>>, vector<1x16x256xbf16>
    %184 = vector.shape_cast %183 : vector<1x16x256xbf16> to vector<16x256xbf16>
    %cst_198 = arith.constant dense<0.000000e+00> : vector<1x256xf32>
    %185 = tpu.matmul %182, %184, %cst_198 {dimension_numbers = #tpu.dot_dimension_numbers<[1], [0], [0], [1], [0, 0, 1, 1], [], []>} : vector<1x16xbf16>, vector<16x256xbf16>, vector<1x256xf32> -> vector<1x256xf32>
    %186 = arith.addf %181, %185 : vector<1x256xf32>
    %c5_199 = arith.constant 5 : index
    %c0_200 = arith.constant 0 : index
    %187 = vector.load %arg20[%c5_199, %c0_200] : memref<16x16xbf16, #tpu.memory_space<vmem>>, vector<1x16xbf16>
    %c5_201 = arith.constant 5 : index
    %c0_202 = arith.constant 0 : index
    %c0_203 = arith.constant 0 : index
    %188 = vector.load %arg11[%c5_201, %c0_202, %c0_203] : memref<16x16x256xbf16, #tpu.memory_space<vmem>>, vector<1x16x256xbf16>
    %189 = vector.shape_cast %188 : vector<1x16x256xbf16> to vector<16x256xbf16>
    %cst_204 = arith.constant dense<0.000000e+00> : vector<1x256xf32>
    %190 = tpu.matmul %187, %189, %cst_204 {dimension_numbers = #tpu.dot_dimension_numbers<[1], [0], [0], [1], [0, 0, 1, 1], [], []>} : vector<1x16xbf16>, vector<16x256xbf16>, vector<1x256xf32> -> vector<1x256xf32>
    %191 = arith.addf %186, %190 : vector<1x256xf32>
    %c6_205 = arith.constant 6 : index
    %c0_206 = arith.constant 0 : index
    %192 = vector.load %arg20[%c6_205, %c0_206] : memref<16x16xbf16, #tpu.memory_space<vmem>>, vector<1x16xbf16>
    %c6_207 = arith.constant 6 : index
    %c0_208 = arith.constant 0 : index
    %c0_209 = arith.constant 0 : index
    %193 = vector.load %arg11[%c6_207, %c0_208, %c0_209] : memref<16x16x256xbf16, #tpu.memory_space<vmem>>, vector<1x16x256xbf16>
    %194 = vector.shape_cast %193 : vector<1x16x256xbf16> to vector<16x256xbf16>
    %cst_210 = arith.constant dense<0.000000e+00> : vector<1x256xf32>
    %195 = tpu.matmul %192, %194, %cst_210 {dimension_numbers = #tpu.dot_dimension_numbers<[1], [0], [0], [1], [0, 0, 1, 1], [], []>} : vector<1x16xbf16>, vector<16x256xbf16>, vector<1x256xf32> -> vector<1x256xf32>
    %196 = arith.addf %191, %195 : vector<1x256xf32>
    %c7_211 = arith.constant 7 : index
    %c0_212 = arith.constant 0 : index
    %197 = vector.load %arg20[%c7_211, %c0_212] : memref<16x16xbf16, #tpu.memory_space<vmem>>, vector<1x16xbf16>
    %c7_213 = arith.constant 7 : index
    %c0_214 = arith.constant 0 : index
    %c0_215 = arith.constant 0 : index
    %198 = vector.load %arg11[%c7_213, %c0_214, %c0_215] : memref<16x16x256xbf16, #tpu.memory_space<vmem>>, vector<1x16x256xbf16>
    %199 = vector.shape_cast %198 : vector<1x16x256xbf16> to vector<16x256xbf16>
    %cst_216 = arith.constant dense<0.000000e+00> : vector<1x256xf32>
    %200 = tpu.matmul %197, %199, %cst_216 {dimension_numbers = #tpu.dot_dimension_numbers<[1], [0], [0], [1], [0, 0, 1, 1], [], []>} : vector<1x16xbf16>, vector<16x256xbf16>, vector<1x256xf32> -> vector<1x256xf32>
    %201 = arith.addf %196, %200 : vector<1x256xf32>
    %c8_217 = arith.constant 8 : index
    %c0_218 = arith.constant 0 : index
    %202 = vector.load %arg20[%c8_217, %c0_218] : memref<16x16xbf16, #tpu.memory_space<vmem>>, vector<1x16xbf16>
    %c8_219 = arith.constant 8 : index
    %c0_220 = arith.constant 0 : index
    %c0_221 = arith.constant 0 : index
    %203 = vector.load %arg11[%c8_219, %c0_220, %c0_221] : memref<16x16x256xbf16, #tpu.memory_space<vmem>>, vector<1x16x256xbf16>
    %204 = vector.shape_cast %203 : vector<1x16x256xbf16> to vector<16x256xbf16>
    %cst_222 = arith.constant dense<0.000000e+00> : vector<1x256xf32>
    %205 = tpu.matmul %202, %204, %cst_222 {dimension_numbers = #tpu.dot_dimension_numbers<[1], [0], [0], [1], [0, 0, 1, 1], [], []>} : vector<1x16xbf16>, vector<16x256xbf16>, vector<1x256xf32> -> vector<1x256xf32>
    %206 = arith.addf %201, %205 : vector<1x256xf32>
    %c9 = arith.constant 9 : index
    %c0_223 = arith.constant 0 : index
    %207 = vector.load %arg20[%c9, %c0_223] : memref<16x16xbf16, #tpu.memory_space<vmem>>, vector<1x16xbf16>
    %c9_224 = arith.constant 9 : index
    %c0_225 = arith.constant 0 : index
    %c0_226 = arith.constant 0 : index
    %208 = vector.load %arg11[%c9_224, %c0_225, %c0_226] : memref<16x16x256xbf16, #tpu.memory_space<vmem>>, vector<1x16x256xbf16>
    %209 = vector.shape_cast %208 : vector<1x16x256xbf16> to vector<16x256xbf16>
    %cst_227 = arith.constant dense<0.000000e+00> : vector<1x256xf32>
    %210 = tpu.matmul %207, %209, %cst_227 {dimension_numbers = #tpu.dot_dimension_numbers<[1], [0], [0], [1], [0, 0, 1, 1], [], []>} : vector<1x16xbf16>, vector<16x256xbf16>, vector<1x256xf32> -> vector<1x256xf32>
    %211 = arith.addf %206, %210 : vector<1x256xf32>
    %c10_228 = arith.constant 10 : index
    %c0_229 = arith.constant 0 : index
    %212 = vector.load %arg20[%c10_228, %c0_229] : memref<16x16xbf16, #tpu.memory_space<vmem>>, vector<1x16xbf16>
    %c10_230 = arith.constant 10 : index
    %c0_231 = arith.constant 0 : index
    %c0_232 = arith.constant 0 : index
    %213 = vector.load %arg11[%c10_230, %c0_231, %c0_232] : memref<16x16x256xbf16, #tpu.memory_space<vmem>>, vector<1x16x256xbf16>
    %214 = vector.shape_cast %213 : vector<1x16x256xbf16> to vector<16x256xbf16>
    %cst_233 = arith.constant dense<0.000000e+00> : vector<1x256xf32>
    %215 = tpu.matmul %212, %214, %cst_233 {dimension_numbers = #tpu.dot_dimension_numbers<[1], [0], [0], [1], [0, 0, 1, 1], [], []>} : vector<1x16xbf16>, vector<16x256xbf16>, vector<1x256xf32> -> vector<1x256xf32>
    %216 = arith.addf %211, %215 : vector<1x256xf32>
    %c11_234 = arith.constant 11 : index
    %c0_235 = arith.constant 0 : index
    %217 = vector.load %arg20[%c11_234, %c0_235] : memref<16x16xbf16, #tpu.memory_space<vmem>>, vector<1x16xbf16>
    %c11_236 = arith.constant 11 : index
    %c0_237 = arith.constant 0 : index
    %c0_238 = arith.constant 0 : index
    %218 = vector.load %arg11[%c11_236, %c0_237, %c0_238] : memref<16x16x256xbf16, #tpu.memory_space<vmem>>, vector<1x16x256xbf16>
    %219 = vector.shape_cast %218 : vector<1x16x256xbf16> to vector<16x256xbf16>
    %cst_239 = arith.constant dense<0.000000e+00> : vector<1x256xf32>
    %220 = tpu.matmul %217, %219, %cst_239 {dimension_numbers = #tpu.dot_dimension_numbers<[1], [0], [0], [1], [0, 0, 1, 1], [], []>} : vector<1x16xbf16>, vector<16x256xbf16>, vector<1x256xf32> -> vector<1x256xf32>
    %221 = arith.addf %216, %220 : vector<1x256xf32>
    %c12_240 = arith.constant 12 : index
    %c0_241 = arith.constant 0 : index
    %222 = vector.load %arg20[%c12_240, %c0_241] : memref<16x16xbf16, #tpu.memory_space<vmem>>, vector<1x16xbf16>
    %c12_242 = arith.constant 12 : index
    %c0_243 = arith.constant 0 : index
    %c0_244 = arith.constant 0 : index
    %223 = vector.load %arg11[%c12_242, %c0_243, %c0_244] : memref<16x16x256xbf16, #tpu.memory_space<vmem>>, vector<1x16x256xbf16>
    %224 = vector.shape_cast %223 : vector<1x16x256xbf16> to vector<16x256xbf16>
    %cst_245 = arith.constant dense<0.000000e+00> : vector<1x256xf32>
    %225 = tpu.matmul %222, %224, %cst_245 {dimension_numbers = #tpu.dot_dimension_numbers<[1], [0], [0], [1], [0, 0, 1, 1], [], []>} : vector<1x16xbf16>, vector<16x256xbf16>, vector<1x256xf32> -> vector<1x256xf32>
    %226 = arith.addf %221, %225 : vector<1x256xf32>
    %c13 = arith.constant 13 : index
    %c0_246 = arith.constant 0 : index
    %227 = vector.load %arg20[%c13, %c0_246] : memref<16x16xbf16, #tpu.memory_space<vmem>>, vector<1x16xbf16>
    %c13_247 = arith.constant 13 : index
    %c0_248 = arith.constant 0 : index
    %c0_249 = arith.constant 0 : index
    %228 = vector.load %arg11[%c13_247, %c0_248, %c0_249] : memref<16x16x256xbf16, #tpu.memory_space<vmem>>, vector<1x16x256xbf16>
    %229 = vector.shape_cast %228 : vector<1x16x256xbf16> to vector<16x256xbf16>
    %cst_250 = arith.constant dense<0.000000e+00> : vector<1x256xf32>
    %230 = tpu.matmul %227, %229, %cst_250 {dimension_numbers = #tpu.dot_dimension_numbers<[1], [0], [0], [1], [0, 0, 1, 1], [], []>} : vector<1x16xbf16>, vector<16x256xbf16>, vector<1x256xf32> -> vector<1x256xf32>
    %231 = arith.addf %226, %230 : vector<1x256xf32>
    %c14 = arith.constant 14 : index
    %c0_251 = arith.constant 0 : index
    %232 = vector.load %arg20[%c14, %c0_251] : memref<16x16xbf16, #tpu.memory_space<vmem>>, vector<1x16xbf16>
    %c14_252 = arith.constant 14 : index
    %c0_253 = arith.constant 0 : index
    %c0_254 = arith.constant 0 : index
    %233 = vector.load %arg11[%c14_252, %c0_253, %c0_254] : memref<16x16x256xbf16, #tpu.memory_space<vmem>>, vector<1x16x256xbf16>
    %234 = vector.shape_cast %233 : vector<1x16x256xbf16> to vector<16x256xbf16>
    %cst_255 = arith.constant dense<0.000000e+00> : vector<1x256xf32>
    %235 = tpu.matmul %232, %234, %cst_255 {dimension_numbers = #tpu.dot_dimension_numbers<[1], [0], [0], [1], [0, 0, 1, 1], [], []>} : vector<1x16xbf16>, vector<16x256xbf16>, vector<1x256xf32> -> vector<1x256xf32>
    %236 = arith.addf %231, %235 : vector<1x256xf32>
    %c15 = arith.constant 15 : index
    %c0_256 = arith.constant 0 : index
    %237 = vector.load %arg20[%c15, %c0_256] : memref<16x16xbf16, #tpu.memory_space<vmem>>, vector<1x16xbf16>
    %c15_257 = arith.constant 15 : index
    %c0_258 = arith.constant 0 : index
    %c0_259 = arith.constant 0 : index
    %238 = vector.load %arg11[%c15_257, %c0_258, %c0_259] : memref<16x16x256xbf16, #tpu.memory_space<vmem>>, vector<1x16x256xbf16>
    %239 = vector.shape_cast %238 : vector<1x16x256xbf16> to vector<16x256xbf16>
    %cst_260 = arith.constant dense<0.000000e+00> : vector<1x256xf32>
    %240 = tpu.matmul %237, %239, %cst_260 {dimension_numbers = #tpu.dot_dimension_numbers<[1], [0], [0], [1], [0, 0, 1, 1], [], []>} : vector<1x16xbf16>, vector<16x256xbf16>, vector<1x256xf32> -> vector<1x256xf32>
    %241 = arith.addf %236, %240 : vector<1x256xf32>
    %c0_261 = arith.constant 0 : index
    %c0_262 = arith.constant 0 : index
    %242 = vector.load %arg12[%c0_261, %c0_262] : memref<1x256xf32, #tpu.memory_space<vmem>>, vector<1x256xf32>
    %243 = arith.addf %241, %242 : vector<1x256xf32>
    %244 = vector.extract_strided_slice %243 {offsets = [0, 0], sizes = [1, 128], strides = [1, 1]} : vector<1x256xf32> to vector<1x128xf32>
    %245 = vector.extract_strided_slice %243 {offsets = [0, 128], sizes = [1, 128], strides = [1, 1]} : vector<1x256xf32> to vector<1x128xf32>
    %cst_263 = arith.constant 5.000000e-01 : f32
    %246 = vector.broadcast %cst_263 : f32 to vector<1x128xf32>
    %247 = arith.mulf %246, %245 : vector<1x128xf32>
    %248 = math.exp %247 : vector<1x128xf32>
    %c0_264 = arith.constant 0 : index
    %c0_265 = arith.constant 0 : index
    %249 = vector.load %arg13[%c0_264, %c0_265] : memref<1x128xf32, #tpu.memory_space<vmem>>, vector<1x128xf32>
    %250 = arith.mulf %248, %249 : vector<1x128xf32>
    %251 = arith.addf %244, %250 : vector<1x128xf32>
    %c0_266 = arith.constant 0 : index
    %c0_267 = arith.constant 0 : index
    %c0_268 = arith.constant 0 : index
    %252 = vector.load %arg14[%c0_266, %c0_267, %c0_268] : memref<1x1x128xf32, #tpu.memory_space<vmem>>, vector<1x1x128xf32>
    %253 = vector.shape_cast %252 : vector<1x1x128xf32> to vector<1x128xf32>
    %254 = vector.shape_cast %251 : vector<1x128xf32> to vector<1x1x128xf32>
    tpu.vector_store %arg14[%c0_266, %c0_267, %c0_268], %254 {strides = array<i32>} : memref<1x1x128xf32, #tpu.memory_space<vmem>>, vector<1x1x128xf32>,
    %c0_269 = arith.constant 0 : index
    %c0_270 = arith.constant 0 : index
    %c0_271 = arith.constant 0 : index
    %255 = vector.load %arg15[%c0_269, %c0_270, %c0_271] : memref<1x1x128xf32, #tpu.memory_space<vmem>>, vector<1x1x128xf32>
    %256 = vector.shape_cast %255 : vector<1x1x128xf32> to vector<1x128xf32>
    %257 = vector.shape_cast %244 : vector<1x128xf32> to vector<1x1x128xf32>
    tpu.vector_store %arg15[%c0_269, %c0_270, %c0_271], %257 {strides = array<i32>} : memref<1x1x128xf32, #tpu.memory_space<vmem>>, vector<1x1x128xf32>,
    %c0_272 = arith.constant 0 : index
    %c0_273 = arith.constant 0 : index
    %c0_274 = arith.constant 0 : index
    %258 = vector.load %arg16[%c0_272, %c0_273, %c0_274] : memref<1x1x128xf32, #tpu.memory_space<vmem>>, vector<1x1x128xf32>
    %259 = vector.shape_cast %258 : vector<1x1x128xf32> to vector<1x128xf32>
    %260 = vector.shape_cast %245 : vector<1x128xf32> to vector<1x1x128xf32>
    tpu.vector_store %arg16[%c0_272, %c0_273, %c0_274], %260 {strides = array<i32>} : memref<1x1x128xf32, #tpu.memory_space<vmem>>, vector<1x1x128xf32>,
    return
  }
  func.func @transform_0(%arg0: i32) -> (i32, i32, i32) {
    %c0_i32 = arith.constant 0 : i32
    %c0_i32_0 = arith.constant 0 : i32
    %c0_i32_1 = arith.constant 0 : i32
    return %arg0, %c0_i32, %c0_i32_0 : i32, i32, i32
  }
  func.func @transform_1(%arg0: i32) -> (i32, i32, i32) {
    %c0_i32 = arith.constant 0 : i32
    %c0_i32_0 = arith.constant 0 : i32
    %c0_i32_1 = arith.constant 0 : i32
    %c0_i32_2 = arith.constant 0 : i32
    return %c0_i32, %c0_i32_0, %c0_i32_1 : i32, i32, i32
  }
  func.func @transform_2(%arg0: i32) -> (i32, i32) {
    %c0_i32 = arith.constant 0 : i32
    %c0_i32_0 = arith.constant 0 : i32
    %c0_i32_1 = arith.constant 0 : i32
    return %c0_i32, %c0_i32_0 : i32, i32
  }
  func.func @transform_3(%arg0: i32) -> (i32, i32) {
    %c0_i32 = arith.constant 0 : i32
    %c0_i32_0 = arith.constant 0 : i32
    %c0_i32_1 = arith.constant 0 : i32
    return %c0_i32, %c0_i32_0 : i32, i32
  }
  func.func @transform_4(%arg0: i32) -> (i32, i32, i32) {
    %c0_i32 = arith.constant 0 : i32
    %c0_i32_0 = arith.constant 0 : i32
    %c0_i32_1 = arith.constant 0 : i32
    %c0_i32_2 = arith.constant 0 : i32
    return %c0_i32, %c0_i32_0, %c0_i32_1 : i32, i32, i32
  }
  func.func @transform_5(%arg0: i32) -> (i32, i32) {
    %c0_i32 = arith.constant 0 : i32
    %c0_i32_0 = arith.constant 0 : i32
    %c0_i32_1 = arith.constant 0 : i32
    return %c0_i32, %c0_i32_0 : i32, i32
  }
  func.func @transform_6(%arg0: i32) -> (i32, i32) {
    %c0_i32 = arith.constant 0 : i32
    %c0_i32_0 = arith.constant 0 : i32
    %c0_i32_1 = arith.constant 0 : i32
    return %c0_i32, %c0_i32_0 : i32, i32
  }
  func.func @transform_7(%arg0: i32) -> (i32, i32, i32) {
    %c0_i32 = arith.constant 0 : i32
    %c0_i32_0 = arith.constant 0 : i32
    %c0_i32_1 = arith.constant 0 : i32
    %c0_i32_2 = arith.constant 0 : i32
    return %c0_i32, %c0_i32_0, %c0_i32_1 : i32, i32, i32
  }
  func.func @transform_8(%arg0: i32) -> (i32, i32) {
    %c0_i32 = arith.constant 0 : i32
    %c0_i32_0 = arith.constant 0 : i32
    %c0_i32_1 = arith.constant 0 : i32
    return %c0_i32, %c0_i32_0 : i32, i32
  }
  func.func @transform_9(%arg0: i32) -> (i32, i32) {
    %c0_i32 = arith.constant 0 : i32
    %c0_i32_0 = arith.constant 0 : i32
    %c0_i32_1 = arith.constant 0 : i32
    return %c0_i32, %c0_i32_0 : i32, i32
  }
  func.func @transform_10(%arg0: i32) -> (i32, i32, i32) {
    %c0_i32 = arith.constant 0 : i32
    %c0_i32_0 = arith.constant 0 : i32
    %c0_i32_1 = arith.constant 0 : i32
    %c0_i32_2 = arith.constant 0 : i32
    return %c0_i32, %c0_i32_0, %c0_i32_1 : i32, i32, i32
  }
  func.func @transform_11(%arg0: i32) -> (i32, i32) {
    %c0_i32 = arith.constant 0 : i32
    %c0_i32_0 = arith.constant 0 : i32
    %c0_i32_1 = arith.constant 0 : i32
    return %c0_i32, %c0_i32_0 : i32, i32
  }
  func.func @transform_12(%arg0: i32) -> (i32, i32) {
    %c0_i32 = arith.constant 0 : i32
    %c0_i32_0 = arith.constant 0 : i32
    %c0_i32_1 = arith.constant 0 : i32
    return %c0_i32, %c0_i32_0 : i32, i32
  }
  func.func @transform_13(%arg0: i32) -> (i32, i32, i32) {
    %c0_i32 = arith.constant 0 : i32
    %c0_i32_0 = arith.constant 0 : i32
    %c0_i32_1 = arith.constant 0 : i32
    return %arg0, %c0_i32, %c0_i32_0 : i32, i32, i32
  }
  func.func @transform_14(%arg0: i32) -> (i32, i32, i32) {
    %c0_i32 = arith.constant 0 : i32
    %c0_i32_0 = arith.constant 0 : i32
    %c0_i32_1 = arith.constant 0 : i32
    return %arg0, %c0_i32, %c0_i32_0 : i32, i32, i32
  }
  func.func @transform_15(%arg0: i32) -> (i32, i32, i32) {
    %c0_i32 = arith.constant 0 : i32
    %c0_i32_0 = arith.constant 0 : i32
    %c0_i32_1 = arith.constant 0 : i32
    return %arg0, %c0_i32, %c0_i32_0 : i32, i32, i32
  }
}

</mosaic_0001>

<llo_original>
// kernel: forward.1
$region0: #{forward.1}
  #allocation0 [shape = 'u32[]', space=smem, size = 0x4, offset = 0x4, fixed_abs, tag = 'smem constant byte address 0x4 - core index']
  #allocation1 [shape = 'u32[144,128]{1,0:T(1,128)}', space=vmem, size = 0x12000, scoped, tag = 'internal scratch']
  #allocation2 [shape = 'bf16[324,3]{1,0:T(8,128)(2,1)}', space=vmem, size = 0x14800, scoped, tag = 'scratch operand']
  #allocation3 [shape = 'bf16[324,8]{1,0:T(8,128)(2,1)}', space=vmem, size = 0x14800, scoped, tag = 'scratch operand']
  #allocation4 [shape = 'bf16[100,8]{1,0:T(8,128)(2,1)}', space=vmem, size = 0x6800, scoped, tag = 'scratch operand']
  #allocation5 [shape = 'bf16[16,16]{1,0:T(8,128)(2,1)}', space=vmem, size = 0x1000, scoped, tag = 'scratch operand']
  %s0 = inlined_call_operand.vmem [shape: bf16[2,324,3], index: 0, kind: input, shape index: {}]
  %s1 = inlined_call_operand.vmem [shape: bf16[9,3,8], index: 1, kind: input, shape index: {}]
  %s2 = inlined_call_operand.vmem [shape: f32[1,8], index: 2, kind: input, shape index: {}]
  %s3 = inlined_call_operand.vmem [shape: bf16[324,286], index: 3, kind: input, shape index: {}]
  %s4 = inlined_call_operand.vmem [shape: bf16[9,8,8], index: 4, kind: input, shape index: {}]
  %s5 = inlined_call_operand.vmem [shape: f32[1,8], index: 5, kind: input, shape index: {}]
  %s6 = inlined_call_operand.vmem [shape: bf16[100,286], index: 6, kind: input, shape index: {}]
  %s7 = inlined_call_operand.hbm [shape: bf16[9,8,16], index: 7, kind: input, shape index: {}]
  %s8 = inlined_call_operand.vmem [shape: f32[1,16], index: 8, kind: input, shape index: {}]
  %s9 = inlined_call_operand.vmem [shape: bf16[16,78], index: 9, kind: input, shape index: {}]
  %s10 = inlined_call_operand.hbm [shape: bf16[16,16,256], index: 10, kind: input, shape index: {}]
  %s11 = inlined_call_operand.vmem [shape: f32[1,256], index: 11, kind: input, shape index: {}]
  %s12 = inlined_call_operand.vmem [shape: f32[1,128], index: 12, kind: input, shape index: {}]
  %s13 = inlined_call_operand.hbm [shape: f32[2,1,128], index: 13, kind: output, shape index: {0}]
  %s14 = inlined_call_operand.hbm [shape: f32[2,1,128], index: 14, kind: output, shape index: {1}]
  %s15 = inlined_call_operand.hbm [shape: f32[2,1,128], index: 15, kind: output, shape index: {2}]
  %16 = xla_tuple %s13, %s14, %s15
  %s17 = sld [smem:[#allocation0]]
  $region109: #{forward.1} parent=0
    _
  %s19 = ssub.s32 1, %s17
  %s20 = scalar_select 0, %s19, %s17
  $region1: #{forward.1} parent=0
    #allocation6 [shape = 'u8[18432]{0}', space=vmem, size = 0x4800, scoped, tag = 'input window, operand 7, single buffered']
    #allocation7 [shape = 's32[2]{0}', space=sflag, size = 0x8, scoped, tag = 'scoped memory for forward.1']
    #allocation8 [shape = 's32[2]{0}', space=sflag, size = 0x8, scoped, tag = 'scoped memory for forward.1']
    #allocation9 [shape = 'u8[131072]{0}', space=vmem, size = 0x20000, scoped, tag = 'input window, operand 10, single buffered']
    #allocation10 [shape = 's32[1]{0}', space=sflag, size = 0x4, scoped, tag = 'scoped memory for forward.1']
    #allocation11 [shape = 'u8[1024]{0}', space=vmem, size = 0x400, scoped, tag = 'output window, operand 0']
    #allocation12 [shape = 'u8[1024]{0}', space=vmem, size = 0x400, scoped, tag = 'output window, operand 1']
    #allocation13 [shape = 's32[2]{0}', space=sflag, size = 0x8, scoped, tag = 'scoped memory for forward.1']
    #allocation14 [shape = 'u8[1024]{0}', space=vmem, size = 0x400, scoped, tag = 'output window, operand 2']
    %21 = vsyncpa [#allocation7], 0
    %22 = vsyncpa [#allocation10], 0
    %23 = vsyncpa [#allocation8], 0
    %s24 = scalar_lea.sflag [#allocation8], 1
    %25 = vsyncpa %s24, 0
    %26 = vsyncpa [#allocation13], 0
    %s27 = scalar_lea.sflag [#allocation13], 1
    %28 = vsyncpa %s27, 0
    loop: start=0, step=1, limit=4
    $region2: #{forward.1} parent=1 // loop_pre_header
      _
    $region3: #{forward.1} parent=1 // loop_header
      %s30 = sphi 0, %s34
      %p31 = scmp.ge.s32.totalorder %s30, 4
      %s40 = sphi 0, %s42
      %s43 = sphi 0, %s40
      %s44 = sphi 0, %s43
      %s60 = sphi 0, %s44
      %s64 = sphi 0, %s64
      %s66 = sphi 0, %s64
      %s67 = sphi 0, %s66
      %s81 = sphi 0, %s67
      %s85 = sphi 0, %s85
      %s87 = sphi 0, %s85
      %s88 = sphi 0, %s87
      %s102 = sphi 0, %s88
      %s106 = sphi 0, %s106
      %s108 = sphi 0, %s106
      %s109 = sphi 0, %s108
      %s123 = sphi 0, %s109
      %s127 = sphi 0, %s127
      %s129 = sphi 0, %s127
      %s130 = sphi 0, %s129
      %s144 = sphi 0, %s130
      %s148 = sphi 0, %s148
      %s150 = sphi 0, %s148
      %s151 = sphi 0, %s150
      %s165 = sphi 0, %s151
      %s169 = sphi 0, %s169
      %s171 = sphi 0, %s169
      %s172 = sphi 0, %s171
      %s186 = sphi 0, %s172
      %s190 = sphi 0, %s190
      %s192 = sphi 0, %s190
      %s193 = sphi 0, %s192
      %s207 = sphi 0, %s193
      %s211 = sphi 0, %s211
      %s213 = sphi 0, %s211
      %s214 = sphi 0, %s213
      %s228 = sphi 0, %s214
      %s232 = sphi 0, %s232
      %s234 = sphi 0, %s232
      %s235 = sphi 0, %s234
      %s249 = sphi 0, %s235
      %s253 = sphi 0, %s253
      %s255 = sphi 0, %s253
      %s256 = sphi 0, %s255
      %s270 = sphi 0, %s256
      %s274 = sphi 0, %s274
      %s276 = sphi 0, %s274
      %s277 = sphi 0, %s276
      %s291 = sphi 0, %s277
      %s295 = sphi 0, %s295
      %s297 = sphi 0, %s295
      %s298 = sphi 0, %s297
      %s312 = sphi 0, %s298
      %s318 = sphi 0, %s320
      %s321 = sphi 0, %s318
      %s322 = sphi 0, %s321
      %s338 = sphi 0, %s322
      %s344 = sphi 0, %s346
      %s347 = sphi 0, %s344
      %s348 = sphi 0, %s347
      %s364 = sphi 0, %s348
      %s370 = sphi 0, %s372
      %s373 = sphi 0, %s370
      %s374 = sphi 0, %s373
      %s390 = sphi 0, %s374
    $region4: #{forward.1} parent=1 // loop_header_branch
      %33 = sbr.rel (%p31) target = $region8
    $region5: #{forward.1} parent=1 // loop_body
      %s35 = ssub.s32 %s30, 1
      %s36 = ssub.s32 %s30, 2
      %s37 = sadd.s32 %s30, 1
      %s38 = ssub.s32 %s30, %s37
      %p39 = scmp.eq.s32.totalorder %s38, 0
      %s41 = sadd.s32 %s40, 1
      %s42 = scalar_select %p39, %s40, %s41
      %p45 = pneg %p39
      %p46 = scmp.eq.s32.totalorder %s30, 1
      %p47 = por %p45, %p46
      %p48 = scmp.ne.s32.totalorder %s40, %s43
      %p49 = scmp.eq.s32.totalorder %s30, 0
      %p50 = por %p48, %p49
      %p51 = scmp.ne.s32.totalorder %s40, %s43
      %p52 = scmp.eq.s32.totalorder %s35, 1
      %p53 = por %p51, %p52
      %p54 = scmp.ne.s32.totalorder %s43, %s44
      %p55 = scmp.eq.s32.totalorder %s35, 0
      %p56 = por %p54, %p55
      %p57 = scmp.ne.s32.totalorder %s43, %s44
      %p58 = scmp.eq.s32.totalorder %s36, 1
      %p59 = por %p57, %p58
      %p61 = scmp.ne.s32.totalorder %s44, %s60
      %p62 = scmp.eq.s32.totalorder %s36, 0
      %p63 = por %p61, %p62
      %s65 = sadd.s32 %s64, 1
      %p68 = scmp.eq.s32.totalorder %s30, 1
      %p69 = scmp.ne.s32.totalorder %s64, %s66
      %p70 = scmp.eq.s32.totalorder %s30, 0
      %p71 = por %p69, %p70
      %p72 = scmp.ne.s32.totalorder %s64, %s66
      %p73 = scmp.eq.s32.totalorder %s35, 1
      %p74 = por %p72, %p73
      %p75 = scmp.ne.s32.totalorder %s66, %s67
      %p76 = scmp.eq.s32.totalorder %s35, 0
      %p77 = por %p75, %p76
      %p78 = scmp.ne.s32.totalorder %s66, %s67
      %p79 = scmp.eq.s32.totalorder %s36, 1
      %p80 = por %p78, %p79
      %p82 = scmp.ne.s32.totalorder %s67, %s81
      %p83 = scmp.eq.s32.totalorder %s36, 0
      %p84 = por %p82, %p83
      %s86 = sadd.s32 %s85, 1
      %p89 = scmp.eq.s32.totalorder %s30, 1
      %p90 = scmp.ne.s32.totalorder %s85, %s87
      %p91 = scmp.eq.s32.totalorder %s30, 0
      %p92 = por %p90, %p91
      %p93 = scmp.ne.s32.totalorder %s85, %s87
      %p94 = scmp.eq.s32.totalorder %s35, 1
      %p95 = por %p93, %p94
      %p96 = scmp.ne.s32.totalorder %s87, %s88
      %p97 = scmp.eq.s32.totalorder %s35, 0
      %p98 = por %p96, %p97
      %p99 = scmp.ne.s32.totalorder %s87, %s88
      %p100 = scmp.eq.s32.totalorder %s36, 1
      %p101 = por %p99, %p100
      %p103 = scmp.ne.s32.totalorder %s88, %s102
      %p104 = scmp.eq.s32.totalorder %s36, 0
      %p105 = por %p103, %p104
      %s107 = sadd.s32 %s106, 1
      %p110 = scmp.eq.s32.totalorder %s30, 1
      %p111 = scmp.ne.s32.totalorder %s106, %s108
      %p112 = scmp.eq.s32.totalorder %s30, 0
      %p113 = por %p111, %p112
      %p114 = scmp.ne.s32.totalorder %s106, %s108
      %p115 = scmp.eq.s32.totalorder %s35, 1
      %p116 = por %p114, %p115
      %p117 = scmp.ne.s32.totalorder %s108, %s109
      %p118 = scmp.eq.s32.totalorder %s35, 0
      %p119 = por %p117, %p118
      %p120 = scmp.ne.s32.totalorder %s108, %s109
      %p121 = scmp.eq.s32.totalorder %s36, 1
      %p122 = por %p120, %p121
      %p124 = scmp.ne.s32.totalorder %s109, %s123
      %p125 = scmp.eq.s32.totalorder %s36, 0
      %p126 = por %p124, %p125
      %s128 = sadd.s32 %s127, 1
      %p131 = scmp.eq.s32.totalorder %s30, 1
      %p132 = scmp.ne.s32.totalorder %s127, %s129
      %p133 = scmp.eq.s32.totalorder %s30, 0
      %p134 = por %p132, %p133
      %p135 = scmp.ne.s32.totalorder %s127, %s129
      %p136 = scmp.eq.s32.totalorder %s35, 1
      %p137 = por %p135, %p136
      %p138 = scmp.ne.s32.totalorder %s129, %s130
      %p139 = scmp.eq.s32.totalorder %s35, 0
      %p140 = por %p138, %p139
      %p141 = scmp.ne.s32.totalorder %s129, %s130
      %p142 = scmp.eq.s32.totalorder %s36, 1
      %p143 = por %p141, %p142
      %p145 = scmp.ne.s32.totalorder %s130, %s144
      %p146 = scmp.eq.s32.totalorder %s36, 0
      %p147 = por %p145, %p146
      %s149 = sadd.s32 %s148, 1
      %p152 = scmp.eq.s32.totalorder %s30, 1
      %p153 = scmp.ne.s32.totalorder %s148, %s150
      %p154 = scmp.eq.s32.totalorder %s30, 0
      %p155 = por %p153, %p154
      %p156 = scmp.ne.s32.totalorder %s148, %s150
      %p157 = scmp.eq.s32.totalorder %s35, 1
      %p158 = por %p156, %p157
      %p159 = scmp.ne.s32.totalorder %s150, %s151
      %p160 = scmp.eq.s32.totalorder %s35, 0
      %p161 = por %p159, %p160
      %p162 = scmp.ne.s32.totalorder %s150, %s151
      %p163 = scmp.eq.s32.totalorder %s36, 1
      %p164 = por %p162, %p163
      %p166 = scmp.ne.s32.totalorder %s151, %s165
      %p167 = scmp.eq.s32.totalorder %s36, 0
      %p168 = por %p166, %p167
      %s170 = sadd.s32 %s169, 1
      %p173 = scmp.eq.s32.totalorder %s30, 1
      %p174 = scmp.ne.s32.totalorder %s169, %s171
      %p175 = scmp.eq.s32.totalorder %s30, 0
      %p176 = por %p174, %p175
      %p177 = scmp.ne.s32.totalorder %s169, %s171
      %p178 = scmp.eq.s32.totalorder %s35, 1
      %p179 = por %p177, %p178
      %p180 = scmp.ne.s32.totalorder %s171, %s172
      %p181 = scmp.eq.s32.totalorder %s35, 0
      %p182 = por %p180, %p181
      %p183 = scmp.ne.s32.totalorder %s171, %s172
      %p184 = scmp.eq.s32.totalorder %s36, 1
      %p185 = por %p183, %p184
      %p187 = scmp.ne.s32.totalorder %s172, %s186
      %p188 = scmp.eq.s32.totalorder %s36, 0
      %p189 = por %p187, %p188
      %s191 = sadd.s32 %s190, 1
      %p194 = scmp.eq.s32.totalorder %s30, 1
      %p195 = scmp.ne.s32.totalorder %s190, %s192
      %p196 = scmp.eq.s32.totalorder %s30, 0
      %p197 = por %p195, %p196
      %p198 = scmp.ne.s32.totalorder %s190, %s192
      %p199 = scmp.eq.s32.totalorder %s35, 1
      %p200 = por %p198, %p199
      %p201 = scmp.ne.s32.totalorder %s192, %s193
      %p202 = scmp.eq.s32.totalorder %s35, 0
      %p203 = por %p201, %p202
      %p204 = scmp.ne.s32.totalorder %s192, %s193
      %p205 = scmp.eq.s32.totalorder %s36, 1
      %p206 = por %p204, %p205
      %p208 = scmp.ne.s32.totalorder %s193, %s207
      %p209 = scmp.eq.s32.totalorder %s36, 0
      %p210 = por %p208, %p209
      %s212 = sadd.s32 %s211, 1
      %p215 = scmp.eq.s32.totalorder %s30, 1
      %p216 = scmp.ne.s32.totalorder %s211, %s213
      %p217 = scmp.eq.s32.totalorder %s30, 0
      %p218 = por %p216, %p217
      %p219 = scmp.ne.s32.totalorder %s211, %s213
      %p220 = scmp.eq.s32.totalorder %s35, 1
      %p221 = por %p219, %p220
      %p222 = scmp.ne.s32.totalorder %s213, %s214
      %p223 = scmp.eq.s32.totalorder %s35, 0
      %p224 = por %p222, %p223
      %p225 = scmp.ne.s32.totalorder %s213, %s214
      %p226 = scmp.eq.s32.totalorder %s36, 1
      %p227 = por %p225, %p226
      %p229 = scmp.ne.s32.totalorder %s214, %s228
      %p230 = scmp.eq.s32.totalorder %s36, 0
      %p231 = por %p229, %p230
      %s233 = sadd.s32 %s232, 1
      %p236 = scmp.eq.s32.totalorder %s30, 1
      %p237 = scmp.ne.s32.totalorder %s232, %s234
      %p238 = scmp.eq.s32.totalorder %s30, 0
      %p239 = por %p237, %p238
      %p240 = scmp.ne.s32.totalorder %s232, %s234
      %p241 = scmp.eq.s32.totalorder %s35, 1
      %p242 = por %p240, %p241
      %p243 = scmp.ne.s32.totalorder %s234, %s235
      %p244 = scmp.eq.s32.totalorder %s35, 0
      %p245 = por %p243, %p244
      %p246 = scmp.ne.s32.totalorder %s234, %s235
      %p247 = scmp.eq.s32.totalorder %s36, 1
      %p248 = por %p246, %p247
      %p250 = scmp.ne.s32.totalorder %s235, %s249
      %p251 = scmp.eq.s32.totalorder %s36, 0
      %p252 = por %p250, %p251
      %s254 = sadd.s32 %s253, 1
      %p257 = scmp.eq.s32.totalorder %s30, 1
      %p258 = scmp.ne.s32.totalorder %s253, %s255
      %p259 = scmp.eq.s32.totalorder %s30, 0
      %p260 = por %p258, %p259
      %p261 = scmp.ne.s32.totalorder %s253, %s255
      %p262 = scmp.eq.s32.totalorder %s35, 1
      %p263 = por %p261, %p262
      %p264 = scmp.ne.s32.totalorder %s255, %s256
      %p265 = scmp.eq.s32.totalorder %s35, 0
      %p266 = por %p264, %p265
      %p267 = scmp.ne.s32.totalorder %s255, %s256
      %p268 = scmp.eq.s32.totalorder %s36, 1
      %p269 = por %p267, %p268
      %p271 = scmp.ne.s32.totalorder %s256, %s270
      %p272 = scmp.eq.s32.totalorder %s36, 0
      %p273 = por %p271, %p272
      %s275 = sadd.s32 %s274, 1
      %p278 = scmp.eq.s32.totalorder %s30, 1
      %p279 = scmp.ne.s32.totalorder %s274, %s276
      %p280 = scmp.eq.s32.totalorder %s30, 0
      %p281 = por %p279, %p280
      %p282 = scmp.ne.s32.totalorder %s274, %s276
      %p283 = scmp.eq.s32.totalorder %s35, 1
      %p284 = por %p282, %p283
      %p285 = scmp.ne.s32.totalorder %s276, %s277
      %p286 = scmp.eq.s32.totalorder %s35, 0
      %p287 = por %p285, %p286
      %p288 = scmp.ne.s32.totalorder %s276, %s277
      %p289 = scmp.eq.s32.totalorder %s36, 1
      %p290 = por %p288, %p289
      %p292 = scmp.ne.s32.totalorder %s277, %s291
      %p293 = scmp.eq.s32.totalorder %s36, 0
      %p294 = por %p292, %p293
      %s296 = sadd.s32 %s295, 1
      %p299 = scmp.eq.s32.totalorder %s30, 1
      %p300 = scmp.ne.s32.totalorder %s295, %s297
      %p301 = scmp.eq.s32.totalorder %s30, 0
      %p302 = por %p300, %p301
      %p303 = scmp.ne.s32.totalorder %s295, %s297
      %p304 = scmp.eq.s32.totalorder %s35, 1
      %p305 = por %p303, %p304
      %p306 = scmp.ne.s32.totalorder %s297, %s298
      %p307 = scmp.eq.s32.totalorder %s35, 0
      %p308 = por %p306, %p307
      %p309 = scmp.ne.s32.totalorder %s297, %s298
      %p310 = scmp.eq.s32.totalorder %s36, 1
      %p311 = por %p309, %p310
      %p313 = scmp.ne.s32.totalorder %s298, %s312
      %p314 = scmp.eq.s32.totalorder %s36, 0
      %p315 = por %p313, %p314
      %s316 = ssub.s32 %s30, %s37
      %p317 = scmp.eq.s32.totalorder %s316, 0
      %s319 = sadd.s32 %s318, 1
      %s320 = scalar_select %p317, %s318, %s319
      %p323 = pneg %p317
      %p324 = scmp.eq.s32.totalorder %s30, 1
      %p325 = por %p323, %p324
      %p326 = scmp.ne.s32.totalorder %s318, %s321
      %p327 = scmp.eq.s32.totalorder %s30, 0
      %p328 = por %p326, %p327
      %p329 = scmp.ne.s32.totalorder %s318, %s321
      %p330 = scmp.eq.s32.totalorder %s35, 1
      %p331 = por %p329, %p330
      %p332 = scmp.ne.s32.totalorder %s321, %s322
      %p333 = scmp.eq.s32.totalorder %s35, 0
      %p334 = por %p332, %p333
      %p335 = scmp.ne.s32.totalorder %s321, %s322
      %p336 = scmp.eq.s32.totalorder %s36, 1
      %p337 = por %p335, %p336
      %p339 = scmp.ne.s32.totalorder %s322, %s338
      %p340 = scmp.eq.s32.totalorder %s36, 0
      %p341 = por %p339, %p340
      %s342 = ssub.s32 %s30, %s37
      %p343 = scmp.eq.s32.totalorder %s342, 0
      %s345 = sadd.s32 %s344, 1
      %s346 = scalar_select %p343, %s344, %s345
      %p349 = pneg %p343
      %p350 = scmp.eq.s32.totalorder %s30, 1
      %p351 = por %p349, %p350
      %p352 = scmp.ne.s32.totalorder %s344, %s347
      %p353 = scmp.eq.s32.totalorder %s30, 0
      %p354 = por %p352, %p353
      %p355 = scmp.ne.s32.totalorder %s344, %s347
      %p356 = scmp.eq.s32.totalorder %s35, 1
      %p357 = por %p355, %p356
      %p358 = scmp.ne.s32.totalorder %s347, %s348
      %p359 = scmp.eq.s32.totalorder %s35, 0
      %p360 = por %p358, %p359
      %p361 = scmp.ne.s32.totalorder %s347, %s348
      %p362 = scmp.eq.s32.totalorder %s36, 1
      %p363 = por %p361, %p362
      %p365 = scmp.ne.s32.totalorder %s348, %s364
      %p366 = scmp.eq.s32.totalorder %s36, 0
      %p367 = por %p365, %p366
      %s368 = ssub.s32 %s30, %s37
      %p369 = scmp.eq.s32.totalorder %s368, 0
      %s371 = sadd.s32 %s370, 1
      %s372 = scalar_select %p369, %s370, %s371
      %p375 = pneg %p369
      %p376 = scmp.eq.s32.totalorder %s30, 1
      %p377 = por %p375, %p376
      %p378 = scmp.ne.s32.totalorder %s370, %s373
      %p379 = scmp.eq.s32.totalorder %s30, 0
      %p380 = por %p378, %p379
      %p381 = scmp.ne.s32.totalorder %s370, %s373
      %p382 = scmp.eq.s32.totalorder %s35, 1
      %p383 = por %p381, %p382
      %p384 = scmp.ne.s32.totalorder %s373, %s374
      %p385 = scmp.eq.s32.totalorder %s35, 0
      %p386 = por %p384, %p385
      %p387 = scmp.ne.s32.totalorder %s373, %s374
      %p388 = scmp.eq.s32.totalorder %s36, 1
      %p389 = por %p387, %p388
      %p391 = scmp.ne.s32.totalorder %s374, %s390
      %p392 = scmp.eq.s32.totalorder %s36, 0
      %p393 = por %p391, %p392
      %p394 = scmp.le.s32.totalorder 1, %s30
      %p395 = scmp.lt.s32.totalorder %s30, 3
      %p396 = pnand %p394, %p395
      %p397 = pneg %p396
      // Predicated region
      $region9: #{forward.1} parent=5 // pred_check
        _
      $region10: #{forward.1} parent=5 // pred_check_branch
        %399 = sbr.rel (%p396) target = $region12
      $region11: #{forward.1} parent=5 // pred_region
        %s400 = ssub.s32 %s30, 1
        // Predicated region
        $region13: #{forward.1} parent=11 // pred_check
          %p401 = pneg %p77
        $region14: #{forward.1} parent=11 // pred_check_branch
          %403 = sbr.rel (%p401) target = $region16
        $region15: #{forward.1} parent=11 // pred_region
          _
        $region16: #{forward.1} parent=11 // pred_fallthru
          _
        // Predicated region
        $region17: #{forward.1} parent=11 // pred_check
          %p404 = pneg %p98
        $region18: #{forward.1} parent=11 // pred_check_branch
          %406 = sbr.rel (%p404) target = $region20
        $region19: #{forward.1} parent=11 // pred_region
          _
        $region20: #{forward.1} parent=11 // pred_fallthru
          _
        // Predicated region
        $region21: #{forward.1} parent=11 // pred_check
          %p407 = pneg %p119
        $region22: #{forward.1} parent=11 // pred_check_branch
          %409 = sbr.rel (%p407) target = $region24
        $region23: #{forward.1} parent=11 // pred_region
          _
        $region24: #{forward.1} parent=11 // pred_fallthru
          _
        // Predicated region
        $region25: #{forward.1} parent=11 // pred_check
          %p410 = pneg %p140
        $region26: #{forward.1} parent=11 // pred_check_branch
          %412 = sbr.rel (%p410) target = $region28
        $region27: #{forward.1} parent=11 // pred_region
          _
        $region28: #{forward.1} parent=11 // pred_fallthru
          _
        // Predicated region
        $region29: #{forward.1} parent=11 // pred_check
          %p413 = pneg %p161
        $region30: #{forward.1} parent=11 // pred_check_branch
          %415 = sbr.rel (%p413) target = $region32
        $region31: #{forward.1} parent=11 // pred_region
          _
        $region32: #{forward.1} parent=11 // pred_fallthru
          _
        // Predicated region
        $region33: #{forward.1} parent=11 // pred_check
          %p416 = pneg %p182
        $region34: #{forward.1} parent=11 // pred_check_branch
          %418 = sbr.rel (%p416) target = $region36
        $region35: #{forward.1} parent=11 // pred_region
          _
        $region36: #{forward.1} parent=11 // pred_fallthru
          _
        // Predicated region
        $region37: #{forward.1} parent=11 // pred_check
          %p419 = pneg %p203
        $region38: #{forward.1} parent=11 // pred_check_branch
          %421 = sbr.rel (%p419) target = $region40
        $region39: #{forward.1} parent=11 // pred_region
          %s423 = ssub.s32 576, 576
          %424 = vsyncadd [#allocation7], %s423
          %s425 = sshll.u32 [#allocation6], 4
          %s426 = int_to_ptr.vmem [resolvable:$true] %s425
          %431 = dma.hbm_to_vmem [thread:$0]  %s7, 576, %s426, [#allocation7], 64, 64, 4
        $region40: #{forward.1} parent=11 // pred_fallthru
          _
        // Predicated region
        $region41: #{forward.1} parent=11 // pred_check
          %p432 = pneg %p224
        $region42: #{forward.1} parent=11 // pred_check_branch
          %434 = sbr.rel (%p432) target = $region44
        $region43: #{forward.1} parent=11 // pred_region
          _
        $region44: #{forward.1} parent=11 // pred_fallthru
          _
        // Predicated region
        $region45: #{forward.1} parent=11 // pred_check
          %p435 = pneg %p245
        $region46: #{forward.1} parent=11 // pred_check_branch
          %437 = sbr.rel (%p435) target = $region48
        $region47: #{forward.1} parent=11 // pred_region
          _
        $region48: #{forward.1} parent=11 // pred_fallthru
          _
        // Predicated region
        $region49: #{forward.1} parent=11 // pred_check
          %p438 = pneg %p266
        $region50: #{forward.1} parent=11 // pred_check_branch
          %440 = sbr.rel (%p438) target = $region52
        $region51: #{forward.1} parent=11 // pred_region
          %s442 = ssub.s32 4096, 4096
          %443 = vsyncadd [#allocation10], %s442
          %s444 = sshll.u32 [#allocation9], 4
          %s445 = int_to_ptr.vmem [resolvable:$true] %s444
          %450 = dma.hbm_to_vmem [thread:$0]  %s10, 4096, %s445, [#allocation10], 128, 128, 8
        $region52: #{forward.1} parent=11 // pred_fallthru
          _
        // Predicated region
        $region53: #{forward.1} parent=11 // pred_check
          %p451 = pneg %p287
        $region54: #{forward.1} parent=11 // pred_check_branch
          %453 = sbr.rel (%p451) target = $region56
        $region55: #{forward.1} parent=11 // pred_region
          _
        $region56: #{forward.1} parent=11 // pred_fallthru
          _
        // Predicated region
        $region57: #{forward.1} parent=11 // pred_check
          %p454 = pneg %p308
        $region58: #{forward.1} parent=11 // pred_check_branch
          %456 = sbr.rel (%p454) target = $region60
        $region59: #{forward.1} parent=11 // pred_region
          _
        $region60: #{forward.1} parent=11 // pred_fallthru
          _
      $region12: #{forward.1} parent=5 // pred_fallthru
        _
      %p457 = scmp.lt.s32.totalorder %s30, 2
      // Predicated region
      $region61: #{forward.1} parent=5 // pred_check
        %p458 = pneg %p457
      $region62: #{forward.1} parent=5 // pred_check_branch
        %460 = sbr.rel (%p458) target = $region64
      $region63: #{forward.1} parent=5 // pred_region
        // Predicated region
        $region65: #{forward.1} parent=63 // pred_check
          %p461 = pneg %p50
        $region66: #{forward.1} parent=63 // pred_check_branch
          %463 = sbr.rel (%p461) target = $region68
        $region67: #{forward.1} parent=63 // pred_region
          %p464 = scmp.lt.s32.totalorder %s30, 1
          %s465 = scalar_select %p464, %s30, 1
          %s466 = smul.addr %s465, 41
          %s467 = smul.addr %s466, 4
          %s468 = scalar_lea.vmem %s0, %s467
        $region68: #{forward.1} parent=63 // pred_fallthru
          _
      $region64: #{forward.1} parent=5 // pred_fallthru
        _
      %p469 = scmp.le.s32.totalorder 1, %s30
      %p470 = scmp.lt.s32.totalorder %s30, 3
      %p471 = pnand %p469, %p470
      %p472 = pneg %p471
      // Predicated region
      $region69: #{forward.1} parent=5 // pred_check
        _
      $region70: #{forward.1} parent=5 // pred_check_branch
        %474 = sbr.rel (%p471) target = $region72
      $region71: #{forward.1} parent=5 // pred_region
        %s475 = ssub.s32 %s30, 1
        // Predicated region
        $region73: #{forward.1} parent=71 // pred_check
          %p476 = pneg %p203
        $region74: #{forward.1} parent=71 // pred_check_branch
          %478 = sbr.rel (%p476) target = $region76
        $region75: #{forward.1} parent=71 // pred_region
          %479 = dma.done [#allocation7], 576
        $region76: #{forward.1} parent=71 // pred_fallthru
          _
        // Predicated region
        $region77: #{forward.1} parent=71 // pred_check
          %p480 = pneg %p266
        $region78: #{forward.1} parent=71 // pred_check_branch
          %482 = sbr.rel (%p480) target = $region80
        $region79: #{forward.1} parent=71 // pred_region
          %483 = dma.done [#allocation10], 4096
        $region80: #{forward.1} parent=71 // pred_fallthru
          _
        %p484 = scmp.lt.s32.totalorder %s35, 1
        %s485 = scalar_select %p484, %s35, 1
        %s486 = smul.addr %s485, 41
        %s487 = smul.addr %s486, 4
        %s488 = scalar_lea.vmem %s0, %s487
        %p489 = pneg %p56
        %p490 = pneg %p53
        %p491 = pneg %p77
        %p492 = pneg %p74
        %p493 = pneg %p98
        %p494 = pneg %p95
        %p495 = pneg %p119
        %p496 = pneg %p116
        %p497 = pneg %p140
        %p498 = pneg %p137
        %p499 = pneg %p161
        %p500 = pneg %p158
        %p501 = pneg %p182
        %p502 = pneg %p179
        %p503 = pneg %p203
        %p504 = pneg %p200
        %p505 = pneg %p224
        %p506 = pneg %p221
        %p507 = pneg %p245
        %p508 = pneg %p242
        %p509 = pneg %p266
        %p510 = pneg %p263
        %p511 = pneg %p287
        %p512 = pneg %p284
        %p513 = pneg %p308
        %p514 = pneg %p305
        %p515 = pneg %p334
        %p516 = pneg %p331
        %s517 = sand.u32 %s321, 1
        %s518 = scalar_lea.sflag [#allocation8], %s517
        %s519 = sand.u32 %s321, 1
        %s520 = scalar_lea.vmem [#allocation11], %s519
        %p521 = pneg %p360
        %p522 = pneg %p357
        %s523 = sand.u32 %s35, 1
        %s524 = scalar_lea.sflag [#allocation13], %s523
        %s525 = sand.u32 %s347, 1
        %s526 = scalar_lea.vmem [#allocation12], %s525
        %p527 = pneg %p386
        %p528 = pneg %p383
        %s529 = sand.u32 %s35, 1
        %s530 = scalar_lea.sflag [#allocation13], %s529
        %s531 = sand.u32 %s373, 1
        %s532 = scalar_lea.vmem [#allocation14], %s531
        %p533 = scmp.lt.s32.totalorder %s35, 1
        %s534 = scalar_select %p533, %s35, 1
        %s535 = smul.addr %s534, 41
        %s536 = smul.addr %s535, 4
        %s537 = scalar_lea.vmem %s0, %s536
        %v539 = vld [vmem:[%s537] sm:$0xf]
        %v540 = vld [vmem:[%s537 + $0x4] sm:$0xf]
        %v541 = vld [vmem:[%s537 + $0x8] sm:$0xf]
        %v542 = vld [vmem:[%s537 + $0xc] sm:$0xf]
        %v543 = vld [vmem:[%s537 + $0x10] sm:$0xf]
        %v544 = vld [vmem:[%s537 + $0x14] sm:$0xf]
        %v545 = vld [vmem:[%s537 + $0x18] sm:$0xf]
        %v546 = vld [vmem:[%s537 + $0x1c] sm:$0xf]
        %v547 = vld [vmem:[%s537 + $0x20] sm:$0xf]
        %v548 = vld [vmem:[%s537 + $0x24] sm:$0xf]
        %v549 = vld [vmem:[%s537 + $0x28] sm:$0xf]
        %v550 = vld [vmem:[%s537 + $0x2c] sm:$0xf]
        %v551 = vld [vmem:[%s537 + $0x30] sm:$0xf]
        %v552 = vld [vmem:[%s537 + $0x34] sm:$0xf]
        %v553 = vld [vmem:[%s537 + $0x38] sm:$0xf]
        %v554 = vld [vmem:[%s537 + $0x3c] sm:$0xf]
        %v555 = vld [vmem:[%s537 + $0x40] sm:$0xf]
        %v556 = vld [vmem:[%s537 + $0x44] sm:$0xf]
        %v557 = vld [vmem:[%s537 + $0x48] sm:$0xf]
        %v558 = vld [vmem:[%s537 + $0x4c] sm:$0xf]
        %v559 = vld [vmem:[%s537 + $0x50] sm:$0xf]
        %v560 = vld [vmem:[%s537 + $0x54] sm:$0xf]
        %v561 = vld [vmem:[%s537 + $0x58] sm:$0xf]
        %v562 = vld [vmem:[%s537 + $0x5c] sm:$0xf]
        %v563 = vld [vmem:[%s537 + $0x60] sm:$0xf]
        %v564 = vld [vmem:[%s537 + $0x64] sm:$0xf]
        %v565 = vld [vmem:[%s537 + $0x68] sm:$0xf]
        %v566 = vld [vmem:[%s537 + $0x6c] sm:$0xf]
        %v567 = vld [vmem:[%s537 + $0x70] sm:$0xf]
        %v568 = vld [vmem:[%s537 + $0x74] sm:$0xf]
        %v569 = vld [vmem:[%s537 + $0x78] sm:$0xf]
        %v570 = vld [vmem:[%s537 + $0x7c] sm:$0xf]
        %v571 = vld [vmem:[%s537 + $0x80] sm:$0xf]
        %v572 = vld [vmem:[%s537 + $0x84] sm:$0xf]
        %v573 = vld [vmem:[%s537 + $0x88] sm:$0xf]
        %v574 = vld [vmem:[%s537 + $0x8c] sm:$0xf]
        %v575 = vld [vmem:[%s537 + $0x90] sm:$0xf]
        %v576 = vld [vmem:[%s537 + $0x94] sm:$0xf]
        %v577 = vld [vmem:[%s537 + $0x98] sm:$0xf]
        %v578 = vld [vmem:[%s537 + $0x9c] sm:$0xf]
        %v579 = vld [vmem:[%s537 + $0xa0] sm:$0x3]
        %vm580 = vcmask 19456
        %581 = vst.msk [vmem:[#allocation2] sm:$0xf] %vm580, %v539
        %582 = vst.msk [vmem:[#allocation2 + $0x4] sm:$0xf] %vm580, %v540
        %583 = vst.msk [vmem:[#allocation2 + $0x8] sm:$0xf] %vm580, %v541
        %584 = vst.msk [vmem:[#allocation2 + $0xc] sm:$0xf] %vm580, %v542
        %585 = vst.msk [vmem:[#allocation2 + $0x10] sm:$0xf] %vm580, %v543
        %586 = vst.msk [vmem:[#allocation2 + $0x14] sm:$0xf] %vm580, %v544
        %587 = vst.msk [vmem:[#allocation2 + $0x18] sm:$0xf] %vm580, %v545
        %588 = vst.msk [vmem:[#allocation2 + $0x1c] sm:$0xf] %vm580, %v546
        %589 = vst.msk [vmem:[#allocation2 + $0x20] sm:$0xf] %vm580, %v547
        %590 = vst.msk [vmem:[#allocation2 + $0x24] sm:$0xf] %vm580, %v548
        %591 = vst.msk [vmem:[#allocation2 + $0x28] sm:$0xf] %vm580, %v549
        %592 = vst.msk [vmem:[#allocation2 + $0x2c] sm:$0xf] %vm580, %v550
        %593 = vst.msk [vmem:[#allocation2 + $0x30] sm:$0xf] %vm580, %v551
        %594 = vst.msk [vmem:[#allocation2 + $0x34] sm:$0xf] %vm580, %v552
        %595 = vst.msk [vmem:[#allocation2 + $0x38] sm:$0xf] %vm580, %v553
        %596 = vst.msk [vmem:[#allocation2 + $0x3c] sm:$0xf] %vm580, %v554
        %597 = vst.msk [vmem:[#allocation2 + $0x40] sm:$0xf] %vm580, %v555
        %598 = vst.msk [vmem:[#allocation2 + $0x44] sm:$0xf] %vm580, %v556
        %599 = vst.msk [vmem:[#allocation2 + $0x48] sm:$0xf] %vm580, %v557
        %600 = vst.msk [vmem:[#allocation2 + $0x4c] sm:$0xf] %vm580, %v558
        %601 = vst.msk [vmem:[#allocation2 + $0x50] sm:$0xf] %vm580, %v559
        %602 = vst.msk [vmem:[#allocation2 + $0x54] sm:$0xf] %vm580, %v560
        %603 = vst.msk [vmem:[#allocation2 + $0x58] sm:$0xf] %vm580, %v561
        %604 = vst.msk [vmem:[#allocation2 + $0x5c] sm:$0xf] %vm580, %v562
        %605 = vst.msk [vmem:[#allocation2 + $0x60] sm:$0xf] %vm580, %v563
        %606 = vst.msk [vmem:[#allocation2 + $0x64] sm:$0xf] %vm580, %v564
        %607 = vst.msk [vmem:[#allocation2 + $0x68] sm:$0xf] %vm580, %v565
        %608 = vst.msk [vmem:[#allocation2 + $0x6c] sm:$0xf] %vm580, %v566
        %609 = vst.msk [vmem:[#allocation2 + $0x70] sm:$0xf] %vm580, %v567
        %610 = vst.msk [vmem:[#allocation2 + $0x74] sm:$0xf] %vm580, %v568
        %611 = vst.msk [vmem:[#allocation2 + $0x78] sm:$0xf] %vm580, %v569
        %612 = vst.msk [vmem:[#allocation2 + $0x7c] sm:$0xf] %vm580, %v570
        %613 = vst.msk [vmem:[#allocation2 + $0x80] sm:$0xf] %vm580, %v571
        %614 = vst.msk [vmem:[#allocation2 + $0x84] sm:$0xf] %vm580, %v572
        %615 = vst.msk [vmem:[#allocation2 + $0x88] sm:$0xf] %vm580, %v573
        %616 = vst.msk [vmem:[#allocation2 + $0x8c] sm:$0xf] %vm580, %v574
        %617 = vst.msk [vmem:[#allocation2 + $0x90] sm:$0xf] %vm580, %v575
        %618 = vst.msk [vmem:[#allocation2 + $0x94] sm:$0xf] %vm580, %v576
        %619 = vst.msk [vmem:[#allocation2 + $0x98] sm:$0xf] %vm580, %v577
        %620 = vst.msk [vmem:[#allocation2 + $0x9c] sm:$0xf] %vm580, %v578
        %vm621 = vcmask 17408
        %622 = vst.msk [vmem:[#allocation2 + $0xa0] sm:$0x3] %vm621, %v579
        %v623 = vld [vmem:[#allocation2] sm:$0xf]
        %v624 = vld [vmem:[#allocation2 + $0x4] sm:$0xf]
        %v625 = vld [vmem:[#allocation2 + $0x8] sm:$0xf]
        %v626 = vld [vmem:[#allocation2 + $0xc] sm:$0xf]
        %v627 = vld [vmem:[#allocation2 + $0x10] sm:$0xf]
        %v628 = vld [vmem:[#allocation2 + $0x14] sm:$0xf]
        %v629 = vld [vmem:[#allocation2 + $0x18] sm:$0xf]
        %v630 = vld [vmem:[#allocation2 + $0x1c] sm:$0xf]
        %v631 = vld [vmem:[#allocation2 + $0x20] sm:$0xf]
        %v632 = vld [vmem:[#allocation2 + $0x24] sm:$0xf]
        %v633 = vld [vmem:[#allocation2 + $0x28] sm:$0xf]
        %v634 = vld [vmem:[#allocation2 + $0x2c] sm:$0xf]
        %v635 = vld [vmem:[#allocation2 + $0x30] sm:$0xf]
        %v636 = vld [vmem:[#allocation2 + $0x34] sm:$0xf]
        %v637 = vld [vmem:[#allocation2 + $0x38] sm:$0xf]
        %v638 = vld [vmem:[#allocation2 + $0x3c] sm:$0xf]
        %v639 = vld [vmem:[#allocation2 + $0x40] sm:$0xf]
        %v640 = vld [vmem:[#allocation2 + $0x44] sm:$0xf]
        %v641 = vld [vmem:[#allocation2 + $0x48] sm:$0xf]
        %v642 = vld [vmem:[#allocation2 + $0x4c] sm:$0xf]
        %v643 = vld [vmem:[#allocation2 + $0x50] sm:$0xf]
        %v644 = vld [vmem:[#allocation2 + $0x54] sm:$0xf]
        %v645 = vld [vmem:[#allocation2 + $0x58] sm:$0xf]
        %v646 = vld [vmem:[#allocation2 + $0x5c] sm:$0xf]
        %v647 = vld [vmem:[#allocation2 + $0x60] sm:$0xf]
        %v648 = vld [vmem:[#allocation2 + $0x64] sm:$0xf]
        %v649 = vld [vmem:[#allocation2 + $0x68] sm:$0xf]
        %v650 = vld [vmem:[#allocation2 + $0x6c] sm:$0xf]
        %v651 = vld [vmem:[#allocation2 + $0x70] sm:$0xf]
        %v652 = vld [vmem:[#allocation2 + $0x74] sm:$0xf]
        %v653 = vld [vmem:[#allocation2 + $0x78] sm:$0xf]
        %v654 = vld [vmem:[#allocation2 + $0x7c] sm:$0xf]
        %v655 = vld [vmem:[#allocation2 + $0x80] sm:$0xf]
        %v656 = vld [vmem:[#allocation2 + $0x84] sm:$0xf]
        %v657 = vld [vmem:[#allocation2 + $0x88] sm:$0xf]
        %v658 = vld [vmem:[#allocation2 + $0x8c] sm:$0x7]
        %v659 = vld [vmem:[%s1] sm:$0x3]
        %v660 = vld [vmem:[#allocation2 + $0x8c] sm:$0xf]
        %s661 = scalar_lea.vmem %s1, 2
        %v662 = vld [vmem:[%s661] sm:$0x3]
        %v699 = vunpack.c.l.b16 %v623
        %v700 = vunpack.c.l.b16 %v624
        %v701 = vunpack.c.l.b16 %v625
        %v702 = vunpack.c.l.b16 %v626
        %v703 = vunpack.c.l.b16 %v627
        %v704 = vunpack.c.l.b16 %v628
        %v705 = vunpack.c.l.b16 %v629
        %v706 = vunpack.c.l.b16 %v630
        %v707 = vunpack.c.l.b16 %v631
        %v708 = vunpack.c.l.b16 %v632
        %v709 = vunpack.c.l.b16 %v633
        %v710 = vunpack.c.l.b16 %v634
        %v711 = vunpack.c.l.b16 %v635
        %v712 = vunpack.c.l.b16 %v636
        %v713 = vunpack.c.l.b16 %v637
        %v714 = vunpack.c.l.b16 %v638
        %v715 = vunpack.c.l.b16 %v639
        %v716 = vunpack.c.l.b16 %v640
        %v717 = vunpack.c.l.b16 %v641
        %v718 = vunpack.c.l.b16 %v642
        %v719 = vunpack.c.l.b16 %v643
        %v720 = vunpack.c.l.b16 %v644
        %v721 = vunpack.c.l.b16 %v645
        %v722 = vunpack.c.l.b16 %v646
        %v723 = vunpack.c.l.b16 %v647
        %v724 = vunpack.c.l.b16 %v648
        %v725 = vunpack.c.l.b16 %v649
        %v726 = vunpack.c.l.b16 %v650
        %v727 = vunpack.c.l.b16 %v651
        %v728 = vunpack.c.l.b16 %v652
        %v729 = vunpack.c.l.b16 %v653
        %v730 = vunpack.c.l.b16 %v654
        %v731 = vunpack.c.l.b16 %v655
        %v732 = vunpack.c.l.b16 %v656
        %v733 = vunpack.c.l.b16 %v657
        %v734 = vunpack.c.l.b16 %v660
        %v735 = vpack.c.b16 %v700, %v699
        %v736 = vpack.c.b16 %v702, %v701
        %v737 = vpack.c.b16 %v704, %v703
        %v738 = vpack.c.b16 %v706, %v705
        %v739 = vpack.c.b16 %v708, %v707
        %v740 = vpack.c.b16 %v710, %v709
        %v741 = vpack.c.b16 %v712, %v711
        %v742 = vpack.c.b16 %v714, %v713
        %v743 = vpack.c.b16 %v716, %v715
        %v744 = vpack.c.b16 %v718, %v717
        %v745 = vpack.c.b16 %v720, %v719
        %v746 = vpack.c.b16 %v722, %v721
        %v747 = vpack.c.b16 %v724, %v723
        %v748 = vpack.c.b16 %v726, %v725
        %v749 = vpack.c.b16 %v728, %v727
        %v750 = vpack.c.b16 %v730, %v729
        %v751 = vpack.c.b16 %v732, %v731
        %v752 = vpack.c.b16 %v734, %v733
        %vm753 = vsmask.f32 7424
        %v755 = vshrl.u32 %v735, 16
        %v757 = vshll.u32 %v735, 16
        %v759 = vrot.slane %v757, 1
        %v760 = vor.u32 %v755, %v759
        %v762 = vshll.u32 %v736, 16
        %v764 = vrot.slane %v762, 1
        %v765 = vsel %vm753, %v760, %v764
        %v766 = vshrl.u32 %v736, 16
        %v768 = vor.u32 %v766, %v764
        %v770 = vshll.u32 %v737, 16
        %v772 = vrot.slane %v770, 1
        %v773 = vsel %vm753, %v768, %v772
        %v774 = vshrl.u32 %v737, 16
        %v776 = vor.u32 %v774, %v772
        %v778 = vshll.u32 %v738, 16
        %v780 = vrot.slane %v778, 1
        %v781 = vsel %vm753, %v776, %v780
        %v782 = vshrl.u32 %v738, 16
        %v784 = vor.u32 %v782, %v780
        %v786 = vshll.u32 %v739, 16
        %v788 = vrot.slane %v786, 1
        %v789 = vsel %vm753, %v784, %v788
        %v790 = vshrl.u32 %v739, 16
        %v792 = vor.u32 %v790, %v788
        %v794 = vshll.u32 %v740, 16
        %v796 = vrot.slane %v794, 1
        %v797 = vsel %vm753, %v792, %v796
        %v798 = vshrl.u32 %v740, 16
        %v800 = vor.u32 %v798, %v796
        %v802 = vshll.u32 %v741, 16
        %v804 = vrot.slane %v802, 1
        %v805 = vsel %vm753, %v800, %v804
        %v806 = vshrl.u32 %v741, 16
        %v808 = vor.u32 %v806, %v804
        %v810 = vshll.u32 %v742, 16
        %v812 = vrot.slane %v810, 1
        %v813 = vsel %vm753, %v808, %v812
        %v814 = vshrl.u32 %v742, 16
        %v816 = vor.u32 %v814, %v812
        %v818 = vshll.u32 %v743, 16
        %v820 = vrot.slane %v818, 1
        %v821 = vsel %vm753, %v816, %v820
        %v822 = vshrl.u32 %v743, 16
        %v824 = vor.u32 %v822, %v820
        %v826 = vshll.u32 %v744, 16
        %v828 = vrot.slane %v826, 1
        %v829 = vsel %vm753, %v824, %v828
        %v830 = vshrl.u32 %v744, 16
        %v832 = vor.u32 %v830, %v828
        %v834 = vshll.u32 %v745, 16
        %v836 = vrot.slane %v834, 1
        %v837 = vsel %vm753, %v832, %v836
        %v838 = vshrl.u32 %v745, 16
        %v840 = vor.u32 %v838, %v836
        %v842 = vshll.u32 %v746, 16
        %v844 = vrot.slane %v842, 1
        %v845 = vsel %vm753, %v840, %v844
        %v846 = vshrl.u32 %v746, 16
        %v848 = vor.u32 %v846, %v844
        %v850 = vshll.u32 %v747, 16
        %v852 = vrot.slane %v850, 1
        %v853 = vsel %vm753, %v848, %v852
        %v854 = vshrl.u32 %v747, 16
        %v856 = vor.u32 %v854, %v852
        %v858 = vshll.u32 %v748, 16
        %v860 = vrot.slane %v858, 1
        %v861 = vsel %vm753, %v856, %v860
        %v862 = vshrl.u32 %v748, 16
        %v864 = vor.u32 %v862, %v860
        %v866 = vshll.u32 %v749, 16
        %v868 = vrot.slane %v866, 1
        %v869 = vsel %vm753, %v864, %v868
        %v870 = vshrl.u32 %v749, 16
        %v872 = vor.u32 %v870, %v868
        %v874 = vshll.u32 %v750, 16
        %v876 = vrot.slane %v874, 1
        %v877 = vsel %vm753, %v872, %v876
        %v878 = vshrl.u32 %v750, 16
        %v880 = vor.u32 %v878, %v876
        %v882 = vshll.u32 %v751, 16
        %v884 = vrot.slane %v882, 1
        %v885 = vsel %vm753, %v880, %v884
        %v886 = vshrl.u32 %v751, 16
        %v888 = vor.u32 %v886, %v884
        %v890 = vshll.u32 %v752, 16
        %v892 = vrot.slane %v890, 1
        %v893 = vsel %vm753, %v888, %v892
        %v894 = vshrl.u32 %v752, 16
        %v896 = vor.u32 %v894, %v892
        %vm897 = vcmask 23552
        %v899 = vsel %vm897, %v765, 0
        %v902 = vsel %vm897, %v773, 0
        %v905 = vsel %vm897, %v781, 0
        %v908 = vsel %vm897, %v789, 0
        %v911 = vsel %vm897, %v797, 0
        %v914 = vsel %vm897, %v805, 0
        %v917 = vsel %vm897, %v813, 0
        %v920 = vsel %vm897, %v821, 0
        %v923 = vsel %vm897, %v829, 0
        %v926 = vsel %vm897, %v837, 0
        %v929 = vsel %vm897, %v845, 0
        %v932 = vsel %vm897, %v853, 0
        %v935 = vsel %vm897, %v861, 0
        %v938 = vsel %vm897, %v869, 0
        %v941 = vsel %vm897, %v877, 0
        %v944 = vsel %vm897, %v885, 0
        %v947 = vsel %vm897, %v893, 0
        %v950 = vsel %vm897, %v896, 0
        %vm952 = vcmask 1040384
        %vm953 = vcmask 1041408
        %v954 = vsel %vm952, 4294967295, 65535
        %v955 = vsel %vm953, %v954, 0
        %v957 = vand.u32 %v662, %v955
        %959 = vmatprep.subr.bf16.mxu0 0
        %960 = vmatpush1.bf16.msra.mxu0 0
        %961 = vmatprep.subr.bf16.mxu0 0
        %962 = vmatpush1.bf16.msra.mxu0 0
        %963 = vmatprep.subr.bf16.mxu0 0
        %964 = vmatpush1.bf16.msra.mxu0 0
        %965 = vmatprep.subr.bf16.mxu0 0
        %966 = vmatpush1.bf16.msra.mxu0 0
        %967 = vmatprep.subr.bf16.mxu0 0
        %968 = vmatpush1.bf16.msra.mxu0 0
        %969 = vmatprep.subr.bf16.mxu0 0
        %970 = vmatpush1.bf16.msra.mxu0 0
        %971 = vmatprep.subr.bf16.mxu0 0
        %972 = vmatpush1.bf16.msra.mxu0 0
        %973 = vmatprep.subr.bf16.mxu0 0
        %974 = vmatpush1.bf16.msra.mxu0 %v957
        %975 = vmatprep.subr.bf16.mxu0 0
        %976 = vmatpush2.bf16.msra.mxu0 0
        %977 = vmatprep.subr.bf16.mxu0 0
        %978 = vmatpush2.bf16.msra.mxu0 0
        %979 = vmatprep.subr.bf16.mxu0 0
        %980 = vmatpush2.bf16.msra.mxu0 0
        %981 = vmatprep.subr.bf16.mxu0 0
        %982 = vmatpush2.bf16.msra.mxu0 0
        %983 = vmatprep.subr.bf16.mxu0 0
        %984 = vmatpush2.bf16.msra.mxu0 0
        %985 = vmatprep.subr.bf16.mxu0 0
        %986 = vmatpush2.bf16.msra.mxu0 0
        %987 = vmatprep.subr.bf16.mxu0 0
        %988 = vmatpush2.bf16.msra.mxu0 0
        %989 = vmatprep.subr.bf16.mxu0 0
        %990 = vmatpush2.bf16.msra.mxu0 0
        %991 = vmatprep.mubr.bf16.mxu0 0
        %992 = vmatmul.mubr.bf16.gmra.mxu0 %v899
        %v993 = vpop.f32.mrf.mxu0
        %v994 = vadd.f32 0.0, %v993
        %v995 = vpop.f32.mrf.mxu0
        %v996 = vpop.f32.mrf.mxu0
        %v997 = vadd.f32 0.0, %v996
        %v998 = vpop.f32.mrf.mxu0
        %999 = vmatprep.mubr.bf16.mxu0 0
        %1000 = vmatmul.mubr.bf16.gmra.mxu0 %v902
        %v1001 = vpop.f32.mrf.mxu0
        %v1002 = vadd.f32 0.0, %v1001
        %v1003 = vpop.f32.mrf.mxu0
        %v1004 = vpop.f32.mrf.mxu0
        %v1005 = vadd.f32 0.0, %v1004
        %v1006 = vpop.f32.mrf.mxu0
        %1007 = vmatprep.mubr.bf16.mxu0 0
        %1008 = vmatmul.mubr.bf16.gmra.mxu0 %v905
        %v1009 = vpop.f32.mrf.mxu0
        %v1010 = vadd.f32 0.0, %v1009
        %v1011 = vpop.f32.mrf.mxu0
        %v1012 = vpop.f32.mrf.mxu0
        %v1013 = vadd.f32 0.0, %v1012
        %v1014 = vpop.f32.mrf.mxu0
        %1015 = vmatprep.mubr.bf16.mxu0 0
        %1016 = vmatmul.mubr.bf16.gmra.mxu0 %v908
        %v1017 = vpop.f32.mrf.mxu0
        %v1018 = vadd.f32 0.0, %v1017
        %v1019 = vpop.f32.mrf.mxu0
        %v1020 = vpop.f32.mrf.mxu0
        %v1021 = vadd.f32 0.0, %v1020
        %v1022 = vpop.f32.mrf.mxu0
        %1023 = vmatprep.mubr.bf16.mxu0 0
        %1024 = vmatmul.mubr.bf16.gmra.mxu0 %v911
        %v1025 = vpop.f32.mrf.mxu0
        %v1026 = vadd.f32 0.0, %v1025
        %v1027 = vpop.f32.mrf.mxu0
        %v1028 = vpop.f32.mrf.mxu0
        %v1029 = vadd.f32 0.0, %v1028
        %v1030 = vpop.f32.mrf.mxu0
        %1031 = vmatprep.mubr.bf16.mxu0 0
        %1032 = vmatmul.mubr.bf16.gmra.mxu0 %v914
        %v1033 = vpop.f32.mrf.mxu0
        %v1034 = vadd.f32 0.0, %v1033
        %v1035 = vpop.f32.mrf.mxu0
        %v1036 = vpop.f32.mrf.mxu0
        %v1037 = vadd.f32 0.0, %v1036
        %v1038 = vpop.f32.mrf.mxu0
        %1039 = vmatprep.mubr.bf16.mxu0 0
        %1040 = vmatmul.mubr.bf16.gmra.mxu0 %v917
        %v1041 = vpop.f32.mrf.mxu0
        %v1042 = vadd.f32 0.0, %v1041
        %v1043 = vpop.f32.mrf.mxu0
        %v1044 = vpop.f32.mrf.mxu0
        %v1045 = vadd.f32 0.0, %v1044
        %v1046 = vpop.f32.mrf.mxu0
        %1047 = vmatprep.mubr.bf16.mxu0 0
        %1048 = vmatmul.mubr.bf16.gmra.mxu0 %v920
        %v1049 = vpop.f32.mrf.mxu0
        %v1050 = vadd.f32 0.0, %v1049
        %v1051 = vpop.f32.mrf.mxu0
        %v1052 = vpop.f32.mrf.mxu0
        %v1053 = vadd.f32 0.0, %v1052
        %v1054 = vpop.f32.mrf.mxu0
        %1055 = vmatprep.mubr.bf16.mxu0 0
        %1056 = vmatmul.mubr.bf16.gmra.mxu0 %v923
        %v1057 = vpop.f32.mrf.mxu0
        %v1058 = vadd.f32 0.0, %v1057
        %v1059 = vpop.f32.mrf.mxu0
        %v1060 = vpop.f32.mrf.mxu0
        %v1061 = vadd.f32 0.0, %v1060
        %v1062 = vpop.f32.mrf.mxu0
        %1063 = vmatprep.mubr.bf16.mxu0 0
        %1064 = vmatmul.mubr.bf16.gmra.mxu0 %v926
        %v1065 = vpop.f32.mrf.mxu0
        %v1066 = vadd.f32 0.0, %v1065
        %v1067 = vpop.f32.mrf.mxu0
        %v1068 = vpop.f32.mrf.mxu0
        %v1069 = vadd.f32 0.0, %v1068
        %v1070 = vpop.f32.mrf.mxu0
        %1071 = vmatprep.mubr.bf16.mxu0 0
        %1072 = vmatmul.mubr.bf16.gmra.mxu0 %v929
        %v1073 = vpop.f32.mrf.mxu0
        %v1074 = vadd.f32 0.0, %v1073
        %v1075 = vpop.f32.mrf.mxu0
        %v1076 = vpop.f32.mrf.mxu0
        %v1077 = vadd.f32 0.0, %v1076
        %v1078 = vpop.f32.mrf.mxu0
        %1079 = vmatprep.mubr.bf16.mxu0 0
        %1080 = vmatmul.mubr.bf16.gmra.mxu0 %v932
        %v1081 = vpop.f32.mrf.mxu0
        %v1082 = vadd.f32 0.0, %v1081
        %v1083 = vpop.f32.mrf.mxu0
        %v1084 = vpop.f32.mrf.mxu0
        %v1085 = vadd.f32 0.0, %v1084
        %v1086 = vpop.f32.mrf.mxu0
        %1087 = vmatprep.mubr.bf16.mxu0 0
        %1088 = vmatmul.mubr.bf16.gmra.mxu0 %v935
        %v1089 = vpop.f32.mrf.mxu0
        %v1090 = vadd.f32 0.0, %v1089
        %v1091 = vpop.f32.mrf.mxu0
        %v1092 = vpop.f32.mrf.mxu0
        %v1093 = vadd.f32 0.0, %v1092
        %v1094 = vpop.f32.mrf.mxu0
        %1095 = vmatprep.mubr.bf16.mxu0 0
        %1096 = vmatmul.mubr.bf16.gmra.mxu0 %v938
        %v1097 = vpop.f32.mrf.mxu0
        %v1098 = vadd.f32 0.0, %v1097
        %v1099 = vpop.f32.mrf.mxu0
        %v1100 = vpop.f32.mrf.mxu0
        %v1101 = vadd.f32 0.0, %v1100
        %v1102 = vpop.f32.mrf.mxu0
        %1103 = vmatprep.mubr.bf16.mxu0 0
        %1104 = vmatmul.mubr.bf16.gmra.mxu0 %v941
        %v1105 = vpop.f32.mrf.mxu0
        %v1106 = vadd.f32 0.0, %v1105
        %v1107 = vpop.f32.mrf.mxu0
        %v1108 = vpop.f32.mrf.mxu0
        %v1109 = vadd.f32 0.0, %v1108
        %v1110 = vpop.f32.mrf.mxu0
        %1111 = vmatprep.mubr.bf16.mxu0 0
        %1112 = vmatmul.mubr.bf16.gmra.mxu0 %v944
        %v1113 = vpop.f32.mrf.mxu0
        %v1114 = vadd.f32 0.0, %v1113
        %v1115 = vpop.f32.mrf.mxu0
        %v1116 = vpop.f32.mrf.mxu0
        %v1117 = vadd.f32 0.0, %v1116
        %v1118 = vpop.f32.mrf.mxu0
        %1119 = vmatprep.mubr.bf16.mxu0 0
        %1120 = vmatmul.mubr.bf16.gmra.mxu0 %v947
        %v1121 = vpop.f32.mrf.mxu0
        %v1122 = vadd.f32 0.0, %v1121
        %v1123 = vpop.f32.mrf.mxu0
        %v1124 = vpop.f32.mrf.mxu0
        %v1125 = vadd.f32 0.0, %v1124
        %v1126 = vpop.f32.mrf.mxu0
        %1127 = vmatprep.mubr.bf16.mxu0 0
        %1128 = vmatmul.mubr.bf16.gmra.mxu0 %v950
        %v1129 = vpop.f32.mrf.mxu0
        %v1130 = vadd.f32 0.0, %v1129
        %v1131 = vpop.f32.mrf.mxu0
        %v1132 = vpop.f32.mrf.mxu0
        %v1133 = vadd.f32 0.0, %v1132
        %v1134 = vpop.f32.mrf.mxu0
        %1135 = vdwg.mxu0
        %v1137 = vunpack.c.l.b16 %v658
        %v1138 = vpack.c.b16 %v1137, %v733
        %v1139 = vsel %vm897, %v735, 0
        %v1141 = vsel %vm897, %v736, 0
        %v1143 = vsel %vm897, %v737, 0
        %v1145 = vsel %vm897, %v738, 0
        %v1147 = vsel %vm897, %v739, 0
        %v1149 = vsel %vm897, %v740, 0
        %v1151 = vsel %vm897, %v741, 0
        %v1153 = vsel %vm897, %v742, 0
        %v1155 = vsel %vm897, %v743, 0
        %v1157 = vsel %vm897, %v744, 0
        %v1159 = vsel %vm897, %v745, 0
        %v1161 = vsel %vm897, %v746, 0
        %v1163 = vsel %vm897, %v747, 0
        %v1165 = vsel %vm897, %v748, 0
        %v1167 = vsel %vm897, %v749, 0
        %v1169 = vsel %vm897, %v750, 0
        %v1171 = vsel %vm897, %v751, 0
        %v1174 = vsel %vm897, %v1138, 0
        %v1177 = vand.u32 %v659, %v955
        %1179 = vmatprep.subr.bf16.mxu0 0
        %1180 = vmatpush1.bf16.msra.mxu0 0
        %1181 = vmatprep.subr.bf16.mxu0 0
        %1182 = vmatpush1.bf16.msra.mxu0 0
        %1183 = vmatprep.subr.bf16.mxu0 0
        %1184 = vmatpush1.bf16.msra.mxu0 0
        %1185 = vmatprep.subr.bf16.mxu0 0
        %1186 = vmatpush1.bf16.msra.mxu0 0
        %1187 = vmatprep.subr.bf16.mxu0 0
        %1188 = vmatpush1.bf16.msra.mxu0 0
        %1189 = vmatprep.subr.bf16.mxu0 0
        %1190 = vmatpush1.bf16.msra.mxu0 0
        %1191 = vmatprep.subr.bf16.mxu0 0
        %1192 = vmatpush1.bf16.msra.mxu0 0
        %1193 = vmatprep.subr.bf16.mxu0 0
        %1194 = vmatpush1.bf16.msra.mxu0 %v1177
        %1195 = vmatprep.subr.bf16.mxu0 0
        %1196 = vmatpush2.bf16.msra.mxu0 0
        %1197 = vmatprep.subr.bf16.mxu0 0
        %1198 = vmatpush2.bf16.msra.mxu0 0
        %1199 = vmatprep.subr.bf16.mxu0 0
        %1200 = vmatpush2.bf16.msra.mxu0 0
        %1201 = vmatprep.subr.bf16.mxu0 0
        %1202 = vmatpush2.bf16.msra.mxu0 0
        %1203 = vmatprep.subr.bf16.mxu0 0
        %1204 = vmatpush2.bf16.msra.mxu0 0
        %1205 = vmatprep.subr.bf16.mxu0 0
        %1206 = vmatpush2.bf16.msra.mxu0 0
        %1207 = vmatprep.subr.bf16.mxu0 0
        %1208 = vmatpush2.bf16.msra.mxu0 0
        %1209 = vmatprep.subr.bf16.mxu0 0
        %1210 = vmatpush2.bf16.msra.mxu0 0
        %1211 = vmatprep.mubr.bf16.mxu0 0
        %1212 = vmatmul.mubr.bf16.gmra.mxu0 %v1139
        %v1213 = vpop.f32.mrf.mxu0
        %v1214 = vadd.f32 %v994, %v1213
        %v1215 = vpop.f32.mrf.mxu0
        %v1216 = vpop.f32.mrf.mxu0
        %v1217 = vadd.f32 %v997, %v1216
        %v1218 = vpop.f32.mrf.mxu0
        %1219 = vmatprep.mubr.bf16.mxu0 0
        %1220 = vmatmul.mubr.bf16.gmra.mxu0 %v1141
        %v1221 = vpop.f32.mrf.mxu0
        %v1222 = vadd.f32 %v1002, %v1221
        %v1223 = vpop.f32.mrf.mxu0
        %v1224 = vpop.f32.mrf.mxu0
        %v1225 = vadd.f32 %v1005, %v1224
        %v1226 = vpop.f32.mrf.mxu0
        %1227 = vmatprep.mubr.bf16.mxu0 0
        %1228 = vmatmul.mubr.bf16.gmra.mxu0 %v1143
        %v1229 = vpop.f32.mrf.mxu0
        %v1230 = vadd.f32 %v1010, %v1229
        %v1231 = vpop.f32.mrf.mxu0
        %v1232 = vpop.f32.mrf.mxu0
        %v1233 = vadd.f32 %v1013, %v1232
        %v1234 = vpop.f32.mrf.mxu0
        %1235 = vmatprep.mubr.bf16.mxu0 0
        %1236 = vmatmul.mubr.bf16.gmra.mxu0 %v1145
        %v1237 = vpop.f32.mrf.mxu0
        %v1238 = vadd.f32 %v1018, %v1237
        %v1239 = vpop.f32.mrf.mxu0
        %v1240 = vpop.f32.mrf.mxu0
        %v1241 = vadd.f32 %v1021, %v1240
        %v1242 = vpop.f32.mrf.mxu0
        %1243 = vmatprep.mubr.bf16.mxu0 0
        %1244 = vmatmul.mubr.bf16.gmra.mxu0 %v1147
        %v1245 = vpop.f32.mrf.mxu0
        %v1246 = vadd.f32 %v1026, %v1245
        %v1247 = vpop.f32.mrf.mxu0
        %v1248 = vpop.f32.mrf.mxu0
        %v1249 = vadd.f32 %v1029, %v1248
        %v1250 = vpop.f32.mrf.mxu0
        %1251 = vmatprep.mubr.bf16.mxu0 0
        %1252 = vmatmul.mubr.bf16.gmra.mxu0 %v1149
        %v1253 = vpop.f32.mrf.mxu0
        %v1254 = vadd.f32 %v1034, %v1253
        %v1255 = vpop.f32.mrf.mxu0
        %v1256 = vpop.f32.mrf.mxu0
        %v1257 = vadd.f32 %v1037, %v1256
        %v1258 = vpop.f32.mrf.mxu0
        %1259 = vmatprep.mubr.bf16.mxu0 0
        %1260 = vmatmul.mubr.bf16.gmra.mxu0 %v1151
        %v1261 = vpop.f32.mrf.mxu0
        %v1262 = vadd.f32 %v1042, %v1261
        %v1263 = vpop.f32.mrf.mxu0
        %v1264 = vpop.f32.mrf.mxu0
        %v1265 = vadd.f32 %v1045, %v1264
        %v1266 = vpop.f32.mrf.mxu0
        %1267 = vmatprep.mubr.bf16.mxu0 0
        %1268 = vmatmul.mubr.bf16.gmra.mxu0 %v1153
        %v1269 = vpop.f32.mrf.mxu0
        %v1270 = vadd.f32 %v1050, %v1269
        %v1271 = vpop.f32.mrf.mxu0
        %v1272 = vpop.f32.mrf.mxu0
        %v1273 = vadd.f32 %v1053, %v1272
        %v1274 = vpop.f32.mrf.mxu0
        %1275 = vmatprep.mubr.bf16.mxu0 0
        %1276 = vmatmul.mubr.bf16.gmra.mxu0 %v1155
        %v1277 = vpop.f32.mrf.mxu0
        %v1278 = vadd.f32 %v1058, %v1277
        %v1279 = vpop.f32.mrf.mxu0
        %v1280 = vpop.f32.mrf.mxu0
        %v1281 = vadd.f32 %v1061, %v1280
        %v1282 = vpop.f32.mrf.mxu0
        %1283 = vmatprep.mubr.bf16.mxu0 0
        %1284 = vmatmul.mubr.bf16.gmra.mxu0 %v1157
        %v1285 = vpop.f32.mrf.mxu0
        %v1286 = vadd.f32 %v1066, %v1285
        %v1287 = vpop.f32.mrf.mxu0
        %v1288 = vpop.f32.mrf.mxu0
        %v1289 = vadd.f32 %v1069, %v1288
        %v1290 = vpop.f32.mrf.mxu0
        %1291 = vmatprep.mubr.bf16.mxu0 0
        %1292 = vmatmul.mubr.bf16.gmra.mxu0 %v1159
        %v1293 = vpop.f32.mrf.mxu0
        %v1294 = vadd.f32 %v1074, %v1293
        %v1295 = vpop.f32.mrf.mxu0
        %v1296 = vpop.f32.mrf.mxu0
        %v1297 = vadd.f32 %v1077, %v1296
        %v1298 = vpop.f32.mrf.mxu0
        %1299 = vmatprep.mubr.bf16.mxu0 0
        %1300 = vmatmul.mubr.bf16.gmra.mxu0 %v1161
        %v1301 = vpop.f32.mrf.mxu0
        %v1302 = vadd.f32 %v1082, %v1301
        %v1303 = vpop.f32.mrf.mxu0
        %v1304 = vpop.f32.mrf.mxu0
        %v1305 = vadd.f32 %v1085, %v1304
        %v1306 = vpop.f32.mrf.mxu0
        %1307 = vmatprep.mubr.bf16.mxu0 0
        %1308 = vmatmul.mubr.bf16.gmra.mxu0 %v1163
        %v1309 = vpop.f32.mrf.mxu0
        %v1310 = vadd.f32 %v1090, %v1309
        %v1311 = vpop.f32.mrf.mxu0
        %v1312 = vpop.f32.mrf.mxu0
        %v1313 = vadd.f32 %v1093, %v1312
        %v1314 = vpop.f32.mrf.mxu0
        %1315 = vmatprep.mubr.bf16.mxu0 0
        %1316 = vmatmul.mubr.bf16.gmra.mxu0 %v1165
        %v1317 = vpop.f32.mrf.mxu0
        %v1318 = vadd.f32 %v1098, %v1317
        %v1319 = vpop.f32.mrf.mxu0
        %v1320 = vpop.f32.mrf.mxu0
        %v1321 = vadd.f32 %v1101, %v1320
        %v1322 = vpop.f32.mrf.mxu0
        %1323 = vmatprep.mubr.bf16.mxu0 0
        %1324 = vmatmul.mubr.bf16.gmra.mxu0 %v1167
        %v1325 = vpop.f32.mrf.mxu0
        %v1326 = vadd.f32 %v1106, %v1325
        %v1327 = vpop.f32.mrf.mxu0
        %v1328 = vpop.f32.mrf.mxu0
        %v1329 = vadd.f32 %v1109, %v1328
        %v1330 = vpop.f32.mrf.mxu0
        %1331 = vmatprep.mubr.bf16.mxu0 0
        %1332 = vmatmul.mubr.bf16.gmra.mxu0 %v1169
        %v1333 = vpop.f32.mrf.mxu0
        %v1334 = vadd.f32 %v1114, %v1333
        %v1335 = vpop.f32.mrf.mxu0
        %v1336 = vpop.f32.mrf.mxu0
        %v1337 = vadd.f32 %v1117, %v1336
        %v1338 = vpop.f32.mrf.mxu0
        %1339 = vmatprep.mubr.bf16.mxu0 0
        %1340 = vmatmul.mubr.bf16.gmra.mxu0 %v1171
        %v1341 = vpop.f32.mrf.mxu0
        %v1342 = vadd.f32 %v1122, %v1341
        %v1343 = vpop.f32.mrf.mxu0
        %v1344 = vpop.f32.mrf.mxu0
        %v1345 = vadd.f32 %v1125, %v1344
        %v1346 = vpop.f32.mrf.mxu0
        %1347 = vmatprep.mubr.bf16.mxu0 0
        %1348 = vmatmul.mubr.bf16.gmra.mxu0 %v1174
        %v1349 = vpop.f32.mrf.mxu0
        %v1350 = vadd.f32 %v1130, %v1349
        %v1351 = vpop.f32.mrf.mxu0
        %v1352 = vpop.f32.mrf.mxu0
        %v1353 = vadd.f32 %v1133, %v1352
        %v1354 = vpop.f32.mrf.mxu0
        %1355 = vdwg.mxu0
        %v1356 = vld [vmem:[#allocation2] sm:$0xe]
        %s1357 = scalar_lea.vmem %s1, 4
        %v1358 = vld [vmem:[%s1357] sm:$0x3]
        %v1360 = vunpack.c.l.b16 %v1356
        %v1361 = vpack.c.b16 %v700, %v1360
        %vm1362 = vcmask 1046528
        %v1363 = vrot.slane %v1361, 1
        %v1364 = vrot.slane %v736, 1
        %v1365 = vsel %vm1362, %v1363, %v1364
        %v1366 = vrot.slane %v737, 1
        %v1367 = vsel %vm1362, %v1364, %v1366
        %v1368 = vrot.slane %v738, 1
        %v1369 = vsel %vm1362, %v1366, %v1368
        %v1370 = vrot.slane %v739, 1
        %v1371 = vsel %vm1362, %v1368, %v1370
        %v1372 = vrot.slane %v740, 1
        %v1373 = vsel %vm1362, %v1370, %v1372
        %v1374 = vrot.slane %v741, 1
        %v1375 = vsel %vm1362, %v1372, %v1374
        %v1376 = vrot.slane %v742, 1
        %v1377 = vsel %vm1362, %v1374, %v1376
        %v1378 = vrot.slane %v743, 1
        %v1379 = vsel %vm1362, %v1376, %v1378
        %v1380 = vrot.slane %v744, 1
        %v1381 = vsel %vm1362, %v1378, %v1380
        %v1382 = vrot.slane %v745, 1
        %v1383 = vsel %vm1362, %v1380, %v1382
        %v1384 = vrot.slane %v746, 1
        %v1385 = vsel %vm1362, %v1382, %v1384
        %v1386 = vrot.slane %v747, 1
        %v1387 = vsel %vm1362, %v1384, %v1386
        %v1388 = vrot.slane %v748, 1
        %v1389 = vsel %vm1362, %v1386, %v1388
        %v1390 = vrot.slane %v749, 1
        %v1391 = vsel %vm1362, %v1388, %v1390
        %v1392 = vrot.slane %v750, 1
        %v1393 = vsel %vm1362, %v1390, %v1392
        %v1394 = vrot.slane %v751, 1
        %v1395 = vsel %vm1362, %v1392, %v1394
        %v1396 = vrot.slane %v752, 1
        %v1397 = vsel %vm1362, %v1394, %v1396
        %v1399 = vsel %vm897, %v1365, 0
        %v1402 = vsel %vm897, %v1367, 0
        %v1405 = vsel %vm897, %v1369, 0
        %v1408 = vsel %vm897, %v1371, 0
        %v1411 = vsel %vm897, %v1373, 0
        %v1414 = vsel %vm897, %v1375, 0
        %v1417 = vsel %vm897, %v1377, 0
        %v1420 = vsel %vm897, %v1379, 0
        %v1423 = vsel %vm897, %v1381, 0
        %v1426 = vsel %vm897, %v1383, 0
        %v1429 = vsel %vm897, %v1385, 0
        %v1432 = vsel %vm897, %v1387, 0
        %v1435 = vsel %vm897, %v1389, 0
        %v1438 = vsel %vm897, %v1391, 0
        %v1441 = vsel %vm897, %v1393, 0
        %v1444 = vsel %vm897, %v1395, 0
        %v1447 = vsel %vm897, %v1397, 0
        %v1450 = vsel %vm897, %v1396, 0
        %v1453 = vand.u32 %v1358, %v955
        %1455 = vmatprep.subr.bf16.mxu0 0
        %1456 = vmatpush1.bf16.msra.mxu0 0
        %1457 = vmatprep.subr.bf16.mxu0 0
        %1458 = vmatpush1.bf16.msra.mxu0 0
        %1459 = vmatprep.subr.bf16.mxu0 0
        %1460 = vmatpush1.bf16.msra.mxu0 0
        %1461 = vmatprep.subr.bf16.mxu0 0
        %1462 = vmatpush1.bf16.msra.mxu0 0
        %1463 = vmatprep.subr.bf16.mxu0 0
        %1464 = vmatpush1.bf16.msra.mxu0 0
        %1465 = vmatprep.subr.bf16.mxu0 0
        %1466 = vmatpush1.bf16.msra.mxu0 0
        %1467 = vmatprep.subr.bf16.mxu0 0
        %1468 = vmatpush1.bf16.msra.mxu0 0
        %1469 = vmatprep.subr.bf16.mxu0 0
        %1470 = vmatpush1.bf16.msra.mxu0 %v1453
        %1471 = vmatprep.subr.bf16.mxu0 0
        %1472 = vmatpush2.bf16.msra.mxu0 0
        %1473 = vmatprep.subr.bf16.mxu0 0
        %1474 = vmatpush2.bf16.msra.mxu0 0
        %1475 = vmatprep.subr.bf16.mxu0 0
        %1476 = vmatpush2.bf16.msra.mxu0 0
        %1477 = vmatprep.subr.bf16.mxu0 0
        %1478 = vmatpush2.bf16.msra.mxu0 0
        %1479 = vmatprep.subr.bf16.mxu0 0
        %1480 = vmatpush2.bf16.msra.mxu0 0
        %1481 = vmatprep.subr.bf16.mxu0 0
        %1482 = vmatpush2.bf16.msra.mxu0 0
        %1483 = vmatprep.subr.bf16.mxu0 0
        %1484 = vmatpush2.bf16.msra.mxu0 0
        %1485 = vmatprep.subr.bf16.mxu0 0
        %1486 = vmatpush2.bf16.msra.mxu0 0
        %1487 = vmatprep.mubr.bf16.mxu0 0
        %1488 = vmatmul.mubr.bf16.gmra.mxu0 %v1399
        %v1489 = vpop.f32.mrf.mxu0
        %v1490 = vadd.f32 0.0, %v1489
        %v1491 = vpop.f32.mrf.mxu0
        %v1492 = vpop.f32.mrf.mxu0
        %v1493 = vadd.f32 0.0, %v1492
        %v1494 = vpop.f32.mrf.mxu0
        %1495 = vmatprep.mubr.bf16.mxu0 0
        %1496 = vmatmul.mubr.bf16.gmra.mxu0 %v1402
        %v1497 = vpop.f32.mrf.mxu0
        %v1498 = vadd.f32 0.0, %v1497
        %v1499 = vpop.f32.mrf.mxu0
        %v1500 = vpop.f32.mrf.mxu0
        %v1501 = vadd.f32 0.0, %v1500
        %v1502 = vpop.f32.mrf.mxu0
        %1503 = vmatprep.mubr.bf16.mxu0 0
        %1504 = vmatmul.mubr.bf16.gmra.mxu0 %v1405
        %v1505 = vpop.f32.mrf.mxu0
        %v1506 = vadd.f32 0.0, %v1505
        %v1507 = vpop.f32.mrf.mxu0
        %v1508 = vpop.f32.mrf.mxu0
        %v1509 = vadd.f32 0.0, %v1508
        %v1510 = vpop.f32.mrf.mxu0
        %1511 = vmatprep.mubr.bf16.mxu0 0
        %1512 = vmatmul.mubr.bf16.gmra.mxu0 %v1408
        %v1513 = vpop.f32.mrf.mxu0
        %v1514 = vadd.f32 0.0, %v1513
        %v1515 = vpop.f32.mrf.mxu0
        %v1516 = vpop.f32.mrf.mxu0
        %v1517 = vadd.f32 0.0, %v1516
        %v1518 = vpop.f32.mrf.mxu0
        %1519 = vmatprep.mubr.bf16.mxu0 0
        %1520 = vmatmul.mubr.bf16.gmra.mxu0 %v1411
        %v1521 = vpop.f32.mrf.mxu0
        %v1522 = vadd.f32 0.0, %v1521
        %v1523 = vpop.f32.mrf.mxu0
        %v1524 = vpop.f32.mrf.mxu0
        %v1525 = vadd.f32 0.0, %v1524
        %v1526 = vpop.f32.mrf.mxu0
        %1527 = vmatprep.mubr.bf16.mxu0 0
        %1528 = vmatmul.mubr.bf16.gmra.mxu0 %v1414
        %v1529 = vpop.f32.mrf.mxu0
        %v1530 = vadd.f32 0.0, %v1529
        %v1531 = vpop.f32.mrf.mxu0
        %v1532 = vpop.f32.mrf.mxu0
        %v1533 = vadd.f32 0.0, %v1532
        %v1534 = vpop.f32.mrf.mxu0
        %1535 = vmatprep.mubr.bf16.mxu0 0
        %1536 = vmatmul.mubr.bf16.gmra.mxu0 %v1417
        %v1537 = vpop.f32.mrf.mxu0
        %v1538 = vadd.f32 0.0, %v1537
        %v1539 = vpop.f32.mrf.mxu0
        %v1540 = vpop.f32.mrf.mxu0
        %v1541 = vadd.f32 0.0, %v1540
        %v1542 = vpop.f32.mrf.mxu0
        %1543 = vmatprep.mubr.bf16.mxu0 0
        %1544 = vmatmul.mubr.bf16.gmra.mxu0 %v1420
        %v1545 = vpop.f32.mrf.mxu0
        %v1546 = vadd.f32 0.0, %v1545
        %v1547 = vpop.f32.mrf.mxu0
        %v1548 = vpop.f32.mrf.mxu0
        %v1549 = vadd.f32 0.0, %v1548
        %v1550 = vpop.f32.mrf.mxu0
        %1551 = vmatprep.mubr.bf16.mxu0 0
        %1552 = vmatmul.mubr.bf16.gmra.mxu0 %v1423
        %v1553 = vpop.f32.mrf.mxu0
        %v1554 = vadd.f32 0.0, %v1553
        %v1555 = vpop.f32.mrf.mxu0
        %v1556 = vpop.f32.mrf.mxu0
        %v1557 = vadd.f32 0.0, %v1556
        %v1558 = vpop.f32.mrf.mxu0
        %1559 = vmatprep.mubr.bf16.mxu0 0
        %1560 = vmatmul.mubr.bf16.gmra.mxu0 %v1426
        %v1561 = vpop.f32.mrf.mxu0
        %v1562 = vadd.f32 0.0, %v1561
        %v1563 = vpop.f32.mrf.mxu0
        %v1564 = vpop.f32.mrf.mxu0
        %v1565 = vadd.f32 0.0, %v1564
        %v1566 = vpop.f32.mrf.mxu0
        %1567 = vmatprep.mubr.bf16.mxu0 0
        %1568 = vmatmul.mubr.bf16.gmra.mxu0 %v1429
        %v1569 = vpop.f32.mrf.mxu0
        %v1570 = vadd.f32 0.0, %v1569
        %v1571 = vpop.f32.mrf.mxu0
        %v1572 = vpop.f32.mrf.mxu0
        %v1573 = vadd.f32 0.0, %v1572
        %v1574 = vpop.f32.mrf.mxu0
        %1575 = vmatprep.mubr.bf16.mxu0 0
        %1576 = vmatmul.mubr.bf16.gmra.mxu0 %v1432
        %v1577 = vpop.f32.mrf.mxu0
        %v1578 = vadd.f32 0.0, %v1577
        %v1579 = vpop.f32.mrf.mxu0
        %v1580 = vpop.f32.mrf.mxu0
        %v1581 = vadd.f32 0.0, %v1580
        %v1582 = vpop.f32.mrf.mxu0
        %1583 = vmatprep.mubr.bf16.mxu0 0
        %1584 = vmatmul.mubr.bf16.gmra.mxu0 %v1435
        %v1585 = vpop.f32.mrf.mxu0
        %v1586 = vadd.f32 0.0, %v1585
        %v1587 = vpop.f32.mrf.mxu0
        %v1588 = vpop.f32.mrf.mxu0
        %v1589 = vadd.f32 0.0, %v1588
        %v1590 = vpop.f32.mrf.mxu0
        %1591 = vmatprep.mubr.bf16.mxu0 0
        %1592 = vmatmul.mubr.bf16.gmra.mxu0 %v1438
        %v1593 = vpop.f32.mrf.mxu0
        %v1594 = vadd.f32 0.0, %v1593
        %v1595 = vpop.f32.mrf.mxu0
        %v1596 = vpop.f32.mrf.mxu0
        %v1597 = vadd.f32 0.0, %v1596
        %v1598 = vpop.f32.mrf.mxu0
        %1599 = vmatprep.mubr.bf16.mxu0 0
        %1600 = vmatmul.mubr.bf16.gmra.mxu0 %v1441
        %v1601 = vpop.f32.mrf.mxu0
        %v1602 = vadd.f32 0.0, %v1601
        %v1603 = vpop.f32.mrf.mxu0
        %v1604 = vpop.f32.mrf.mxu0
        %v1605 = vadd.f32 0.0, %v1604
        %v1606 = vpop.f32.mrf.mxu0
        %1607 = vmatprep.mubr.bf16.mxu0 0
        %1608 = vmatmul.mubr.bf16.gmra.mxu0 %v1444
        %v1609 = vpop.f32.mrf.mxu0
        %v1610 = vadd.f32 0.0, %v1609
        %v1611 = vpop.f32.mrf.mxu0
        %v1612 = vpop.f32.mrf.mxu0
        %v1613 = vadd.f32 0.0, %v1612
        %v1614 = vpop.f32.mrf.mxu0
        %1615 = vmatprep.mubr.bf16.mxu0 0
        %1616 = vmatmul.mubr.bf16.gmra.mxu0 %v1447
        %v1617 = vpop.f32.mrf.mxu0
        %v1618 = vadd.f32 0.0, %v1617
        %v1619 = vpop.f32.mrf.mxu0
        %v1620 = vpop.f32.mrf.mxu0
        %v1621 = vadd.f32 0.0, %v1620
        %v1622 = vpop.f32.mrf.mxu0
        %1623 = vmatprep.mubr.bf16.mxu0 0
        %1624 = vmatmul.mubr.bf16.gmra.mxu0 %v1450
        %v1625 = vpop.f32.mrf.mxu0
        %v1626 = vadd.f32 0.0, %v1625
        %v1627 = vpop.f32.mrf.mxu0
        %v1628 = vpop.f32.mrf.mxu0
        %v1629 = vadd.f32 0.0, %v1628
        %v1630 = vpop.f32.mrf.mxu0
        %1631 = vdwg.mxu0
        %v1632 = vadd.f32 %v1214, %v1490
        %v1633 = vadd.f32 %v1217, %v1493
        %v1634 = vadd.f32 %v1222, %v1498
        %v1635 = vadd.f32 %v1225, %v1501
        %v1636 = vadd.f32 %v1230, %v1506
        %v1637 = vadd.f32 %v1233, %v1509
        %v1638 = vadd.f32 %v1238, %v1514
        %v1639 = vadd.f32 %v1241, %v1517
        %v1640 = vadd.f32 %v1246, %v1522
        %v1641 = vadd.f32 %v1249, %v1525
        %v1642 = vadd.f32 %v1254, %v1530
        %v1643 = vadd.f32 %v1257, %v1533
        %v1644 = vadd.f32 %v1262, %v1538
        %v1645 = vadd.f32 %v1265, %v1541
        %v1646 = vadd.f32 %v1270, %v1546
        %v1647 = vadd.f32 %v1273, %v1549
        %v1648 = vadd.f32 %v1278, %v1554
        %v1649 = vadd.f32 %v1281, %v1557
        %v1650 = vadd.f32 %v1286, %v1562
        %v1651 = vadd.f32 %v1289, %v1565
        %v1652 = vadd.f32 %v1294, %v1570
        %v1653 = vadd.f32 %v1297, %v1573
        %v1654 = vadd.f32 %v1302, %v1578
        %v1655 = vadd.f32 %v1305, %v1581
        %v1656 = vadd.f32 %v1310, %v1586
        %v1657 = vadd.f32 %v1313, %v1589
        %v1658 = vadd.f32 %v1318, %v1594
        %v1659 = vadd.f32 %v1321, %v1597
        %v1660 = vadd.f32 %v1326, %v1602
        %v1661 = vadd.f32 %v1329, %v1605
        %v1662 = vadd.f32 %v1334, %v1610
        %v1663 = vadd.f32 %v1337, %v1613
        %v1664 = vadd.f32 %v1342, %v1618
        %v1665 = vadd.f32 %v1345, %v1621
        %v1666 = vadd.f32 %v1350, %v1626
        %v1667 = vadd.f32 %v1353, %v1629
        %v1668 = vld [vmem:[#allocation2 + $0x8] sm:$0xe]
        %v1669 = vld [vmem:[#allocation2 + $0xc] sm:$0xf]
        %v1670 = vld [vmem:[#allocation2 + $0x10] sm:$0xf]
        %v1671 = vld [vmem:[#allocation2 + $0x14] sm:$0xf]
        %v1672 = vld [vmem:[#allocation2 + $0x18] sm:$0xf]
        %v1673 = vld [vmem:[#allocation2 + $0x1c] sm:$0xf]
        %v1674 = vld [vmem:[#allocation2 + $0x20] sm:$0xf]
        %v1675 = vld [vmem:[#allocation2 + $0x24] sm:$0xf]
        %v1676 = vld [vmem:[#allocation2 + $0x28] sm:$0xf]
        %v1677 = vld [vmem:[#allocation2 + $0x2c] sm:$0xf]
        %v1678 = vld [vmem:[#allocation2 + $0x30] sm:$0xf]
        %v1679 = vld [vmem:[#allocation2 + $0x34] sm:$0xf]
        %v1680 = vld [vmem:[#allocation2 + $0x38] sm:$0xf]
        %v1681 = vld [vmem:[#allocation2 + $0x3c] sm:$0xf]
        %v1682 = vld [vmem:[#allocation2 + $0x40] sm:$0xf]
        %v1683 = vld [vmem:[#allocation2 + $0x44] sm:$0xf]
        %v1684 = vld [vmem:[#allocation2 + $0x48] sm:$0xf]
        %v1685 = vld [vmem:[#allocation2 + $0x4c] sm:$0xf]
        %v1686 = vld [vmem:[#allocation2 + $0x50] sm:$0xf]
        %v1687 = vld [vmem:[#allocation2 + $0x54] sm:$0xf]
        %v1688 = vld [vmem:[#allocation2 + $0x58] sm:$0xf]
        %v1689 = vld [vmem:[#allocation2 + $0x5c] sm:$0xf]
        %v1690 = vld [vmem:[#allocation2 + $0x60] sm:$0xf]
        %v1691 = vld [vmem:[#allocation2 + $0x64] sm:$0xf]
        %v1692 = vld [vmem:[#allocation2 + $0x68] sm:$0xf]
        %v1693 = vld [vmem:[#allocation2 + $0x6c] sm:$0xf]
        %v1694 = vld [vmem:[#allocation2 + $0x70] sm:$0xf]
        %v1695 = vld [vmem:[#allocation2 + $0x74] sm:$0xf]
        %v1696 = vld [vmem:[#allocation2 + $0x78] sm:$0xf]
        %v1697 = vld [vmem:[#allocation2 + $0x7c] sm:$0xf]
        %v1698 = vld [vmem:[#allocation2 + $0x80] sm:$0xf]
        %v1699 = vld [vmem:[#allocation2 + $0x84] sm:$0xf]
        %v1700 = vld [vmem:[#allocation2 + $0x88] sm:$0xf]
        %v1701 = vld [vmem:[#allocation2 + $0x8c] sm:$0xf]
        %v1702 = vld [vmem:[#allocation2 + $0x90] sm:$0xf]
        %v1703 = vld [vmem:[#allocation2 + $0x94] sm:$0xf]
        %s1704 = scalar_lea.vmem %s1, 6
        %v1705 = vld [vmem:[%s1704] sm:$0x3]
        %v1742 = vunpack.c.l.b16 %v1668
        %v1743 = vunpack.c.l.b16 %v1669
        %v1744 = vunpack.c.l.b16 %v1670
        %v1745 = vunpack.c.l.b16 %v1671
        %v1746 = vunpack.c.l.b16 %v1672
        %v1747 = vunpack.c.l.b16 %v1673
        %v1748 = vunpack.c.l.b16 %v1674
        %v1749 = vunpack.c.l.b16 %v1675
        %v1750 = vunpack.c.l.b16 %v1676
        %v1751 = vunpack.c.l.b16 %v1677
        %v1752 = vunpack.c.l.b16 %v1678
        %v1753 = vunpack.c.l.b16 %v1679
        %v1754 = vunpack.c.l.b16 %v1680
        %v1755 = vunpack.c.l.b16 %v1681
        %v1756 = vunpack.c.l.b16 %v1682
        %v1757 = vunpack.c.l.b16 %v1683
        %v1758 = vunpack.c.l.b16 %v1684
        %v1759 = vunpack.c.l.b16 %v1685
        %v1760 = vunpack.c.l.b16 %v1686
        %v1761 = vunpack.c.l.b16 %v1687
        %v1762 = vunpack.c.l.b16 %v1688
        %v1763 = vunpack.c.l.b16 %v1689
        %v1764 = vunpack.c.l.b16 %v1690
        %v1765 = vunpack.c.l.b16 %v1691
        %v1766 = vunpack.c.l.b16 %v1692
        %v1767 = vunpack.c.l.b16 %v1693
        %v1768 = vunpack.c.l.b16 %v1694
        %v1769 = vunpack.c.l.b16 %v1695
        %v1770 = vunpack.c.l.b16 %v1696
        %v1771 = vunpack.c.l.b16 %v1697
        %v1772 = vunpack.c.l.b16 %v1698
        %v1773 = vunpack.c.l.b16 %v1699
        %v1774 = vunpack.c.l.b16 %v1700
        %v1775 = vunpack.c.l.b16 %v1701
        %v1776 = vunpack.c.l.b16 %v1702
        %v1777 = vunpack.c.l.b16 %v1703
        %v1778 = vpack.c.b16 %v1743, %v1742
        %v1779 = vpack.c.b16 %v1745, %v1744
        %v1780 = vpack.c.b16 %v1747, %v1746
        %v1781 = vpack.c.b16 %v1749, %v1748
        %v1782 = vpack.c.b16 %v1751, %v1750
        %v1783 = vpack.c.b16 %v1753, %v1752
        %v1784 = vpack.c.b16 %v1755, %v1754
        %v1785 = vpack.c.b16 %v1757, %v1756
        %v1786 = vpack.c.b16 %v1759, %v1758
        %v1787 = vpack.c.b16 %v1761, %v1760
        %v1788 = vpack.c.b16 %v1763, %v1762
        %v1789 = vpack.c.b16 %v1765, %v1764
        %v1790 = vpack.c.b16 %v1767, %v1766
        %v1791 = vpack.c.b16 %v1769, %v1768
        %v1792 = vpack.c.b16 %v1771, %v1770
        %v1793 = vpack.c.b16 %v1773, %v1772
        %v1794 = vpack.c.b16 %v1775, %v1774
        %v1795 = vpack.c.b16 %v1777, %v1776
        %v1796 = vrot.slane %v1778, 1
        %v1797 = vrot.slane %v1779, 1
        %v1798 = vsel %vm1362, %v1796, %v1797
        %v1799 = vrot.slane %v1780, 1
        %v1800 = vsel %vm1362, %v1797, %v1799
        %v1801 = vrot.slane %v1781, 1
        %v1802 = vsel %vm1362, %v1799, %v1801
        %v1803 = vrot.slane %v1782, 1
        %v1804 = vsel %vm1362, %v1801, %v1803
        %v1805 = vrot.slane %v1783, 1
        %v1806 = vsel %vm1362, %v1803, %v1805
        %v1807 = vrot.slane %v1784, 1
        %v1808 = vsel %vm1362, %v1805, %v1807
        %v1809 = vrot.slane %v1785, 1
        %v1810 = vsel %vm1362, %v1807, %v1809
        %v1811 = vrot.slane %v1786, 1
        %v1812 = vsel %vm1362, %v1809, %v1811
        %v1813 = vrot.slane %v1787, 1
        %v1814 = vsel %vm1362, %v1811, %v1813
        %v1815 = vrot.slane %v1788, 1
        %v1816 = vsel %vm1362, %v1813, %v1815
        %v1817 = vrot.slane %v1789, 1
        %v1818 = vsel %vm1362, %v1815, %v1817
        %v1819 = vrot.slane %v1790, 1
        %v1820 = vsel %vm1362, %v1817, %v1819
        %v1821 = vrot.slane %v1791, 1
        %v1822 = vsel %vm1362, %v1819, %v1821
        %v1823 = vrot.slane %v1792, 1
        %v1824 = vsel %vm1362, %v1821, %v1823
        %v1825 = vrot.slane %v1793, 1
        %v1826 = vsel %vm1362, %v1823, %v1825
        %v1827 = vrot.slane %v1794, 1
        %v1828 = vsel %vm1362, %v1825, %v1827
        %v1829 = vrot.slane %v1795, 1
        %v1830 = vsel %vm1362, %v1827, %v1829
        %v1832 = vsel %vm897, %v1798, 0
        %v1835 = vsel %vm897, %v1800, 0
        %v1838 = vsel %vm897, %v1802, 0
        %v1841 = vsel %vm897, %v1804, 0
        %v1844 = vsel %vm897, %v1806, 0
        %v1847 = vsel %vm897, %v1808, 0
        %v1850 = vsel %vm897, %v1810, 0
        %v1853 = vsel %vm897, %v1812, 0
        %v1856 = vsel %vm897, %v1814, 0
        %v1859 = vsel %vm897, %v1816, 0
        %v1862 = vsel %vm897, %v1818, 0
        %v1865 = vsel %vm897, %v1820, 0
        %v1868 = vsel %vm897, %v1822, 0
        %v1871 = vsel %vm897, %v1824, 0
        %v1874 = vsel %vm897, %v1826, 0
        %v1877 = vsel %vm897, %v1828, 0
        %v1880 = vsel %vm897, %v1830, 0
        %v1883 = vsel %vm897, %v1829, 0
        %v1886 = vand.u32 %v1705, %v955
        %1888 = vmatprep.subr.bf16.mxu0 0
        %1889 = vmatpush1.bf16.msra.mxu0 0
        %1890 = vmatprep.subr.bf16.mxu0 0
        %1891 = vmatpush1.bf16.msra.mxu0 0
        %1892 = vmatprep.subr.bf16.mxu0 0
        %1893 = vmatpush1.bf16.msra.mxu0 0
        %1894 = vmatprep.subr.bf16.mxu0 0
        %1895 = vmatpush1.bf16.msra.mxu0 0
        %1896 = vmatprep.subr.bf16.mxu0 0
        %1897 = vmatpush1.bf16.msra.mxu0 0
        %1898 = vmatprep.subr.bf16.mxu0 0
        %1899 = vmatpush1.bf16.msra.mxu0 0
        %1900 = vmatprep.subr.bf16.mxu0 0
        %1901 = vmatpush1.bf16.msra.mxu0 0
        %1902 = vmatprep.subr.bf16.mxu0 0
        %1903 = vmatpush1.bf16.msra.mxu0 %v1886
        %1904 = vmatprep.subr.bf16.mxu0 0
        %1905 = vmatpush2.bf16.msra.mxu0 0
        %1906 = vmatprep.subr.bf16.mxu0 0
        %1907 = vmatpush2.bf16.msra.mxu0 0
        %1908 = vmatprep.subr.bf16.mxu0 0
        %1909 = vmatpush2.bf16.msra.mxu0 0
        %1910 = vmatprep.subr.bf16.mxu0 0
        %1911 = vmatpush2.bf16.msra.mxu0 0
        %1912 = vmatprep.subr.bf16.mxu0 0
        %1913 = vmatpush2.bf16.msra.mxu0 0
        %1914 = vmatprep.subr.bf16.mxu0 0
        %1915 = vmatpush2.bf16.msra.mxu0 0
        %1916 = vmatprep.subr.bf16.mxu0 0
        %1917 = vmatpush2.bf16.msra.mxu0 0
        %1918 = vmatprep.subr.bf16.mxu0 0
        %1919 = vmatpush2.bf16.msra.mxu0 0
        %1920 = vmatprep.mubr.bf16.mxu0 0
        %1921 = vmatmul.mubr.bf16.gmra.mxu0 %v1832
        %v1922 = vpop.f32.mrf.mxu0
        %v1923 = vadd.f32 0.0, %v1922
        %v1924 = vpop.f32.mrf.mxu0
        %v1925 = vpop.f32.mrf.mxu0
        %v1926 = vadd.f32 0.0, %v1925
        %v1927 = vpop.f32.mrf.mxu0
        %1928 = vmatprep.mubr.bf16.mxu0 0
        %1929 = vmatmul.mubr.bf16.gmra.mxu0 %v1835
        %v1930 = vpop.f32.mrf.mxu0
        %v1931 = vadd.f32 0.0, %v1930
        %v1932 = vpop.f32.mrf.mxu0
        %v1933 = vpop.f32.mrf.mxu0
        %v1934 = vadd.f32 0.0, %v1933
        %v1935 = vpop.f32.mrf.mxu0
        %1936 = vmatprep.mubr.bf16.mxu0 0
        %1937 = vmatmul.mubr.bf16.gmra.mxu0 %v1838
        %v1938 = vpop.f32.mrf.mxu0
        %v1939 = vadd.f32 0.0, %v1938
        %v1940 = vpop.f32.mrf.mxu0
        %v1941 = vpop.f32.mrf.mxu0
        %v1942 = vadd.f32 0.0, %v1941
        %v1943 = vpop.f32.mrf.mxu0
        %1944 = vmatprep.mubr.bf16.mxu0 0
        %1945 = vmatmul.mubr.bf16.gmra.mxu0 %v1841
        %v1946 = vpop.f32.mrf.mxu0
        %v1947 = vadd.f32 0.0, %v1946
        %v1948 = vpop.f32.mrf.mxu0
        %v1949 = vpop.f32.mrf.mxu0
        %v1950 = vadd.f32 0.0, %v1949
        %v1951 = vpop.f32.mrf.mxu0
        %1952 = vmatprep.mubr.bf16.mxu0 0
        %1953 = vmatmul.mubr.bf16.gmra.mxu0 %v1844
        %v1954 = vpop.f32.mrf.mxu0
        %v1955 = vadd.f32 0.0, %v1954
        %v1956 = vpop.f32.mrf.mxu0
        %v1957 = vpop.f32.mrf.mxu0
        %v1958 = vadd.f32 0.0, %v1957
        %v1959 = vpop.f32.mrf.mxu0
        %1960 = vmatprep.mubr.bf16.mxu0 0
        %1961 = vmatmul.mubr.bf16.gmra.mxu0 %v1847
        %v1962 = vpop.f32.mrf.mxu0
        %v1963 = vadd.f32 0.0, %v1962
        %v1964 = vpop.f32.mrf.mxu0
        %v1965 = vpop.f32.mrf.mxu0
        %v1966 = vadd.f32 0.0, %v1965
        %v1967 = vpop.f32.mrf.mxu0
        %1968 = vmatprep.mubr.bf16.mxu0 0
        %1969 = vmatmul.mubr.bf16.gmra.mxu0 %v1850
        %v1970 = vpop.f32.mrf.mxu0
        %v1971 = vadd.f32 0.0, %v1970
        %v1972 = vpop.f32.mrf.mxu0
        %v1973 = vpop.f32.mrf.mxu0
        %v1974 = vadd.f32 0.0, %v1973
        %v1975 = vpop.f32.mrf.mxu0
        %1976 = vmatprep.mubr.bf16.mxu0 0
        %1977 = vmatmul.mubr.bf16.gmra.mxu0 %v1853
        %v1978 = vpop.f32.mrf.mxu0
        %v1979 = vadd.f32 0.0, %v1978
        %v1980 = vpop.f32.mrf.mxu0
        %v1981 = vpop.f32.mrf.mxu0
        %v1982 = vadd.f32 0.0, %v1981
        %v1983 = vpop.f32.mrf.mxu0
        %1984 = vmatprep.mubr.bf16.mxu0 0
        %1985 = vmatmul.mubr.bf16.gmra.mxu0 %v1856
        %v1986 = vpop.f32.mrf.mxu0
        %v1987 = vadd.f32 0.0, %v1986
        %v1988 = vpop.f32.mrf.mxu0
        %v1989 = vpop.f32.mrf.mxu0
        %v1990 = vadd.f32 0.0, %v1989
        %v1991 = vpop.f32.mrf.mxu0
        %1992 = vmatprep.mubr.bf16.mxu0 0
        %1993 = vmatmul.mubr.bf16.gmra.mxu0 %v1859
        %v1994 = vpop.f32.mrf.mxu0
        %v1995 = vadd.f32 0.0, %v1994
        %v1996 = vpop.f32.mrf.mxu0
        %v1997 = vpop.f32.mrf.mxu0
        %v1998 = vadd.f32 0.0, %v1997
        %v1999 = vpop.f32.mrf.mxu0
        %2000 = vmatprep.mubr.bf16.mxu0 0
        %2001 = vmatmul.mubr.bf16.gmra.mxu0 %v1862
        %v2002 = vpop.f32.mrf.mxu0
        %v2003 = vadd.f32 0.0, %v2002
        %v2004 = vpop.f32.mrf.mxu0
        %v2005 = vpop.f32.mrf.mxu0
        %v2006 = vadd.f32 0.0, %v2005
        %v2007 = vpop.f32.mrf.mxu0
        %2008 = vmatprep.mubr.bf16.mxu0 0
        %2009 = vmatmul.mubr.bf16.gmra.mxu0 %v1865
        %v2010 = vpop.f32.mrf.mxu0
        %v2011 = vadd.f32 0.0, %v2010
        %v2012 = vpop.f32.mrf.mxu0
        %v2013 = vpop.f32.mrf.mxu0
        %v2014 = vadd.f32 0.0, %v2013
        %v2015 = vpop.f32.mrf.mxu0
        %2016 = vmatprep.mubr.bf16.mxu0 0
        %2017 = vmatmul.mubr.bf16.gmra.mxu0 %v1868
        %v2018 = vpop.f32.mrf.mxu0
        %v2019 = vadd.f32 0.0, %v2018
        %v2020 = vpop.f32.mrf.mxu0
        %v2021 = vpop.f32.mrf.mxu0
        %v2022 = vadd.f32 0.0, %v2021
        %v2023 = vpop.f32.mrf.mxu0
        %2024 = vmatprep.mubr.bf16.mxu0 0
        %2025 = vmatmul.mubr.bf16.gmra.mxu0 %v1871
        %v2026 = vpop.f32.mrf.mxu0
        %v2027 = vadd.f32 0.0, %v2026
        %v2028 = vpop.f32.mrf.mxu0
        %v2029 = vpop.f32.mrf.mxu0
        %v2030 = vadd.f32 0.0, %v2029
        %v2031 = vpop.f32.mrf.mxu0
        %2032 = vmatprep.mubr.bf16.mxu0 0
        %2033 = vmatmul.mubr.bf16.gmra.mxu0 %v1874
        %v2034 = vpop.f32.mrf.mxu0
        %v2035 = vadd.f32 0.0, %v2034
        %v2036 = vpop.f32.mrf.mxu0
        %v2037 = vpop.f32.mrf.mxu0
        %v2038 = vadd.f32 0.0, %v2037
        %v2039 = vpop.f32.mrf.mxu0
        %2040 = vmatprep.mubr.bf16.mxu0 0
        %2041 = vmatmul.mubr.bf16.gmra.mxu0 %v1877
        %v2042 = vpop.f32.mrf.mxu0
        %v2043 = vadd.f32 0.0, %v2042
        %v2044 = vpop.f32.mrf.mxu0
        %v2045 = vpop.f32.mrf.mxu0
        %v2046 = vadd.f32 0.0, %v2045
        %v2047 = vpop.f32.mrf.mxu0
        %2048 = vmatprep.mubr.bf16.mxu0 0
        %2049 = vmatmul.mubr.bf16.gmra.mxu0 %v1880
        %v2050 = vpop.f32.mrf.mxu0
        %v2051 = vadd.f32 0.0, %v2050
        %v2052 = vpop.f32.mrf.mxu0
        %v2053 = vpop.f32.mrf.mxu0
        %v2054 = vadd.f32 0.0, %v2053
        %v2055 = vpop.f32.mrf.mxu0
        %2056 = vmatprep.mubr.bf16.mxu0 0
        %2057 = vmatmul.mubr.bf16.gmra.mxu0 %v1883
        %v2058 = vpop.f32.mrf.mxu0
        %v2059 = vadd.f32 0.0, %v2058
        %v2060 = vpop.f32.mrf.mxu0
        %v2061 = vpop.f32.mrf.mxu0
        %v2062 = vadd.f32 0.0, %v2061
        %v2063 = vpop.f32.mrf.mxu0
        %2064 = vdwg.mxu0
        %v2065 = vadd.f32 %v1632, %v1923
        %v2066 = vadd.f32 %v1633, %v1926
        %v2067 = vadd.f32 %v1634, %v1931
        %v2068 = vadd.f32 %v1635, %v1934
        %v2069 = vadd.f32 %v1636, %v1939
        %v2070 = vadd.f32 %v1637, %v1942
        %v2071 = vadd.f32 %v1638, %v1947
        %v2072 = vadd.f32 %v1639, %v1950
        %v2073 = vadd.f32 %v1640, %v1955
        %v2074 = vadd.f32 %v1641, %v1958
        %v2075 = vadd.f32 %v1642, %v1963
        %v2076 = vadd.f32 %v1643, %v1966
        %v2077 = vadd.f32 %v1644, %v1971
        %v2078 = vadd.f32 %v1645, %v1974
        %v2079 = vadd.f32 %v1646, %v1979
        %v2080 = vadd.f32 %v1647, %v1982
        %v2081 = vadd.f32 %v1648, %v1987
        %v2082 = vadd.f32 %v1649, %v1990
        %v2083 = vadd.f32 %v1650, %v1995
        %v2084 = vadd.f32 %v1651, %v1998
        %v2085 = vadd.f32 %v1652, %v2003
        %v2086 = vadd.f32 %v1653, %v2006
        %v2087 = vadd.f32 %v1654, %v2011
        %v2088 = vadd.f32 %v1655, %v2014
        %v2089 = vadd.f32 %v1656, %v2019
        %v2090 = vadd.f32 %v1657, %v2022
        %v2091 = vadd.f32 %v1658, %v2027
        %v2092 = vadd.f32 %v1659, %v2030
        %v2093 = vadd.f32 %v1660, %v2035
        %v2094 = vadd.f32 %v1661, %v2038
        %v2095 = vadd.f32 %v1662, %v2043
        %v2096 = vadd.f32 %v1663, %v2046
        %v2097 = vadd.f32 %v1664, %v2051
        %v2098 = vadd.f32 %v1665, %v2054
        %v2099 = vadd.f32 %v1666, %v2059
        %v2100 = vadd.f32 %v1667, %v2062
        %v2101 = vld [vmem:[#allocation2 + $0x8] sm:$0xe]
        %v2102 = vld [vmem:[#allocation2 + $0xc] sm:$0xf]
        %v2103 = vld [vmem:[#allocation2 + $0x10] sm:$0xf]
        %v2104 = vld [vmem:[#allocation2 + $0x14] sm:$0xf]
        %v2105 = vld [vmem:[#allocation2 + $0x18] sm:$0xf]
        %v2106 = vld [vmem:[#allocation2 + $0x1c] sm:$0xf]
        %v2107 = vld [vmem:[#allocation2 + $0x20] sm:$0xf]
        %v2108 = vld [vmem:[#allocation2 + $0x24] sm:$0xf]
        %v2109 = vld [vmem:[#allocation2 + $0x28] sm:$0xf]
        %v2110 = vld [vmem:[#allocation2 + $0x2c] sm:$0xf]
        %v2111 = vld [vmem:[#allocation2 + $0x30] sm:$0xf]
        %v2112 = vld [vmem:[#allocation2 + $0x34] sm:$0xf]
        %v2113 = vld [vmem:[#allocation2 + $0x38] sm:$0xf]
        %v2114 = vld [vmem:[#allocation2 + $0x3c] sm:$0xf]
        %v2115 = vld [vmem:[#allocation2 + $0x40] sm:$0xf]
        %v2116 = vld [vmem:[#allocation2 + $0x44] sm:$0xf]
        %v2117 = vld [vmem:[#allocation2 + $0x48] sm:$0xf]
        %v2118 = vld [vmem:[#allocation2 + $0x4c] sm:$0xf]
        %v2119 = vld [vmem:[#allocation2 + $0x50] sm:$0xf]
        %v2120 = vld [vmem:[#allocation2 + $0x54] sm:$0xf]
        %v2121 = vld [vmem:[#allocation2 + $0x58] sm:$0xf]
        %v2122 = vld [vmem:[#allocation2 + $0x5c] sm:$0xf]
        %v2123 = vld [vmem:[#allocation2 + $0x60] sm:$0xf]
        %v2124 = vld [vmem:[#allocation2 + $0x64] sm:$0xf]
        %v2125 = vld [vmem:[#allocation2 + $0x68] sm:$0xf]
        %v2126 = vld [vmem:[#allocation2 + $0x6c] sm:$0xf]
        %v2127 = vld [vmem:[#allocation2 + $0x70] sm:$0xf]
        %v2128 = vld [vmem:[#allocation2 + $0x74] sm:$0xf]
        %v2129 = vld [vmem:[#allocation2 + $0x78] sm:$0xf]
        %v2130 = vld [vmem:[#allocation2 + $0x7c] sm:$0xf]
        %v2131 = vld [vmem:[#allocation2 + $0x80] sm:$0xf]
        %v2132 = vld [vmem:[#allocation2 + $0x84] sm:$0xf]
        %v2133 = vld [vmem:[#allocation2 + $0x88] sm:$0xf]
        %v2134 = vld [vmem:[#allocation2 + $0x8c] sm:$0xf]
        %v2135 = vld [vmem:[#allocation2 + $0x90] sm:$0xf]
        %v2136 = vld [vmem:[#allocation2 + $0x94] sm:$0xf]
        %v2137 = vld [vmem:[#allocation2 + $0x98] sm:$0x1]
        %s2138 = scalar_lea.vmem %s1, 8
        %v2139 = vld [vmem:[%s2138] sm:$0x3]
        %v2177 = vunpack.c.l.b16 %v2101
        %v2178 = vunpack.c.l.b16 %v2102
        %v2179 = vunpack.c.l.b16 %v2103
        %v2180 = vunpack.c.l.b16 %v2104
        %v2181 = vunpack.c.l.b16 %v2105
        %v2182 = vunpack.c.l.b16 %v2106
        %v2183 = vunpack.c.l.b16 %v2107
        %v2184 = vunpack.c.l.b16 %v2108
        %v2185 = vunpack.c.l.b16 %v2109
        %v2186 = vunpack.c.l.b16 %v2110
        %v2187 = vunpack.c.l.b16 %v2111
        %v2188 = vunpack.c.l.b16 %v2112
        %v2189 = vunpack.c.l.b16 %v2113
        %v2190 = vunpack.c.l.b16 %v2114
        %v2191 = vunpack.c.l.b16 %v2115
        %v2192 = vunpack.c.l.b16 %v2116
        %v2193 = vunpack.c.l.b16 %v2117
        %v2194 = vunpack.c.l.b16 %v2118
        %v2195 = vunpack.c.l.b16 %v2119
        %v2196 = vunpack.c.l.b16 %v2120
        %v2197 = vunpack.c.l.b16 %v2121
        %v2198 = vunpack.c.l.b16 %v2122
        %v2199 = vunpack.c.l.b16 %v2123
        %v2200 = vunpack.c.l.b16 %v2124
        %v2201 = vunpack.c.l.b16 %v2125
        %v2202 = vunpack.c.l.b16 %v2126
        %v2203 = vunpack.c.l.b16 %v2127
        %v2204 = vunpack.c.l.b16 %v2128
        %v2205 = vunpack.c.l.b16 %v2129
        %v2206 = vunpack.c.l.b16 %v2130
        %v2207 = vunpack.c.l.b16 %v2131
        %v2208 = vunpack.c.l.b16 %v2132
        %v2209 = vunpack.c.l.b16 %v2133
        %v2210 = vunpack.c.l.b16 %v2134
        %v2211 = vunpack.c.l.b16 %v2135
        %v2212 = vunpack.c.l.b16 %v2136
        %v2213 = vunpack.c.l.b16 %v2137
        %v2214 = vpack.c.b16 %v2178, %v2177
        %v2215 = vpack.c.b16 %v2180, %v2179
        %v2216 = vpack.c.b16 %v2182, %v2181
        %v2217 = vpack.c.b16 %v2184, %v2183
        %v2218 = vpack.c.b16 %v2186, %v2185
        %v2219 = vpack.c.b16 %v2188, %v2187
        %v2220 = vpack.c.b16 %v2190, %v2189
        %v2221 = vpack.c.b16 %v2192, %v2191
        %v2222 = vpack.c.b16 %v2194, %v2193
        %v2223 = vpack.c.b16 %v2196, %v2195
        %v2224 = vpack.c.b16 %v2198, %v2197
        %v2225 = vpack.c.b16 %v2200, %v2199
        %v2226 = vpack.c.b16 %v2202, %v2201
        %v2227 = vpack.c.b16 %v2204, %v2203
        %v2228 = vpack.c.b16 %v2206, %v2205
        %v2229 = vpack.c.b16 %v2208, %v2207
        %v2230 = vpack.c.b16 %v2210, %v2209
        %v2231 = vpack.c.b16 %v2212, %v2211
        %v2232 = vpack.c.b16 %v2213, %v2213
        %vm2233 = vsmask.f32 6400
        %v2235 = vshrl.u32 %v2214, 16
        %v2237 = vrot.slane %v2235, 1
        %v2238 = vshll.u32 %v2214, 16
        %v2240 = vrot.slane %v2238, 2
        %v2241 = vor.u32 %v2237, %v2240
        %v2243 = vshrl.u32 %v2215, 16
        %v2245 = vrot.slane %v2243, 1
        %v2246 = vshll.u32 %v2215, 16
        %v2248 = vrot.slane %v2246, 2
        %v2249 = vor.u32 %v2245, %v2248
        %v2250 = vsel %vm2233, %v2241, %v2249
        %v2252 = vshrl.u32 %v2216, 16
        %v2254 = vrot.slane %v2252, 1
        %v2255 = vshll.u32 %v2216, 16
        %v2257 = vrot.slane %v2255, 2
        %v2258 = vor.u32 %v2254, %v2257
        %v2259 = vsel %vm2233, %v2249, %v2258
        %v2261 = vshrl.u32 %v2217, 16
        %v2263 = vrot.slane %v2261, 1
        %v2264 = vshll.u32 %v2217, 16
        %v2266 = vrot.slane %v2264, 2
        %v2267 = vor.u32 %v2263, %v2266
        %v2268 = vsel %vm2233, %v2258, %v2267
        %v2270 = vshrl.u32 %v2218, 16
        %v2272 = vrot.slane %v2270, 1
        %v2273 = vshll.u32 %v2218, 16
        %v2275 = vrot.slane %v2273, 2
        %v2276 = vor.u32 %v2272, %v2275
        %v2277 = vsel %vm2233, %v2267, %v2276
        %v2279 = vshrl.u32 %v2219, 16
        %v2281 = vrot.slane %v2279, 1
        %v2282 = vshll.u32 %v2219, 16
        %v2284 = vrot.slane %v2282, 2
        %v2285 = vor.u32 %v2281, %v2284
        %v2286 = vsel %vm2233, %v2276, %v2285
        %v2288 = vshrl.u32 %v2220, 16
        %v2290 = vrot.slane %v2288, 1
        %v2291 = vshll.u32 %v2220, 16
        %v2293 = vrot.slane %v2291, 2
        %v2294 = vor.u32 %v2290, %v2293
        %v2295 = vsel %vm2233, %v2285, %v2294
        %v2297 = vshrl.u32 %v2221, 16
        %v2299 = vrot.slane %v2297, 1
        %v2300 = vshll.u32 %v2221, 16
        %v2302 = vrot.slane %v2300, 2
        %v2303 = vor.u32 %v2299, %v2302
        %v2304 = vsel %vm2233, %v2294, %v2303
        %v2306 = vshrl.u32 %v2222, 16
        %v2308 = vrot.slane %v2306, 1
        %v2309 = vshll.u32 %v2222, 16
        %v2311 = vrot.slane %v2309, 2
        %v2312 = vor.u32 %v2308, %v2311
        %v2313 = vsel %vm2233, %v2303, %v2312
        %v2315 = vshrl.u32 %v2223, 16
        %v2317 = vrot.slane %v2315, 1
        %v2318 = vshll.u32 %v2223, 16
        %v2320 = vrot.slane %v2318, 2
        %v2321 = vor.u32 %v2317, %v2320
        %v2322 = vsel %vm2233, %v2312, %v2321
        %v2324 = vshrl.u32 %v2224, 16
        %v2326 = vrot.slane %v2324, 1
        %v2327 = vshll.u32 %v2224, 16
        %v2329 = vrot.slane %v2327, 2
        %v2330 = vor.u32 %v2326, %v2329
        %v2331 = vsel %vm2233, %v2321, %v2330
        %v2333 = vshrl.u32 %v2225, 16
        %v2335 = vrot.slane %v2333, 1
        %v2336 = vshll.u32 %v2225, 16
        %v2338 = vrot.slane %v2336, 2
        %v2339 = vor.u32 %v2335, %v2338
        %v2340 = vsel %vm2233, %v2330, %v2339
        %v2342 = vshrl.u32 %v2226, 16
        %v2344 = vrot.slane %v2342, 1
        %v2345 = vshll.u32 %v2226, 16
        %v2347 = vrot.slane %v2345, 2
        %v2348 = vor.u32 %v2344, %v2347
        %v2349 = vsel %vm2233, %v2339, %v2348
        %v2351 = vshrl.u32 %v2227, 16
        %v2353 = vrot.slane %v2351, 1
        %v2354 = vshll.u32 %v2227, 16
        %v2356 = vrot.slane %v2354, 2
        %v2357 = vor.u32 %v2353, %v2356
        %v2358 = vsel %vm2233, %v2348, %v2357
        %v2360 = vshrl.u32 %v2228, 16
        %v2362 = vrot.slane %v2360, 1
        %v2363 = vshll.u32 %v2228, 16
        %v2365 = vrot.slane %v2363, 2
        %v2366 = vor.u32 %v2362, %v2365
        %v2367 = vsel %vm2233, %v2357, %v2366
        %v2369 = vshrl.u32 %v2229, 16
        %v2371 = vrot.slane %v2369, 1
        %v2372 = vshll.u32 %v2229, 16
        %v2374 = vrot.slane %v2372, 2
        %v2375 = vor.u32 %v2371, %v2374
        %v2376 = vsel %vm2233, %v2366, %v2375
        %v2378 = vshrl.u32 %v2230, 16
        %v2380 = vrot.slane %v2378, 1
        %v2381 = vshll.u32 %v2230, 16
        %v2383 = vrot.slane %v2381, 2
        %v2384 = vor.u32 %v2380, %v2383
        %v2385 = vsel %vm2233, %v2375, %v2384
        %v2387 = vshrl.u32 %v2231, 16
        %v2389 = vrot.slane %v2387, 1
        %v2390 = vshll.u32 %v2231, 16
        %v2392 = vrot.slane %v2390, 2
        %v2393 = vor.u32 %v2389, %v2392
        %v2394 = vsel %vm2233, %v2384, %v2393
        %v2396 = vshll.u32 %v2232, 16
        %v2398 = vrot.slane %v2396, 2
        %v2399 = vsel %vm2233, %v2393, %v2398
        %v2401 = vsel %vm897, %v2250, 0
        %v2404 = vsel %vm897, %v2259, 0
        %v2407 = vsel %vm897, %v2268, 0
        %v2410 = vsel %vm897, %v2277, 0
        %v2413 = vsel %vm897, %v2286, 0
        %v2416 = vsel %vm897, %v2295, 0
        %v2419 = vsel %vm897, %v2304, 0
        %v2422 = vsel %vm897, %v2313, 0
        %v2425 = vsel %vm897, %v2322, 0
        %v2428 = vsel %vm897, %v2331, 0
        %v2431 = vsel %vm897, %v2340, 0
        %v2434 = vsel %vm897, %v2349, 0
        %v2437 = vsel %vm897, %v2358, 0
        %v2440 = vsel %vm897, %v2367, 0
        %v2443 = vsel %vm897, %v2376, 0
        %v2446 = vsel %vm897, %v2385, 0
        %v2449 = vsel %vm897, %v2394, 0
        %v2452 = vsel %vm897, %v2399, 0
        %v2455 = vand.u32 %v2139, %v955
        %2457 = vmatprep.subr.bf16.mxu0 0
        %2458 = vmatpush1.bf16.msra.mxu0 0
        %2459 = vmatprep.subr.bf16.mxu0 0
        %2460 = vmatpush1.bf16.msra.mxu0 0
        %2461 = vmatprep.subr.bf16.mxu0 0
        %2462 = vmatpush1.bf16.msra.mxu0 0
        %2463 = vmatprep.subr.bf16.mxu0 0
        %2464 = vmatpush1.bf16.msra.mxu0 0
        %2465 = vmatprep.subr.bf16.mxu0 0
        %2466 = vmatpush1.bf16.msra.mxu0 0
        %2467 = vmatprep.subr.bf16.mxu0 0
        %2468 = vmatpush1.bf16.msra.mxu0 0
        %2469 = vmatprep.subr.bf16.mxu0 0
        %2470 = vmatpush1.bf16.msra.mxu0 0
        %2471 = vmatprep.subr.bf16.mxu0 0
        %2472 = vmatpush1.bf16.msra.mxu0 %v2455
        %2473 = vmatprep.subr.bf16.mxu0 0
        %2474 = vmatpush2.bf16.msra.mxu0 0
        %2475 = vmatprep.subr.bf16.mxu0 0
        %2476 = vmatpush2.bf16.msra.mxu0 0
        %2477 = vmatprep.subr.bf16.mxu0 0
        %2478 = vmatpush2.bf16.msra.mxu0 0
        %2479 = vmatprep.subr.bf16.mxu0 0
        %2480 = vmatpush2.bf16.msra.mxu0 0
        %2481 = vmatprep.subr.bf16.mxu0 0
        %2482 = vmatpush2.bf16.msra.mxu0 0
        %2483 = vmatprep.subr.bf16.mxu0 0
        %2484 = vmatpush2.bf16.msra.mxu0 0
        %2485 = vmatprep.subr.bf16.mxu0 0
        %2486 = vmatpush2.bf16.msra.mxu0 0
        %2487 = vmatprep.subr.bf16.mxu0 0
        %2488 = vmatpush2.bf16.msra.mxu0 0
        %2489 = vmatprep.mubr.bf16.mxu0 0
        %2490 = vmatmul.mubr.bf16.gmra.mxu0 %v2401
        %v2491 = vpop.f32.mrf.mxu0
        %v2492 = vadd.f32 0.0, %v2491
        %v2493 = vpop.f32.mrf.mxu0
        %v2494 = vpop.f32.mrf.mxu0
        %v2495 = vadd.f32 0.0, %v2494
        %v2496 = vpop.f32.mrf.mxu0
        %2497 = vmatprep.mubr.bf16.mxu0 0
        %2498 = vmatmul.mubr.bf16.gmra.mxu0 %v2404
        %v2499 = vpop.f32.mrf.mxu0
        %v2500 = vadd.f32 0.0, %v2499
        %v2501 = vpop.f32.mrf.mxu0
        %v2502 = vpop.f32.mrf.mxu0
        %v2503 = vadd.f32 0.0, %v2502
        %v2504 = vpop.f32.mrf.mxu0
        %2505 = vmatprep.mubr.bf16.mxu0 0
        %2506 = vmatmul.mubr.bf16.gmra.mxu0 %v2407
        %v2507 = vpop.f32.mrf.mxu0
        %v2508 = vadd.f32 0.0, %v2507
        %v2509 = vpop.f32.mrf.mxu0
        %v2510 = vpop.f32.mrf.mxu0
        %v2511 = vadd.f32 0.0, %v2510
        %v2512 = vpop.f32.mrf.mxu0
        %2513 = vmatprep.mubr.bf16.mxu0 0
        %2514 = vmatmul.mubr.bf16.gmra.mxu0 %v2410
        %v2515 = vpop.f32.mrf.mxu0
        %v2516 = vadd.f32 0.0, %v2515
        %v2517 = vpop.f32.mrf.mxu0
        %v2518 = vpop.f32.mrf.mxu0
        %v2519 = vadd.f32 0.0, %v2518
        %v2520 = vpop.f32.mrf.mxu0
        %2521 = vmatprep.mubr.bf16.mxu0 0
        %2522 = vmatmul.mubr.bf16.gmra.mxu0 %v2413
        %v2523 = vpop.f32.mrf.mxu0
        %v2524 = vadd.f32 0.0, %v2523
        %v2525 = vpop.f32.mrf.mxu0
        %v2526 = vpop.f32.mrf.mxu0
        %v2527 = vadd.f32 0.0, %v2526
        %v2528 = vpop.f32.mrf.mxu0
        %2529 = vmatprep.mubr.bf16.mxu0 0
        %2530 = vmatmul.mubr.bf16.gmra.mxu0 %v2416
        %v2531 = vpop.f32.mrf.mxu0
        %v2532 = vadd.f32 0.0, %v2531
        %v2533 = vpop.f32.mrf.mxu0
        %v2534 = vpop.f32.mrf.mxu0
        %v2535 = vadd.f32 0.0, %v2534
        %v2536 = vpop.f32.mrf.mxu0
        %2537 = vmatprep.mubr.bf16.mxu0 0
        %2538 = vmatmul.mubr.bf16.gmra.mxu0 %v2419
        %v2539 = vpop.f32.mrf.mxu0
        %v2540 = vadd.f32 0.0, %v2539
        %v2541 = vpop.f32.mrf.mxu0
        %v2542 = vpop.f32.mrf.mxu0
        %v2543 = vadd.f32 0.0, %v2542
        %v2544 = vpop.f32.mrf.mxu0
        %2545 = vmatprep.mubr.bf16.mxu0 0
        %2546 = vmatmul.mubr.bf16.gmra.mxu0 %v2422
        %v2547 = vpop.f32.mrf.mxu0
        %v2548 = vadd.f32 0.0, %v2547
        %v2549 = vpop.f32.mrf.mxu0
        %v2550 = vpop.f32.mrf.mxu0
        %v2551 = vadd.f32 0.0, %v2550
        %v2552 = vpop.f32.mrf.mxu0
        %2553 = vmatprep.mubr.bf16.mxu0 0
        %2554 = vmatmul.mubr.bf16.gmra.mxu0 %v2425
        %v2555 = vpop.f32.mrf.mxu0
        %v2556 = vadd.f32 0.0, %v2555
        %v2557 = vpop.f32.mrf.mxu0
        %v2558 = vpop.f32.mrf.mxu0
        %v2559 = vadd.f32 0.0, %v2558
        %v2560 = vpop.f32.mrf.mxu0
        %2561 = vmatprep.mubr.bf16.mxu0 0
        %2562 = vmatmul.mubr.bf16.gmra.mxu0 %v2428
        %v2563 = vpop.f32.mrf.mxu0
        %v2564 = vadd.f32 0.0, %v2563
        %v2565 = vpop.f32.mrf.mxu0
        %v2566 = vpop.f32.mrf.mxu0
        %v2567 = vadd.f32 0.0, %v2566
        %v2568 = vpop.f32.mrf.mxu0
        %2569 = vmatprep.mubr.bf16.mxu0 0
        %2570 = vmatmul.mubr.bf16.gmra.mxu0 %v2431
        %v2571 = vpop.f32.mrf.mxu0
        %v2572 = vadd.f32 0.0, %v2571
        %v2573 = vpop.f32.mrf.mxu0
        %v2574 = vpop.f32.mrf.mxu0
        %v2575 = vadd.f32 0.0, %v2574
        %v2576 = vpop.f32.mrf.mxu0
        %2577 = vmatprep.mubr.bf16.mxu0 0
        %2578 = vmatmul.mubr.bf16.gmra.mxu0 %v2434
        %v2579 = vpop.f32.mrf.mxu0
        %v2580 = vadd.f32 0.0, %v2579
        %v2581 = vpop.f32.mrf.mxu0
        %v2582 = vpop.f32.mrf.mxu0
        %v2583 = vadd.f32 0.0, %v2582
        %v2584 = vpop.f32.mrf.mxu0
        %2585 = vmatprep.mubr.bf16.mxu0 0
        %2586 = vmatmul.mubr.bf16.gmra.mxu0 %v2437
        %v2587 = vpop.f32.mrf.mxu0
        %v2588 = vadd.f32 0.0, %v2587
        %v2589 = vpop.f32.mrf.mxu0
        %v2590 = vpop.f32.mrf.mxu0
        %v2591 = vadd.f32 0.0, %v2590
        %v2592 = vpop.f32.mrf.mxu0
        %2593 = vmatprep.mubr.bf16.mxu0 0
        %2594 = vmatmul.mubr.bf16.gmra.mxu0 %v2440
        %v2595 = vpop.f32.mrf.mxu0
        %v2596 = vadd.f32 0.0, %v2595
        %v2597 = vpop.f32.mrf.mxu0
        %v2598 = vpop.f32.mrf.mxu0
        %v2599 = vadd.f32 0.0, %v2598
        %v2600 = vpop.f32.mrf.mxu0
        %2601 = vmatprep.mubr.bf16.mxu0 0
        %2602 = vmatmul.mubr.bf16.gmra.mxu0 %v2443
        %v2603 = vpop.f32.mrf.mxu0
        %v2604 = vadd.f32 0.0, %v2603
        %v2605 = vpop.f32.mrf.mxu0
        %v2606 = vpop.f32.mrf.mxu0
        %v2607 = vadd.f32 0.0, %v2606
        %v2608 = vpop.f32.mrf.mxu0
        %2609 = vmatprep.mubr.bf16.mxu0 0
        %2610 = vmatmul.mubr.bf16.gmra.mxu0 %v2446
        %v2611 = vpop.f32.mrf.mxu0
        %v2612 = vadd.f32 0.0, %v2611
        %v2613 = vpop.f32.mrf.mxu0
        %v2614 = vpop.f32.mrf.mxu0
        %v2615 = vadd.f32 0.0, %v2614
        %v2616 = vpop.f32.mrf.mxu0
        %2617 = vmatprep.mubr.bf16.mxu0 0
        %2618 = vmatmul.mubr.bf16.gmra.mxu0 %v2449
        %v2619 = vpop.f32.mrf.mxu0
        %v2620 = vadd.f32 0.0, %v2619
        %v2621 = vpop.f32.mrf.mxu0
        %v2622 = vpop.f32.mrf.mxu0
        %v2623 = vadd.f32 0.0, %v2622
        %v2624 = vpop.f32.mrf.mxu0
        %2625 = vmatprep.mubr.bf16.mxu0 0
        %2626 = vmatmul.mubr.bf16.gmra.mxu0 %v2452
        %v2627 = vpop.f32.mrf.mxu0
        %v2628 = vadd.f32 0.0, %v2627
        %v2629 = vpop.f32.mrf.mxu0
        %v2630 = vpop.f32.mrf.mxu0
        %v2631 = vadd.f32 0.0, %v2630
        %v2632 = vpop.f32.mrf.mxu0
        %2633 = vdwg.mxu0
        %v2634 = vadd.f32 %v2065, %v2492
        %v2635 = vadd.f32 %v2066, %v2495
        %v2636 = vadd.f32 %v2067, %v2500
        %v2637 = vadd.f32 %v2068, %v2503
        %v2638 = vadd.f32 %v2069, %v2508
        %v2639 = vadd.f32 %v2070, %v2511
        %v2640 = vadd.f32 %v2071, %v2516
        %v2641 = vadd.f32 %v2072, %v2519
        %v2642 = vadd.f32 %v2073, %v2524
        %v2643 = vadd.f32 %v2074, %v2527
        %v2644 = vadd.f32 %v2075, %v2532
        %v2645 = vadd.f32 %v2076, %v2535
        %v2646 = vadd.f32 %v2077, %v2540
        %v2647 = vadd.f32 %v2078, %v2543
        %v2648 = vadd.f32 %v2079, %v2548
        %v2649 = vadd.f32 %v2080, %v2551
        %v2650 = vadd.f32 %v2081, %v2556
        %v2651 = vadd.f32 %v2082, %v2559
        %v2652 = vadd.f32 %v2083, %v2564
        %v2653 = vadd.f32 %v2084, %v2567
        %v2654 = vadd.f32 %v2085, %v2572
        %v2655 = vadd.f32 %v2086, %v2575
        %v2656 = vadd.f32 %v2087, %v2580
        %v2657 = vadd.f32 %v2088, %v2583
        %v2658 = vadd.f32 %v2089, %v2588
        %v2659 = vadd.f32 %v2090, %v2591
        %v2660 = vadd.f32 %v2091, %v2596
        %v2661 = vadd.f32 %v2092, %v2599
        %v2662 = vadd.f32 %v2093, %v2604
        %v2663 = vadd.f32 %v2094, %v2607
        %v2664 = vadd.f32 %v2095, %v2612
        %v2665 = vadd.f32 %v2096, %v2615
        %v2666 = vadd.f32 %v2097, %v2620
        %v2667 = vadd.f32 %v2098, %v2623
        %v2668 = vadd.f32 %v2099, %v2628
        %v2669 = vadd.f32 %v2100, %v2631
        %v2670 = vld [vmem:[#allocation2 + $0x8] sm:$0xc]
        %s2671 = scalar_lea.vmem %s1, 10
        %v2672 = vld [vmem:[%s2671] sm:$0x3]
        %v2674 = vunpack.c.l.b16 %v2670
        %v2675 = vpack.c.b16 %v2178, %v2674
        %vm2676 = vcmask 1045504
        %v2677 = vrot.slane %v2675, 2
        %v2678 = vrot.slane %v2215, 2
        %v2679 = vsel %vm2676, %v2677, %v2678
        %v2680 = vrot.slane %v2216, 2
        %v2681 = vsel %vm2676, %v2678, %v2680
        %v2682 = vrot.slane %v2217, 2
        %v2683 = vsel %vm2676, %v2680, %v2682
        %v2684 = vrot.slane %v2218, 2
        %v2685 = vsel %vm2676, %v2682, %v2684
        %v2686 = vrot.slane %v2219, 2
        %v2687 = vsel %vm2676, %v2684, %v2686
        %v2688 = vrot.slane %v2220, 2
        %v2689 = vsel %vm2676, %v2686, %v2688
        %v2690 = vrot.slane %v2221, 2
        %v2691 = vsel %vm2676, %v2688, %v2690
        %v2692 = vrot.slane %v2222, 2
        %v2693 = vsel %vm2676, %v2690, %v2692
        %v2694 = vrot.slane %v2223, 2
        %v2695 = vsel %vm2676, %v2692, %v2694
        %v2696 = vrot.slane %v2224, 2
        %v2697 = vsel %vm2676, %v2694, %v2696
        %v2698 = vrot.slane %v2225, 2
        %v2699 = vsel %vm2676, %v2696, %v2698
        %v2700 = vrot.slane %v2226, 2
        %v2701 = vsel %vm2676, %v2698, %v2700
        %v2702 = vrot.slane %v2227, 2
        %v2703 = vsel %vm2676, %v2700, %v2702
        %v2704 = vrot.slane %v2228, 2
        %v2705 = vsel %vm2676, %v2702, %v2704
        %v2706 = vrot.slane %v2229, 2
        %v2707 = vsel %vm2676, %v2704, %v2706
        %v2708 = vrot.slane %v2230, 2
        %v2709 = vsel %vm2676, %v2706, %v2708
        %v2710 = vrot.slane %v2231, 2
        %v2711 = vsel %vm2676, %v2708, %v2710
        %v2712 = vrot.slane %v2232, 2
        %v2713 = vsel %vm2676, %v2710, %v2712
        %v2715 = vsel %vm897, %v2679, 0
        %v2718 = vsel %vm897, %v2681, 0
        %v2721 = vsel %vm897, %v2683, 0
        %v2724 = vsel %vm897, %v2685, 0
        %v2727 = vsel %vm897, %v2687, 0
        %v2730 = vsel %vm897, %v2689, 0
        %v2733 = vsel %vm897, %v2691, 0
        %v2736 = vsel %vm897, %v2693, 0
        %v2739 = vsel %vm897, %v2695, 0
        %v2742 = vsel %vm897, %v2697, 0
        %v2745 = vsel %vm897, %v2699, 0
        %v2748 = vsel %vm897, %v2701, 0
        %v2751 = vsel %vm897, %v2703, 0
        %v2754 = vsel %vm897, %v2705, 0
        %v2757 = vsel %vm897, %v2707, 0
        %v2760 = vsel %vm897, %v2709, 0
        %v2763 = vsel %vm897, %v2711, 0
        %v2766 = vsel %vm897, %v2713, 0
        %v2769 = vand.u32 %v2672, %v955
        %2771 = vmatprep.subr.bf16.mxu0 0
        %2772 = vmatpush1.bf16.msra.mxu0 0
        %2773 = vmatprep.subr.bf16.mxu0 0
        %2774 = vmatpush1.bf16.msra.mxu0 0
        %2775 = vmatprep.subr.bf16.mxu0 0
        %2776 = vmatpush1.bf16.msra.mxu0 0
        %2777 = vmatprep.subr.bf16.mxu0 0
        %2778 = vmatpush1.bf16.msra.mxu0 0
        %2779 = vmatprep.subr.bf16.mxu0 0
        %2780 = vmatpush1.bf16.msra.mxu0 0
        %2781 = vmatprep.subr.bf16.mxu0 0
        %2782 = vmatpush1.bf16.msra.mxu0 0
        %2783 = vmatprep.subr.bf16.mxu0 0
        %2784 = vmatpush1.bf16.msra.mxu0 0
        %2785 = vmatprep.subr.bf16.mxu0 0
        %2786 = vmatpush1.bf16.msra.mxu0 %v2769
        %2787 = vmatprep.subr.bf16.mxu0 0
        %2788 = vmatpush2.bf16.msra.mxu0 0
        %2789 = vmatprep.subr.bf16.mxu0 0
        %2790 = vmatpush2.bf16.msra.mxu0 0
        %2791 = vmatprep.subr.bf16.mxu0 0
        %2792 = vmatpush2.bf16.msra.mxu0 0
        %2793 = vmatprep.subr.bf16.mxu0 0
        %2794 = vmatpush2.bf16.msra.mxu0 0
        %2795 = vmatprep.subr.bf16.mxu0 0
        %2796 = vmatpush2.bf16.msra.mxu0 0
        %2797 = vmatprep.subr.bf16.mxu0 0
        %2798 = vmatpush2.bf16.msra.mxu0 0
        %2799 = vmatprep.subr.bf16.mxu0 0
        %2800 = vmatpush2.bf16.msra.mxu0 0
        %2801 = vmatprep.subr.bf16.mxu0 0
        %2802 = vmatpush2.bf16.msra.mxu0 0
        %2803 = vmatprep.mubr.bf16.mxu0 0
        %2804 = vmatmul.mubr.bf16.gmra.mxu0 %v2715
        %v2805 = vpop.f32.mrf.mxu0
        %v2806 = vadd.f32 0.0, %v2805
        %v2807 = vpop.f32.mrf.mxu0
        %v2808 = vpop.f32.mrf.mxu0
        %v2809 = vadd.f32 0.0, %v2808
        %v2810 = vpop.f32.mrf.mxu0
        %2811 = vmatprep.mubr.bf16.mxu0 0
        %2812 = vmatmul.mubr.bf16.gmra.mxu0 %v2718
        %v2813 = vpop.f32.mrf.mxu0
        %v2814 = vadd.f32 0.0, %v2813
        %v2815 = vpop.f32.mrf.mxu0
        %v2816 = vpop.f32.mrf.mxu0
        %v2817 = vadd.f32 0.0, %v2816
        %v2818 = vpop.f32.mrf.mxu0
        %2819 = vmatprep.mubr.bf16.mxu0 0
        %2820 = vmatmul.mubr.bf16.gmra.mxu0 %v2721
        %v2821 = vpop.f32.mrf.mxu0
        %v2822 = vadd.f32 0.0, %v2821
        %v2823 = vpop.f32.mrf.mxu0
        %v2824 = vpop.f32.mrf.mxu0
        %v2825 = vadd.f32 0.0, %v2824
        %v2826 = vpop.f32.mrf.mxu0
        %2827 = vmatprep.mubr.bf16.mxu0 0
        %2828 = vmatmul.mubr.bf16.gmra.mxu0 %v2724
        %v2829 = vpop.f32.mrf.mxu0
        %v2830 = vadd.f32 0.0, %v2829
        %v2831 = vpop.f32.mrf.mxu0
        %v2832 = vpop.f32.mrf.mxu0
        %v2833 = vadd.f32 0.0, %v2832
        %v2834 = vpop.f32.mrf.mxu0
        %2835 = vmatprep.mubr.bf16.mxu0 0
        %2836 = vmatmul.mubr.bf16.gmra.mxu0 %v2727
        %v2837 = vpop.f32.mrf.mxu0
        %v2838 = vadd.f32 0.0, %v2837
        %v2839 = vpop.f32.mrf.mxu0
        %v2840 = vpop.f32.mrf.mxu0
        %v2841 = vadd.f32 0.0, %v2840
        %v2842 = vpop.f32.mrf.mxu0
        %2843 = vmatprep.mubr.bf16.mxu0 0
        %2844 = vmatmul.mubr.bf16.gmra.mxu0 %v2730
        %v2845 = vpop.f32.mrf.mxu0
        %v2846 = vadd.f32 0.0, %v2845
        %v2847 = vpop.f32.mrf.mxu0
        %v2848 = vpop.f32.mrf.mxu0
        %v2849 = vadd.f32 0.0, %v2848
        %v2850 = vpop.f32.mrf.mxu0
        %2851 = vmatprep.mubr.bf16.mxu0 0
        %2852 = vmatmul.mubr.bf16.gmra.mxu0 %v2733
        %v2853 = vpop.f32.mrf.mxu0
        %v2854 = vadd.f32 0.0, %v2853
        %v2855 = vpop.f32.mrf.mxu0
        %v2856 = vpop.f32.mrf.mxu0
        %v2857 = vadd.f32 0.0, %v2856
        %v2858 = vpop.f32.mrf.mxu0
        %2859 = vmatprep.mubr.bf16.mxu0 0
        %2860 = vmatmul.mubr.bf16.gmra.mxu0 %v2736
        %v2861 = vpop.f32.mrf.mxu0
        %v2862 = vadd.f32 0.0, %v2861
        %v2863 = vpop.f32.mrf.mxu0
        %v2864 = vpop.f32.mrf.mxu0
        %v2865 = vadd.f32 0.0, %v2864
        %v2866 = vpop.f32.mrf.mxu0
        %2867 = vmatprep.mubr.bf16.mxu0 0
        %2868 = vmatmul.mubr.bf16.gmra.mxu0 %v2739
        %v2869 = vpop.f32.mrf.mxu0
        %v2870 = vadd.f32 0.0, %v2869
        %v2871 = vpop.f32.mrf.mxu0
        %v2872 = vpop.f32.mrf.mxu0
        %v2873 = vadd.f32 0.0, %v2872
        %v2874 = vpop.f32.mrf.mxu0
        %2875 = vmatprep.mubr.bf16.mxu0 0
        %2876 = vmatmul.mubr.bf16.gmra.mxu0 %v2742
        %v2877 = vpop.f32.mrf.mxu0
        %v2878 = vadd.f32 0.0, %v2877
        %v2879 = vpop.f32.mrf.mxu0
        %v2880 = vpop.f32.mrf.mxu0
        %v2881 = vadd.f32 0.0, %v2880
        %v2882 = vpop.f32.mrf.mxu0
        %2883 = vmatprep.mubr.bf16.mxu0 0
        %2884 = vmatmul.mubr.bf16.gmra.mxu0 %v2745
        %v2885 = vpop.f32.mrf.mxu0
        %v2886 = vadd.f32 0.0, %v2885
        %v2887 = vpop.f32.mrf.mxu0
        %v2888 = vpop.f32.mrf.mxu0
        %v2889 = vadd.f32 0.0, %v2888
        %v2890 = vpop.f32.mrf.mxu0
        %2891 = vmatprep.mubr.bf16.mxu0 0
        %2892 = vmatmul.mubr.bf16.gmra.mxu0 %v2748
        %v2893 = vpop.f32.mrf.mxu0
        %v2894 = vadd.f32 0.0, %v2893
        %v2895 = vpop.f32.mrf.mxu0
        %v2896 = vpop.f32.mrf.mxu0
        %v2897 = vadd.f32 0.0, %v2896
        %v2898 = vpop.f32.mrf.mxu0
        %2899 = vmatprep.mubr.bf16.mxu0 0
        %2900 = vmatmul.mubr.bf16.gmra.mxu0 %v2751
        %v2901 = vpop.f32.mrf.mxu0
        %v2902 = vadd.f32 0.0, %v2901
        %v2903 = vpop.f32.mrf.mxu0
        %v2904 = vpop.f32.mrf.mxu0
        %v2905 = vadd.f32 0.0, %v2904
        %v2906 = vpop.f32.mrf.mxu0
        %2907 = vmatprep.mubr.bf16.mxu0 0
        %2908 = vmatmul.mubr.bf16.gmra.mxu0 %v2754
        %v2909 = vpop.f32.mrf.mxu0
        %v2910 = vadd.f32 0.0, %v2909
        %v2911 = vpop.f32.mrf.mxu0
        %v2912 = vpop.f32.mrf.mxu0
        %v2913 = vadd.f32 0.0, %v2912
        %v2914 = vpop.f32.mrf.mxu0
        %2915 = vmatprep.mubr.bf16.mxu0 0
        %2916 = vmatmul.mubr.bf16.gmra.mxu0 %v2757
        %v2917 = vpop.f32.mrf.mxu0
        %v2918 = vadd.f32 0.0, %v2917
        %v2919 = vpop.f32.mrf.mxu0
        %v2920 = vpop.f32.mrf.mxu0
        %v2921 = vadd.f32 0.0, %v2920
        %v2922 = vpop.f32.mrf.mxu0
        %2923 = vmatprep.mubr.bf16.mxu0 0
        %2924 = vmatmul.mubr.bf16.gmra.mxu0 %v2760
        %v2925 = vpop.f32.mrf.mxu0
        %v2926 = vadd.f32 0.0, %v2925
        %v2927 = vpop.f32.mrf.mxu0
        %v2928 = vpop.f32.mrf.mxu0
        %v2929 = vadd.f32 0.0, %v2928
        %v2930 = vpop.f32.mrf.mxu0
        %2931 = vmatprep.mubr.bf16.mxu0 0
        %2932 = vmatmul.mubr.bf16.gmra.mxu0 %v2763
        %v2933 = vpop.f32.mrf.mxu0
        %v2934 = vadd.f32 0.0, %v2933
        %v2935 = vpop.f32.mrf.mxu0
        %v2936 = vpop.f32.mrf.mxu0
        %v2937 = vadd.f32 0.0, %v2936
        %v2938 = vpop.f32.mrf.mxu0
        %2939 = vmatprep.mubr.bf16.mxu0 0
        %2940 = vmatmul.mubr.bf16.gmra.mxu0 %v2766
        %v2941 = vpop.f32.mrf.mxu0
        %v2942 = vadd.f32 0.0, %v2941
        %v2943 = vpop.f32.mrf.mxu0
        %v2944 = vpop.f32.mrf.mxu0
        %v2945 = vadd.f32 0.0, %v2944
        %v2946 = vpop.f32.mrf.mxu0
        %2947 = vdwg.mxu0
        %v2948 = vadd.f32 %v2634, %v2806
        %v2949 = vadd.f32 %v2635, %v2809
        %v2950 = vadd.f32 %v2636, %v2814
        %v2951 = vadd.f32 %v2637, %v2817
        %v2952 = vadd.f32 %v2638, %v2822
        %v2953 = vadd.f32 %v2639, %v2825
        %v2954 = vadd.f32 %v2640, %v2830
        %v2955 = vadd.f32 %v2641, %v2833
        %v2956 = vadd.f32 %v2642, %v2838
        %v2957 = vadd.f32 %v2643, %v2841
        %v2958 = vadd.f32 %v2644, %v2846
        %v2959 = vadd.f32 %v2645, %v2849
        %v2960 = vadd.f32 %v2646, %v2854
        %v2961 = vadd.f32 %v2647, %v2857
        %v2962 = vadd.f32 %v2648, %v2862
        %v2963 = vadd.f32 %v2649, %v2865
        %v2964 = vadd.f32 %v2650, %v2870
        %v2965 = vadd.f32 %v2651, %v2873
        %v2966 = vadd.f32 %v2652, %v2878
        %v2967 = vadd.f32 %v2653, %v2881
        %v2968 = vadd.f32 %v2654, %v2886
        %v2969 = vadd.f32 %v2655, %v2889
        %v2970 = vadd.f32 %v2656, %v2894
        %v2971 = vadd.f32 %v2657, %v2897
        %v2972 = vadd.f32 %v2658, %v2902
        %v2973 = vadd.f32 %v2659, %v2905
        %v2974 = vadd.f32 %v2660, %v2910
        %v2975 = vadd.f32 %v2661, %v2913
        %v2976 = vadd.f32 %v2662, %v2918
        %v2977 = vadd.f32 %v2663, %v2921
        %v2978 = vadd.f32 %v2664, %v2926
        %v2979 = vadd.f32 %v2665, %v2929
        %v2980 = vadd.f32 %v2666, %v2934
        %v2981 = vadd.f32 %v2667, %v2937
        %v2982 = vadd.f32 %v2668, %v2942
        %v2983 = vadd.f32 %v2669, %v2945
        %v2984 = vld [vmem:[#allocation2 + $0x10] sm:$0xc]
        %v2985 = vld [vmem:[#allocation2 + $0x14] sm:$0xf]
        %v2986 = vld [vmem:[#allocation2 + $0x18] sm:$0xf]
        %v2987 = vld [vmem:[#allocation2 + $0x1c] sm:$0xf]
        %v2988 = vld [vmem:[#allocation2 + $0x20] sm:$0xf]
        %v2989 = vld [vmem:[#allocation2 + $0x24] sm:$0xf]
        %v2990 = vld [vmem:[#allocation2 + $0x28] sm:$0xf]
        %v2991 = vld [vmem:[#allocation2 + $0x2c] sm:$0xf]
        %v2992 = vld [vmem:[#allocation2 + $0x30] sm:$0xf]
        %v2993 = vld [vmem:[#allocation2 + $0x34] sm:$0xf]
        %v2994 = vld [vmem:[#allocation2 + $0x38] sm:$0xf]
        %v2995 = vld [vmem:[#allocation2 + $0x3c] sm:$0xf]
        %v2996 = vld [vmem:[#allocation2 + $0x40] sm:$0xf]
        %v2997 = vld [vmem:[#allocation2 + $0x44] sm:$0xf]
        %v2998 = vld [vmem:[#allocation2 + $0x48] sm:$0xf]
        %v2999 = vld [vmem:[#allocation2 + $0x4c] sm:$0xf]
        %v3000 = vld [vmem:[#allocation2 + $0x50] sm:$0xf]
        %v3001 = vld [vmem:[#allocation2 + $0x54] sm:$0xf]
        %v3002 = vld [vmem:[#allocation2 + $0x58] sm:$0xf]
        %v3003 = vld [vmem:[#allocation2 + $0x5c] sm:$0xf]
        %v3004 = vld [vmem:[#allocation2 + $0x60] sm:$0xf]
        %v3005 = vld [vmem:[#allocation2 + $0x64] sm:$0xf]
        %v3006 = vld [vmem:[#allocation2 + $0x68] sm:$0xf]
        %v3007 = vld [vmem:[#allocation2 + $0x6c] sm:$0xf]
        %v3008 = vld [vmem:[#allocation2 + $0x70] sm:$0xf]
        %v3009 = vld [vmem:[#allocation2 + $0x74] sm:$0xf]
        %v3010 = vld [vmem:[#allocation2 + $0x78] sm:$0xf]
        %v3011 = vld [vmem:[#allocation2 + $0x7c] sm:$0xf]
        %v3012 = vld [vmem:[#allocation2 + $0x80] sm:$0xf]
        %v3013 = vld [vmem:[#allocation2 + $0x84] sm:$0xf]
        %v3014 = vld [vmem:[#allocation2 + $0x88] sm:$0xf]
        %v3015 = vld [vmem:[#allocation2 + $0x8c] sm:$0xf]
        %v3016 = vld [vmem:[#allocation2 + $0x90] sm:$0xf]
        %v3017 = vld [vmem:[#allocation2 + $0x94] sm:$0xf]
        %v3018 = vld [vmem:[#allocation2 + $0x98] sm:$0xf]
        %v3019 = vld [vmem:[#allocation2 + $0x9c] sm:$0xf]
        %v3020 = vld [vmem:[#allocation2 + $0xa0] sm:$0x1]
        %s3021 = scalar_lea.vmem %s1, 12
        %v3022 = vld [vmem:[%s3021] sm:$0x3]
        %v3060 = vunpack.c.l.b16 %v2984
        %v3061 = vunpack.c.l.b16 %v2985
        %v3062 = vunpack.c.l.b16 %v2986
        %v3063 = vunpack.c.l.b16 %v2987
        %v3064 = vunpack.c.l.b16 %v2988
        %v3065 = vunpack.c.l.b16 %v2989
        %v3066 = vunpack.c.l.b16 %v2990
        %v3067 = vunpack.c.l.b16 %v2991
        %v3068 = vunpack.c.l.b16 %v2992
        %v3069 = vunpack.c.l.b16 %v2993
        %v3070 = vunpack.c.l.b16 %v2994
        %v3071 = vunpack.c.l.b16 %v2995
        %v3072 = vunpack.c.l.b16 %v2996
        %v3073 = vunpack.c.l.b16 %v2997
        %v3074 = vunpack.c.l.b16 %v2998
        %v3075 = vunpack.c.l.b16 %v2999
        %v3076 = vunpack.c.l.b16 %v3000
        %v3077 = vunpack.c.l.b16 %v3001
        %v3078 = vunpack.c.l.b16 %v3002
        %v3079 = vunpack.c.l.b16 %v3003
        %v3080 = vunpack.c.l.b16 %v3004
        %v3081 = vunpack.c.l.b16 %v3005
        %v3082 = vunpack.c.l.b16 %v3006
        %v3083 = vunpack.c.l.b16 %v3007
        %v3084 = vunpack.c.l.b16 %v3008
        %v3085 = vunpack.c.l.b16 %v3009
        %v3086 = vunpack.c.l.b16 %v3010
        %v3087 = vunpack.c.l.b16 %v3011
        %v3088 = vunpack.c.l.b16 %v3012
        %v3089 = vunpack.c.l.b16 %v3013
        %v3090 = vunpack.c.l.b16 %v3014
        %v3091 = vunpack.c.l.b16 %v3015
        %v3092 = vunpack.c.l.b16 %v3016
        %v3093 = vunpack.c.l.b16 %v3017
        %v3094 = vunpack.c.l.b16 %v3018
        %v3095 = vunpack.c.l.b16 %v3019
        %v3096 = vunpack.c.l.b16 %v3020
        %v3097 = vpack.c.b16 %v3061, %v3060
        %v3098 = vpack.c.b16 %v3063, %v3062
        %v3099 = vpack.c.b16 %v3065, %v3064
        %v3100 = vpack.c.b16 %v3067, %v3066
        %v3101 = vpack.c.b16 %v3069, %v3068
        %v3102 = vpack.c.b16 %v3071, %v3070
        %v3103 = vpack.c.b16 %v3073, %v3072
        %v3104 = vpack.c.b16 %v3075, %v3074
        %v3105 = vpack.c.b16 %v3077, %v3076
        %v3106 = vpack.c.b16 %v3079, %v3078
        %v3107 = vpack.c.b16 %v3081, %v3080
        %v3108 = vpack.c.b16 %v3083, %v3082
        %v3109 = vpack.c.b16 %v3085, %v3084
        %v3110 = vpack.c.b16 %v3087, %v3086
        %v3111 = vpack.c.b16 %v3089, %v3088
        %v3112 = vpack.c.b16 %v3091, %v3090
        %v3113 = vpack.c.b16 %v3093, %v3092
        %v3114 = vpack.c.b16 %v3095, %v3094
        %v3115 = vpack.c.b16 %v3096, %v3096
        %v3116 = vrot.slane %v3097, 2
        %v3117 = vrot.slane %v3098, 2
        %v3118 = vsel %vm2676, %v3116, %v3117
        %v3119 = vrot.slane %v3099, 2
        %v3120 = vsel %vm2676, %v3117, %v3119
        %v3121 = vrot.slane %v3100, 2
        %v3122 = vsel %vm2676, %v3119, %v3121
        %v3123 = vrot.slane %v3101, 2
        %v3124 = vsel %vm2676, %v3121, %v3123
        %v3125 = vrot.slane %v3102, 2
        %v3126 = vsel %vm2676, %v3123, %v3125
        %v3127 = vrot.slane %v3103, 2
        %v3128 = vsel %vm2676, %v3125, %v3127
        %v3129 = vrot.slane %v3104, 2
        %v3130 = vsel %vm2676, %v3127, %v3129
        %v3131 = vrot.slane %v3105, 2
        %v3132 = vsel %vm2676, %v3129, %v3131
        %v3133 = vrot.slane %v3106, 2
        %v3134 = vsel %vm2676, %v3131, %v3133
        %v3135 = vrot.slane %v3107, 2
        %v3136 = vsel %vm2676, %v3133, %v3135
        %v3137 = vrot.slane %v3108, 2
        %v3138 = vsel %vm2676, %v3135, %v3137
        %v3139 = vrot.slane %v3109, 2
        %v3140 = vsel %vm2676, %v3137, %v3139
        %v3141 = vrot.slane %v3110, 2
        %v3142 = vsel %vm2676, %v3139, %v3141
        %v3143 = vrot.slane %v3111, 2
        %v3144 = vsel %vm2676, %v3141, %v3143
        %v3145 = vrot.slane %v3112, 2
        %v3146 = vsel %vm2676, %v3143, %v3145
        %v3147 = vrot.slane %v3113, 2
        %v3148 = vsel %vm2676, %v3145, %v3147
        %v3149 = vrot.slane %v3114, 2
        %v3150 = vsel %vm2676, %v3147, %v3149
        %v3151 = vrot.slane %v3115, 2
        %v3152 = vsel %vm2676, %v3149, %v3151
        %v3154 = vsel %vm897, %v3118, 0
        %v3157 = vsel %vm897, %v3120, 0
        %v3160 = vsel %vm897, %v3122, 0
        %v3163 = vsel %vm897, %v3124, 0
        %v3166 = vsel %vm897, %v3126, 0
        %v3169 = vsel %vm897, %v3128, 0
        %v3172 = vsel %vm897, %v3130, 0
        %v3175 = vsel %vm897, %v3132, 0
        %v3178 = vsel %vm897, %v3134, 0
        %v3181 = vsel %vm897, %v3136, 0
        %v3184 = vsel %vm897, %v3138, 0
        %v3187 = vsel %vm897, %v3140, 0
        %v3190 = vsel %vm897, %v3142, 0
        %v3193 = vsel %vm897, %v3144, 0
        %v3196 = vsel %vm897, %v3146, 0
        %v3199 = vsel %vm897, %v3148, 0
        %v3202 = vsel %vm897, %v3150, 0
        %v3205 = vsel %vm897, %v3152, 0
        %v3208 = vand.u32 %v3022, %v955
        %3210 = vmatprep.subr.bf16.mxu0 0
        %3211 = vmatpush1.bf16.msra.mxu0 0
        %3212 = vmatprep.subr.bf16.mxu0 0
        %3213 = vmatpush1.bf16.msra.mxu0 0
        %3214 = vmatprep.subr.bf16.mxu0 0
        %3215 = vmatpush1.bf16.msra.mxu0 0
        %3216 = vmatprep.subr.bf16.mxu0 0
        %3217 = vmatpush1.bf16.msra.mxu0 0
        %3218 = vmatprep.subr.bf16.mxu0 0
        %3219 = vmatpush1.bf16.msra.mxu0 0
        %3220 = vmatprep.subr.bf16.mxu0 0
        %3221 = vmatpush1.bf16.msra.mxu0 0
        %3222 = vmatprep.subr.bf16.mxu0 0
        %3223 = vmatpush1.bf16.msra.mxu0 0
        %3224 = vmatprep.subr.bf16.mxu0 0
        %3225 = vmatpush1.bf16.msra.mxu0 %v3208
        %3226 = vmatprep.subr.bf16.mxu0 0
        %3227 = vmatpush2.bf16.msra.mxu0 0
        %3228 = vmatprep.subr.bf16.mxu0 0
        %3229 = vmatpush2.bf16.msra.mxu0 0
        %3230 = vmatprep.subr.bf16.mxu0 0
        %3231 = vmatpush2.bf16.msra.mxu0 0
        %3232 = vmatprep.subr.bf16.mxu0 0
        %3233 = vmatpush2.bf16.msra.mxu0 0
        %3234 = vmatprep.subr.bf16.mxu0 0
        %3235 = vmatpush2.bf16.msra.mxu0 0
        %3236 = vmatprep.subr.bf16.mxu0 0
        %3237 = vmatpush2.bf16.msra.mxu0 0
        %3238 = vmatprep.subr.bf16.mxu0 0
        %3239 = vmatpush2.bf16.msra.mxu0 0
        %3240 = vmatprep.subr.bf16.mxu0 0
        %3241 = vmatpush2.bf16.msra.mxu0 0
        %3242 = vmatprep.mubr.bf16.mxu0 0
        %3243 = vmatmul.mubr.bf16.gmra.mxu0 %v3154
        %v3244 = vpop.f32.mrf.mxu0
        %v3245 = vadd.f32 0.0, %v3244
        %v3246 = vpop.f32.mrf.mxu0
        %v3247 = vpop.f32.mrf.mxu0
        %v3248 = vadd.f32 0.0, %v3247
        %v3249 = vpop.f32.mrf.mxu0
        %3250 = vmatprep.mubr.bf16.mxu0 0
        %3251 = vmatmul.mubr.bf16.gmra.mxu0 %v3157
        %v3252 = vpop.f32.mrf.mxu0
        %v3253 = vadd.f32 0.0, %v3252
        %v3254 = vpop.f32.mrf.mxu0
        %v3255 = vpop.f32.mrf.mxu0
        %v3256 = vadd.f32 0.0, %v3255
        %v3257 = vpop.f32.mrf.mxu0
        %3258 = vmatprep.mubr.bf16.mxu0 0
        %3259 = vmatmul.mubr.bf16.gmra.mxu0 %v3160
        %v3260 = vpop.f32.mrf.mxu0
        %v3261 = vadd.f32 0.0, %v3260
        %v3262 = vpop.f32.mrf.mxu0
        %v3263 = vpop.f32.mrf.mxu0
        %v3264 = vadd.f32 0.0, %v3263
        %v3265 = vpop.f32.mrf.mxu0
        %3266 = vmatprep.mubr.bf16.mxu0 0
        %3267 = vmatmul.mubr.bf16.gmra.mxu0 %v3163
        %v3268 = vpop.f32.mrf.mxu0
        %v3269 = vadd.f32 0.0, %v3268
        %v3270 = vpop.f32.mrf.mxu0
        %v3271 = vpop.f32.mrf.mxu0
        %v3272 = vadd.f32 0.0, %v3271
        %v3273 = vpop.f32.mrf.mxu0
        %3274 = vmatprep.mubr.bf16.mxu0 0
        %3275 = vmatmul.mubr.bf16.gmra.mxu0 %v3166
        %v3276 = vpop.f32.mrf.mxu0
        %v3277 = vadd.f32 0.0, %v3276
        %v3278 = vpop.f32.mrf.mxu0
        %v3279 = vpop.f32.mrf.mxu0
        %v3280 = vadd.f32 0.0, %v3279
        %v3281 = vpop.f32.mrf.mxu0
        %3282 = vmatprep.mubr.bf16.mxu0 0
        %3283 = vmatmul.mubr.bf16.gmra.mxu0 %v3169
        %v3284 = vpop.f32.mrf.mxu0
        %v3285 = vadd.f32 0.0, %v3284
        %v3286 = vpop.f32.mrf.mxu0
        %v3287 = vpop.f32.mrf.mxu0
        %v3288 = vadd.f32 0.0, %v3287
        %v3289 = vpop.f32.mrf.mxu0
        %3290 = vmatprep.mubr.bf16.mxu0 0
        %3291 = vmatmul.mubr.bf16.gmra.mxu0 %v3172
        %v3292 = vpop.f32.mrf.mxu0
        %v3293 = vadd.f32 0.0, %v3292
        %v3294 = vpop.f32.mrf.mxu0
        %v3295 = vpop.f32.mrf.mxu0
        %v3296 = vadd.f32 0.0, %v3295
        %v3297 = vpop.f32.mrf.mxu0
        %3298 = vmatprep.mubr.bf16.mxu0 0
        %3299 = vmatmul.mubr.bf16.gmra.mxu0 %v3175
        %v3300 = vpop.f32.mrf.mxu0
        %v3301 = vadd.f32 0.0, %v3300
        %v3302 = vpop.f32.mrf.mxu0
        %v3303 = vpop.f32.mrf.mxu0
        %v3304 = vadd.f32 0.0, %v3303
        %v3305 = vpop.f32.mrf.mxu0
        %3306 = vmatprep.mubr.bf16.mxu0 0
        %3307 = vmatmul.mubr.bf16.gmra.mxu0 %v3178
        %v3308 = vpop.f32.mrf.mxu0
        %v3309 = vadd.f32 0.0, %v3308
        %v3310 = vpop.f32.mrf.mxu0
        %v3311 = vpop.f32.mrf.mxu0
        %v3312 = vadd.f32 0.0, %v3311
        %v3313 = vpop.f32.mrf.mxu0
        %3314 = vmatprep.mubr.bf16.mxu0 0
        %3315 = vmatmul.mubr.bf16.gmra.mxu0 %v3181
        %v3316 = vpop.f32.mrf.mxu0
        %v3317 = vadd.f32 0.0, %v3316
        %v3318 = vpop.f32.mrf.mxu0
        %v3319 = vpop.f32.mrf.mxu0
        %v3320 = vadd.f32 0.0, %v3319
        %v3321 = vpop.f32.mrf.mxu0
        %3322 = vmatprep.mubr.bf16.mxu0 0
        %3323 = vmatmul.mubr.bf16.gmra.mxu0 %v3184
        %v3324 = vpop.f32.mrf.mxu0
        %v3325 = vadd.f32 0.0, %v3324
        %v3326 = vpop.f32.mrf.mxu0
        %v3327 = vpop.f32.mrf.mxu0
        %v3328 = vadd.f32 0.0, %v3327
        %v3329 = vpop.f32.mrf.mxu0
        %3330 = vmatprep.mubr.bf16.mxu0 0
        %3331 = vmatmul.mubr.bf16.gmra.mxu0 %v3187
        %v3332 = vpop.f32.mrf.mxu0
        %v3333 = vadd.f32 0.0, %v3332
        %v3334 = vpop.f32.mrf.mxu0
        %v3335 = vpop.f32.mrf.mxu0
        %v3336 = vadd.f32 0.0, %v3335
        %v3337 = vpop.f32.mrf.mxu0
        %3338 = vmatprep.mubr.bf16.mxu0 0
        %3339 = vmatmul.mubr.bf16.gmra.mxu0 %v3190
        %v3340 = vpop.f32.mrf.mxu0
        %v3341 = vadd.f32 0.0, %v3340
        %v3342 = vpop.f32.mrf.mxu0
        %v3343 = vpop.f32.mrf.mxu0
        %v3344 = vadd.f32 0.0, %v3343
        %v3345 = vpop.f32.mrf.mxu0
        %3346 = vmatprep.mubr.bf16.mxu0 0
        %3347 = vmatmul.mubr.bf16.gmra.mxu0 %v3193
        %v3348 = vpop.f32.mrf.mxu0
        %v3349 = vadd.f32 0.0, %v3348
        %v3350 = vpop.f32.mrf.mxu0
        %v3351 = vpop.f32.mrf.mxu0
        %v3352 = vadd.f32 0.0, %v3351
        %v3353 = vpop.f32.mrf.mxu0
        %3354 = vmatprep.mubr.bf16.mxu0 0
        %3355 = vmatmul.mubr.bf16.gmra.mxu0 %v3196
        %v3356 = vpop.f32.mrf.mxu0
        %v3357 = vadd.f32 0.0, %v3356
        %v3358 = vpop.f32.mrf.mxu0
        %v3359 = vpop.f32.mrf.mxu0
        %v3360 = vadd.f32 0.0, %v3359
        %v3361 = vpop.f32.mrf.mxu0
        %3362 = vmatprep.mubr.bf16.mxu0 0
        %3363 = vmatmul.mubr.bf16.gmra.mxu0 %v3199
        %v3364 = vpop.f32.mrf.mxu0
        %v3365 = vadd.f32 0.0, %v3364
        %v3366 = vpop.f32.mrf.mxu0
        %v3367 = vpop.f32.mrf.mxu0
        %v3368 = vadd.f32 0.0, %v3367
        %v3369 = vpop.f32.mrf.mxu0
        %3370 = vmatprep.mubr.bf16.mxu0 0
        %3371 = vmatmul.mubr.bf16.gmra.mxu0 %v3202
        %v3372 = vpop.f32.mrf.mxu0
        %v3373 = vadd.f32 0.0, %v3372
        %v3374 = vpop.f32.mrf.mxu0
        %v3375 = vpop.f32.mrf.mxu0
        %v3376 = vadd.f32 0.0, %v3375
        %v3377 = vpop.f32.mrf.mxu0
        %3378 = vmatprep.mubr.bf16.mxu0 0
        %3379 = vmatmul.mubr.bf16.gmra.mxu0 %v3205
        %v3380 = vpop.f32.mrf.mxu0
        %v3381 = vadd.f32 0.0, %v3380
        %v3382 = vpop.f32.mrf.mxu0
        %v3383 = vpop.f32.mrf.mxu0
        %v3384 = vadd.f32 0.0, %v3383
        %v3385 = vpop.f32.mrf.mxu0
        %3386 = vdwg.mxu0
        %v3387 = vadd.f32 %v2948, %v3245
        %v3388 = vadd.f32 %v2949, %v3248
        %v3389 = vadd.f32 %v2950, %v3253
        %v3390 = vadd.f32 %v2951, %v3256
        %v3391 = vadd.f32 %v2952, %v3261
        %v3392 = vadd.f32 %v2953, %v3264
        %v3393 = vadd.f32 %v2954, %v3269
        %v3394 = vadd.f32 %v2955, %v3272
        %v3395 = vadd.f32 %v2956, %v3277
        %v3396 = vadd.f32 %v2957, %v3280
        %v3397 = vadd.f32 %v2958, %v3285
        %v3398 = vadd.f32 %v2959, %v3288
        %v3399 = vadd.f32 %v2960, %v3293
        %v3400 = vadd.f32 %v2961, %v3296
        %v3401 = vadd.f32 %v2962, %v3301
        %v3402 = vadd.f32 %v2963, %v3304
        %v3403 = vadd.f32 %v2964, %v3309
        %v3404 = vadd.f32 %v2965, %v3312
        %v3405 = vadd.f32 %v2966, %v3317
        %v3406 = vadd.f32 %v2967, %v3320
        %v3407 = vadd.f32 %v2968, %v3325
        %v3408 = vadd.f32 %v2969, %v3328
        %v3409 = vadd.f32 %v2970, %v3333
        %v3410 = vadd.f32 %v2971, %v3336
        %v3411 = vadd.f32 %v2972, %v3341
        %v3412 = vadd.f32 %v2973, %v3344
        %v3413 = vadd.f32 %v2974, %v3349
        %v3414 = vadd.f32 %v2975, %v3352
        %v3415 = vadd.f32 %v2976, %v3357
        %v3416 = vadd.f32 %v2977, %v3360
        %v3417 = vadd.f32 %v2978, %v3365
        %v3418 = vadd.f32 %v2979, %v3368
        %v3419 = vadd.f32 %v2980, %v3373
        %v3420 = vadd.f32 %v2981, %v3376
        %v3421 = vadd.f32 %v2982, %v3381
        %v3422 = vadd.f32 %v2983, %v3384
        %v3423 = vld [vmem:[#allocation2 + $0xa0] sm:$0x3]
        %s3424 = scalar_lea.vmem %s1, 14
        %v3425 = vld [vmem:[%s3424] sm:$0x3]
        %v3427 = vunpack.c.l.b16 %v3423
        %v3428 = vpack.c.b16 %v3427, %v3427
        %vm3429 = vsmask.f32 5376
        %v3431 = vshrl.u32 %v3097, 16
        %v3433 = vrot.slane %v3431, 2
        %v3434 = vshll.u32 %v3097, 16
        %v3436 = vrot.slane %v3434, 3
        %v3437 = vor.u32 %v3433, %v3436
        %v3439 = vshrl.u32 %v3098, 16
        %v3441 = vrot.slane %v3439, 2
        %v3442 = vshll.u32 %v3098, 16
        %v3444 = vrot.slane %v3442, 3
        %v3445 = vor.u32 %v3441, %v3444
        %v3446 = vsel %vm3429, %v3437, %v3445
        %v3448 = vshrl.u32 %v3099, 16
        %v3450 = vrot.slane %v3448, 2
        %v3451 = vshll.u32 %v3099, 16
        %v3453 = vrot.slane %v3451, 3
        %v3454 = vor.u32 %v3450, %v3453
        %v3455 = vsel %vm3429, %v3445, %v3454
        %v3457 = vshrl.u32 %v3100, 16
        %v3459 = vrot.slane %v3457, 2
        %v3460 = vshll.u32 %v3100, 16
        %v3462 = vrot.slane %v3460, 3
        %v3463 = vor.u32 %v3459, %v3462
        %v3464 = vsel %vm3429, %v3454, %v3463
        %v3466 = vshrl.u32 %v3101, 16
        %v3468 = vrot.slane %v3466, 2
        %v3469 = vshll.u32 %v3101, 16
        %v3471 = vrot.slane %v3469, 3
        %v3472 = vor.u32 %v3468, %v3471
        %v3473 = vsel %vm3429, %v3463, %v3472
        %v3475 = vshrl.u32 %v3102, 16
        %v3477 = vrot.slane %v3475, 2
        %v3478 = vshll.u32 %v3102, 16
        %v3480 = vrot.slane %v3478, 3
        %v3481 = vor.u32 %v3477, %v3480
        %v3482 = vsel %vm3429, %v3472, %v3481
        %v3484 = vshrl.u32 %v3103, 16
        %v3486 = vrot.slane %v3484, 2
        %v3487 = vshll.u32 %v3103, 16
        %v3489 = vrot.slane %v3487, 3
        %v3490 = vor.u32 %v3486, %v3489
        %v3491 = vsel %vm3429, %v3481, %v3490
        %v3493 = vshrl.u32 %v3104, 16
        %v3495 = vrot.slane %v3493, 2
        %v3496 = vshll.u32 %v3104, 16
        %v3498 = vrot.slane %v3496, 3
        %v3499 = vor.u32 %v3495, %v3498
        %v3500 = vsel %vm3429, %v3490, %v3499
        %v3502 = vshrl.u32 %v3105, 16
        %v3504 = vrot.slane %v3502, 2
        %v3505 = vshll.u32 %v3105, 16
        %v3507 = vrot.slane %v3505, 3
        %v3508 = vor.u32 %v3504, %v3507
        %v3509 = vsel %vm3429, %v3499, %v3508
        %v3511 = vshrl.u32 %v3106, 16
        %v3513 = vrot.slane %v3511, 2
        %v3514 = vshll.u32 %v3106, 16
        %v3516 = vrot.slane %v3514, 3
        %v3517 = vor.u32 %v3513, %v3516
        %v3518 = vsel %vm3429, %v3508, %v3517
        %v3520 = vshrl.u32 %v3107, 16
        %v3522 = vrot.slane %v3520, 2
        %v3523 = vshll.u32 %v3107, 16
        %v3525 = vrot.slane %v3523, 3
        %v3526 = vor.u32 %v3522, %v3525
        %v3527 = vsel %vm3429, %v3517, %v3526
        %v3529 = vshrl.u32 %v3108, 16
        %v3531 = vrot.slane %v3529, 2
        %v3532 = vshll.u32 %v3108, 16
        %v3534 = vrot.slane %v3532, 3
        %v3535 = vor.u32 %v3531, %v3534
        %v3536 = vsel %vm3429, %v3526, %v3535
        %v3538 = vshrl.u32 %v3109, 16
        %v3540 = vrot.slane %v3538, 2
        %v3541 = vshll.u32 %v3109, 16
        %v3543 = vrot.slane %v3541, 3
        %v3544 = vor.u32 %v3540, %v3543
        %v3545 = vsel %vm3429, %v3535, %v3544
        %v3547 = vshrl.u32 %v3110, 16
        %v3549 = vrot.slane %v3547, 2
        %v3550 = vshll.u32 %v3110, 16
        %v3552 = vrot.slane %v3550, 3
        %v3553 = vor.u32 %v3549, %v3552
        %v3554 = vsel %vm3429, %v3544, %v3553
        %v3556 = vshrl.u32 %v3111, 16
        %v3558 = vrot.slane %v3556, 2
        %v3559 = vshll.u32 %v3111, 16
        %v3561 = vrot.slane %v3559, 3
        %v3562 = vor.u32 %v3558, %v3561
        %v3563 = vsel %vm3429, %v3553, %v3562
        %v3565 = vshrl.u32 %v3112, 16
        %v3567 = vrot.slane %v3565, 2
        %v3568 = vshll.u32 %v3112, 16
        %v3570 = vrot.slane %v3568, 3
        %v3571 = vor.u32 %v3567, %v3570
        %v3572 = vsel %vm3429, %v3562, %v3571
        %v3574 = vshrl.u32 %v3113, 16
        %v3576 = vrot.slane %v3574, 2
        %v3577 = vshll.u32 %v3113, 16
        %v3579 = vrot.slane %v3577, 3
        %v3580 = vor.u32 %v3576, %v3579
        %v3581 = vsel %vm3429, %v3571, %v3580
        %v3583 = vshrl.u32 %v3114, 16
        %v3585 = vrot.slane %v3583, 2
        %v3586 = vshll.u32 %v3114, 16
        %v3588 = vrot.slane %v3586, 3
        %v3589 = vor.u32 %v3585, %v3588
        %v3590 = vsel %vm3429, %v3580, %v3589
        %v3592 = vshrl.u32 %v3428, 16
        %v3594 = vrot.slane %v3592, 2
        %v3595 = vshll.u32 %v3428, 16
        %v3597 = vrot.slane %v3595, 3
        %v3598 = vor.u32 %v3594, %v3597
        %v3599 = vsel %vm3429, %v3589, %v3598
        %v3601 = vsel %vm897, %v3446, 0
        %v3604 = vsel %vm897, %v3455, 0
        %v3607 = vsel %vm897, %v3464, 0
        %v3610 = vsel %vm897, %v3473, 0
        %v3613 = vsel %vm897, %v3482, 0
        %v3616 = vsel %vm897, %v3491, 0
        %v3619 = vsel %vm897, %v3500, 0
        %v3622 = vsel %vm897, %v3509, 0
        %v3625 = vsel %vm897, %v3518, 0
        %v3628 = vsel %vm897, %v3527, 0
        %v3631 = vsel %vm897, %v3536, 0
        %v3634 = vsel %vm897, %v3545, 0
        %v3637 = vsel %vm897, %v3554, 0
        %v3640 = vsel %vm897, %v3563, 0
        %v3643 = vsel %vm897, %v3572, 0
        %v3646 = vsel %vm897, %v3581, 0
        %v3649 = vsel %vm897, %v3590, 0
        %v3652 = vsel %vm897, %v3599, 0
        %v3655 = vand.u32 %v3425, %v955
        %3657 = vmatprep.subr.bf16.mxu0 0
        %3658 = vmatpush1.bf16.msra.mxu0 0
        %3659 = vmatprep.subr.bf16.mxu0 0
        %3660 = vmatpush1.bf16.msra.mxu0 0
        %3661 = vmatprep.subr.bf16.mxu0 0
        %3662 = vmatpush1.bf16.msra.mxu0 0
        %3663 = vmatprep.subr.bf16.mxu0 0
        %3664 = vmatpush1.bf16.msra.mxu0 0
        %3665 = vmatprep.subr.bf16.mxu0 0
        %3666 = vmatpush1.bf16.msra.mxu0 0
        %3667 = vmatprep.subr.bf16.mxu0 0
        %3668 = vmatpush1.bf16.msra.mxu0 0
        %3669 = vmatprep.subr.bf16.mxu0 0
        %3670 = vmatpush1.bf16.msra.mxu0 0
        %3671 = vmatprep.subr.bf16.mxu0 0
        %3672 = vmatpush1.bf16.msra.mxu0 %v3655
        %3673 = vmatprep.subr.bf16.mxu0 0
        %3674 = vmatpush2.bf16.msra.mxu0 0
        %3675 = vmatprep.subr.bf16.mxu0 0
        %3676 = vmatpush2.bf16.msra.mxu0 0
        %3677 = vmatprep.subr.bf16.mxu0 0
        %3678 = vmatpush2.bf16.msra.mxu0 0
        %3679 = vmatprep.subr.bf16.mxu0 0
        %3680 = vmatpush2.bf16.msra.mxu0 0
        %3681 = vmatprep.subr.bf16.mxu0 0
        %3682 = vmatpush2.bf16.msra.mxu0 0
        %3683 = vmatprep.subr.bf16.mxu0 0
        %3684 = vmatpush2.bf16.msra.mxu0 0
        %3685 = vmatprep.subr.bf16.mxu0 0
        %3686 = vmatpush2.bf16.msra.mxu0 0
        %3687 = vmatprep.subr.bf16.mxu0 0
        %3688 = vmatpush2.bf16.msra.mxu0 0
        %3689 = vmatprep.mubr.bf16.mxu0 0
        %3690 = vmatmul.mubr.bf16.gmra.mxu0 %v3601
        %v3691 = vpop.f32.mrf.mxu0
        %v3692 = vadd.f32 0.0, %v3691
        %v3693 = vpop.f32.mrf.mxu0
        %v3694 = vpop.f32.mrf.mxu0
        %v3695 = vadd.f32 0.0, %v3694
        %v3696 = vpop.f32.mrf.mxu0
        %3697 = vmatprep.mubr.bf16.mxu0 0
        %3698 = vmatmul.mubr.bf16.gmra.mxu0 %v3604
        %v3699 = vpop.f32.mrf.mxu0
        %v3700 = vadd.f32 0.0, %v3699
        %v3701 = vpop.f32.mrf.mxu0
        %v3702 = vpop.f32.mrf.mxu0
        %v3703 = vadd.f32 0.0, %v3702
        %v3704 = vpop.f32.mrf.mxu0
        %3705 = vmatprep.mubr.bf16.mxu0 0
        %3706 = vmatmul.mubr.bf16.gmra.mxu0 %v3607
        %v3707 = vpop.f32.mrf.mxu0
        %v3708 = vadd.f32 0.0, %v3707
        %v3709 = vpop.f32.mrf.mxu0
        %v3710 = vpop.f32.mrf.mxu0
        %v3711 = vadd.f32 0.0, %v3710
        %v3712 = vpop.f32.mrf.mxu0
        %3713 = vmatprep.mubr.bf16.mxu0 0
        %3714 = vmatmul.mubr.bf16.gmra.mxu0 %v3610
        %v3715 = vpop.f32.mrf.mxu0
        %v3716 = vadd.f32 0.0, %v3715
        %v3717 = vpop.f32.mrf.mxu0
        %v3718 = vpop.f32.mrf.mxu0
        %v3719 = vadd.f32 0.0, %v3718
        %v3720 = vpop.f32.mrf.mxu0
        %3721 = vmatprep.mubr.bf16.mxu0 0
        %3722 = vmatmul.mubr.bf16.gmra.mxu0 %v3613
        %v3723 = vpop.f32.mrf.mxu0
        %v3724 = vadd.f32 0.0, %v3723
        %v3725 = vpop.f32.mrf.mxu0
        %v3726 = vpop.f32.mrf.mxu0
        %v3727 = vadd.f32 0.0, %v3726
        %v3728 = vpop.f32.mrf.mxu0
        %3729 = vmatprep.mubr.bf16.mxu0 0
        %3730 = vmatmul.mubr.bf16.gmra.mxu0 %v3616
        %v3731 = vpop.f32.mrf.mxu0
        %v3732 = vadd.f32 0.0, %v3731
        %v3733 = vpop.f32.mrf.mxu0
        %v3734 = vpop.f32.mrf.mxu0
        %v3735 = vadd.f32 0.0, %v3734
        %v3736 = vpop.f32.mrf.mxu0
        %3737 = vmatprep.mubr.bf16.mxu0 0
        %3738 = vmatmul.mubr.bf16.gmra.mxu0 %v3619
        %v3739 = vpop.f32.mrf.mxu0
        %v3740 = vadd.f32 0.0, %v3739
        %v3741 = vpop.f32.mrf.mxu0
        %v3742 = vpop.f32.mrf.mxu0
        %v3743 = vadd.f32 0.0, %v3742
        %v3744 = vpop.f32.mrf.mxu0
        %3745 = vmatprep.mubr.bf16.mxu0 0
        %3746 = vmatmul.mubr.bf16.gmra.mxu0 %v3622
        %v3747 = vpop.f32.mrf.mxu0
        %v3748 = vadd.f32 0.0, %v3747
        %v3749 = vpop.f32.mrf.mxu0
        %v3750 = vpop.f32.mrf.mxu0
        %v3751 = vadd.f32 0.0, %v3750
        %v3752 = vpop.f32.mrf.mxu0
        %3753 = vmatprep.mubr.bf16.mxu0 0
        %3754 = vmatmul.mubr.bf16.gmra.mxu0 %v3625
        %v3755 = vpop.f32.mrf.mxu0
        %v3756 = vadd.f32 0.0, %v3755
        %v3757 = vpop.f32.mrf.mxu0
        %v3758 = vpop.f32.mrf.mxu0
        %v3759 = vadd.f32 0.0, %v3758
        %v3760 = vpop.f32.mrf.mxu0
        %3761 = vmatprep.mubr.bf16.mxu0 0
        %3762 = vmatmul.mubr.bf16.gmra.mxu0 %v3628
        %v3763 = vpop.f32.mrf.mxu0
        %v3764 = vadd.f32 0.0, %v3763
        %v3765 = vpop.f32.mrf.mxu0
        %v3766 = vpop.f32.mrf.mxu0
        %v3767 = vadd.f32 0.0, %v3766
        %v3768 = vpop.f32.mrf.mxu0
        %3769 = vmatprep.mubr.bf16.mxu0 0
        %3770 = vmatmul.mubr.bf16.gmra.mxu0 %v3631
        %v3771 = vpop.f32.mrf.mxu0
        %v3772 = vadd.f32 0.0, %v3771
        %v3773 = vpop.f32.mrf.mxu0
        %v3774 = vpop.f32.mrf.mxu0
        %v3775 = vadd.f32 0.0, %v3774
        %v3776 = vpop.f32.mrf.mxu0
        %3777 = vmatprep.mubr.bf16.mxu0 0
        %3778 = vmatmul.mubr.bf16.gmra.mxu0 %v3634
        %v3779 = vpop.f32.mrf.mxu0
        %v3780 = vadd.f32 0.0, %v3779
        %v3781 = vpop.f32.mrf.mxu0
        %v3782 = vpop.f32.mrf.mxu0
        %v3783 = vadd.f32 0.0, %v3782
        %v3784 = vpop.f32.mrf.mxu0
        %3785 = vmatprep.mubr.bf16.mxu0 0
        %3786 = vmatmul.mubr.bf16.gmra.mxu0 %v3637
        %v3787 = vpop.f32.mrf.mxu0
        %v3788 = vadd.f32 0.0, %v3787
        %v3789 = vpop.f32.mrf.mxu0
        %v3790 = vpop.f32.mrf.mxu0
        %v3791 = vadd.f32 0.0, %v3790
        %v3792 = vpop.f32.mrf.mxu0
        %3793 = vmatprep.mubr.bf16.mxu0 0
        %3794 = vmatmul.mubr.bf16.gmra.mxu0 %v3640
        %v3795 = vpop.f32.mrf.mxu0
        %v3796 = vadd.f32 0.0, %v3795
        %v3797 = vpop.f32.mrf.mxu0
        %v3798 = vpop.f32.mrf.mxu0
        %v3799 = vadd.f32 0.0, %v3798
        %v3800 = vpop.f32.mrf.mxu0
        %3801 = vmatprep.mubr.bf16.mxu0 0
        %3802 = vmatmul.mubr.bf16.gmra.mxu0 %v3643
        %v3803 = vpop.f32.mrf.mxu0
        %v3804 = vadd.f32 0.0, %v3803
        %v3805 = vpop.f32.mrf.mxu0
        %v3806 = vpop.f32.mrf.mxu0
        %v3807 = vadd.f32 0.0, %v3806
        %v3808 = vpop.f32.mrf.mxu0
        %3809 = vmatprep.mubr.bf16.mxu0 0
        %3810 = vmatmul.mubr.bf16.gmra.mxu0 %v3646
        %v3811 = vpop.f32.mrf.mxu0
        %v3812 = vadd.f32 0.0, %v3811
        %v3813 = vpop.f32.mrf.mxu0
        %v3814 = vpop.f32.mrf.mxu0
        %v3815 = vadd.f32 0.0, %v3814
        %v3816 = vpop.f32.mrf.mxu0
        %3817 = vmatprep.mubr.bf16.mxu0 0
        %3818 = vmatmul.mubr.bf16.gmra.mxu0 %v3649
        %v3819 = vpop.f32.mrf.mxu0
        %v3820 = vadd.f32 0.0, %v3819
        %v3821 = vpop.f32.mrf.mxu0
        %v3822 = vpop.f32.mrf.mxu0
        %v3823 = vadd.f32 0.0, %v3822
        %v3824 = vpop.f32.mrf.mxu0
        %3825 = vmatprep.mubr.bf16.mxu0 0
        %3826 = vmatmul.mubr.bf16.gmra.mxu0 %v3652
        %v3827 = vpop.f32.mrf.mxu0
        %v3828 = vadd.f32 0.0, %v3827
        %v3829 = vpop.f32.mrf.mxu0
        %v3830 = vpop.f32.mrf.mxu0
        %v3831 = vadd.f32 0.0, %v3830
        %v3832 = vpop.f32.mrf.mxu0
        %3833 = vdwg.mxu0
        %v3834 = vadd.f32 %v3387, %v3692
        %v3835 = vadd.f32 %v3388, %v3695
        %v3836 = vadd.f32 %v3389, %v3700
        %v3837 = vadd.f32 %v3390, %v3703
        %v3838 = vadd.f32 %v3391, %v3708
        %v3839 = vadd.f32 %v3392, %v3711
        %v3840 = vadd.f32 %v3393, %v3716
        %v3841 = vadd.f32 %v3394, %v3719
        %v3842 = vadd.f32 %v3395, %v3724
        %v3843 = vadd.f32 %v3396, %v3727
        %v3844 = vadd.f32 %v3397, %v3732
        %v3845 = vadd.f32 %v3398, %v3735
        %v3846 = vadd.f32 %v3399, %v3740
        %v3847 = vadd.f32 %v3400, %v3743
        %v3848 = vadd.f32 %v3401, %v3748
        %v3849 = vadd.f32 %v3402, %v3751
        %v3850 = vadd.f32 %v3403, %v3756
        %v3851 = vadd.f32 %v3404, %v3759
        %v3852 = vadd.f32 %v3405, %v3764
        %v3853 = vadd.f32 %v3406, %v3767
        %v3854 = vadd.f32 %v3407, %v3772
        %v3855 = vadd.f32 %v3408, %v3775
        %v3856 = vadd.f32 %v3409, %v3780
        %v3857 = vadd.f32 %v3410, %v3783
        %v3858 = vadd.f32 %v3411, %v3788
        %v3859 = vadd.f32 %v3412, %v3791
        %v3860 = vadd.f32 %v3413, %v3796
        %v3861 = vadd.f32 %v3414, %v3799
        %v3862 = vadd.f32 %v3415, %v3804
        %v3863 = vadd.f32 %v3416, %v3807
        %v3864 = vadd.f32 %v3417, %v3812
        %v3865 = vadd.f32 %v3418, %v3815
        %v3866 = vadd.f32 %v3419, %v3820
        %v3867 = vadd.f32 %v3420, %v3823
        %v3868 = vadd.f32 %v3421, %v3828
        %v3869 = vadd.f32 %v3422, %v3831
        %v3870 = vld [vmem:[#allocation2 + $0x10] sm:$0x8]
        %s3871 = scalar_lea.vmem %s1, 16
        %v3872 = vld [vmem:[%s3871] sm:$0x3]
        %v3874 = vunpack.c.l.b16 %v3870
        %v3875 = vpack.c.b16 %v3061, %v3874
        %vm3876 = vcmask 1044480
        %v3877 = vrot.slane %v3875, 3
        %v3878 = vrot.slane %v3098, 3
        %v3879 = vsel %vm3876, %v3877, %v3878
        %v3880 = vrot.slane %v3099, 3
        %v3881 = vsel %vm3876, %v3878, %v3880
        %v3882 = vrot.slane %v3100, 3
        %v3883 = vsel %vm3876, %v3880, %v3882
        %v3884 = vrot.slane %v3101, 3
        %v3885 = vsel %vm3876, %v3882, %v3884
        %v3886 = vrot.slane %v3102, 3
        %v3887 = vsel %vm3876, %v3884, %v3886
        %v3888 = vrot.slane %v3103, 3
        %v3889 = vsel %vm3876, %v3886, %v3888
        %v3890 = vrot.slane %v3104, 3
        %v3891 = vsel %vm3876, %v3888, %v3890
        %v3892 = vrot.slane %v3105, 3
        %v3893 = vsel %vm3876, %v3890, %v3892
        %v3894 = vrot.slane %v3106, 3
        %v3895 = vsel %vm3876, %v3892, %v3894
        %v3896 = vrot.slane %v3107, 3
        %v3897 = vsel %vm3876, %v3894, %v3896
        %v3898 = vrot.slane %v3108, 3
        %v3899 = vsel %vm3876, %v3896, %v3898
        %v3900 = vrot.slane %v3109, 3
        %v3901 = vsel %vm3876, %v3898, %v3900
        %v3902 = vrot.slane %v3110, 3
        %v3903 = vsel %vm3876, %v3900, %v3902
        %v3904 = vrot.slane %v3111, 3
        %v3905 = vsel %vm3876, %v3902, %v3904
        %v3906 = vrot.slane %v3112, 3
        %v3907 = vsel %vm3876, %v3904, %v3906
        %v3908 = vrot.slane %v3113, 3
        %v3909 = vsel %vm3876, %v3906, %v3908
        %v3910 = vrot.slane %v3114, 3
        %v3911 = vsel %vm3876, %v3908, %v3910
        %v3912 = vrot.slane %v3428, 3
        %v3913 = vsel %vm3876, %v3910, %v3912
        %v3915 = vsel %vm897, %v3879, 0
        %v3918 = vsel %vm897, %v3881, 0
        %v3921 = vsel %vm897, %v3883, 0
        %v3924 = vsel %vm897, %v3885, 0
        %v3927 = vsel %vm897, %v3887, 0
        %v3930 = vsel %vm897, %v3889, 0
        %v3933 = vsel %vm897, %v3891, 0
        %v3936 = vsel %vm897, %v3893, 0
        %v3939 = vsel %vm897, %v3895, 0
        %v3942 = vsel %vm897, %v3897, 0
        %v3945 = vsel %vm897, %v3899, 0
        %v3948 = vsel %vm897, %v3901, 0
        %v3951 = vsel %vm897, %v3903, 0
        %v3954 = vsel %vm897, %v3905, 0
        %v3957 = vsel %vm897, %v3907, 0
        %v3960 = vsel %vm897, %v3909, 0
        %v3963 = vsel %vm897, %v3911, 0
        %v3966 = vsel %vm897, %v3913, 0
        %v3969 = vand.u32 %v3872, %v955
        %3971 = vmatprep.subr.bf16.mxu0 0
        %3972 = vmatpush1.bf16.msra.mxu0 0
        %3973 = vmatprep.subr.bf16.mxu0 0
        %3974 = vmatpush1.bf16.msra.mxu0 0
        %3975 = vmatprep.subr.bf16.mxu0 0
        %3976 = vmatpush1.bf16.msra.mxu0 0
        %3977 = vmatprep.subr.bf16.mxu0 0
        %3978 = vmatpush1.bf16.msra.mxu0 0
        %3979 = vmatprep.subr.bf16.mxu0 0
        %3980 = vmatpush1.bf16.msra.mxu0 0
        %3981 = vmatprep.subr.bf16.mxu0 0
        %3982 = vmatpush1.bf16.msra.mxu0 0
        %3983 = vmatprep.subr.bf16.mxu0 0
        %3984 = vmatpush1.bf16.msra.mxu0 0
        %3985 = vmatprep.subr.bf16.mxu0 0
        %3986 = vmatpush1.bf16.msra.mxu0 %v3969
        %3987 = vmatprep.subr.bf16.mxu0 0
        %3988 = vmatpush2.bf16.msra.mxu0 0
        %3989 = vmatprep.subr.bf16.mxu0 0
        %3990 = vmatpush2.bf16.msra.mxu0 0
        %3991 = vmatprep.subr.bf16.mxu0 0
        %3992 = vmatpush2.bf16.msra.mxu0 0
        %3993 = vmatprep.subr.bf16.mxu0 0
        %3994 = vmatpush2.bf16.msra.mxu0 0
        %3995 = vmatprep.subr.bf16.mxu0 0
        %3996 = vmatpush2.bf16.msra.mxu0 0
        %3997 = vmatprep.subr.bf16.mxu0 0
        %3998 = vmatpush2.bf16.msra.mxu0 0
        %3999 = vmatprep.subr.bf16.mxu0 0
        %4000 = vmatpush2.bf16.msra.mxu0 0
        %4001 = vmatprep.subr.bf16.mxu0 0
        %4002 = vmatpush2.bf16.msra.mxu0 0
        %4003 = vmatprep.mubr.bf16.mxu0 0
        %4004 = vmatmul.mubr.bf16.gmra.mxu0 %v3915
        %v4005 = vpop.f32.mrf.mxu0
        %v4006 = vadd.f32 0.0, %v4005
        %v4007 = vpop.f32.mrf.mxu0
        %v4008 = vpop.f32.mrf.mxu0
        %v4009 = vadd.f32 0.0, %v4008
        %v4010 = vpop.f32.mrf.mxu0
        %4011 = vmatprep.mubr.bf16.mxu0 0
        %4012 = vmatmul.mubr.bf16.gmra.mxu0 %v3918
        %v4013 = vpop.f32.mrf.mxu0
        %v4014 = vadd.f32 0.0, %v4013
        %v4015 = vpop.f32.mrf.mxu0
        %v4016 = vpop.f32.mrf.mxu0
        %v4017 = vadd.f32 0.0, %v4016
        %v4018 = vpop.f32.mrf.mxu0
        %4019 = vmatprep.mubr.bf16.mxu0 0
        %4020 = vmatmul.mubr.bf16.gmra.mxu0 %v3921
        %v4021 = vpop.f32.mrf.mxu0
        %v4022 = vadd.f32 0.0, %v4021
        %v4023 = vpop.f32.mrf.mxu0
        %v4024 = vpop.f32.mrf.mxu0
        %v4025 = vadd.f32 0.0, %v4024
        %v4026 = vpop.f32.mrf.mxu0
        %4027 = vmatprep.mubr.bf16.mxu0 0
        %4028 = vmatmul.mubr.bf16.gmra.mxu0 %v3924
        %v4029 = vpop.f32.mrf.mxu0
        %v4030 = vadd.f32 0.0, %v4029
        %v4031 = vpop.f32.mrf.mxu0
        %v4032 = vpop.f32.mrf.mxu0
        %v4033 = vadd.f32 0.0, %v4032
        %v4034 = vpop.f32.mrf.mxu0
        %4035 = vmatprep.mubr.bf16.mxu0 0
        %4036 = vmatmul.mubr.bf16.gmra.mxu0 %v3927
        %v4037 = vpop.f32.mrf.mxu0
        %v4038 = vadd.f32 0.0, %v4037
        %v4039 = vpop.f32.mrf.mxu0
        %v4040 = vpop.f32.mrf.mxu0
        %v4041 = vadd.f32 0.0, %v4040
        %v4042 = vpop.f32.mrf.mxu0
        %4043 = vmatprep.mubr.bf16.mxu0 0
        %4044 = vmatmul.mubr.bf16.gmra.mxu0 %v3930
        %v4045 = vpop.f32.mrf.mxu0
        %v4046 = vadd.f32 0.0, %v4045
        %v4047 = vpop.f32.mrf.mxu0
        %v4048 = vpop.f32.mrf.mxu0
        %v4049 = vadd.f32 0.0, %v4048
        %v4050 = vpop.f32.mrf.mxu0
        %4051 = vmatprep.mubr.bf16.mxu0 0
        %4052 = vmatmul.mubr.bf16.gmra.mxu0 %v3933
        %v4053 = vpop.f32.mrf.mxu0
        %v4054 = vadd.f32 0.0, %v4053
        %v4055 = vpop.f32.mrf.mxu0
        %v4056 = vpop.f32.mrf.mxu0
        %v4057 = vadd.f32 0.0, %v4056
        %v4058 = vpop.f32.mrf.mxu0
        %4059 = vmatprep.mubr.bf16.mxu0 0
        %4060 = vmatmul.mubr.bf16.gmra.mxu0 %v3936
        %v4061 = vpop.f32.mrf.mxu0
        %v4062 = vadd.f32 0.0, %v4061
        %v4063 = vpop.f32.mrf.mxu0
        %v4064 = vpop.f32.mrf.mxu0
        %v4065 = vadd.f32 0.0, %v4064
        %v4066 = vpop.f32.mrf.mxu0
        %4067 = vmatprep.mubr.bf16.mxu0 0
        %4068 = vmatmul.mubr.bf16.gmra.mxu0 %v3939
        %v4069 = vpop.f32.mrf.mxu0
        %v4070 = vadd.f32 0.0, %v4069
        %v4071 = vpop.f32.mrf.mxu0
        %v4072 = vpop.f32.mrf.mxu0
        %v4073 = vadd.f32 0.0, %v4072
        %v4074 = vpop.f32.mrf.mxu0
        %4075 = vmatprep.mubr.bf16.mxu0 0
        %4076 = vmatmul.mubr.bf16.gmra.mxu0 %v3942
        %v4077 = vpop.f32.mrf.mxu0
        %v4078 = vadd.f32 0.0, %v4077
        %v4079 = vpop.f32.mrf.mxu0
        %v4080 = vpop.f32.mrf.mxu0
        %v4081 = vadd.f32 0.0, %v4080
        %v4082 = vpop.f32.mrf.mxu0
        %4083 = vmatprep.mubr.bf16.mxu0 0
        %4084 = vmatmul.mubr.bf16.gmra.mxu0 %v3945
        %v4085 = vpop.f32.mrf.mxu0
        %v4086 = vadd.f32 0.0, %v4085
        %v4087 = vpop.f32.mrf.mxu0
        %v4088 = vpop.f32.mrf.mxu0
        %v4089 = vadd.f32 0.0, %v4088
        %v4090 = vpop.f32.mrf.mxu0
        %4091 = vmatprep.mubr.bf16.mxu0 0
        %4092 = vmatmul.mubr.bf16.gmra.mxu0 %v3948
        %v4093 = vpop.f32.mrf.mxu0
        %v4094 = vadd.f32 0.0, %v4093
        %v4095 = vpop.f32.mrf.mxu0
        %v4096 = vpop.f32.mrf.mxu0
        %v4097 = vadd.f32 0.0, %v4096
        %v4098 = vpop.f32.mrf.mxu0
        %4099 = vmatprep.mubr.bf16.mxu0 0
        %4100 = vmatmul.mubr.bf16.gmra.mxu0 %v3951
        %v4101 = vpop.f32.mrf.mxu0
        %v4102 = vadd.f32 0.0, %v4101
        %v4103 = vpop.f32.mrf.mxu0
        %v4104 = vpop.f32.mrf.mxu0
        %v4105 = vadd.f32 0.0, %v4104
        %v4106 = vpop.f32.mrf.mxu0
        %4107 = vmatprep.mubr.bf16.mxu0 0
        %4108 = vmatmul.mubr.bf16.gmra.mxu0 %v3954
        %v4109 = vpop.f32.mrf.mxu0
        %v4110 = vadd.f32 0.0, %v4109
        %v4111 = vpop.f32.mrf.mxu0
        %v4112 = vpop.f32.mrf.mxu0
        %v4113 = vadd.f32 0.0, %v4112
        %v4114 = vpop.f32.mrf.mxu0
        %4115 = vmatprep.mubr.bf16.mxu0 0
        %4116 = vmatmul.mubr.bf16.gmra.mxu0 %v3957
        %v4117 = vpop.f32.mrf.mxu0
        %v4118 = vadd.f32 0.0, %v4117
        %v4119 = vpop.f32.mrf.mxu0
        %v4120 = vpop.f32.mrf.mxu0
        %v4121 = vadd.f32 0.0, %v4120
        %v4122 = vpop.f32.mrf.mxu0
        %4123 = vmatprep.mubr.bf16.mxu0 0
        %4124 = vmatmul.mubr.bf16.gmra.mxu0 %v3960
        %v4125 = vpop.f32.mrf.mxu0
        %v4126 = vadd.f32 0.0, %v4125
        %v4127 = vpop.f32.mrf.mxu0
        %v4128 = vpop.f32.mrf.mxu0
        %v4129 = vadd.f32 0.0, %v4128
        %v4130 = vpop.f32.mrf.mxu0
        %4131 = vmatprep.mubr.bf16.mxu0 0
        %4132 = vmatmul.mubr.bf16.gmra.mxu0 %v3963
        %v4133 = vpop.f32.mrf.mxu0
        %v4134 = vadd.f32 0.0, %v4133
        %v4135 = vpop.f32.mrf.mxu0
        %v4136 = vpop.f32.mrf.mxu0
        %v4137 = vadd.f32 0.0, %v4136
        %v4138 = vpop.f32.mrf.mxu0
        %4139 = vmatprep.mubr.bf16.mxu0 0
        %4140 = vmatmul.mubr.bf16.gmra.mxu0 %v3966
        %v4141 = vpop.f32.mrf.mxu0
        %v4142 = vadd.f32 0.0, %v4141
        %v4143 = vpop.f32.mrf.mxu0
        %v4144 = vpop.f32.mrf.mxu0
        %v4145 = vadd.f32 0.0, %v4144
        %v4146 = vpop.f32.mrf.mxu0
        %4147 = vdwg.mxu0
        %v4148 = vadd.f32 %v3834, %v4006
        %v4149 = vadd.f32 %v3835, %v4009
        %v4150 = vadd.f32 %v3836, %v4014
        %v4151 = vadd.f32 %v3837, %v4017
        %v4152 = vadd.f32 %v3838, %v4022
        %v4153 = vadd.f32 %v3839, %v4025
        %v4154 = vadd.f32 %v3840, %v4030
        %v4155 = vadd.f32 %v3841, %v4033
        %v4156 = vadd.f32 %v3842, %v4038
        %v4157 = vadd.f32 %v3843, %v4041
        %v4158 = vadd.f32 %v3844, %v4046
        %v4159 = vadd.f32 %v3845, %v4049
        %v4160 = vadd.f32 %v3846, %v4054
        %v4161 = vadd.f32 %v3847, %v4057
        %v4162 = vadd.f32 %v3848, %v4062
        %v4163 = vadd.f32 %v3849, %v4065
        %v4164 = vadd.f32 %v3850, %v4070
        %v4165 = vadd.f32 %v3851, %v4073
        %v4166 = vadd.f32 %v3852, %v4078
        %v4167 = vadd.f32 %v3853, %v4081
        %v4168 = vadd.f32 %v3854, %v4086
        %v4169 = vadd.f32 %v3855, %v4089
        %v4170 = vadd.f32 %v3856, %v4094
        %v4171 = vadd.f32 %v3857, %v4097
        %v4172 = vadd.f32 %v3858, %v4102
        %v4173 = vadd.f32 %v3859, %v4105
        %v4174 = vadd.f32 %v3860, %v4110
        %v4175 = vadd.f32 %v3861, %v4113
        %v4176 = vadd.f32 %v3862, %v4118
        %v4177 = vadd.f32 %v3863, %v4121
        %v4178 = vadd.f32 %v3864, %v4126
        %v4179 = vadd.f32 %v3865, %v4129
        %v4180 = vadd.f32 %v3866, %v4134
        %v4181 = vadd.f32 %v3867, %v4137
        %v4182 = vadd.f32 %v3868, %v4142
        %v4183 = vadd.f32 %v3869, %v4145
        %v4184 = vld [vmem:[%s2] sm:$0x1]
        %v4186 = vlaneseq
        %v4187 = vshrl.u32 %v4186, 7
        %v4188 = vsub.s32 0, %v4187
        %v4189 = vrot.slane %v4184, %v4188
        %v4191 = vadd.f32 %v4148, %v4189
        %v4192 = vadd.f32 %v4149, %v4189
        %v4193 = vadd.f32 %v4150, %v4189
        %v4194 = vadd.f32 %v4151, %v4189
        %v4195 = vadd.f32 %v4152, %v4189
        %v4196 = vadd.f32 %v4153, %v4189
        %v4197 = vadd.f32 %v4154, %v4189
        %v4198 = vadd.f32 %v4155, %v4189
        %v4199 = vadd.f32 %v4156, %v4189
        %v4200 = vadd.f32 %v4157, %v4189
        %v4201 = vadd.f32 %v4158, %v4189
        %v4202 = vadd.f32 %v4159, %v4189
        %v4203 = vadd.f32 %v4160, %v4189
        %v4204 = vadd.f32 %v4161, %v4189
        %v4205 = vadd.f32 %v4162, %v4189
        %v4206 = vadd.f32 %v4163, %v4189
        %v4207 = vadd.f32 %v4164, %v4189
        %v4208 = vadd.f32 %v4165, %v4189
        %v4209 = vadd.f32 %v4166, %v4189
        %v4210 = vadd.f32 %v4167, %v4189
        %v4211 = vadd.f32 %v4168, %v4189
        %v4212 = vadd.f32 %v4169, %v4189
        %v4213 = vadd.f32 %v4170, %v4189
        %v4214 = vadd.f32 %v4171, %v4189
        %v4215 = vadd.f32 %v4172, %v4189
        %v4216 = vadd.f32 %v4173, %v4189
        %v4217 = vadd.f32 %v4174, %v4189
        %v4218 = vadd.f32 %v4175, %v4189
        %v4219 = vadd.f32 %v4176, %v4189
        %v4220 = vadd.f32 %v4177, %v4189
        %v4221 = vadd.f32 %v4178, %v4189
        %v4222 = vadd.f32 %v4179, %v4189
        %v4223 = vadd.f32 %v4180, %v4189
        %v4224 = vadd.f32 %v4181, %v4189
        %v4225 = vadd.f32 %v4182, %v4189
        %v4226 = vadd.f32 %v4183, %v4189
        %v4227 = vld [vmem:[%s3] sm:$0xff]
        %v4228 = vld [vmem:[%s3 + $0x8] sm:$0xf]
        %v4229 = vld [vmem:[%s3 + $0xc] sm:$0xff]
        %v4230 = vld [vmem:[%s3 + $0x14] sm:$0xf]
        %v4231 = vld [vmem:[%s3 + $0x18] sm:$0xff]
        %v4232 = vld [vmem:[%s3 + $0x20] sm:$0xf]
        %v4233 = vld [vmem:[%s3 + $0x24] sm:$0xff]
        %v4234 = vld [vmem:[%s3 + $0x2c] sm:$0xf]
        %v4235 = vld [vmem:[%s3 + $0x30] sm:$0xff]
        %v4236 = vld [vmem:[%s3 + $0x38] sm:$0xf]
        %v4237 = vld [vmem:[%s3 + $0x3c] sm:$0xff]
        %v4238 = vld [vmem:[%s3 + $0x44] sm:$0xf]
        %v4239 = vld [vmem:[%s3 + $0x48] sm:$0xff]
        %v4240 = vld [vmem:[%s3 + $0x50] sm:$0xf]
        %v4241 = vld [vmem:[%s3 + $0x54] sm:$0xff]
        %v4242 = vld [vmem:[%s3 + $0x5c] sm:$0xf]
        %v4243 = vld [vmem:[%s3 + $0x60] sm:$0xff]
        %v4244 = vld [vmem:[%s3 + $0x68] sm:$0xf]
        %v4245 = vld [vmem:[%s3 + $0x6c] sm:$0xff]
        %v4246 = vld [vmem:[%s3 + $0x74] sm:$0xf]
        %v4247 = vld [vmem:[%s3 + $0x78] sm:$0xff]
        %v4248 = vld [vmem:[%s3 + $0x80] sm:$0xf]
        %v4249 = vld [vmem:[%s3 + $0x84] sm:$0xff]
        %v4250 = vld [vmem:[%s3 + $0x8c] sm:$0xf]
        %v4251 = vld [vmem:[%s3 + $0x90] sm:$0xff]
        %v4252 = vld [vmem:[%s3 + $0x98] sm:$0xf]
        %v4253 = vld [vmem:[%s3 + $0x9c] sm:$0xff]
        %v4254 = vld [vmem:[%s3 + $0xa4] sm:$0xf]
        %v4255 = vld [vmem:[%s3 + $0xa8] sm:$0xff]
        %v4256 = vld [vmem:[%s3 + $0xb0] sm:$0xf]
        %v4257 = vld [vmem:[%s3 + $0xb4] sm:$0xff]
        %v4258 = vld [vmem:[%s3 + $0xbc] sm:$0xf]
        %v4259 = vld [vmem:[%s3 + $0xc0] sm:$0xff]
        %v4260 = vld [vmem:[%s3 + $0xc8] sm:$0xf]
        %v4261 = vld [vmem:[%s3 + $0xcc] sm:$0xff]
        %v4262 = vld [vmem:[%s3 + $0xd4] sm:$0xf]
        %v4263 = vld [vmem:[%s3 + $0xd8] sm:$0xff]
        %v4264 = vld [vmem:[%s3 + $0xe0] sm:$0xf]
        %v4265 = vld [vmem:[%s3 + $0xe4] sm:$0xff]
        %v4266 = vld [vmem:[%s3 + $0xec] sm:$0xf]
        %v4267 = vld [vmem:[%s3 + $0xf0] sm:$0xff]
        %v4268 = vld [vmem:[%s3 + $0xf8] sm:$0xf]
        %v4269 = vld [vmem:[%s3 + $0xfc] sm:$0xff]
        %v4270 = vld [vmem:[%s3 + $0x104] sm:$0xf]
        %v4271 = vld [vmem:[%s3 + $0x108] sm:$0xff]
        %v4272 = vld [vmem:[%s3 + $0x110] sm:$0xf]
        %v4273 = vld [vmem:[%s3 + $0x114] sm:$0xff]
        %v4274 = vld [vmem:[%s3 + $0x11c] sm:$0xf]
        %v4275 = vld [vmem:[%s3 + $0x120] sm:$0xff]
        %v4276 = vld [vmem:[%s3 + $0x128] sm:$0xf]
        %v4277 = vld [vmem:[%s3 + $0x12c] sm:$0xff]
        %v4278 = vld [vmem:[%s3 + $0x134] sm:$0xf]
        %v4279 = vld [vmem:[%s3 + $0x138] sm:$0xff]
        %v4280 = vld [vmem:[%s3 + $0x140] sm:$0xf]
        %v4281 = vld [vmem:[%s3 + $0x144] sm:$0xff]
        %v4282 = vld [vmem:[%s3 + $0x14c] sm:$0xf]
        %v4283 = vld [vmem:[%s3 + $0x150] sm:$0xff]
        %v4284 = vld [vmem:[%s3 + $0x158] sm:$0xf]
        %v4285 = vld [vmem:[%s3 + $0x15c] sm:$0xff]
        %v4286 = vld [vmem:[%s3 + $0x164] sm:$0xf]
        %v4287 = vld [vmem:[%s3 + $0x168] sm:$0xff]
        %v4288 = vld [vmem:[%s3 + $0x170] sm:$0xf]
        %v4289 = vld [vmem:[%s3 + $0x174] sm:$0xff]
        %v4290 = vld [vmem:[%s3 + $0x17c] sm:$0xf]
        %v4291 = vld [vmem:[%s3 + $0x180] sm:$0xff]
        %v4292 = vld [vmem:[%s3 + $0x188] sm:$0xf]
        %v4293 = vld [vmem:[%s3 + $0x18c] sm:$0xff]
        %v4294 = vld [vmem:[%s3 + $0x194] sm:$0xf]
        %v4295 = vld [vmem:[%s3 + $0x198] sm:$0xff]
        %v4296 = vld [vmem:[%s3 + $0x1a0] sm:$0xf]
        %v4297 = vld [vmem:[%s3 + $0x1a4] sm:$0xff]
        %v4298 = vld [vmem:[%s3 + $0x1ac] sm:$0xf]
        %v4299 = vld [vmem:[%s3 + $0x1b0] sm:$0xff]
        %v4300 = vld [vmem:[%s3 + $0x1b8] sm:$0xf]
        %v4301 = vld [vmem:[%s3 + $0x1bc] sm:$0xff]
        %v4302 = vld [vmem:[%s3 + $0x1c4] sm:$0xf]
        %v4303 = vld [vmem:[%s3 + $0x1c8] sm:$0xff]
        %v4304 = vld [vmem:[%s3 + $0x1d0] sm:$0xf]
        %v4305 = vld [vmem:[%s3 + $0x1d4] sm:$0xff]
        %v4306 = vld [vmem:[%s3 + $0x1dc] sm:$0xf]
        %v4307 = vld [vmem:[%s3 + $0x1e0] sm:$0x33]
        %v4308 = vld [vmem:[%s3 + $0x1e8] sm:$0x3]
        %v4309 = vpack.c.bf16 %v4192, %v4191
        %v4310 = vpack.c.bf16 %v4194, %v4193
        %v4311 = vpack.c.bf16 %v4196, %v4195
        %v4312 = vpack.c.bf16 %v4198, %v4197
        %v4313 = vpack.c.bf16 %v4200, %v4199
        %v4314 = vpack.c.bf16 %v4202, %v4201
        %v4315 = vpack.c.bf16 %v4204, %v4203
        %v4316 = vpack.c.bf16 %v4206, %v4205
        %v4317 = vpack.c.bf16 %v4208, %v4207
        %v4318 = vpack.c.bf16 %v4210, %v4209
        %v4319 = vpack.c.bf16 %v4212, %v4211
        %v4320 = vpack.c.bf16 %v4214, %v4213
        %v4321 = vpack.c.bf16 %v4216, %v4215
        %v4322 = vpack.c.bf16 %v4218, %v4217
        %v4323 = vpack.c.bf16 %v4220, %v4219
        %v4324 = vpack.c.bf16 %v4222, %v4221
        %v4325 = vpack.c.bf16 %v4224, %v4223
        %v4326 = vpack.c.bf16 %v4226, %v4225
        %v4409 = vunpack.c.l.b16 %v4227
        %v4410 = vunpack.c.h.b16 %v4227
        %v4411 = vunpack.c.l.b16 %v4228
        %v4412 = vunpack.c.l.b16 %v4229
        %v4413 = vunpack.c.h.b16 %v4229
        %v4414 = vunpack.c.l.b16 %v4230
        %v4415 = vunpack.c.l.b16 %v4231
        %v4416 = vunpack.c.h.b16 %v4231
        %v4417 = vunpack.c.l.b16 %v4232
        %v4418 = vunpack.c.l.b16 %v4233
        %v4419 = vunpack.c.h.b16 %v4233
        %v4420 = vunpack.c.l.b16 %v4234
        %v4421 = vunpack.c.l.b16 %v4235
        %v4422 = vunpack.c.h.b16 %v4235
        %v4423 = vunpack.c.l.b16 %v4236
        %v4424 = vunpack.c.l.b16 %v4237
        %v4425 = vunpack.c.h.b16 %v4237
        %v4426 = vunpack.c.l.b16 %v4238
        %v4427 = vunpack.c.l.b16 %v4239
        %v4428 = vunpack.c.h.b16 %v4239
        %v4429 = vunpack.c.l.b16 %v4240
        %v4430 = vunpack.c.l.b16 %v4241
        %v4431 = vunpack.c.h.b16 %v4241
        %v4432 = vunpack.c.l.b16 %v4242
        %v4433 = vunpack.c.l.b16 %v4243
        %v4434 = vunpack.c.h.b16 %v4243
        %v4435 = vunpack.c.l.b16 %v4244
        %v4436 = vunpack.c.l.b16 %v4245
        %v4437 = vunpack.c.h.b16 %v4245
        %v4438 = vunpack.c.l.b16 %v4246
        %v4439 = vunpack.c.l.b16 %v4247
        %v4440 = vunpack.c.h.b16 %v4247
        %v4441 = vunpack.c.l.b16 %v4248
        %v4442 = vunpack.c.l.b16 %v4249
        %v4443 = vunpack.c.h.b16 %v4249
        %v4444 = vunpack.c.l.b16 %v4250
        %v4445 = vunpack.c.l.b16 %v4251
        %v4446 = vunpack.c.h.b16 %v4251
        %v4447 = vunpack.c.l.b16 %v4252
        %v4448 = vunpack.c.l.b16 %v4253
        %v4449 = vunpack.c.h.b16 %v4253
        %v4450 = vunpack.c.l.b16 %v4254
        %v4451 = vunpack.c.l.b16 %v4255
        %v4452 = vunpack.c.h.b16 %v4255
        %v4453 = vunpack.c.l.b16 %v4256
        %v4454 = vunpack.c.l.b16 %v4257
        %v4455 = vunpack.c.h.b16 %v4257
        %v4456 = vunpack.c.l.b16 %v4258
        %v4457 = vunpack.c.l.b16 %v4259
        %v4458 = vunpack.c.h.b16 %v4259
        %v4459 = vunpack.c.l.b16 %v4260
        %v4460 = vunpack.c.l.b16 %v4261
        %v4461 = vunpack.c.h.b16 %v4261
        %v4462 = vunpack.c.l.b16 %v4262
        %v4463 = vunpack.c.l.b16 %v4263
        %v4464 = vunpack.c.h.b16 %v4263
        %v4465 = vunpack.c.l.b16 %v4264
        %v4466 = vunpack.c.l.b16 %v4265
        %v4467 = vunpack.c.h.b16 %v4265
        %v4468 = vunpack.c.l.b16 %v4266
        %v4469 = vunpack.c.l.b16 %v4267
        %v4470 = vunpack.c.h.b16 %v4267
        %v4471 = vunpack.c.l.b16 %v4268
        %v4472 = vunpack.c.l.b16 %v4269
        %v4473 = vunpack.c.h.b16 %v4269
        %v4474 = vunpack.c.l.b16 %v4270
        %v4475 = vunpack.c.l.b16 %v4271
        %v4476 = vunpack.c.h.b16 %v4271
        %v4477 = vunpack.c.l.b16 %v4272
        %v4478 = vunpack.c.l.b16 %v4273
        %v4479 = vunpack.c.h.b16 %v4273
        %v4480 = vunpack.c.l.b16 %v4274
        %v4481 = vunpack.c.l.b16 %v4275
        %v4482 = vunpack.c.h.b16 %v4275
        %v4483 = vunpack.c.l.b16 %v4276
        %v4484 = vunpack.c.l.b16 %v4277
        %v4485 = vunpack.c.h.b16 %v4277
        %v4486 = vunpack.c.l.b16 %v4278
        %v4487 = vunpack.c.l.b16 %v4279
        %v4488 = vunpack.c.h.b16 %v4279
        %v4489 = vunpack.c.l.b16 %v4280
        %v4490 = vunpack.c.l.b16 %v4281
        %v4491 = vunpack.c.h.b16 %v4281
        %v4492 = vunpack.c.l.b16 %v4282
        %v4493 = vunpack.c.l.b16 %v4283
        %v4494 = vunpack.c.h.b16 %v4283
        %v4495 = vunpack.c.l.b16 %v4284
        %v4496 = vunpack.c.l.b16 %v4285
        %v4497 = vunpack.c.h.b16 %v4285
        %v4498 = vunpack.c.l.b16 %v4286
        %v4499 = vunpack.c.l.b16 %v4287
        %v4500 = vunpack.c.h.b16 %v4287
        %v4501 = vunpack.c.l.b16 %v4288
        %v4502 = vunpack.c.l.b16 %v4289
        %v4503 = vunpack.c.h.b16 %v4289
        %v4504 = vunpack.c.l.b16 %v4290
        %v4505 = vunpack.c.l.b16 %v4291
        %v4506 = vunpack.c.h.b16 %v4291
        %v4507 = vunpack.c.l.b16 %v4292
        %v4508 = vunpack.c.l.b16 %v4293
        %v4509 = vunpack.c.h.b16 %v4293
        %v4510 = vunpack.c.l.b16 %v4294
        %v4511 = vunpack.c.l.b16 %v4295
        %v4512 = vunpack.c.h.b16 %v4295
        %v4513 = vunpack.c.l.b16 %v4296
        %v4514 = vunpack.c.l.b16 %v4297
        %v4515 = vunpack.c.h.b16 %v4297
        %v4516 = vunpack.c.l.b16 %v4298
        %v4517 = vunpack.c.l.b16 %v4299
        %v4518 = vunpack.c.h.b16 %v4299
        %v4519 = vunpack.c.l.b16 %v4300
        %v4520 = vunpack.c.l.b16 %v4301
        %v4521 = vunpack.c.h.b16 %v4301
        %v4522 = vunpack.c.l.b16 %v4302
        %v4523 = vunpack.c.l.b16 %v4303
        %v4524 = vunpack.c.h.b16 %v4303
        %v4525 = vunpack.c.l.b16 %v4304
        %v4526 = vunpack.c.l.b16 %v4305
        %v4527 = vunpack.c.h.b16 %v4305
        %v4528 = vunpack.c.l.b16 %v4306
        %v4529 = vunpack.c.l.b16 %v4307
        %v4530 = vunpack.c.h.b16 %v4307
        %v4531 = vunpack.c.l.b16 %v4308
        %v4532 = vpack.c.b16 %v4412, %v4409
        %v4533 = vpack.c.b16 %v4413, %v4410
        %v4534 = vpack.c.b16 %v4414, %v4411
        %v4535 = vpack.c.b16 %v4418, %v4415
        %v4536 = vpack.c.b16 %v4419, %v4416
        %v4537 = vpack.c.b16 %v4420, %v4417
        %v4538 = vpack.c.b16 %v4424, %v4421
        %v4539 = vpack.c.b16 %v4425, %v4422
        %v4540 = vpack.c.b16 %v4426, %v4423
        %v4541 = vpack.c.b16 %v4430, %v4427
        %v4542 = vpack.c.b16 %v4431, %v4428
        %v4543 = vpack.c.b16 %v4432, %v4429
        %v4544 = vpack.c.b16 %v4436, %v4433
        %v4545 = vpack.c.b16 %v4437, %v4434
        %v4546 = vpack.c.b16 %v4438, %v4435
        %v4547 = vpack.c.b16 %v4442, %v4439
        %v4548 = vpack.c.b16 %v4443, %v4440
        %v4549 = vpack.c.b16 %v4444, %v4441
        %v4550 = vpack.c.b16 %v4448, %v4445
        %v4551 = vpack.c.b16 %v4449, %v4446
        %v4552 = vpack.c.b16 %v4450, %v4447
        %v4553 = vpack.c.b16 %v4454, %v4451
        %v4554 = vpack.c.b16 %v4455, %v4452
        %v4555 = vpack.c.b16 %v4456, %v4453
        %v4556 = vpack.c.b16 %v4460, %v4457
        %v4557 = vpack.c.b16 %v4461, %v4458
        %v4558 = vpack.c.b16 %v4462, %v4459
        %v4559 = vpack.c.b16 %v4466, %v4463
        %v4560 = vpack.c.b16 %v4467, %v4464
        %v4561 = vpack.c.b16 %v4468, %v4465
        %v4562 = vpack.c.b16 %v4472, %v4469
        %v4563 = vpack.c.b16 %v4473, %v4470
        %v4564 = vpack.c.b16 %v4474, %v4471
        %v4565 = vpack.c.b16 %v4478, %v4475
        %v4566 = vpack.c.b16 %v4479, %v4476
        %v4567 = vpack.c.b16 %v4480, %v4477
        %v4568 = vpack.c.b16 %v4484, %v4481
        %v4569 = vpack.c.b16 %v4485, %v4482
        %v4570 = vpack.c.b16 %v4486, %v4483
        %v4571 = vpack.c.b16 %v4490, %v4487
        %v4572 = vpack.c.b16 %v4491, %v4488
        %v4573 = vpack.c.b16 %v4492, %v4489
        %v4574 = vpack.c.b16 %v4496, %v4493
        %v4575 = vpack.c.b16 %v4497, %v4494
        %v4576 = vpack.c.b16 %v4498, %v4495
        %v4577 = vpack.c.b16 %v4502, %v4499
        %v4578 = vpack.c.b16 %v4503, %v4500
        %v4579 = vpack.c.b16 %v4504, %v4501
        %v4580 = vpack.c.b16 %v4508, %v4505
        %v4581 = vpack.c.b16 %v4509, %v4506
        %v4582 = vpack.c.b16 %v4510, %v4507
        %v4583 = vpack.c.b16 %v4514, %v4511
        %v4584 = vpack.c.b16 %v4515, %v4512
        %v4585 = vpack.c.b16 %v4516, %v4513
        %v4586 = vpack.c.b16 %v4520, %v4517
        %v4587 = vpack.c.b16 %v4521, %v4518
        %v4588 = vpack.c.b16 %v4522, %v4519
        %v4589 = vpack.c.b16 %v4526, %v4523
        %v4590 = vpack.c.b16 %v4527, %v4524
        %v4591 = vpack.c.b16 %v4528, %v4525
        %v4592 = vpack.c.b16 %v4529, %v4529
        %v4593 = vpack.c.b16 %v4530, %v4530
        %v4594 = vpack.c.b16 %v4531, %v4531
        %vm4637 = vcmask 244736
        %v4639 = vsel %vm4637, %v4534, 0
        %v4642 = vsel %vm4637, %v4537, 0
        %v4645 = vsel %vm4637, %v4540, 0
        %v4648 = vsel %vm4637, %v4543, 0
        %v4651 = vsel %vm4637, %v4546, 0
        %v4654 = vsel %vm4637, %v4549, 0
        %v4657 = vsel %vm4637, %v4552, 0
        %v4660 = vsel %vm4637, %v4555, 0
        %v4663 = vsel %vm4637, %v4558, 0
        %v4666 = vsel %vm4637, %v4561, 0
        %v4669 = vsel %vm4637, %v4564, 0
        %v4672 = vsel %vm4637, %v4567, 0
        %v4675 = vsel %vm4637, %v4570, 0
        %v4678 = vsel %vm4637, %v4573, 0
        %v4681 = vsel %vm4637, %v4576, 0
        %v4684 = vsel %vm4637, %v4579, 0
        %v4687 = vsel %vm4637, %v4582, 0
        %v4690 = vsel %vm4637, %v4585, 0
        %v4693 = vsel %vm4637, %v4588, 0
        %v4696 = vsel %vm4637, %v4591, 0
        %v4699 = vsel %vm4637, %v4594, 0
        %vm4701 = vcmask 1046528
        %v4703 = vsel %vm4701, %v4326, 0
        %4705 = vmatprep.subr.bf16.mxu0 0
        %4706 = vmatpush1.bf16.msra.mxu0 %v4316
        %4707 = vmatprep.subr.bf16.mxu0 0
        %4708 = vmatpush1.bf16.msra.mxu0 %v4315
        %4709 = vmatprep.subr.bf16.mxu0 0
        %4710 = vmatpush1.bf16.msra.mxu0 %v4314
        %4711 = vmatprep.subr.bf16.mxu0 0
        %4712 = vmatpush1.bf16.msra.mxu0 %v4313
        %4713 = vmatprep.subr.bf16.mxu0 0
        %4714 = vmatpush1.bf16.msra.mxu0 %v4312
        %4715 = vmatprep.subr.bf16.mxu0 0
        %4716 = vmatpush1.bf16.msra.mxu0 %v4311
        %4717 = vmatprep.subr.bf16.mxu0 0
        %4718 = vmatpush1.bf16.msra.mxu0 %v4310
        %4719 = vmatprep.subr.bf16.mxu0 0
        %4720 = vmatpush1.bf16.msra.mxu0 %v4309
        %4721 = vmatprep.subr.bf16.mxu0 0
        %4722 = vmatpush2.bf16.msra.mxu0 %v4324
        %4723 = vmatprep.subr.bf16.mxu0 0
        %4724 = vmatpush2.bf16.msra.mxu0 %v4323
        %4725 = vmatprep.subr.bf16.mxu0 0
        %4726 = vmatpush2.bf16.msra.mxu0 %v4322
        %4727 = vmatprep.subr.bf16.mxu0 0
        %4728 = vmatpush2.bf16.msra.mxu0 %v4321
        %4729 = vmatprep.subr.bf16.mxu0 0
        %4730 = vmatpush2.bf16.msra.mxu0 %v4320
        %4731 = vmatprep.subr.bf16.mxu0 0
        %4732 = vmatpush2.bf16.msra.mxu0 %v4319
        %4733 = vmatprep.subr.bf16.mxu0 0
        %4734 = vmatpush2.bf16.msra.mxu0 %v4318
        %4735 = vmatprep.subr.bf16.mxu0 0
        %4736 = vmatpush2.bf16.msra.mxu0 %v4317
        %4737 = vmatprep.mubr.bf16.mxu0 %v4533
        %4738 = vmatmul.mubr.bf16.gmra.mxu0 %v4532
        %v4739 = vpop.f32.mrf.mxu0
        %v4740 = vadd.f32 0.0, %v4739
        %v4741 = vpop.f32.mrf.mxu0
        %v4742 = vpop.f32.mrf.mxu0
        %v4743 = vadd.f32 0.0, %v4742
        %v4744 = vpop.f32.mrf.mxu0
        %4745 = vmatprep.mubr.bf16.mxu0 %v4536
        %4746 = vmatmul.mubr.bf16.gmra.mxu0 %v4535
        %v4747 = vpop.f32.mrf.mxu0
        %v4748 = vadd.f32 0.0, %v4747
        %v4749 = vpop.f32.mrf.mxu0
        %v4750 = vpop.f32.mrf.mxu0
        %v4751 = vadd.f32 0.0, %v4750
        %v4752 = vpop.f32.mrf.mxu0
        %4753 = vmatprep.mubr.bf16.mxu0 %v4539
        %4754 = vmatmul.mubr.bf16.gmra.mxu0 %v4538
        %v4755 = vpop.f32.mrf.mxu0
        %v4756 = vadd.f32 0.0, %v4755
        %v4757 = vpop.f32.mrf.mxu0
        %v4758 = vpop.f32.mrf.mxu0
        %v4759 = vadd.f32 0.0, %v4758
        %v4760 = vpop.f32.mrf.mxu0
        %4761 = vmatprep.mubr.bf16.mxu0 %v4542
        %4762 = vmatmul.mubr.bf16.gmra.mxu0 %v4541
        %v4763 = vpop.f32.mrf.mxu0
        %v4764 = vadd.f32 0.0, %v4763
        %v4765 = vpop.f32.mrf.mxu0
        %v4766 = vpop.f32.mrf.mxu0
        %v4767 = vadd.f32 0.0, %v4766
        %v4768 = vpop.f32.mrf.mxu0
        %4769 = vmatprep.mubr.bf16.mxu0 %v4545
        %4770 = vmatmul.mubr.bf16.gmra.mxu0 %v4544
        %v4771 = vpop.f32.mrf.mxu0
        %v4772 = vadd.f32 0.0, %v4771
        %v4773 = vpop.f32.mrf.mxu0
        %v4774 = vpop.f32.mrf.mxu0
        %v4775 = vadd.f32 0.0, %v4774
        %v4776 = vpop.f32.mrf.mxu0
        %4777 = vmatprep.mubr.bf16.mxu0 %v4548
        %4778 = vmatmul.mubr.bf16.gmra.mxu0 %v4547
        %v4779 = vpop.f32.mrf.mxu0
        %v4780 = vadd.f32 0.0, %v4779
        %v4781 = vpop.f32.mrf.mxu0
        %v4782 = vpop.f32.mrf.mxu0
        %v4783 = vadd.f32 0.0, %v4782
        %v4784 = vpop.f32.mrf.mxu0
        %4785 = vmatprep.mubr.bf16.mxu0 %v4551
        %4786 = vmatmul.mubr.bf16.gmra.mxu0 %v4550
        %v4787 = vpop.f32.mrf.mxu0
        %v4788 = vadd.f32 0.0, %v4787
        %v4789 = vpop.f32.mrf.mxu0
        %v4790 = vpop.f32.mrf.mxu0
        %v4791 = vadd.f32 0.0, %v4790
        %v4792 = vpop.f32.mrf.mxu0
        %4793 = vmatprep.mubr.bf16.mxu0 %v4554
        %4794 = vmatmul.mubr.bf16.gmra.mxu0 %v4553
        %v4795 = vpop.f32.mrf.mxu0
        %v4796 = vadd.f32 0.0, %v4795
        %v4797 = vpop.f32.mrf.mxu0
        %v4798 = vpop.f32.mrf.mxu0
        %v4799 = vadd.f32 0.0, %v4798
        %v4800 = vpop.f32.mrf.mxu0
        %4801 = vmatprep.mubr.bf16.mxu0 %v4557
        %4802 = vmatmul.mubr.bf16.gmra.mxu0 %v4556
        %v4803 = vpop.f32.mrf.mxu0
        %v4804 = vadd.f32 0.0, %v4803
        %v4805 = vpop.f32.mrf.mxu0
        %v4806 = vpop.f32.mrf.mxu0
        %v4807 = vadd.f32 0.0, %v4806
        %v4808 = vpop.f32.mrf.mxu0
        %4809 = vmatprep.mubr.bf16.mxu0 %v4560
        %4810 = vmatmul.mubr.bf16.gmra.mxu0 %v4559
        %v4811 = vpop.f32.mrf.mxu0
        %v4812 = vadd.f32 0.0, %v4811
        %v4813 = vpop.f32.mrf.mxu0
        %v4814 = vpop.f32.mrf.mxu0
        %v4815 = vadd.f32 0.0, %v4814
        %v4816 = vpop.f32.mrf.mxu0
        %4817 = vmatprep.mubr.bf16.mxu0 %v4563
        %4818 = vmatmul.mubr.bf16.gmra.mxu0 %v4562
        %v4819 = vpop.f32.mrf.mxu0
        %v4820 = vadd.f32 0.0, %v4819
        %v4821 = vpop.f32.mrf.mxu0
        %v4822 = vpop.f32.mrf.mxu0
        %v4823 = vadd.f32 0.0, %v4822
        %v4824 = vpop.f32.mrf.mxu0
        %4825 = vmatprep.mubr.bf16.mxu0 %v4566
        %4826 = vmatmul.mubr.bf16.gmra.mxu0 %v4565
        %v4827 = vpop.f32.mrf.mxu0
        %v4828 = vadd.f32 0.0, %v4827
        %v4829 = vpop.f32.mrf.mxu0
        %v4830 = vpop.f32.mrf.mxu0
        %v4831 = vadd.f32 0.0, %v4830
        %v4832 = vpop.f32.mrf.mxu0
        %4833 = vmatprep.mubr.bf16.mxu0 %v4569
        %4834 = vmatmul.mubr.bf16.gmra.mxu0 %v4568
        %v4835 = vpop.f32.mrf.mxu0
        %v4836 = vadd.f32 0.0, %v4835
        %v4837 = vpop.f32.mrf.mxu0
        %v4838 = vpop.f32.mrf.mxu0
        %v4839 = vadd.f32 0.0, %v4838
        %v4840 = vpop.f32.mrf.mxu0
        %4841 = vmatprep.mubr.bf16.mxu0 %v4572
        %4842 = vmatmul.mubr.bf16.gmra.mxu0 %v4571
        %v4843 = vpop.f32.mrf.mxu0
        %v4844 = vadd.f32 0.0, %v4843
        %v4845 = vpop.f32.mrf.mxu0
        %v4846 = vpop.f32.mrf.mxu0
        %v4847 = vadd.f32 0.0, %v4846
        %v4848 = vpop.f32.mrf.mxu0
        %4849 = vmatprep.mubr.bf16.mxu0 %v4575
        %4850 = vmatmul.mubr.bf16.gmra.mxu0 %v4574
        %v4851 = vpop.f32.mrf.mxu0
        %v4852 = vadd.f32 0.0, %v4851
        %v4853 = vpop.f32.mrf.mxu0
        %v4854 = vpop.f32.mrf.mxu0
        %v4855 = vadd.f32 0.0, %v4854
        %v4856 = vpop.f32.mrf.mxu0
        %4857 = vmatprep.mubr.bf16.mxu0 %v4578
        %4858 = vmatmul.mubr.bf16.gmra.mxu0 %v4577
        %v4859 = vpop.f32.mrf.mxu0
        %v4860 = vadd.f32 0.0, %v4859
        %v4861 = vpop.f32.mrf.mxu0
        %v4862 = vpop.f32.mrf.mxu0
        %v4863 = vadd.f32 0.0, %v4862
        %v4864 = vpop.f32.mrf.mxu0
        %4865 = vmatprep.mubr.bf16.mxu0 %v4581
        %4866 = vmatmul.mubr.bf16.gmra.mxu0 %v4580
        %v4867 = vpop.f32.mrf.mxu0
        %v4868 = vadd.f32 0.0, %v4867
        %v4869 = vpop.f32.mrf.mxu0
        %v4870 = vpop.f32.mrf.mxu0
        %v4871 = vadd.f32 0.0, %v4870
        %v4872 = vpop.f32.mrf.mxu0
        %4873 = vmatprep.mubr.bf16.mxu0 %v4584
        %4874 = vmatmul.mubr.bf16.gmra.mxu0 %v4583
        %v4875 = vpop.f32.mrf.mxu0
        %v4876 = vadd.f32 0.0, %v4875
        %v4877 = vpop.f32.mrf.mxu0
        %v4878 = vpop.f32.mrf.mxu0
        %v4879 = vadd.f32 0.0, %v4878
        %v4880 = vpop.f32.mrf.mxu0
        %4881 = vmatprep.mubr.bf16.mxu0 %v4587
        %4882 = vmatmul.mubr.bf16.gmra.mxu0 %v4586
        %v4883 = vpop.f32.mrf.mxu0
        %v4884 = vadd.f32 0.0, %v4883
        %v4885 = vpop.f32.mrf.mxu0
        %v4886 = vpop.f32.mrf.mxu0
        %v4887 = vadd.f32 0.0, %v4886
        %v4888 = vpop.f32.mrf.mxu0
        %4889 = vmatprep.mubr.bf16.mxu0 %v4590
        %4890 = vmatmul.mubr.bf16.gmra.mxu0 %v4589
        %v4891 = vpop.f32.mrf.mxu0
        %v4892 = vadd.f32 0.0, %v4891
        %v4893 = vpop.f32.mrf.mxu0
        %v4894 = vpop.f32.mrf.mxu0
        %v4895 = vadd.f32 0.0, %v4894
        %v4896 = vpop.f32.mrf.mxu0
        %4897 = vmatprep.mubr.bf16.mxu0 %v4593
        %4898 = vmatmul.mubr.bf16.gmra.mxu0 %v4592
        %v4899 = vpop.f32.mrf.mxu0
        %v4900 = vadd.f32 0.0, %v4899
        %v4901 = vpop.f32.mrf.mxu0
        %v4902 = vpop.f32.mrf.mxu0
        %v4903 = vpop.f32.mrf.mxu0
        %4904 = vdwg.mxu0
        %4905 = vmatprep.subr.bf16.mxu0 0
        %4906 = vmatpush1.bf16.msra.mxu0 0
        %4907 = vmatprep.subr.bf16.mxu0 0
        %4908 = vmatpush1.bf16.msra.mxu0 0
        %4909 = vmatprep.subr.bf16.mxu0 0
        %4910 = vmatpush1.bf16.msra.mxu0 0
        %4911 = vmatprep.subr.bf16.mxu0 0
        %4912 = vmatpush1.bf16.msra.mxu0 0
        %4913 = vmatprep.subr.bf16.mxu0 0
        %4914 = vmatpush1.bf16.msra.mxu0 0
        %4915 = vmatprep.subr.bf16.mxu0 0
        %4916 = vmatpush1.bf16.msra.mxu0 0
        %4917 = vmatprep.subr.bf16.mxu0 0
        %4918 = vmatpush1.bf16.msra.mxu0 %v4703
        %4919 = vmatprep.subr.bf16.mxu0 0
        %4920 = vmatpush1.bf16.msra.mxu0 %v4325
        %4921 = vmatprep.subr.bf16.mxu0 0
        %4922 = vmatpush2.bf16.msra.mxu0 0
        %4923 = vmatprep.subr.bf16.mxu0 0
        %4924 = vmatpush2.bf16.msra.mxu0 0
        %4925 = vmatprep.subr.bf16.mxu0 0
        %4926 = vmatpush2.bf16.msra.mxu0 0
        %4927 = vmatprep.subr.bf16.mxu0 0
        %4928 = vmatpush2.bf16.msra.mxu0 0
        %4929 = vmatprep.subr.bf16.mxu0 0
        %4930 = vmatpush2.bf16.msra.mxu0 0
        %4931 = vmatprep.subr.bf16.mxu0 0
        %4932 = vmatpush2.bf16.msra.mxu0 0
        %4933 = vmatprep.subr.bf16.mxu0 0
        %4934 = vmatpush2.bf16.msra.mxu0 0
        %4935 = vmatprep.subr.bf16.mxu0 0
        %4936 = vmatpush2.bf16.msra.mxu0 0
        %4937 = vmatprep.mubr.bf16.mxu0 0
        %4938 = vmatmul.mubr.bf16.gmra.mxu0 %v4639
        %v4939 = vpop.f32.mrf.mxu0
        %v4940 = vadd.f32 %v4740, %v4939
        %v4941 = vpop.f32.mrf.mxu0
        %v4942 = vpop.f32.mrf.mxu0
        %v4943 = vadd.f32 %v4743, %v4942
        %v4944 = vpop.f32.mrf.mxu0
        %4945 = vmatprep.mubr.bf16.mxu0 0
        %4946 = vmatmul.mubr.bf16.gmra.mxu0 %v4642
        %v4947 = vpop.f32.mrf.mxu0
        %v4948 = vadd.f32 %v4748, %v4947
        %v4949 = vpop.f32.mrf.mxu0
        %v4950 = vpop.f32.mrf.mxu0
        %v4951 = vadd.f32 %v4751, %v4950
        %v4952 = vpop.f32.mrf.mxu0
        %4953 = vmatprep.mubr.bf16.mxu0 0
        %4954 = vmatmul.mubr.bf16.gmra.mxu0 %v4645
        %v4955 = vpop.f32.mrf.mxu0
        %v4956 = vadd.f32 %v4756, %v4955
        %v4957 = vpop.f32.mrf.mxu0
        %v4958 = vpop.f32.mrf.mxu0
        %v4959 = vadd.f32 %v4759, %v4958
        %v4960 = vpop.f32.mrf.mxu0
        %4961 = vmatprep.mubr.bf16.mxu0 0
        %4962 = vmatmul.mubr.bf16.gmra.mxu0 %v4648
        %v4963 = vpop.f32.mrf.mxu0
        %v4964 = vadd.f32 %v4764, %v4963
        %v4965 = vpop.f32.mrf.mxu0
        %v4966 = vpop.f32.mrf.mxu0
        %v4967 = vadd.f32 %v4767, %v4966
        %v4968 = vpop.f32.mrf.mxu0
        %4969 = vmatprep.mubr.bf16.mxu0 0
        %4970 = vmatmul.mubr.bf16.gmra.mxu0 %v4651
        %v4971 = vpop.f32.mrf.mxu0
        %v4972 = vadd.f32 %v4772, %v4971
        %v4973 = vpop.f32.mrf.mxu0
        %v4974 = vpop.f32.mrf.mxu0
        %v4975 = vadd.f32 %v4775, %v4974
        %v4976 = vpop.f32.mrf.mxu0
        %4977 = vmatprep.mubr.bf16.mxu0 0
        %4978 = vmatmul.mubr.bf16.gmra.mxu0 %v4654
        %v4979 = vpop.f32.mrf.mxu0
        %v4980 = vadd.f32 %v4780, %v4979
        %v4981 = vpop.f32.mrf.mxu0
        %v4982 = vpop.f32.mrf.mxu0
        %v4983 = vadd.f32 %v4783, %v4982
        %v4984 = vpop.f32.mrf.mxu0
        %4985 = vmatprep.mubr.bf16.mxu0 0
        %4986 = vmatmul.mubr.bf16.gmra.mxu0 %v4657
        %v4987 = vpop.f32.mrf.mxu0
        %v4988 = vadd.f32 %v4788, %v4987
        %v4989 = vpop.f32.mrf.mxu0
        %v4990 = vpop.f32.mrf.mxu0
        %v4991 = vadd.f32 %v4791, %v4990
        %v4992 = vpop.f32.mrf.mxu0
        %4993 = vmatprep.mubr.bf16.mxu0 0
        %4994 = vmatmul.mubr.bf16.gmra.mxu0 %v4660
        %v4995 = vpop.f32.mrf.mxu0
        %v4996 = vadd.f32 %v4796, %v4995
        %v4997 = vpop.f32.mrf.mxu0
        %v4998 = vpop.f32.mrf.mxu0
        %v4999 = vadd.f32 %v4799, %v4998
        %v5000 = vpop.f32.mrf.mxu0
        %5001 = vmatprep.mubr.bf16.mxu0 0
        %5002 = vmatmul.mubr.bf16.gmra.mxu0 %v4663
        %v5003 = vpop.f32.mrf.mxu0
        %v5004 = vadd.f32 %v4804, %v5003
        %v5005 = vpop.f32.mrf.mxu0
        %v5006 = vpop.f32.mrf.mxu0
        %v5007 = vadd.f32 %v4807, %v5006
        %v5008 = vpop.f32.mrf.mxu0
        %5009 = vmatprep.mubr.bf16.mxu0 0
        %5010 = vmatmul.mubr.bf16.gmra.mxu0 %v4666
        %v5011 = vpop.f32.mrf.mxu0
        %v5012 = vadd.f32 %v4812, %v5011
        %v5013 = vpop.f32.mrf.mxu0
        %v5014 = vpop.f32.mrf.mxu0
        %v5015 = vadd.f32 %v4815, %v5014
        %v5016 = vpop.f32.mrf.mxu0
        %5017 = vmatprep.mubr.bf16.mxu0 0
        %5018 = vmatmul.mubr.bf16.gmra.mxu0 %v4669
        %v5019 = vpop.f32.mrf.mxu0
        %v5020 = vadd.f32 %v4820, %v5019
        %v5021 = vpop.f32.mrf.mxu0
        %v5022 = vpop.f32.mrf.mxu0
        %v5023 = vadd.f32 %v4823, %v5022
        %v5024 = vpop.f32.mrf.mxu0
        %5025 = vmatprep.mubr.bf16.mxu0 0
        %5026 = vmatmul.mubr.bf16.gmra.mxu0 %v4672
        %v5027 = vpop.f32.mrf.mxu0
        %v5028 = vadd.f32 %v4828, %v5027
        %v5029 = vpop.f32.mrf.mxu0
        %v5030 = vpop.f32.mrf.mxu0
        %v5031 = vadd.f32 %v4831, %v5030
        %v5032 = vpop.f32.mrf.mxu0
        %5033 = vmatprep.mubr.bf16.mxu0 0
        %5034 = vmatmul.mubr.bf16.gmra.mxu0 %v4675
        %v5035 = vpop.f32.mrf.mxu0
        %v5036 = vadd.f32 %v4836, %v5035
        %v5037 = vpop.f32.mrf.mxu0
        %v5038 = vpop.f32.mrf.mxu0
        %v5039 = vadd.f32 %v4839, %v5038
        %v5040 = vpop.f32.mrf.mxu0
        %5041 = vmatprep.mubr.bf16.mxu0 0
        %5042 = vmatmul.mubr.bf16.gmra.mxu0 %v4678
        %v5043 = vpop.f32.mrf.mxu0
        %v5044 = vadd.f32 %v4844, %v5043
        %v5045 = vpop.f32.mrf.mxu0
        %v5046 = vpop.f32.mrf.mxu0
        %v5047 = vadd.f32 %v4847, %v5046
        %v5048 = vpop.f32.mrf.mxu0
        %5049 = vmatprep.mubr.bf16.mxu0 0
        %5050 = vmatmul.mubr.bf16.gmra.mxu0 %v4681
        %v5051 = vpop.f32.mrf.mxu0
        %v5052 = vadd.f32 %v4852, %v5051
        %v5053 = vpop.f32.mrf.mxu0
        %v5054 = vpop.f32.mrf.mxu0
        %v5055 = vadd.f32 %v4855, %v5054
        %v5056 = vpop.f32.mrf.mxu0
        %5057 = vmatprep.mubr.bf16.mxu0 0
        %5058 = vmatmul.mubr.bf16.gmra.mxu0 %v4684
        %v5059 = vpop.f32.mrf.mxu0
        %v5060 = vadd.f32 %v4860, %v5059
        %v5061 = vpop.f32.mrf.mxu0
        %v5062 = vpop.f32.mrf.mxu0
        %v5063 = vadd.f32 %v4863, %v5062
        %v5064 = vpop.f32.mrf.mxu0
        %5065 = vmatprep.mubr.bf16.mxu0 0
        %5066 = vmatmul.mubr.bf16.gmra.mxu0 %v4687
        %v5067 = vpop.f32.mrf.mxu0
        %v5068 = vadd.f32 %v4868, %v5067
        %v5069 = vpop.f32.mrf.mxu0
        %v5070 = vpop.f32.mrf.mxu0
        %v5071 = vadd.f32 %v4871, %v5070
        %v5072 = vpop.f32.mrf.mxu0
        %5073 = vmatprep.mubr.bf16.mxu0 0
        %5074 = vmatmul.mubr.bf16.gmra.mxu0 %v4690
        %v5075 = vpop.f32.mrf.mxu0
        %v5076 = vadd.f32 %v4876, %v5075
        %v5077 = vpop.f32.mrf.mxu0
        %v5078 = vpop.f32.mrf.mxu0
        %v5079 = vadd.f32 %v4879, %v5078
        %v5080 = vpop.f32.mrf.mxu0
        %5081 = vmatprep.mubr.bf16.mxu0 0
        %5082 = vmatmul.mubr.bf16.gmra.mxu0 %v4693
        %v5083 = vpop.f32.mrf.mxu0
        %v5084 = vadd.f32 %v4884, %v5083
        %v5085 = vpop.f32.mrf.mxu0
        %v5086 = vpop.f32.mrf.mxu0
        %v5087 = vadd.f32 %v4887, %v5086
        %v5088 = vpop.f32.mrf.mxu0
        %5089 = vmatprep.mubr.bf16.mxu0 0
        %5090 = vmatmul.mubr.bf16.gmra.mxu0 %v4696
        %v5091 = vpop.f32.mrf.mxu0
        %v5092 = vadd.f32 %v4892, %v5091
        %v5093 = vpop.f32.mrf.mxu0
        %v5094 = vpop.f32.mrf.mxu0
        %v5095 = vadd.f32 %v4895, %v5094
        %v5096 = vpop.f32.mrf.mxu0
        %5097 = vmatprep.mubr.bf16.mxu0 0
        %5098 = vmatmul.mubr.bf16.gmra.mxu0 %v4699
        %v5099 = vpop.f32.mrf.mxu0
        %v5100 = vadd.f32 %v4900, %v5099
        %v5101 = vpop.f32.mrf.mxu0
        %v5102 = vpop.f32.mrf.mxu0
        %v5103 = vpop.f32.mrf.mxu0
        %5104 = vdwg.mxu0
        %v5105 = vpack.c.bf16 %v4943, %v4940
        %v5106 = vpack.c.bf16 %v4951, %v4948
        %v5107 = vpack.c.bf16 %v4959, %v4956
        %v5108 = vpack.c.bf16 %v4967, %v4964
        %v5109 = vpack.c.bf16 %v4975, %v4972
        %v5110 = vpack.c.bf16 %v4983, %v4980
        %v5111 = vpack.c.bf16 %v4991, %v4988
        %v5112 = vpack.c.bf16 %v4999, %v4996
        %v5113 = vpack.c.bf16 %v5007, %v5004
        %v5114 = vpack.c.bf16 %v5015, %v5012
        %v5115 = vpack.c.bf16 %v5023, %v5020
        %v5116 = vpack.c.bf16 %v5031, %v5028
        %v5117 = vpack.c.bf16 %v5039, %v5036
        %v5118 = vpack.c.bf16 %v5047, %v5044
        %v5119 = vpack.c.bf16 %v5055, %v5052
        %v5120 = vpack.c.bf16 %v5063, %v5060
        %v5121 = vpack.c.bf16 %v5071, %v5068
        %v5122 = vpack.c.bf16 %v5079, %v5076
        %v5123 = vpack.c.bf16 %v5087, %v5084
        %v5124 = vpack.c.bf16 %v5095, %v5092
        %v5125 = vpack.c.bf16 %v5100, %v5100
        %v5147 = vunpack.c.l.b16 %v5105
        %v5148 = vunpack.c.h.b16 %v5105
        %v5149 = vunpack.c.l.b16 %v5106
        %v5150 = vunpack.c.h.b16 %v5106
        %v5151 = vunpack.c.l.b16 %v5107
        %v5152 = vunpack.c.h.b16 %v5107
        %v5153 = vunpack.c.l.b16 %v5108
        %v5154 = vunpack.c.h.b16 %v5108
        %v5155 = vunpack.c.l.b16 %v5109
        %v5156 = vunpack.c.h.b16 %v5109
        %v5157 = vunpack.c.l.b16 %v5110
        %v5158 = vunpack.c.h.b16 %v5110
        %v5159 = vunpack.c.l.b16 %v5111
        %v5160 = vunpack.c.h.b16 %v5111
        %v5161 = vunpack.c.l.b16 %v5112
        %v5162 = vunpack.c.h.b16 %v5112
        %v5163 = vunpack.c.l.b16 %v5113
        %v5164 = vunpack.c.h.b16 %v5113
        %v5165 = vunpack.c.l.b16 %v5114
        %v5166 = vunpack.c.h.b16 %v5114
        %v5167 = vunpack.c.l.b16 %v5115
        %v5168 = vunpack.c.h.b16 %v5115
        %v5169 = vunpack.c.l.b16 %v5116
        %v5170 = vunpack.c.h.b16 %v5116
        %v5171 = vunpack.c.l.b16 %v5117
        %v5172 = vunpack.c.h.b16 %v5117
        %v5173 = vunpack.c.l.b16 %v5118
        %v5174 = vunpack.c.h.b16 %v5118
        %v5175 = vunpack.c.l.b16 %v5119
        %v5176 = vunpack.c.h.b16 %v5119
        %v5177 = vunpack.c.l.b16 %v5120
        %v5178 = vunpack.c.h.b16 %v5120
        %v5179 = vunpack.c.l.b16 %v5121
        %v5180 = vunpack.c.h.b16 %v5121
        %v5181 = vunpack.c.l.b16 %v5122
        %v5182 = vunpack.c.h.b16 %v5122
        %v5183 = vunpack.c.l.b16 %v5123
        %v5184 = vunpack.c.h.b16 %v5123
        %v5185 = vunpack.c.l.b16 %v5124
        %v5186 = vunpack.c.h.b16 %v5124
        %v5187 = vunpack.c.l.b16 %v5125
        %v5188 = vpack.c.b16 %v5147, %v5147
        %v5189 = vpack.c.b16 %v5148, %v5148
        %v5190 = vpack.c.b16 %v5149, %v5149
        %v5191 = vpack.c.b16 %v5150, %v5150
        %v5192 = vpack.c.b16 %v5151, %v5151
        %v5193 = vpack.c.b16 %v5152, %v5152
        %v5194 = vpack.c.b16 %v5153, %v5153
        %v5195 = vpack.c.b16 %v5154, %v5154
        %v5196 = vpack.c.b16 %v5155, %v5155
        %v5197 = vpack.c.b16 %v5156, %v5156
        %v5198 = vpack.c.b16 %v5157, %v5157
        %v5199 = vpack.c.b16 %v5158, %v5158
        %v5200 = vpack.c.b16 %v5159, %v5159
        %v5201 = vpack.c.b16 %v5160, %v5160
        %v5202 = vpack.c.b16 %v5161, %v5161
        %v5203 = vpack.c.b16 %v5162, %v5162
        %v5204 = vpack.c.b16 %v5163, %v5163
        %v5205 = vpack.c.b16 %v5164, %v5164
        %v5206 = vpack.c.b16 %v5165, %v5165
        %v5207 = vpack.c.b16 %v5166, %v5166
        %v5208 = vpack.c.b16 %v5167, %v5167
        %v5209 = vpack.c.b16 %v5168, %v5168
        %v5210 = vpack.c.b16 %v5169, %v5169
        %v5211 = vpack.c.b16 %v5170, %v5170
        %v5212 = vpack.c.b16 %v5171, %v5171
        %v5213 = vpack.c.b16 %v5172, %v5172
        %v5214 = vpack.c.b16 %v5173, %v5173
        %v5215 = vpack.c.b16 %v5174, %v5174
        %v5216 = vpack.c.b16 %v5175, %v5175
        %v5217 = vpack.c.b16 %v5176, %v5176
        %v5218 = vpack.c.b16 %v5177, %v5177
        %v5219 = vpack.c.b16 %v5178, %v5178
        %v5220 = vpack.c.b16 %v5179, %v5179
        %v5221 = vpack.c.b16 %v5180, %v5180
        %v5222 = vpack.c.b16 %v5181, %v5181
        %v5223 = vpack.c.b16 %v5182, %v5182
        %v5224 = vpack.c.b16 %v5183, %v5183
        %v5225 = vpack.c.b16 %v5184, %v5184
        %v5226 = vpack.c.b16 %v5185, %v5185
        %v5227 = vpack.c.b16 %v5186, %v5186
        %v5228 = vpack.c.b16 %v5187, %v5187
        %vm5270 = vcmask 60416
        %5271 = vst.msk [vmem:[#allocation3] sm:$0xf] %vm5270, %v5188
        %5272 = vst.msk [vmem:[#allocation3 + $0x4] sm:$0xf] %vm5270, %v5189
        %5273 = vst.msk [vmem:[#allocation3 + $0x8] sm:$0xf] %vm5270, %v5190
        %5274 = vst.msk [vmem:[#allocation3 + $0xc] sm:$0xf] %vm5270, %v5191
        %5275 = vst.msk [vmem:[#allocation3 + $0x10] sm:$0xf] %vm5270, %v5192
        %5276 = vst.msk [vmem:[#allocation3 + $0x14] sm:$0xf] %vm5270, %v5193
        %5277 = vst.msk [vmem:[#allocation3 + $0x18] sm:$0xf] %vm5270, %v5194
        %5278 = vst.msk [vmem:[#allocation3 + $0x1c] sm:$0xf] %vm5270, %v5195
        %5279 = vst.msk [vmem:[#allocation3 + $0x20] sm:$0xf] %vm5270, %v5196
        %5280 = vst.msk [vmem:[#allocation3 + $0x24] sm:$0xf] %vm5270, %v5197
        %5281 = vst.msk [vmem:[#allocation3 + $0x28] sm:$0xf] %vm5270, %v5198
        %5282 = vst.msk [vmem:[#allocation3 + $0x2c] sm:$0xf] %vm5270, %v5199
        %5283 = vst.msk [vmem:[#allocation3 + $0x30] sm:$0xf] %vm5270, %v5200
        %5284 = vst.msk [vmem:[#allocation3 + $0x34] sm:$0xf] %vm5270, %v5201
        %5285 = vst.msk [vmem:[#allocation3 + $0x38] sm:$0xf] %vm5270, %v5202
        %5286 = vst.msk [vmem:[#allocation3 + $0x3c] sm:$0xf] %vm5270, %v5203
        %5287 = vst.msk [vmem:[#allocation3 + $0x40] sm:$0xf] %vm5270, %v5204
        %5288 = vst.msk [vmem:[#allocation3 + $0x44] sm:$0xf] %vm5270, %v5205
        %5289 = vst.msk [vmem:[#allocation3 + $0x48] sm:$0xf] %vm5270, %v5206
        %5290 = vst.msk [vmem:[#allocation3 + $0x4c] sm:$0xf] %vm5270, %v5207
        %5291 = vst.msk [vmem:[#allocation3 + $0x50] sm:$0xf] %vm5270, %v5208
        %5292 = vst.msk [vmem:[#allocation3 + $0x54] sm:$0xf] %vm5270, %v5209
        %5293 = vst.msk [vmem:[#allocation3 + $0x58] sm:$0xf] %vm5270, %v5210
        %5294 = vst.msk [vmem:[#allocation3 + $0x5c] sm:$0xf] %vm5270, %v5211
        %5295 = vst.msk [vmem:[#allocation3 + $0x60] sm:$0xf] %vm5270, %v5212
        %5296 = vst.msk [vmem:[#allocation3 + $0x64] sm:$0xf] %vm5270, %v5213
        %5297 = vst.msk [vmem:[#allocation3 + $0x68] sm:$0xf] %vm5270, %v5214
        %5298 = vst.msk [vmem:[#allocation3 + $0x6c] sm:$0xf] %vm5270, %v5215
        %5299 = vst.msk [vmem:[#allocation3 + $0x70] sm:$0xf] %vm5270, %v5216
        %5300 = vst.msk [vmem:[#allocation3 + $0x74] sm:$0xf] %vm5270, %v5217
        %5301 = vst.msk [vmem:[#allocation3 + $0x78] sm:$0xf] %vm5270, %v5218
        %5302 = vst.msk [vmem:[#allocation3 + $0x7c] sm:$0xf] %vm5270, %v5219
        %5303 = vst.msk [vmem:[#allocation3 + $0x80] sm:$0xf] %vm5270, %v5220
        %5304 = vst.msk [vmem:[#allocation3 + $0x84] sm:$0xf] %vm5270, %v5221
        %5305 = vst.msk [vmem:[#allocation3 + $0x88] sm:$0xf] %vm5270, %v5222
        %5306 = vst.msk [vmem:[#allocation3 + $0x8c] sm:$0xf] %vm5270, %v5223
        %5307 = vst.msk [vmem:[#allocation3 + $0x90] sm:$0xf] %vm5270, %v5224
        %5308 = vst.msk [vmem:[#allocation3 + $0x94] sm:$0xf] %vm5270, %v5225
        %5309 = vst.msk [vmem:[#allocation3 + $0x98] sm:$0xf] %vm5270, %v5226
        %5310 = vst.msk [vmem:[#allocation3 + $0x9c] sm:$0xf] %vm5270, %v5227
        %vm5311 = vcmask 58368
        %5312 = vst.msk [vmem:[#allocation3 + $0xa0] sm:$0x3] %vm5311, %v5228
        %v5313 = vld [vmem:[#allocation3] sm:$0xf]
        %v5314 = vld [vmem:[#allocation3 + $0x4] sm:$0xf]
        %v5315 = vld [vmem:[#allocation3 + $0x8] sm:$0xf]
        %v5316 = vld [vmem:[#allocation3 + $0xc] sm:$0xf]
        %v5317 = vld [vmem:[#allocation3 + $0x10] sm:$0xf]
        %v5318 = vld [vmem:[#allocation3 + $0x14] sm:$0xf]
        %v5319 = vld [vmem:[#allocation3 + $0x18] sm:$0xf]
        %v5320 = vld [vmem:[#allocation3 + $0x1c] sm:$0xf]
        %v5321 = vld [vmem:[#allocation3 + $0x20] sm:$0xf]
        %v5322 = vld [vmem:[#allocation3 + $0x24] sm:$0xf]
        %v5323 = vld [vmem:[#allocation3 + $0x28] sm:$0xf]
        %v5324 = vld [vmem:[#allocation3 + $0x2c] sm:$0xf]
        %v5325 = vld [vmem:[#allocation3 + $0x30] sm:$0xf]
        %v5326 = vld [vmem:[#allocation3 + $0x34] sm:$0xf]
        %v5327 = vld [vmem:[#allocation3 + $0x38] sm:$0xf]
        %v5328 = vld [vmem:[#allocation3 + $0x3c] sm:$0xf]
        %v5329 = vld [vmem:[#allocation3 + $0x40] sm:$0xf]
        %v5330 = vld [vmem:[#allocation3 + $0x44] sm:$0xf]
        %v5331 = vld [vmem:[#allocation3 + $0x48] sm:$0xf]
        %v5332 = vld [vmem:[#allocation3 + $0x4c] sm:$0xf]
        %v5333 = vld [vmem:[#allocation3 + $0x50] sm:$0xf]
        %v5334 = vld [vmem:[#allocation3 + $0x54] sm:$0xf]
        %v5335 = vld [vmem:[#allocation3 + $0x58] sm:$0xf]
        %v5336 = vld [vmem:[#allocation3 + $0x5c] sm:$0xf]
        %v5337 = vld [vmem:[#allocation3 + $0x60] sm:$0xf]
        %v5338 = vld [vmem:[#allocation3 + $0x64] sm:$0xf]
        %v5339 = vld [vmem:[#allocation3 + $0x68] sm:$0xf]
        %v5340 = vld [vmem:[#allocation3 + $0x6c] sm:$0xf]
        %v5341 = vld [vmem:[#allocation3 + $0x70] sm:$0xf]
        %v5342 = vld [vmem:[#allocation3 + $0x74] sm:$0xf]
        %v5343 = vld [vmem:[#allocation3 + $0x78] sm:$0xf]
        %v5344 = vld [vmem:[#allocation3 + $0x7c] sm:$0xf]
        %v5345 = vld [vmem:[#allocation3 + $0x80] sm:$0xf]
        %v5346 = vld [vmem:[#allocation3 + $0x84] sm:$0xf]
        %v5347 = vld [vmem:[#allocation3 + $0x88] sm:$0xf]
        %v5348 = vld [vmem:[#allocation3 + $0x8c] sm:$0x7]
        %v5349 = vld [vmem:[%s4] sm:$0xf]
        %v5350 = vld [vmem:[#allocation3 + $0x8c] sm:$0xf]
        %s5351 = scalar_lea.vmem %s4, 4
        %v5352 = vld [vmem:[%s5351] sm:$0xf]
        %v5389 = vunpack.c.l.b16 %v5313
        %v5390 = vunpack.c.l.b16 %v5314
        %v5391 = vunpack.c.l.b16 %v5315
        %v5392 = vunpack.c.l.b16 %v5316
        %v5393 = vunpack.c.l.b16 %v5317
        %v5394 = vunpack.c.l.b16 %v5318
        %v5395 = vunpack.c.l.b16 %v5319
        %v5396 = vunpack.c.l.b16 %v5320
        %v5397 = vunpack.c.l.b16 %v5321
        %v5398 = vunpack.c.l.b16 %v5322
        %v5399 = vunpack.c.l.b16 %v5323
        %v5400 = vunpack.c.l.b16 %v5324
        %v5401 = vunpack.c.l.b16 %v5325
        %v5402 = vunpack.c.l.b16 %v5326
        %v5403 = vunpack.c.l.b16 %v5327
        %v5404 = vunpack.c.l.b16 %v5328
        %v5405 = vunpack.c.l.b16 %v5329
        %v5406 = vunpack.c.l.b16 %v5330
        %v5407 = vunpack.c.l.b16 %v5331
        %v5408 = vunpack.c.l.b16 %v5332
        %v5409 = vunpack.c.l.b16 %v5333
        %v5410 = vunpack.c.l.b16 %v5334
        %v5411 = vunpack.c.l.b16 %v5335
        %v5412 = vunpack.c.l.b16 %v5336
        %v5413 = vunpack.c.l.b16 %v5337
        %v5414 = vunpack.c.l.b16 %v5338
        %v5415 = vunpack.c.l.b16 %v5339
        %v5416 = vunpack.c.l.b16 %v5340
        %v5417 = vunpack.c.l.b16 %v5341
        %v5418 = vunpack.c.l.b16 %v5342
        %v5419 = vunpack.c.l.b16 %v5343
        %v5420 = vunpack.c.l.b16 %v5344
        %v5421 = vunpack.c.l.b16 %v5345
        %v5422 = vunpack.c.l.b16 %v5346
        %v5423 = vunpack.c.l.b16 %v5347
        %v5424 = vunpack.c.l.b16 %v5350
        %v5425 = vpack.c.b16 %v5390, %v5389
        %v5426 = vpack.c.b16 %v5392, %v5391
        %v5427 = vpack.c.b16 %v5394, %v5393
        %v5428 = vpack.c.b16 %v5396, %v5395
        %v5429 = vpack.c.b16 %v5398, %v5397
        %v5430 = vpack.c.b16 %v5400, %v5399
        %v5431 = vpack.c.b16 %v5402, %v5401
        %v5432 = vpack.c.b16 %v5404, %v5403
        %v5433 = vpack.c.b16 %v5406, %v5405
        %v5434 = vpack.c.b16 %v5408, %v5407
        %v5435 = vpack.c.b16 %v5410, %v5409
        %v5436 = vpack.c.b16 %v5412, %v5411
        %v5437 = vpack.c.b16 %v5414, %v5413
        %v5438 = vpack.c.b16 %v5416, %v5415
        %v5439 = vpack.c.b16 %v5418, %v5417
        %v5440 = vpack.c.b16 %v5420, %v5419
        %v5441 = vpack.c.b16 %v5422, %v5421
        %v5442 = vpack.c.b16 %v5424, %v5423
        %v5444 = vshrl.u32 %v5425, 16
        %v5446 = vshll.u32 %v5425, 16
        %v5448 = vrot.slane %v5446, 1
        %v5449 = vor.u32 %v5444, %v5448
        %v5451 = vshll.u32 %v5426, 16
        %v5453 = vrot.slane %v5451, 1
        %v5454 = vsel %vm753, %v5449, %v5453
        %v5455 = vshrl.u32 %v5426, 16
        %v5457 = vor.u32 %v5455, %v5453
        %v5459 = vshll.u32 %v5427, 16
        %v5461 = vrot.slane %v5459, 1
        %v5462 = vsel %vm753, %v5457, %v5461
        %v5463 = vshrl.u32 %v5427, 16
        %v5465 = vor.u32 %v5463, %v5461
        %v5467 = vshll.u32 %v5428, 16
        %v5469 = vrot.slane %v5467, 1
        %v5470 = vsel %vm753, %v5465, %v5469
        %v5471 = vshrl.u32 %v5428, 16
        %v5473 = vor.u32 %v5471, %v5469
        %v5475 = vshll.u32 %v5429, 16
        %v5477 = vrot.slane %v5475, 1
        %v5478 = vsel %vm753, %v5473, %v5477
        %v5479 = vshrl.u32 %v5429, 16
        %v5481 = vor.u32 %v5479, %v5477
        %v5483 = vshll.u32 %v5430, 16
        %v5485 = vrot.slane %v5483, 1
        %v5486 = vsel %vm753, %v5481, %v5485
        %v5487 = vshrl.u32 %v5430, 16
        %v5489 = vor.u32 %v5487, %v5485
        %v5491 = vshll.u32 %v5431, 16
        %v5493 = vrot.slane %v5491, 1
        %v5494 = vsel %vm753, %v5489, %v5493
        %v5495 = vshrl.u32 %v5431, 16
        %v5497 = vor.u32 %v5495, %v5493
        %v5499 = vshll.u32 %v5432, 16
        %v5501 = vrot.slane %v5499, 1
        %v5502 = vsel %vm753, %v5497, %v5501
        %v5503 = vshrl.u32 %v5432, 16
        %v5505 = vor.u32 %v5503, %v5501
        %v5507 = vshll.u32 %v5433, 16
        %v5509 = vrot.slane %v5507, 1
        %v5510 = vsel %vm753, %v5505, %v5509
        %v5511 = vshrl.u32 %v5433, 16
        %v5513 = vor.u32 %v5511, %v5509
        %v5515 = vshll.u32 %v5434, 16
        %v5517 = vrot.slane %v5515, 1
        %v5518 = vsel %vm753, %v5513, %v5517
        %v5519 = vshrl.u32 %v5434, 16
        %v5521 = vor.u32 %v5519, %v5517
        %v5523 = vshll.u32 %v5435, 16
        %v5525 = vrot.slane %v5523, 1
        %v5526 = vsel %vm753, %v5521, %v5525
        %v5527 = vshrl.u32 %v5435, 16
        %v5529 = vor.u32 %v5527, %v5525
        %v5531 = vshll.u32 %v5436, 16
        %v5533 = vrot.slane %v5531, 1
        %v5534 = vsel %vm753, %v5529, %v5533
        %v5535 = vshrl.u32 %v5436, 16
        %v5537 = vor.u32 %v5535, %v5533
        %v5539 = vshll.u32 %v5437, 16
        %v5541 = vrot.slane %v5539, 1
        %v5542 = vsel %vm753, %v5537, %v5541
        %v5543 = vshrl.u32 %v5437, 16
        %v5545 = vor.u32 %v5543, %v5541
        %v5547 = vshll.u32 %v5438, 16
        %v5549 = vrot.slane %v5547, 1
        %v5550 = vsel %vm753, %v5545, %v5549
        %v5551 = vshrl.u32 %v5438, 16
        %v5553 = vor.u32 %v5551, %v5549
        %v5555 = vshll.u32 %v5439, 16
        %v5557 = vrot.slane %v5555, 1
        %v5558 = vsel %vm753, %v5553, %v5557
        %v5559 = vshrl.u32 %v5439, 16
        %v5561 = vor.u32 %v5559, %v5557
        %v5563 = vshll.u32 %v5440, 16
        %v5565 = vrot.slane %v5563, 1
        %v5566 = vsel %vm753, %v5561, %v5565
        %v5567 = vshrl.u32 %v5440, 16
        %v5569 = vor.u32 %v5567, %v5565
        %v5571 = vshll.u32 %v5441, 16
        %v5573 = vrot.slane %v5571, 1
        %v5574 = vsel %vm753, %v5569, %v5573
        %v5575 = vshrl.u32 %v5441, 16
        %v5577 = vor.u32 %v5575, %v5573
        %v5579 = vshll.u32 %v5442, 16
        %v5581 = vrot.slane %v5579, 1
        %v5582 = vsel %vm753, %v5577, %v5581
        %v5583 = vshrl.u32 %v5442, 16
        %v5585 = vor.u32 %v5583, %v5581
        %vm5586 = vcmask 64512
        %v5588 = vsel %vm5586, %v5454, 0
        %v5591 = vsel %vm5586, %v5462, 0
        %v5594 = vsel %vm5586, %v5470, 0
        %v5597 = vsel %vm5586, %v5478, 0
        %v5600 = vsel %vm5586, %v5486, 0
        %v5603 = vsel %vm5586, %v5494, 0
        %v5606 = vsel %vm5586, %v5502, 0
        %v5609 = vsel %vm5586, %v5510, 0
        %v5612 = vsel %vm5586, %v5518, 0
        %v5615 = vsel %vm5586, %v5526, 0
        %v5618 = vsel %vm5586, %v5534, 0
        %v5621 = vsel %vm5586, %v5542, 0
        %v5624 = vsel %vm5586, %v5550, 0
        %v5627 = vsel %vm5586, %v5558, 0
        %v5630 = vsel %vm5586, %v5566, 0
        %v5633 = vsel %vm5586, %v5574, 0
        %v5636 = vsel %vm5586, %v5582, 0
        %v5639 = vsel %vm5586, %v5585, 0
        %vm5641 = vcmask 1043456
        %v5643 = vsel %vm5641, %v5352, 0
        %5645 = vmatprep.subr.bf16.mxu0 0
        %5646 = vmatpush1.bf16.msra.mxu0 0
        %5647 = vmatprep.subr.bf16.mxu0 0
        %5648 = vmatpush1.bf16.msra.mxu0 0
        %5649 = vmatprep.subr.bf16.mxu0 0
        %5650 = vmatpush1.bf16.msra.mxu0 0
        %5651 = vmatprep.subr.bf16.mxu0 0
        %5652 = vmatpush1.bf16.msra.mxu0 0
        %5653 = vmatprep.subr.bf16.mxu0 0
        %5654 = vmatpush1.bf16.msra.mxu0 0
        %5655 = vmatprep.subr.bf16.mxu0 0
        %5656 = vmatpush1.bf16.msra.mxu0 0
        %5657 = vmatprep.subr.bf16.mxu0 0
        %5658 = vmatpush1.bf16.msra.mxu0 0
        %5659 = vmatprep.subr.bf16.mxu0 0
        %5660 = vmatpush1.bf16.msra.mxu0 %v5643
        %5661 = vmatprep.subr.bf16.mxu0 0
        %5662 = vmatpush2.bf16.msra.mxu0 0
        %5663 = vmatprep.subr.bf16.mxu0 0
        %5664 = vmatpush2.bf16.msra.mxu0 0
        %5665 = vmatprep.subr.bf16.mxu0 0
        %5666 = vmatpush2.bf16.msra.mxu0 0
        %5667 = vmatprep.subr.bf16.mxu0 0
        %5668 = vmatpush2.bf16.msra.mxu0 0
        %5669 = vmatprep.subr.bf16.mxu0 0
        %5670 = vmatpush2.bf16.msra.mxu0 0
        %5671 = vmatprep.subr.bf16.mxu0 0
        %5672 = vmatpush2.bf16.msra.mxu0 0
        %5673 = vmatprep.subr.bf16.mxu0 0
        %5674 = vmatpush2.bf16.msra.mxu0 0
        %5675 = vmatprep.subr.bf16.mxu0 0
        %5676 = vmatpush2.bf16.msra.mxu0 0
        %5677 = vmatprep.mubr.bf16.mxu0 0
        %5678 = vmatmul.mubr.bf16.gmra.mxu0 %v5588
        %v5679 = vpop.f32.mrf.mxu0
        %v5680 = vadd.f32 0.0, %v5679
        %v5681 = vpop.f32.mrf.mxu0
        %v5682 = vpop.f32.mrf.mxu0
        %v5683 = vadd.f32 0.0, %v5682
        %v5684 = vpop.f32.mrf.mxu0
        %5685 = vmatprep.mubr.bf16.mxu0 0
        %5686 = vmatmul.mubr.bf16.gmra.mxu0 %v5591
        %v5687 = vpop.f32.mrf.mxu0
        %v5688 = vadd.f32 0.0, %v5687
        %v5689 = vpop.f32.mrf.mxu0
        %v5690 = vpop.f32.mrf.mxu0
        %v5691 = vadd.f32 0.0, %v5690
        %v5692 = vpop.f32.mrf.mxu0
        %5693 = vmatprep.mubr.bf16.mxu0 0
        %5694 = vmatmul.mubr.bf16.gmra.mxu0 %v5594
        %v5695 = vpop.f32.mrf.mxu0
        %v5696 = vadd.f32 0.0, %v5695
        %v5697 = vpop.f32.mrf.mxu0
        %v5698 = vpop.f32.mrf.mxu0
        %v5699 = vadd.f32 0.0, %v5698
        %v5700 = vpop.f32.mrf.mxu0
        %5701 = vmatprep.mubr.bf16.mxu0 0
        %5702 = vmatmul.mubr.bf16.gmra.mxu0 %v5597
        %v5703 = vpop.f32.mrf.mxu0
        %v5704 = vadd.f32 0.0, %v5703
        %v5705 = vpop.f32.mrf.mxu0
        %v5706 = vpop.f32.mrf.mxu0
        %v5707 = vadd.f32 0.0, %v5706
        %v5708 = vpop.f32.mrf.mxu0
        %5709 = vmatprep.mubr.bf16.mxu0 0
        %5710 = vmatmul.mubr.bf16.gmra.mxu0 %v5600
        %v5711 = vpop.f32.mrf.mxu0
        %v5712 = vadd.f32 0.0, %v5711
        %v5713 = vpop.f32.mrf.mxu0
        %v5714 = vpop.f32.mrf.mxu0
        %v5715 = vadd.f32 0.0, %v5714
        %v5716 = vpop.f32.mrf.mxu0
        %5717 = vmatprep.mubr.bf16.mxu0 0
        %5718 = vmatmul.mubr.bf16.gmra.mxu0 %v5603
        %v5719 = vpop.f32.mrf.mxu0
        %v5720 = vadd.f32 0.0, %v5719
        %v5721 = vpop.f32.mrf.mxu0
        %v5722 = vpop.f32.mrf.mxu0
        %v5723 = vadd.f32 0.0, %v5722
        %v5724 = vpop.f32.mrf.mxu0
        %5725 = vmatprep.mubr.bf16.mxu0 0
        %5726 = vmatmul.mubr.bf16.gmra.mxu0 %v5606
        %v5727 = vpop.f32.mrf.mxu0
        %v5728 = vadd.f32 0.0, %v5727
        %v5729 = vpop.f32.mrf.mxu0
        %v5730 = vpop.f32.mrf.mxu0
        %v5731 = vadd.f32 0.0, %v5730
        %v5732 = vpop.f32.mrf.mxu0
        %5733 = vmatprep.mubr.bf16.mxu0 0
        %5734 = vmatmul.mubr.bf16.gmra.mxu0 %v5609
        %v5735 = vpop.f32.mrf.mxu0
        %v5736 = vadd.f32 0.0, %v5735
        %v5737 = vpop.f32.mrf.mxu0
        %v5738 = vpop.f32.mrf.mxu0
        %v5739 = vadd.f32 0.0, %v5738
        %v5740 = vpop.f32.mrf.mxu0
        %5741 = vmatprep.mubr.bf16.mxu0 0
        %5742 = vmatmul.mubr.bf16.gmra.mxu0 %v5612
        %v5743 = vpop.f32.mrf.mxu0
        %v5744 = vadd.f32 0.0, %v5743
        %v5745 = vpop.f32.mrf.mxu0
        %v5746 = vpop.f32.mrf.mxu0
        %v5747 = vadd.f32 0.0, %v5746
        %v5748 = vpop.f32.mrf.mxu0
        %5749 = vmatprep.mubr.bf16.mxu0 0
        %5750 = vmatmul.mubr.bf16.gmra.mxu0 %v5615
        %v5751 = vpop.f32.mrf.mxu0
        %v5752 = vadd.f32 0.0, %v5751
        %v5753 = vpop.f32.mrf.mxu0
        %v5754 = vpop.f32.mrf.mxu0
        %v5755 = vadd.f32 0.0, %v5754
        %v5756 = vpop.f32.mrf.mxu0
        %5757 = vmatprep.mubr.bf16.mxu0 0
        %5758 = vmatmul.mubr.bf16.gmra.mxu0 %v5618
        %v5759 = vpop.f32.mrf.mxu0
        %v5760 = vadd.f32 0.0, %v5759
        %v5761 = vpop.f32.mrf.mxu0
        %v5762 = vpop.f32.mrf.mxu0
        %v5763 = vadd.f32 0.0, %v5762
        %v5764 = vpop.f32.mrf.mxu0
        %5765 = vmatprep.mubr.bf16.mxu0 0
        %5766 = vmatmul.mubr.bf16.gmra.mxu0 %v5621
        %v5767 = vpop.f32.mrf.mxu0
        %v5768 = vadd.f32 0.0, %v5767
        %v5769 = vpop.f32.mrf.mxu0
        %v5770 = vpop.f32.mrf.mxu0
        %v5771 = vadd.f32 0.0, %v5770
        %v5772 = vpop.f32.mrf.mxu0
        %5773 = vmatprep.mubr.bf16.mxu0 0
        %5774 = vmatmul.mubr.bf16.gmra.mxu0 %v5624
        %v5775 = vpop.f32.mrf.mxu0
        %v5776 = vadd.f32 0.0, %v5775
        %v5777 = vpop.f32.mrf.mxu0
        %v5778 = vpop.f32.mrf.mxu0
        %v5779 = vadd.f32 0.0, %v5778
        %v5780 = vpop.f32.mrf.mxu0
        %5781 = vmatprep.mubr.bf16.mxu0 0
        %5782 = vmatmul.mubr.bf16.gmra.mxu0 %v5627
        %v5783 = vpop.f32.mrf.mxu0
        %v5784 = vadd.f32 0.0, %v5783
        %v5785 = vpop.f32.mrf.mxu0
        %v5786 = vpop.f32.mrf.mxu0
        %v5787 = vadd.f32 0.0, %v5786
        %v5788 = vpop.f32.mrf.mxu0
        %5789 = vmatprep.mubr.bf16.mxu0 0
        %5790 = vmatmul.mubr.bf16.gmra.mxu0 %v5630
        %v5791 = vpop.f32.mrf.mxu0
        %v5792 = vadd.f32 0.0, %v5791
        %v5793 = vpop.f32.mrf.mxu0
        %v5794 = vpop.f32.mrf.mxu0
        %v5795 = vadd.f32 0.0, %v5794
        %v5796 = vpop.f32.mrf.mxu0
        %5797 = vmatprep.mubr.bf16.mxu0 0
        %5798 = vmatmul.mubr.bf16.gmra.mxu0 %v5633
        %v5799 = vpop.f32.mrf.mxu0
        %v5800 = vadd.f32 0.0, %v5799
        %v5801 = vpop.f32.mrf.mxu0
        %v5802 = vpop.f32.mrf.mxu0
        %v5803 = vadd.f32 0.0, %v5802
        %v5804 = vpop.f32.mrf.mxu0
        %5805 = vmatprep.mubr.bf16.mxu0 0
        %5806 = vmatmul.mubr.bf16.gmra.mxu0 %v5636
        %v5807 = vpop.f32.mrf.mxu0
        %v5808 = vadd.f32 0.0, %v5807
        %v5809 = vpop.f32.mrf.mxu0
        %v5810 = vpop.f32.mrf.mxu0
        %v5811 = vadd.f32 0.0, %v5810
        %v5812 = vpop.f32.mrf.mxu0
        %5813 = vmatprep.mubr.bf16.mxu0 0
        %5814 = vmatmul.mubr.bf16.gmra.mxu0 %v5639
        %v5815 = vpop.f32.mrf.mxu0
        %v5816 = vadd.f32 0.0, %v5815
        %v5817 = vpop.f32.mrf.mxu0
        %v5818 = vpop.f32.mrf.mxu0
        %v5819 = vadd.f32 0.0, %v5818
        %v5820 = vpop.f32.mrf.mxu0
        %5821 = vdwg.mxu0
        %v5823 = vunpack.c.l.b16 %v5348
        %v5824 = vpack.c.b16 %v5823, %v5423
        %v5825 = vsel %vm5586, %v5425, 0
        %v5827 = vsel %vm5586, %v5426, 0
        %v5829 = vsel %vm5586, %v5427, 0
        %v5831 = vsel %vm5586, %v5428, 0
        %v5833 = vsel %vm5586, %v5429, 0
        %v5835 = vsel %vm5586, %v5430, 0
        %v5837 = vsel %vm5586, %v5431, 0
        %v5839 = vsel %vm5586, %v5432, 0
        %v5841 = vsel %vm5586, %v5433, 0
        %v5843 = vsel %vm5586, %v5434, 0
        %v5845 = vsel %vm5586, %v5435, 0
        %v5847 = vsel %vm5586, %v5436, 0
        %v5849 = vsel %vm5586, %v5437, 0
        %v5851 = vsel %vm5586, %v5438, 0
        %v5853 = vsel %vm5586, %v5439, 0
        %v5855 = vsel %vm5586, %v5440, 0
        %v5857 = vsel %vm5586, %v5441, 0
        %v5860 = vsel %vm5586, %v5824, 0
        %v5863 = vsel %vm5641, %v5349, 0
        %5865 = vmatprep.subr.bf16.mxu0 0
        %5866 = vmatpush1.bf16.msra.mxu0 0
        %5867 = vmatprep.subr.bf16.mxu0 0
        %5868 = vmatpush1.bf16.msra.mxu0 0
        %5869 = vmatprep.subr.bf16.mxu0 0
        %5870 = vmatpush1.bf16.msra.mxu0 0
        %5871 = vmatprep.subr.bf16.mxu0 0
        %5872 = vmatpush1.bf16.msra.mxu0 0
        %5873 = vmatprep.subr.bf16.mxu0 0
        %5874 = vmatpush1.bf16.msra.mxu0 0
        %5875 = vmatprep.subr.bf16.mxu0 0
        %5876 = vmatpush1.bf16.msra.mxu0 0
        %5877 = vmatprep.subr.bf16.mxu0 0
        %5878 = vmatpush1.bf16.msra.mxu0 0
        %5879 = vmatprep.subr.bf16.mxu0 0
        %5880 = vmatpush1.bf16.msra.mxu0 %v5863
        %5881 = vmatprep.subr.bf16.mxu0 0
        %5882 = vmatpush2.bf16.msra.mxu0 0
        %5883 = vmatprep.subr.bf16.mxu0 0
        %5884 = vmatpush2.bf16.msra.mxu0 0
        %5885 = vmatprep.subr.bf16.mxu0 0
        %5886 = vmatpush2.bf16.msra.mxu0 0
        %5887 = vmatprep.subr.bf16.mxu0 0
        %5888 = vmatpush2.bf16.msra.mxu0 0
        %5889 = vmatprep.subr.bf16.mxu0 0
        %5890 = vmatpush2.bf16.msra.mxu0 0
        %5891 = vmatprep.subr.bf16.mxu0 0
        %5892 = vmatpush2.bf16.msra.mxu0 0
        %5893 = vmatprep.subr.bf16.mxu0 0
        %5894 = vmatpush2.bf16.msra.mxu0 0
        %5895 = vmatprep.subr.bf16.mxu0 0
        %5896 = vmatpush2.bf16.msra.mxu0 0
        %5897 = vmatprep.mubr.bf16.mxu0 0
        %5898 = vmatmul.mubr.bf16.gmra.mxu0 %v5825
        %v5899 = vpop.f32.mrf.mxu0
        %v5900 = vadd.f32 %v5680, %v5899
        %v5901 = vpop.f32.mrf.mxu0
        %v5902 = vpop.f32.mrf.mxu0
        %v5903 = vadd.f32 %v5683, %v5902
        %v5904 = vpop.f32.mrf.mxu0
        %5905 = vmatprep.mubr.bf16.mxu0 0
        %5906 = vmatmul.mubr.bf16.gmra.mxu0 %v5827
        %v5907 = vpop.f32.mrf.mxu0
        %v5908 = vadd.f32 %v5688, %v5907
        %v5909 = vpop.f32.mrf.mxu0
        %v5910 = vpop.f32.mrf.mxu0
        %v5911 = vadd.f32 %v5691, %v5910
        %v5912 = vpop.f32.mrf.mxu0
        %5913 = vmatprep.mubr.bf16.mxu0 0
        %5914 = vmatmul.mubr.bf16.gmra.mxu0 %v5829
        %v5915 = vpop.f32.mrf.mxu0
        %v5916 = vadd.f32 %v5696, %v5915
        %v5917 = vpop.f32.mrf.mxu0
        %v5918 = vpop.f32.mrf.mxu0
        %v5919 = vadd.f32 %v5699, %v5918
        %v5920 = vpop.f32.mrf.mxu0
        %5921 = vmatprep.mubr.bf16.mxu0 0
        %5922 = vmatmul.mubr.bf16.gmra.mxu0 %v5831
        %v5923 = vpop.f32.mrf.mxu0
        %v5924 = vadd.f32 %v5704, %v5923
        %v5925 = vpop.f32.mrf.mxu0
        %v5926 = vpop.f32.mrf.mxu0
        %v5927 = vadd.f32 %v5707, %v5926
        %v5928 = vpop.f32.mrf.mxu0
        %5929 = vmatprep.mubr.bf16.mxu0 0
        %5930 = vmatmul.mubr.bf16.gmra.mxu0 %v5833
        %v5931 = vpop.f32.mrf.mxu0
        %v5932 = vadd.f32 %v5712, %v5931
        %v5933 = vpop.f32.mrf.mxu0
        %v5934 = vpop.f32.mrf.mxu0
        %v5935 = vadd.f32 %v5715, %v5934
        %v5936 = vpop.f32.mrf.mxu0
        %5937 = vmatprep.mubr.bf16.mxu0 0
        %5938 = vmatmul.mubr.bf16.gmra.mxu0 %v5835
        %v5939 = vpop.f32.mrf.mxu0
        %v5940 = vadd.f32 %v5720, %v5939
        %v5941 = vpop.f32.mrf.mxu0
        %v5942 = vpop.f32.mrf.mxu0
        %v5943 = vadd.f32 %v5723, %v5942
        %v5944 = vpop.f32.mrf.mxu0
        %5945 = vmatprep.mubr.bf16.mxu0 0
        %5946 = vmatmul.mubr.bf16.gmra.mxu0 %v5837
        %v5947 = vpop.f32.mrf.mxu0
        %v5948 = vadd.f32 %v5728, %v5947
        %v5949 = vpop.f32.mrf.mxu0
        %v5950 = vpop.f32.mrf.mxu0
        %v5951 = vadd.f32 %v5731, %v5950
        %v5952 = vpop.f32.mrf.mxu0
        %5953 = vmatprep.mubr.bf16.mxu0 0
        %5954 = vmatmul.mubr.bf16.gmra.mxu0 %v5839
        %v5955 = vpop.f32.mrf.mxu0
        %v5956 = vadd.f32 %v5736, %v5955
        %v5957 = vpop.f32.mrf.mxu0
        %v5958 = vpop.f32.mrf.mxu0
        %v5959 = vadd.f32 %v5739, %v5958
        %v5960 = vpop.f32.mrf.mxu0
        %5961 = vmatprep.mubr.bf16.mxu0 0
        %5962 = vmatmul.mubr.bf16.gmra.mxu0 %v5841
        %v5963 = vpop.f32.mrf.mxu0
        %v5964 = vadd.f32 %v5744, %v5963
        %v5965 = vpop.f32.mrf.mxu0
        %v5966 = vpop.f32.mrf.mxu0
        %v5967 = vadd.f32 %v5747, %v5966
        %v5968 = vpop.f32.mrf.mxu0
        %5969 = vmatprep.mubr.bf16.mxu0 0
        %5970 = vmatmul.mubr.bf16.gmra.mxu0 %v5843
        %v5971 = vpop.f32.mrf.mxu0
        %v5972 = vadd.f32 %v5752, %v5971
        %v5973 = vpop.f32.mrf.mxu0
        %v5974 = vpop.f32.mrf.mxu0
        %v5975 = vadd.f32 %v5755, %v5974
        %v5976 = vpop.f32.mrf.mxu0
        %5977 = vmatprep.mubr.bf16.mxu0 0
        %5978 = vmatmul.mubr.bf16.gmra.mxu0 %v5845
        %v5979 = vpop.f32.mrf.mxu0
        %v5980 = vadd.f32 %v5760, %v5979
        %v5981 = vpop.f32.mrf.mxu0
        %v5982 = vpop.f32.mrf.mxu0
        %v5983 = vadd.f32 %v5763, %v5982
        %v5984 = vpop.f32.mrf.mxu0
        %5985 = vmatprep.mubr.bf16.mxu0 0
        %5986 = vmatmul.mubr.bf16.gmra.mxu0 %v5847
        %v5987 = vpop.f32.mrf.mxu0
        %v5988 = vadd.f32 %v5768, %v5987
        %v5989 = vpop.f32.mrf.mxu0
        %v5990 = vpop.f32.mrf.mxu0
        %v5991 = vadd.f32 %v5771, %v5990
        %v5992 = vpop.f32.mrf.mxu0
        %5993 = vmatprep.mubr.bf16.mxu0 0
        %5994 = vmatmul.mubr.bf16.gmra.mxu0 %v5849
        %v5995 = vpop.f32.mrf.mxu0
        %v5996 = vadd.f32 %v5776, %v5995
        %v5997 = vpop.f32.mrf.mxu0
        %v5998 = vpop.f32.mrf.mxu0
        %v5999 = vadd.f32 %v5779, %v5998
        %v6000 = vpop.f32.mrf.mxu0
        %6001 = vmatprep.mubr.bf16.mxu0 0
        %6002 = vmatmul.mubr.bf16.gmra.mxu0 %v5851
        %v6003 = vpop.f32.mrf.mxu0
        %v6004 = vadd.f32 %v5784, %v6003
        %v6005 = vpop.f32.mrf.mxu0
        %v6006 = vpop.f32.mrf.mxu0
        %v6007 = vadd.f32 %v5787, %v6006
        %v6008 = vpop.f32.mrf.mxu0
        %6009 = vmatprep.mubr.bf16.mxu0 0
        %6010 = vmatmul.mubr.bf16.gmra.mxu0 %v5853
        %v6011 = vpop.f32.mrf.mxu0
        %v6012 = vadd.f32 %v5792, %v6011
        %v6013 = vpop.f32.mrf.mxu0
        %v6014 = vpop.f32.mrf.mxu0
        %v6015 = vadd.f32 %v5795, %v6014
        %v6016 = vpop.f32.mrf.mxu0
        %6017 = vmatprep.mubr.bf16.mxu0 0
        %6018 = vmatmul.mubr.bf16.gmra.mxu0 %v5855
        %v6019 = vpop.f32.mrf.mxu0
        %v6020 = vadd.f32 %v5800, %v6019
        %v6021 = vpop.f32.mrf.mxu0
        %v6022 = vpop.f32.mrf.mxu0
        %v6023 = vadd.f32 %v5803, %v6022
        %v6024 = vpop.f32.mrf.mxu0
        %6025 = vmatprep.mubr.bf16.mxu0 0
        %6026 = vmatmul.mubr.bf16.gmra.mxu0 %v5857
        %v6027 = vpop.f32.mrf.mxu0
        %v6028 = vadd.f32 %v5808, %v6027
        %v6029 = vpop.f32.mrf.mxu0
        %v6030 = vpop.f32.mrf.mxu0
        %v6031 = vadd.f32 %v5811, %v6030
        %v6032 = vpop.f32.mrf.mxu0
        %6033 = vmatprep.mubr.bf16.mxu0 0
        %6034 = vmatmul.mubr.bf16.gmra.mxu0 %v5860
        %v6035 = vpop.f32.mrf.mxu0
        %v6036 = vadd.f32 %v5816, %v6035
        %v6037 = vpop.f32.mrf.mxu0
        %v6038 = vpop.f32.mrf.mxu0
        %v6039 = vadd.f32 %v5819, %v6038
        %v6040 = vpop.f32.mrf.mxu0
        %6041 = vdwg.mxu0
        %v6042 = vld [vmem:[#allocation3] sm:$0xe]
        %s6043 = scalar_lea.vmem %s4, 8
        %v6044 = vld [vmem:[%s6043] sm:$0xf]
        %v6046 = vunpack.c.l.b16 %v6042
        %v6047 = vpack.c.b16 %v5390, %v6046
        %v6048 = vrot.slane %v6047, 1
        %v6049 = vrot.slane %v5426, 1
        %v6050 = vsel %vm1362, %v6048, %v6049
        %v6051 = vrot.slane %v5427, 1
        %v6052 = vsel %vm1362, %v6049, %v6051
        %v6053 = vrot.slane %v5428, 1
        %v6054 = vsel %vm1362, %v6051, %v6053
        %v6055 = vrot.slane %v5429, 1
        %v6056 = vsel %vm1362, %v6053, %v6055
        %v6057 = vrot.slane %v5430, 1
        %v6058 = vsel %vm1362, %v6055, %v6057
        %v6059 = vrot.slane %v5431, 1
        %v6060 = vsel %vm1362, %v6057, %v6059
        %v6061 = vrot.slane %v5432, 1
        %v6062 = vsel %vm1362, %v6059, %v6061
        %v6063 = vrot.slane %v5433, 1
        %v6064 = vsel %vm1362, %v6061, %v6063
        %v6065 = vrot.slane %v5434, 1
        %v6066 = vsel %vm1362, %v6063, %v6065
        %v6067 = vrot.slane %v5435, 1
        %v6068 = vsel %vm1362, %v6065, %v6067
        %v6069 = vrot.slane %v5436, 1
        %v6070 = vsel %vm1362, %v6067, %v6069
        %v6071 = vrot.slane %v5437, 1
        %v6072 = vsel %vm1362, %v6069, %v6071
        %v6073 = vrot.slane %v5438, 1
        %v6074 = vsel %vm1362, %v6071, %v6073
        %v6075 = vrot.slane %v5439, 1
        %v6076 = vsel %vm1362, %v6073, %v6075
        %v6077 = vrot.slane %v5440, 1
        %v6078 = vsel %vm1362, %v6075, %v6077
        %v6079 = vrot.slane %v5441, 1
        %v6080 = vsel %vm1362, %v6077, %v6079
        %v6081 = vrot.slane %v5442, 1
        %v6082 = vsel %vm1362, %v6079, %v6081
        %v6084 = vsel %vm5586, %v6050, 0
        %v6087 = vsel %vm5586, %v6052, 0
        %v6090 = vsel %vm5586, %v6054, 0
        %v6093 = vsel %vm5586, %v6056, 0
        %v6096 = vsel %vm5586, %v6058, 0
        %v6099 = vsel %vm5586, %v6060, 0
        %v6102 = vsel %vm5586, %v6062, 0
        %v6105 = vsel %vm5586, %v6064, 0
        %v6108 = vsel %vm5586, %v6066, 0
        %v6111 = vsel %vm5586, %v6068, 0
        %v6114 = vsel %vm5586, %v6070, 0
        %v6117 = vsel %vm5586, %v6072, 0
        %v6120 = vsel %vm5586, %v6074, 0
        %v6123 = vsel %vm5586, %v6076, 0
        %v6126 = vsel %vm5586, %v6078, 0
        %v6129 = vsel %vm5586, %v6080, 0
        %v6132 = vsel %vm5586, %v6082, 0
        %v6135 = vsel %vm5586, %v6081, 0
        %v6138 = vsel %vm5641, %v6044, 0
        %6140 = vmatprep.subr.bf16.mxu0 0
        %6141 = vmatpush1.bf16.msra.mxu0 0
        %6142 = vmatprep.subr.bf16.mxu0 0
        %6143 = vmatpush1.bf16.msra.mxu0 0
        %6144 = vmatprep.subr.bf16.mxu0 0
        %6145 = vmatpush1.bf16.msra.mxu0 0
        %6146 = vmatprep.subr.bf16.mxu0 0
        %6147 = vmatpush1.bf16.msra.mxu0 0
        %6148 = vmatprep.subr.bf16.mxu0 0
        %6149 = vmatpush1.bf16.msra.mxu0 0
        %6150 = vmatprep.subr.bf16.mxu0 0
        %6151 = vmatpush1.bf16.msra.mxu0 0
        %6152 = vmatprep.subr.bf16.mxu0 0
        %6153 = vmatpush1.bf16.msra.mxu0 0
        %6154 = vmatprep.subr.bf16.mxu0 0
        %6155 = vmatpush1.bf16.msra.mxu0 %v6138
        %6156 = vmatprep.subr.bf16.mxu0 0
        %6157 = vmatpush2.bf16.msra.mxu0 0
        %6158 = vmatprep.subr.bf16.mxu0 0
        %6159 = vmatpush2.bf16.msra.mxu0 0
        %6160 = vmatprep.subr.bf16.mxu0 0
        %6161 = vmatpush2.bf16.msra.mxu0 0
        %6162 = vmatprep.subr.bf16.mxu0 0
        %6163 = vmatpush2.bf16.msra.mxu0 0
        %6164 = vmatprep.subr.bf16.mxu0 0
        %6165 = vmatpush2.bf16.msra.mxu0 0
        %6166 = vmatprep.subr.bf16.mxu0 0
        %6167 = vmatpush2.bf16.msra.mxu0 0
        %6168 = vmatprep.subr.bf16.mxu0 0
        %6169 = vmatpush2.bf16.msra.mxu0 0
        %6170 = vmatprep.subr.bf16.mxu0 0
        %6171 = vmatpush2.bf16.msra.mxu0 0
        %6172 = vmatprep.mubr.bf16.mxu0 0
        %6173 = vmatmul.mubr.bf16.gmra.mxu0 %v6084
        %v6174 = vpop.f32.mrf.mxu0
        %v6175 = vadd.f32 0.0, %v6174
        %v6176 = vpop.f32.mrf.mxu0
        %v6177 = vpop.f32.mrf.mxu0
        %v6178 = vadd.f32 0.0, %v6177
        %v6179 = vpop.f32.mrf.mxu0
        %6180 = vmatprep.mubr.bf16.mxu0 0
        %6181 = vmatmul.mubr.bf16.gmra.mxu0 %v6087
        %v6182 = vpop.f32.mrf.mxu0
        %v6183 = vadd.f32 0.0, %v6182
        %v6184 = vpop.f32.mrf.mxu0
        %v6185 = vpop.f32.mrf.mxu0
        %v6186 = vadd.f32 0.0, %v6185
        %v6187 = vpop.f32.mrf.mxu0
        %6188 = vmatprep.mubr.bf16.mxu0 0
        %6189 = vmatmul.mubr.bf16.gmra.mxu0 %v6090
        %v6190 = vpop.f32.mrf.mxu0
        %v6191 = vadd.f32 0.0, %v6190
        %v6192 = vpop.f32.mrf.mxu0
        %v6193 = vpop.f32.mrf.mxu0
        %v6194 = vadd.f32 0.0, %v6193
        %v6195 = vpop.f32.mrf.mxu0
        %6196 = vmatprep.mubr.bf16.mxu0 0
        %6197 = vmatmul.mubr.bf16.gmra.mxu0 %v6093
        %v6198 = vpop.f32.mrf.mxu0
        %v6199 = vadd.f32 0.0, %v6198
        %v6200 = vpop.f32.mrf.mxu0
        %v6201 = vpop.f32.mrf.mxu0
        %v6202 = vadd.f32 0.0, %v6201
        %v6203 = vpop.f32.mrf.mxu0
        %6204 = vmatprep.mubr.bf16.mxu0 0
        %6205 = vmatmul.mubr.bf16.gmra.mxu0 %v6096
        %v6206 = vpop.f32.mrf.mxu0
        %v6207 = vadd.f32 0.0, %v6206
        %v6208 = vpop.f32.mrf.mxu0
        %v6209 = vpop.f32.mrf.mxu0
        %v6210 = vadd.f32 0.0, %v6209
        %v6211 = vpop.f32.mrf.mxu0
        %6212 = vmatprep.mubr.bf16.mxu0 0
        %6213 = vmatmul.mubr.bf16.gmra.mxu0 %v6099
        %v6214 = vpop.f32.mrf.mxu0
        %v6215 = vadd.f32 0.0, %v6214
        %v6216 = vpop.f32.mrf.mxu0
        %v6217 = vpop.f32.mrf.mxu0
        %v6218 = vadd.f32 0.0, %v6217
        %v6219 = vpop.f32.mrf.mxu0
        %6220 = vmatprep.mubr.bf16.mxu0 0
        %6221 = vmatmul.mubr.bf16.gmra.mxu0 %v6102
        %v6222 = vpop.f32.mrf.mxu0
        %v6223 = vadd.f32 0.0, %v6222
        %v6224 = vpop.f32.mrf.mxu0
        %v6225 = vpop.f32.mrf.mxu0
        %v6226 = vadd.f32 0.0, %v6225
        %v6227 = vpop.f32.mrf.mxu0
        %6228 = vmatprep.mubr.bf16.mxu0 0
        %6229 = vmatmul.mubr.bf16.gmra.mxu0 %v6105
        %v6230 = vpop.f32.mrf.mxu0
        %v6231 = vadd.f32 0.0, %v6230
        %v6232 = vpop.f32.mrf.mxu0
        %v6233 = vpop.f32.mrf.mxu0
        %v6234 = vadd.f32 0.0, %v6233
        %v6235 = vpop.f32.mrf.mxu0
        %6236 = vmatprep.mubr.bf16.mxu0 0
        %6237 = vmatmul.mubr.bf16.gmra.mxu0 %v6108
        %v6238 = vpop.f32.mrf.mxu0
        %v6239 = vadd.f32 0.0, %v6238
        %v6240 = vpop.f32.mrf.mxu0
        %v6241 = vpop.f32.mrf.mxu0
        %v6242 = vadd.f32 0.0, %v6241
        %v6243 = vpop.f32.mrf.mxu0
        %6244 = vmatprep.mubr.bf16.mxu0 0
        %6245 = vmatmul.mubr.bf16.gmra.mxu0 %v6111
        %v6246 = vpop.f32.mrf.mxu0
        %v6247 = vadd.f32 0.0, %v6246
        %v6248 = vpop.f32.mrf.mxu0
        %v6249 = vpop.f32.mrf.mxu0
        %v6250 = vadd.f32 0.0, %v6249
        %v6251 = vpop.f32.mrf.mxu0
        %6252 = vmatprep.mubr.bf16.mxu0 0
        %6253 = vmatmul.mubr.bf16.gmra.mxu0 %v6114
        %v6254 = vpop.f32.mrf.mxu0
        %v6255 = vadd.f32 0.0, %v6254
        %v6256 = vpop.f32.mrf.mxu0
        %v6257 = vpop.f32.mrf.mxu0
        %v6258 = vadd.f32 0.0, %v6257
        %v6259 = vpop.f32.mrf.mxu0
        %6260 = vmatprep.mubr.bf16.mxu0 0
        %6261 = vmatmul.mubr.bf16.gmra.mxu0 %v6117
        %v6262 = vpop.f32.mrf.mxu0
        %v6263 = vadd.f32 0.0, %v6262
        %v6264 = vpop.f32.mrf.mxu0
        %v6265 = vpop.f32.mrf.mxu0
        %v6266 = vadd.f32 0.0, %v6265
        %v6267 = vpop.f32.mrf.mxu0
        %6268 = vmatprep.mubr.bf16.mxu0 0
        %6269 = vmatmul.mubr.bf16.gmra.mxu0 %v6120
        %v6270 = vpop.f32.mrf.mxu0
        %v6271 = vadd.f32 0.0, %v6270
        %v6272 = vpop.f32.mrf.mxu0
        %v6273 = vpop.f32.mrf.mxu0
        %v6274 = vadd.f32 0.0, %v6273
        %v6275 = vpop.f32.mrf.mxu0
        %6276 = vmatprep.mubr.bf16.mxu0 0
        %6277 = vmatmul.mubr.bf16.gmra.mxu0 %v6123
        %v6278 = vpop.f32.mrf.mxu0
        %v6279 = vadd.f32 0.0, %v6278
        %v6280 = vpop.f32.mrf.mxu0
        %v6281 = vpop.f32.mrf.mxu0
        %v6282 = vadd.f32 0.0, %v6281
        %v6283 = vpop.f32.mrf.mxu0
        %6284 = vmatprep.mubr.bf16.mxu0 0
        %6285 = vmatmul.mubr.bf16.gmra.mxu0 %v6126
        %v6286 = vpop.f32.mrf.mxu0
        %v6287 = vadd.f32 0.0, %v6286
        %v6288 = vpop.f32.mrf.mxu0
        %v6289 = vpop.f32.mrf.mxu0
        %v6290 = vadd.f32 0.0, %v6289
        %v6291 = vpop.f32.mrf.mxu0
        %6292 = vmatprep.mubr.bf16.mxu0 0
        %6293 = vmatmul.mubr.bf16.gmra.mxu0 %v6129
        %v6294 = vpop.f32.mrf.mxu0
        %v6295 = vadd.f32 0.0, %v6294
        %v6296 = vpop.f32.mrf.mxu0
        %v6297 = vpop.f32.mrf.mxu0
        %v6298 = vadd.f32 0.0, %v6297
        %v6299 = vpop.f32.mrf.mxu0
        %6300 = vmatprep.mubr.bf16.mxu0 0
        %6301 = vmatmul.mubr.bf16.gmra.mxu0 %v6132
        %v6302 = vpop.f32.mrf.mxu0
        %v6303 = vadd.f32 0.0, %v6302
        %v6304 = vpop.f32.mrf.mxu0
        %v6305 = vpop.f32.mrf.mxu0
        %v6306 = vadd.f32 0.0, %v6305
        %v6307 = vpop.f32.mrf.mxu0
        %6308 = vmatprep.mubr.bf16.mxu0 0
        %6309 = vmatmul.mubr.bf16.gmra.mxu0 %v6135
        %v6310 = vpop.f32.mrf.mxu0
        %v6311 = vadd.f32 0.0, %v6310
        %v6312 = vpop.f32.mrf.mxu0
        %v6313 = vpop.f32.mrf.mxu0
        %v6314 = vadd.f32 0.0, %v6313
        %v6315 = vpop.f32.mrf.mxu0
        %6316 = vdwg.mxu0
        %v6317 = vadd.f32 %v5900, %v6175
        %v6318 = vadd.f32 %v5903, %v6178
        %v6319 = vadd.f32 %v5908, %v6183
        %v6320 = vadd.f32 %v5911, %v6186
        %v6321 = vadd.f32 %v5916, %v6191
        %v6322 = vadd.f32 %v5919, %v6194
        %v6323 = vadd.f32 %v5924, %v6199
        %v6324 = vadd.f32 %v5927, %v6202
        %v6325 = vadd.f32 %v5932, %v6207
        %v6326 = vadd.f32 %v5935, %v6210
        %v6327 = vadd.f32 %v5940, %v6215
        %v6328 = vadd.f32 %v5943, %v6218
        %v6329 = vadd.f32 %v5948, %v6223
        %v6330 = vadd.f32 %v5951, %v6226
        %v6331 = vadd.f32 %v5956, %v6231
        %v6332 = vadd.f32 %v5959, %v6234
        %v6333 = vadd.f32 %v5964, %v6239
        %v6334 = vadd.f32 %v5967, %v6242
        %v6335 = vadd.f32 %v5972, %v6247
        %v6336 = vadd.f32 %v5975, %v6250
        %v6337 = vadd.f32 %v5980, %v6255
        %v6338 = vadd.f32 %v5983, %v6258
        %v6339 = vadd.f32 %v5988, %v6263
        %v6340 = vadd.f32 %v5991, %v6266
        %v6341 = vadd.f32 %v5996, %v6271
        %v6342 = vadd.f32 %v5999, %v6274
        %v6343 = vadd.f32 %v6004, %v6279
        %v6344 = vadd.f32 %v6007, %v6282
        %v6345 = vadd.f32 %v6012, %v6287
        %v6346 = vadd.f32 %v6015, %v6290
        %v6347 = vadd.f32 %v6020, %v6295
        %v6348 = vadd.f32 %v6023, %v6298
        %v6349 = vadd.f32 %v6028, %v6303
        %v6350 = vadd.f32 %v6031, %v6306
        %v6351 = vadd.f32 %v6036, %v6311
        %v6352 = vadd.f32 %v6039, %v6314
        %v6353 = vld [vmem:[#allocation3 + $0x8] sm:$0xe]
        %v6354 = vld [vmem:[#allocation3 + $0xc] sm:$0xf]
        %v6355 = vld [vmem:[#allocation3 + $0x10] sm:$0xf]
        %v6356 = vld [vmem:[#allocation3 + $0x14] sm:$0xf]
        %v6357 = vld [vmem:[#allocation3 + $0x18] sm:$0xf]
        %v6358 = vld [vmem:[#allocation3 + $0x1c] sm:$0xf]
        %v6359 = vld [vmem:[#allocation3 + $0x20] sm:$0xf]
        %v6360 = vld [vmem:[#allocation3 + $0x24] sm:$0xf]
        %v6361 = vld [vmem:[#allocation3 + $0x28] sm:$0xf]
        %v6362 = vld [vmem:[#allocation3 + $0x2c] sm:$0xf]
        %v6363 = vld [vmem:[#allocation3 + $0x30] sm:$0xf]
        %v6364 = vld [vmem:[#allocation3 + $0x34] sm:$0xf]
        %v6365 = vld [vmem:[#allocation3 + $0x38] sm:$0xf]
        %v6366 = vld [vmem:[#allocation3 + $0x3c] sm:$0xf]
        %v6367 = vld [vmem:[#allocation3 + $0x40] sm:$0xf]
        %v6368 = vld [vmem:[#allocation3 + $0x44] sm:$0xf]
        %v6369 = vld [vmem:[#allocation3 + $0x48] sm:$0xf]
        %v6370 = vld [vmem:[#allocation3 + $0x4c] sm:$0xf]
        %v6371 = vld [vmem:[#allocation3 + $0x50] sm:$0xf]
        %v6372 = vld [vmem:[#allocation3 + $0x54] sm:$0xf]
        %v6373 = vld [vmem:[#allocation3 + $0x58] sm:$0xf]
        %v6374 = vld [vmem:[#allocation3 + $0x5c] sm:$0xf]
        %v6375 = vld [vmem:[#allocation3 + $0x60] sm:$0xf]
        %v6376 = vld [vmem:[#allocation3 + $0x64] sm:$0xf]
        %v6377 = vld [vmem:[#allocation3 + $0x68] sm:$0xf]
        %v6378 = vld [vmem:[#allocation3 + $0x6c] sm:$0xf]
        %v6379 = vld [vmem:[#allocation3 + $0x70] sm:$0xf]
        %v6380 = vld [vmem:[#allocation3 + $0x74] sm:$0xf]
        %v6381 = vld [vmem:[#allocation3 + $0x78] sm:$0xf]
        %v6382 = vld [vmem:[#allocation3 + $0x7c] sm:$0xf]
        %v6383 = vld [vmem:[#allocation3 + $0x80] sm:$0xf]
        %v6384 = vld [vmem:[#allocation3 + $0x84] sm:$0xf]
        %v6385 = vld [vmem:[#allocation3 + $0x88] sm:$0xf]
        %v6386 = vld [vmem:[#allocation3 + $0x8c] sm:$0xf]
        %v6387 = vld [vmem:[#allocation3 + $0x90] sm:$0xf]
        %v6388 = vld [vmem:[#allocation3 + $0x94] sm:$0xf]
        %s6389 = scalar_lea.vmem %s4, 12
        %v6390 = vld [vmem:[%s6389] sm:$0xf]
        %v6427 = vunpack.c.l.b16 %v6353
        %v6428 = vunpack.c.l.b16 %v6354
        %v6429 = vunpack.c.l.b16 %v6355
        %v6430 = vunpack.c.l.b16 %v6356
        %v6431 = vunpack.c.l.b16 %v6357
        %v6432 = vunpack.c.l.b16 %v6358
        %v6433 = vunpack.c.l.b16 %v6359
        %v6434 = vunpack.c.l.b16 %v6360
        %v6435 = vunpack.c.l.b16 %v6361
        %v6436 = vunpack.c.l.b16 %v6362
        %v6437 = vunpack.c.l.b16 %v6363
        %v6438 = vunpack.c.l.b16 %v6364
        %v6439 = vunpack.c.l.b16 %v6365
        %v6440 = vunpack.c.l.b16 %v6366
        %v6441 = vunpack.c.l.b16 %v6367
        %v6442 = vunpack.c.l.b16 %v6368
        %v6443 = vunpack.c.l.b16 %v6369
        %v6444 = vunpack.c.l.b16 %v6370
        %v6445 = vunpack.c.l.b16 %v6371
        %v6446 = vunpack.c.l.b16 %v6372
        %v6447 = vunpack.c.l.b16 %v6373
        %v6448 = vunpack.c.l.b16 %v6374
        %v6449 = vunpack.c.l.b16 %v6375
        %v6450 = vunpack.c.l.b16 %v6376
        %v6451 = vunpack.c.l.b16 %v6377
        %v6452 = vunpack.c.l.b16 %v6378
        %v6453 = vunpack.c.l.b16 %v6379
        %v6454 = vunpack.c.l.b16 %v6380
        %v6455 = vunpack.c.l.b16 %v6381
        %v6456 = vunpack.c.l.b16 %v6382
        %v6457 = vunpack.c.l.b16 %v6383
        %v6458 = vunpack.c.l.b16 %v6384
        %v6459 = vunpack.c.l.b16 %v6385
        %v6460 = vunpack.c.l.b16 %v6386
        %v6461 = vunpack.c.l.b16 %v6387
        %v6462 = vunpack.c.l.b16 %v6388
        %v6463 = vpack.c.b16 %v6428, %v6427
        %v6464 = vpack.c.b16 %v6430, %v6429
        %v6465 = vpack.c.b16 %v6432, %v6431
        %v6466 = vpack.c.b16 %v6434, %v6433
        %v6467 = vpack.c.b16 %v6436, %v6435
        %v6468 = vpack.c.b16 %v6438, %v6437
        %v6469 = vpack.c.b16 %v6440, %v6439
        %v6470 = vpack.c.b16 %v6442, %v6441
        %v6471 = vpack.c.b16 %v6444, %v6443
        %v6472 = vpack.c.b16 %v6446, %v6445
        %v6473 = vpack.c.b16 %v6448, %v6447
        %v6474 = vpack.c.b16 %v6450, %v6449
        %v6475 = vpack.c.b16 %v6452, %v6451
        %v6476 = vpack.c.b16 %v6454, %v6453
        %v6477 = vpack.c.b16 %v6456, %v6455
        %v6478 = vpack.c.b16 %v6458, %v6457
        %v6479 = vpack.c.b16 %v6460, %v6459
        %v6480 = vpack.c.b16 %v6462, %v6461
        %v6481 = vrot.slane %v6463, 1
        %v6482 = vrot.slane %v6464, 1
        %v6483 = vsel %vm1362, %v6481, %v6482
        %v6484 = vrot.slane %v6465, 1
        %v6485 = vsel %vm1362, %v6482, %v6484
        %v6486 = vrot.slane %v6466, 1
        %v6487 = vsel %vm1362, %v6484, %v6486
        %v6488 = vrot.slane %v6467, 1
        %v6489 = vsel %vm1362, %v6486, %v6488
        %v6490 = vrot.slane %v6468, 1
        %v6491 = vsel %vm1362, %v6488, %v6490
        %v6492 = vrot.slane %v6469, 1
        %v6493 = vsel %vm1362, %v6490, %v6492
        %v6494 = vrot.slane %v6470, 1
        %v6495 = vsel %vm1362, %v6492, %v6494
        %v6496 = vrot.slane %v6471, 1
        %v6497 = vsel %vm1362, %v6494, %v6496
        %v6498 = vrot.slane %v6472, 1
        %v6499 = vsel %vm1362, %v6496, %v6498
        %v6500 = vrot.slane %v6473, 1
        %v6501 = vsel %vm1362, %v6498, %v6500
        %v6502 = vrot.slane %v6474, 1
        %v6503 = vsel %vm1362, %v6500, %v6502
        %v6504 = vrot.slane %v6475, 1
        %v6505 = vsel %vm1362, %v6502, %v6504
        %v6506 = vrot.slane %v6476, 1
        %v6507 = vsel %vm1362, %v6504, %v6506
        %v6508 = vrot.slane %v6477, 1
        %v6509 = vsel %vm1362, %v6506, %v6508
        %v6510 = vrot.slane %v6478, 1
        %v6511 = vsel %vm1362, %v6508, %v6510
        %v6512 = vrot.slane %v6479, 1
        %v6513 = vsel %vm1362, %v6510, %v6512
        %v6514 = vrot.slane %v6480, 1
        %v6515 = vsel %vm1362, %v6512, %v6514
        %v6517 = vsel %vm5586, %v6483, 0
        %v6520 = vsel %vm5586, %v6485, 0
        %v6523 = vsel %vm5586, %v6487, 0
        %v6526 = vsel %vm5586, %v6489, 0
        %v6529 = vsel %vm5586, %v6491, 0
        %v6532 = vsel %vm5586, %v6493, 0
        %v6535 = vsel %vm5586, %v6495, 0
        %v6538 = vsel %vm5586, %v6497, 0
        %v6541 = vsel %vm5586, %v6499, 0
        %v6544 = vsel %vm5586, %v6501, 0
        %v6547 = vsel %vm5586, %v6503, 0
        %v6550 = vsel %vm5586, %v6505, 0
        %v6553 = vsel %vm5586, %v6507, 0
        %v6556 = vsel %vm5586, %v6509, 0
        %v6559 = vsel %vm5586, %v6511, 0
        %v6562 = vsel %vm5586, %v6513, 0
        %v6565 = vsel %vm5586, %v6515, 0
        %v6568 = vsel %vm5586, %v6514, 0
        %v6571 = vsel %vm5641, %v6390, 0
        %6573 = vmatprep.subr.bf16.mxu0 0
        %6574 = vmatpush1.bf16.msra.mxu0 0
        %6575 = vmatprep.subr.bf16.mxu0 0
        %6576 = vmatpush1.bf16.msra.mxu0 0
        %6577 = vmatprep.subr.bf16.mxu0 0
        %6578 = vmatpush1.bf16.msra.mxu0 0
        %6579 = vmatprep.subr.bf16.mxu0 0
        %6580 = vmatpush1.bf16.msra.mxu0 0
        %6581 = vmatprep.subr.bf16.mxu0 0
        %6582 = vmatpush1.bf16.msra.mxu0 0
        %6583 = vmatprep.subr.bf16.mxu0 0
        %6584 = vmatpush1.bf16.msra.mxu0 0
        %6585 = vmatprep.subr.bf16.mxu0 0
        %6586 = vmatpush1.bf16.msra.mxu0 0
        %6587 = vmatprep.subr.bf16.mxu0 0
        %6588 = vmatpush1.bf16.msra.mxu0 %v6571
        %6589 = vmatprep.subr.bf16.mxu0 0
        %6590 = vmatpush2.bf16.msra.mxu0 0
        %6591 = vmatprep.subr.bf16.mxu0 0
        %6592 = vmatpush2.bf16.msra.mxu0 0
        %6593 = vmatprep.subr.bf16.mxu0 0
        %6594 = vmatpush2.bf16.msra.mxu0 0
        %6595 = vmatprep.subr.bf16.mxu0 0
        %6596 = vmatpush2.bf16.msra.mxu0 0
        %6597 = vmatprep.subr.bf16.mxu0 0
        %6598 = vmatpush2.bf16.msra.mxu0 0
        %6599 = vmatprep.subr.bf16.mxu0 0
        %6600 = vmatpush2.bf16.msra.mxu0 0
        %6601 = vmatprep.subr.bf16.mxu0 0
        %6602 = vmatpush2.bf16.msra.mxu0 0
        %6603 = vmatprep.subr.bf16.mxu0 0
        %6604 = vmatpush2.bf16.msra.mxu0 0
        %6605 = vmatprep.mubr.bf16.mxu0 0
        %6606 = vmatmul.mubr.bf16.gmra.mxu0 %v6517
        %v6607 = vpop.f32.mrf.mxu0
        %v6608 = vadd.f32 0.0, %v6607
        %v6609 = vpop.f32.mrf.mxu0
        %v6610 = vpop.f32.mrf.mxu0
        %v6611 = vadd.f32 0.0, %v6610
        %v6612 = vpop.f32.mrf.mxu0
        %6613 = vmatprep.mubr.bf16.mxu0 0
        %6614 = vmatmul.mubr.bf16.gmra.mxu0 %v6520
        %v6615 = vpop.f32.mrf.mxu0
        %v6616 = vadd.f32 0.0, %v6615
        %v6617 = vpop.f32.mrf.mxu0
        %v6618 = vpop.f32.mrf.mxu0
        %v6619 = vadd.f32 0.0, %v6618
        %v6620 = vpop.f32.mrf.mxu0
        %6621 = vmatprep.mubr.bf16.mxu0 0
        %6622 = vmatmul.mubr.bf16.gmra.mxu0 %v6523
        %v6623 = vpop.f32.mrf.mxu0
        %v6624 = vadd.f32 0.0, %v6623
        %v6625 = vpop.f32.mrf.mxu0
        %v6626 = vpop.f32.mrf.mxu0
        %v6627 = vadd.f32 0.0, %v6626
        %v6628 = vpop.f32.mrf.mxu0
        %6629 = vmatprep.mubr.bf16.mxu0 0
        %6630 = vmatmul.mubr.bf16.gmra.mxu0 %v6526
        %v6631 = vpop.f32.mrf.mxu0
        %v6632 = vadd.f32 0.0, %v6631
        %v6633 = vpop.f32.mrf.mxu0
        %v6634 = vpop.f32.mrf.mxu0
        %v6635 = vadd.f32 0.0, %v6634
        %v6636 = vpop.f32.mrf.mxu0
        %6637 = vmatprep.mubr.bf16.mxu0 0
        %6638 = vmatmul.mubr.bf16.gmra.mxu0 %v6529
        %v6639 = vpop.f32.mrf.mxu0
        %v6640 = vadd.f32 0.0, %v6639
        %v6641 = vpop.f32.mrf.mxu0
        %v6642 = vpop.f32.mrf.mxu0
        %v6643 = vadd.f32 0.0, %v6642
        %v6644 = vpop.f32.mrf.mxu0
        %6645 = vmatprep.mubr.bf16.mxu0 0
        %6646 = vmatmul.mubr.bf16.gmra.mxu0 %v6532
        %v6647 = vpop.f32.mrf.mxu0
        %v6648 = vadd.f32 0.0, %v6647
        %v6649 = vpop.f32.mrf.mxu0
        %v6650 = vpop.f32.mrf.mxu0
        %v6651 = vadd.f32 0.0, %v6650
        %v6652 = vpop.f32.mrf.mxu0
        %6653 = vmatprep.mubr.bf16.mxu0 0
        %6654 = vmatmul.mubr.bf16.gmra.mxu0 %v6535
        %v6655 = vpop.f32.mrf.mxu0
        %v6656 = vadd.f32 0.0, %v6655
        %v6657 = vpop.f32.mrf.mxu0
        %v6658 = vpop.f32.mrf.mxu0
        %v6659 = vadd.f32 0.0, %v6658
        %v6660 = vpop.f32.mrf.mxu0
        %6661 = vmatprep.mubr.bf16.mxu0 0
        %6662 = vmatmul.mubr.bf16.gmra.mxu0 %v6538
        %v6663 = vpop.f32.mrf.mxu0
        %v6664 = vadd.f32 0.0, %v6663
        %v6665 = vpop.f32.mrf.mxu0
        %v6666 = vpop.f32.mrf.mxu0
        %v6667 = vadd.f32 0.0, %v6666
        %v6668 = vpop.f32.mrf.mxu0
        %6669 = vmatprep.mubr.bf16.mxu0 0
        %6670 = vmatmul.mubr.bf16.gmra.mxu0 %v6541
        %v6671 = vpop.f32.mrf.mxu0
        %v6672 = vadd.f32 0.0, %v6671
        %v6673 = vpop.f32.mrf.mxu0
        %v6674 = vpop.f32.mrf.mxu0
        %v6675 = vadd.f32 0.0, %v6674
        %v6676 = vpop.f32.mrf.mxu0
        %6677 = vmatprep.mubr.bf16.mxu0 0
        %6678 = vmatmul.mubr.bf16.gmra.mxu0 %v6544
        %v6679 = vpop.f32.mrf.mxu0
        %v6680 = vadd.f32 0.0, %v6679
        %v6681 = vpop.f32.mrf.mxu0
        %v6682 = vpop.f32.mrf.mxu0
        %v6683 = vadd.f32 0.0, %v6682
        %v6684 = vpop.f32.mrf.mxu0
        %6685 = vmatprep.mubr.bf16.mxu0 0
        %6686 = vmatmul.mubr.bf16.gmra.mxu0 %v6547
        %v6687 = vpop.f32.mrf.mxu0
        %v6688 = vadd.f32 0.0, %v6687
        %v6689 = vpop.f32.mrf.mxu0
        %v6690 = vpop.f32.mrf.mxu0
        %v6691 = vadd.f32 0.0, %v6690
        %v6692 = vpop.f32.mrf.mxu0
        %6693 = vmatprep.mubr.bf16.mxu0 0
        %6694 = vmatmul.mubr.bf16.gmra.mxu0 %v6550
        %v6695 = vpop.f32.mrf.mxu0
        %v6696 = vadd.f32 0.0, %v6695
        %v6697 = vpop.f32.mrf.mxu0
        %v6698 = vpop.f32.mrf.mxu0
        %v6699 = vadd.f32 0.0, %v6698
        %v6700 = vpop.f32.mrf.mxu0
        %6701 = vmatprep.mubr.bf16.mxu0 0
        %6702 = vmatmul.mubr.bf16.gmra.mxu0 %v6553
        %v6703 = vpop.f32.mrf.mxu0
        %v6704 = vadd.f32 0.0, %v6703
        %v6705 = vpop.f32.mrf.mxu0
        %v6706 = vpop.f32.mrf.mxu0
        %v6707 = vadd.f32 0.0, %v6706
        %v6708 = vpop.f32.mrf.mxu0
        %6709 = vmatprep.mubr.bf16.mxu0 0
        %6710 = vmatmul.mubr.bf16.gmra.mxu0 %v6556
        %v6711 = vpop.f32.mrf.mxu0
        %v6712 = vadd.f32 0.0, %v6711
        %v6713 = vpop.f32.mrf.mxu0
        %v6714 = vpop.f32.mrf.mxu0
        %v6715 = vadd.f32 0.0, %v6714
        %v6716 = vpop.f32.mrf.mxu0
        %6717 = vmatprep.mubr.bf16.mxu0 0
        %6718 = vmatmul.mubr.bf16.gmra.mxu0 %v6559
        %v6719 = vpop.f32.mrf.mxu0
        %v6720 = vadd.f32 0.0, %v6719
        %v6721 = vpop.f32.mrf.mxu0
        %v6722 = vpop.f32.mrf.mxu0
        %v6723 = vadd.f32 0.0, %v6722
        %v6724 = vpop.f32.mrf.mxu0
        %6725 = vmatprep.mubr.bf16.mxu0 0
        %6726 = vmatmul.mubr.bf16.gmra.mxu0 %v6562
        %v6727 = vpop.f32.mrf.mxu0
        %v6728 = vadd.f32 0.0, %v6727
        %v6729 = vpop.f32.mrf.mxu0
        %v6730 = vpop.f32.mrf.mxu0
        %v6731 = vadd.f32 0.0, %v6730
        %v6732 = vpop.f32.mrf.mxu0
        %6733 = vmatprep.mubr.bf16.mxu0 0
        %6734 = vmatmul.mubr.bf16.gmra.mxu0 %v6565
        %v6735 = vpop.f32.mrf.mxu0
        %v6736 = vadd.f32 0.0, %v6735
        %v6737 = vpop.f32.mrf.mxu0
        %v6738 = vpop.f32.mrf.mxu0
        %v6739 = vadd.f32 0.0, %v6738
        %v6740 = vpop.f32.mrf.mxu0
        %6741 = vmatprep.mubr.bf16.mxu0 0
        %6742 = vmatmul.mubr.bf16.gmra.mxu0 %v6568
        %v6743 = vpop.f32.mrf.mxu0
        %v6744 = vadd.f32 0.0, %v6743
        %v6745 = vpop.f32.mrf.mxu0
        %v6746 = vpop.f32.mrf.mxu0
        %v6747 = vadd.f32 0.0, %v6746
        %v6748 = vpop.f32.mrf.mxu0
        %6749 = vdwg.mxu0
        %v6750 = vadd.f32 %v6317, %v6608
        %v6751 = vadd.f32 %v6318, %v6611
        %v6752 = vadd.f32 %v6319, %v6616
        %v6753 = vadd.f32 %v6320, %v6619
        %v6754 = vadd.f32 %v6321, %v6624
        %v6755 = vadd.f32 %v6322, %v6627
        %v6756 = vadd.f32 %v6323, %v6632
        %v6757 = vadd.f32 %v6324, %v6635
        %v6758 = vadd.f32 %v6325, %v6640
        %v6759 = vadd.f32 %v6326, %v6643
        %v6760 = vadd.f32 %v6327, %v6648
        %v6761 = vadd.f32 %v6328, %v6651
        %v6762 = vadd.f32 %v6329, %v6656
        %v6763 = vadd.f32 %v6330, %v6659
        %v6764 = vadd.f32 %v6331, %v6664
        %v6765 = vadd.f32 %v6332, %v6667
        %v6766 = vadd.f32 %v6333, %v6672
        %v6767 = vadd.f32 %v6334, %v6675
        %v6768 = vadd.f32 %v6335, %v6680
        %v6769 = vadd.f32 %v6336, %v6683
        %v6770 = vadd.f32 %v6337, %v6688
        %v6771 = vadd.f32 %v6338, %v6691
        %v6772 = vadd.f32 %v6339, %v6696
        %v6773 = vadd.f32 %v6340, %v6699
        %v6774 = vadd.f32 %v6341, %v6704
        %v6775 = vadd.f32 %v6342, %v6707
        %v6776 = vadd.f32 %v6343, %v6712
        %v6777 = vadd.f32 %v6344, %v6715
        %v6778 = vadd.f32 %v6345, %v6720
        %v6779 = vadd.f32 %v6346, %v6723
        %v6780 = vadd.f32 %v6347, %v6728
        %v6781 = vadd.f32 %v6348, %v6731
        %v6782 = vadd.f32 %v6349, %v6736
        %v6783 = vadd.f32 %v6350, %v6739
        %v6784 = vadd.f32 %v6351, %v6744
        %v6785 = vadd.f32 %v6352, %v6747
        %v6786 = vld [vmem:[#allocation3 + $0x8] sm:$0xe]
        %v6787 = vld [vmem:[#allocation3 + $0xc] sm:$0xf]
        %v6788 = vld [vmem:[#allocation3 + $0x10] sm:$0xf]
        %v6789 = vld [vmem:[#allocation3 + $0x14] sm:$0xf]
        %v6790 = vld [vmem:[#allocation3 + $0x18] sm:$0xf]
        %v6791 = vld [vmem:[#allocation3 + $0x1c] sm:$0xf]
        %v6792 = vld [vmem:[#allocation3 + $0x20] sm:$0xf]
        %v6793 = vld [vmem:[#allocation3 + $0x24] sm:$0xf]
        %v6794 = vld [vmem:[#allocation3 + $0x28] sm:$0xf]
        %v6795 = vld [vmem:[#allocation3 + $0x2c] sm:$0xf]
        %v6796 = vld [vmem:[#allocation3 + $0x30] sm:$0xf]
        %v6797 = vld [vmem:[#allocation3 + $0x34] sm:$0xf]
        %v6798 = vld [vmem:[#allocation3 + $0x38] sm:$0xf]
        %v6799 = vld [vmem:[#allocation3 + $0x3c] sm:$0xf]
        %v6800 = vld [vmem:[#allocation3 + $0x40] sm:$0xf]
        %v6801 = vld [vmem:[#allocation3 + $0x44] sm:$0xf]
        %v6802 = vld [vmem:[#allocation3 + $0x48] sm:$0xf]
        %v6803 = vld [vmem:[#allocation3 + $0x4c] sm:$0xf]
        %v6804 = vld [vmem:[#allocation3 + $0x50] sm:$0xf]
        %v6805 = vld [vmem:[#allocation3 + $0x54] sm:$0xf]
        %v6806 = vld [vmem:[#allocation3 + $0x58] sm:$0xf]
        %v6807 = vld [vmem:[#allocation3 + $0x5c] sm:$0xf]
        %v6808 = vld [vmem:[#allocation3 + $0x60] sm:$0xf]
        %v6809 = vld [vmem:[#allocation3 + $0x64] sm:$0xf]
        %v6810 = vld [vmem:[#allocation3 + $0x68] sm:$0xf]
        %v6811 = vld [vmem:[#allocation3 + $0x6c] sm:$0xf]
        %v6812 = vld [vmem:[#allocation3 + $0x70] sm:$0xf]
        %v6813 = vld [vmem:[#allocation3 + $0x74] sm:$0xf]
        %v6814 = vld [vmem:[#allocation3 + $0x78] sm:$0xf]
        %v6815 = vld [vmem:[#allocation3 + $0x7c] sm:$0xf]
        %v6816 = vld [vmem:[#allocation3 + $0x80] sm:$0xf]
        %v6817 = vld [vmem:[#allocation3 + $0x84] sm:$0xf]
        %v6818 = vld [vmem:[#allocation3 + $0x88] sm:$0xf]
        %v6819 = vld [vmem:[#allocation3 + $0x8c] sm:$0xf]
        %v6820 = vld [vmem:[#allocation3 + $0x90] sm:$0xf]
        %v6821 = vld [vmem:[#allocation3 + $0x94] sm:$0xf]
        %v6822 = vld [vmem:[#allocation3 + $0x98] sm:$0x1]
        %s6823 = scalar_lea.vmem %s4, 16
        %v6824 = vld [vmem:[%s6823] sm:$0xf]
        %v6862 = vunpack.c.l.b16 %v6786
        %v6863 = vunpack.c.l.b16 %v6787
        %v6864 = vunpack.c.l.b16 %v6788
        %v6865 = vunpack.c.l.b16 %v6789
        %v6866 = vunpack.c.l.b16 %v6790
        %v6867 = vunpack.c.l.b16 %v6791
        %v6868 = vunpack.c.l.b16 %v6792
        %v6869 = vunpack.c.l.b16 %v6793
        %v6870 = vunpack.c.l.b16 %v6794
        %v6871 = vunpack.c.l.b16 %v6795
        %v6872 = vunpack.c.l.b16 %v6796
        %v6873 = vunpack.c.l.b16 %v6797
        %v6874 = vunpack.c.l.b16 %v6798
        %v6875 = vunpack.c.l.b16 %v6799
        %v6876 = vunpack.c.l.b16 %v6800
        %v6877 = vunpack.c.l.b16 %v6801
        %v6878 = vunpack.c.l.b16 %v6802
        %v6879 = vunpack.c.l.b16 %v6803
        %v6880 = vunpack.c.l.b16 %v6804
        %v6881 = vunpack.c.l.b16 %v6805
        %v6882 = vunpack.c.l.b16 %v6806
        %v6883 = vunpack.c.l.b16 %v6807
        %v6884 = vunpack.c.l.b16 %v6808
        %v6885 = vunpack.c.l.b16 %v6809
        %v6886 = vunpack.c.l.b16 %v6810
        %v6887 = vunpack.c.l.b16 %v6811
        %v6888 = vunpack.c.l.b16 %v6812
        %v6889 = vunpack.c.l.b16 %v6813
        %v6890 = vunpack.c.l.b16 %v6814
        %v6891 = vunpack.c.l.b16 %v6815
        %v6892 = vunpack.c.l.b16 %v6816
        %v6893 = vunpack.c.l.b16 %v6817
        %v6894 = vunpack.c.l.b16 %v6818
        %v6895 = vunpack.c.l.b16 %v6819
        %v6896 = vunpack.c.l.b16 %v6820
        %v6897 = vunpack.c.l.b16 %v6821
        %v6898 = vunpack.c.l.b16 %v6822
        %v6899 = vpack.c.b16 %v6863, %v6862
        %v6900 = vpack.c.b16 %v6865, %v6864
        %v6901 = vpack.c.b16 %v6867, %v6866
        %v6902 = vpack.c.b16 %v6869, %v6868
        %v6903 = vpack.c.b16 %v6871, %v6870
        %v6904 = vpack.c.b16 %v6873, %v6872
        %v6905 = vpack.c.b16 %v6875, %v6874
        %v6906 = vpack.c.b16 %v6877, %v6876
        %v6907 = vpack.c.b16 %v6879, %v6878
        %v6908 = vpack.c.b16 %v6881, %v6880
        %v6909 = vpack.c.b16 %v6883, %v6882
        %v6910 = vpack.c.b16 %v6885, %v6884
        %v6911 = vpack.c.b16 %v6887, %v6886
        %v6912 = vpack.c.b16 %v6889, %v6888
        %v6913 = vpack.c.b16 %v6891, %v6890
        %v6914 = vpack.c.b16 %v6893, %v6892
        %v6915 = vpack.c.b16 %v6895, %v6894
        %v6916 = vpack.c.b16 %v6897, %v6896
        %v6917 = vpack.c.b16 %v6898, %v6898
        %v6919 = vshrl.u32 %v6899, 16
        %v6921 = vrot.slane %v6919, 1
        %v6922 = vshll.u32 %v6899, 16
        %v6924 = vrot.slane %v6922, 2
        %v6925 = vor.u32 %v6921, %v6924
        %v6927 = vshrl.u32 %v6900, 16
        %v6929 = vrot.slane %v6927, 1
        %v6930 = vshll.u32 %v6900, 16
        %v6932 = vrot.slane %v6930, 2
        %v6933 = vor.u32 %v6929, %v6932
        %v6934 = vsel %vm2233, %v6925, %v6933
        %v6936 = vshrl.u32 %v6901, 16
        %v6938 = vrot.slane %v6936, 1
        %v6939 = vshll.u32 %v6901, 16
        %v6941 = vrot.slane %v6939, 2
        %v6942 = vor.u32 %v6938, %v6941
        %v6943 = vsel %vm2233, %v6933, %v6942
        %v6945 = vshrl.u32 %v6902, 16
        %v6947 = vrot.slane %v6945, 1
        %v6948 = vshll.u32 %v6902, 16
        %v6950 = vrot.slane %v6948, 2
        %v6951 = vor.u32 %v6947, %v6950
        %v6952 = vsel %vm2233, %v6942, %v6951
        %v6954 = vshrl.u32 %v6903, 16
        %v6956 = vrot.slane %v6954, 1
        %v6957 = vshll.u32 %v6903, 16
        %v6959 = vrot.slane %v6957, 2
        %v6960 = vor.u32 %v6956, %v6959
        %v6961 = vsel %vm2233, %v6951, %v6960
        %v6963 = vshrl.u32 %v6904, 16
        %v6965 = vrot.slane %v6963, 1
        %v6966 = vshll.u32 %v6904, 16
        %v6968 = vrot.slane %v6966, 2
        %v6969 = vor.u32 %v6965, %v6968
        %v6970 = vsel %vm2233, %v6960, %v6969
        %v6972 = vshrl.u32 %v6905, 16
        %v6974 = vrot.slane %v6972, 1
        %v6975 = vshll.u32 %v6905, 16
        %v6977 = vrot.slane %v6975, 2
        %v6978 = vor.u32 %v6974, %v6977
        %v6979 = vsel %vm2233, %v6969, %v6978
        %v6981 = vshrl.u32 %v6906, 16
        %v6983 = vrot.slane %v6981, 1
        %v6984 = vshll.u32 %v6906, 16
        %v6986 = vrot.slane %v6984, 2
        %v6987 = vor.u32 %v6983, %v6986
        %v6988 = vsel %vm2233, %v6978, %v6987
        %v6990 = vshrl.u32 %v6907, 16
        %v6992 = vrot.slane %v6990, 1
        %v6993 = vshll.u32 %v6907, 16
        %v6995 = vrot.slane %v6993, 2
        %v6996 = vor.u32 %v6992, %v6995
        %v6997 = vsel %vm2233, %v6987, %v6996
        %v6999 = vshrl.u32 %v6908, 16
        %v7001 = vrot.slane %v6999, 1
        %v7002 = vshll.u32 %v6908, 16
        %v7004 = vrot.slane %v7002, 2
        %v7005 = vor.u32 %v7001, %v7004
        %v7006 = vsel %vm2233, %v6996, %v7005
        %v7008 = vshrl.u32 %v6909, 16
        %v7010 = vrot.slane %v7008, 1
        %v7011 = vshll.u32 %v6909, 16
        %v7013 = vrot.slane %v7011, 2
        %v7014 = vor.u32 %v7010, %v7013
        %v7015 = vsel %vm2233, %v7005, %v7014
        %v7017 = vshrl.u32 %v6910, 16
        %v7019 = vrot.slane %v7017, 1
        %v7020 = vshll.u32 %v6910, 16
        %v7022 = vrot.slane %v7020, 2
        %v7023 = vor.u32 %v7019, %v7022
        %v7024 = vsel %vm2233, %v7014, %v7023
        %v7026 = vshrl.u32 %v6911, 16
        %v7028 = vrot.slane %v7026, 1
        %v7029 = vshll.u32 %v6911, 16
        %v7031 = vrot.slane %v7029, 2
        %v7032 = vor.u32 %v7028, %v7031
        %v7033 = vsel %vm2233, %v7023, %v7032
        %v7035 = vshrl.u32 %v6912, 16
        %v7037 = vrot.slane %v7035, 1
        %v7038 = vshll.u32 %v6912, 16
        %v7040 = vrot.slane %v7038, 2
        %v7041 = vor.u32 %v7037, %v7040
        %v7042 = vsel %vm2233, %v7032, %v7041
        %v7044 = vshrl.u32 %v6913, 16
        %v7046 = vrot.slane %v7044, 1
        %v7047 = vshll.u32 %v6913, 16
        %v7049 = vrot.slane %v7047, 2
        %v7050 = vor.u32 %v7046, %v7049
        %v7051 = vsel %vm2233, %v7041, %v7050
        %v7053 = vshrl.u32 %v6914, 16
        %v7055 = vrot.slane %v7053, 1
        %v7056 = vshll.u32 %v6914, 16
        %v7058 = vrot.slane %v7056, 2
        %v7059 = vor.u32 %v7055, %v7058
        %v7060 = vsel %vm2233, %v7050, %v7059
        %v7062 = vshrl.u32 %v6915, 16
        %v7064 = vrot.slane %v7062, 1
        %v7065 = vshll.u32 %v6915, 16
        %v7067 = vrot.slane %v7065, 2
        %v7068 = vor.u32 %v7064, %v7067
        %v7069 = vsel %vm2233, %v7059, %v7068
        %v7071 = vshrl.u32 %v6916, 16
        %v7073 = vrot.slane %v7071, 1
        %v7074 = vshll.u32 %v6916, 16
        %v7076 = vrot.slane %v7074, 2
        %v7077 = vor.u32 %v7073, %v7076
        %v7078 = vsel %vm2233, %v7068, %v7077
        %v7080 = vshll.u32 %v6917, 16
        %v7082 = vrot.slane %v7080, 2
        %v7083 = vsel %vm2233, %v7077, %v7082
        %v7085 = vsel %vm5586, %v6934, 0
        %v7088 = vsel %vm5586, %v6943, 0
        %v7091 = vsel %vm5586, %v6952, 0
        %v7094 = vsel %vm5586, %v6961, 0
        %v7097 = vsel %vm5586, %v6970, 0
        %v7100 = vsel %vm5586, %v6979, 0
        %v7103 = vsel %vm5586, %v6988, 0
        %v7106 = vsel %vm5586, %v6997, 0
        %v7109 = vsel %vm5586, %v7006, 0
        %v7112 = vsel %vm5586, %v7015, 0
        %v7115 = vsel %vm5586, %v7024, 0
        %v7118 = vsel %vm5586, %v7033, 0
        %v7121 = vsel %vm5586, %v7042, 0
        %v7124 = vsel %vm5586, %v7051, 0
        %v7127 = vsel %vm5586, %v7060, 0
        %v7130 = vsel %vm5586, %v7069, 0
        %v7133 = vsel %vm5586, %v7078, 0
        %v7136 = vsel %vm5586, %v7083, 0
        %v7139 = vsel %vm5641, %v6824, 0
        %7141 = vmatprep.subr.bf16.mxu0 0
        %7142 = vmatpush1.bf16.msra.mxu0 0
        %7143 = vmatprep.subr.bf16.mxu0 0
        %7144 = vmatpush1.bf16.msra.mxu0 0
        %7145 = vmatprep.subr.bf16.mxu0 0
        %7146 = vmatpush1.bf16.msra.mxu0 0
        %7147 = vmatprep.subr.bf16.mxu0 0
        %7148 = vmatpush1.bf16.msra.mxu0 0
        %7149 = vmatprep.subr.bf16.mxu0 0
        %7150 = vmatpush1.bf16.msra.mxu0 0
        %7151 = vmatprep.subr.bf16.mxu0 0
        %7152 = vmatpush1.bf16.msra.mxu0 0
        %7153 = vmatprep.subr.bf16.mxu0 0
        %7154 = vmatpush1.bf16.msra.mxu0 0
        %7155 = vmatprep.subr.bf16.mxu0 0
        %7156 = vmatpush1.bf16.msra.mxu0 %v7139
        %7157 = vmatprep.subr.bf16.mxu0 0
        %7158 = vmatpush2.bf16.msra.mxu0 0
        %7159 = vmatprep.subr.bf16.mxu0 0
        %7160 = vmatpush2.bf16.msra.mxu0 0
        %7161 = vmatprep.subr.bf16.mxu0 0
        %7162 = vmatpush2.bf16.msra.mxu0 0
        %7163 = vmatprep.subr.bf16.mxu0 0
        %7164 = vmatpush2.bf16.msra.mxu0 0
        %7165 = vmatprep.subr.bf16.mxu0 0
        %7166 = vmatpush2.bf16.msra.mxu0 0
        %7167 = vmatprep.subr.bf16.mxu0 0
        %7168 = vmatpush2.bf16.msra.mxu0 0
        %7169 = vmatprep.subr.bf16.mxu0 0
        %7170 = vmatpush2.bf16.msra.mxu0 0
        %7171 = vmatprep.subr.bf16.mxu0 0
        %7172 = vmatpush2.bf16.msra.mxu0 0
        %7173 = vmatprep.mubr.bf16.mxu0 0
        %7174 = vmatmul.mubr.bf16.gmra.mxu0 %v7085
        %v7175 = vpop.f32.mrf.mxu0
        %v7176 = vadd.f32 0.0, %v7175
        %v7177 = vpop.f32.mrf.mxu0
        %v7178 = vpop.f32.mrf.mxu0
        %v7179 = vadd.f32 0.0, %v7178
        %v7180 = vpop.f32.mrf.mxu0
        %7181 = vmatprep.mubr.bf16.mxu0 0
        %7182 = vmatmul.mubr.bf16.gmra.mxu0 %v7088
        %v7183 = vpop.f32.mrf.mxu0
        %v7184 = vadd.f32 0.0, %v7183
        %v7185 = vpop.f32.mrf.mxu0
        %v7186 = vpop.f32.mrf.mxu0
        %v7187 = vadd.f32 0.0, %v7186
        %v7188 = vpop.f32.mrf.mxu0
        %7189 = vmatprep.mubr.bf16.mxu0 0
        %7190 = vmatmul.mubr.bf16.gmra.mxu0 %v7091
        %v7191 = vpop.f32.mrf.mxu0
        %v7192 = vadd.f32 0.0, %v7191
        %v7193 = vpop.f32.mrf.mxu0
        %v7194 = vpop.f32.mrf.mxu0
        %v7195 = vadd.f32 0.0, %v7194
        %v7196 = vpop.f32.mrf.mxu0
        %7197 = vmatprep.mubr.bf16.mxu0 0
        %7198 = vmatmul.mubr.bf16.gmra.mxu0 %v7094
        %v7199 = vpop.f32.mrf.mxu0
        %v7200 = vadd.f32 0.0, %v7199
        %v7201 = vpop.f32.mrf.mxu0
        %v7202 = vpop.f32.mrf.mxu0
        %v7203 = vadd.f32 0.0, %v7202
        %v7204 = vpop.f32.mrf.mxu0
        %7205 = vmatprep.mubr.bf16.mxu0 0
        %7206 = vmatmul.mubr.bf16.gmra.mxu0 %v7097
        %v7207 = vpop.f32.mrf.mxu0
        %v7208 = vadd.f32 0.0, %v7207
        %v7209 = vpop.f32.mrf.mxu0
        %v7210 = vpop.f32.mrf.mxu0
        %v7211 = vadd.f32 0.0, %v7210
        %v7212 = vpop.f32.mrf.mxu0
        %7213 = vmatprep.mubr.bf16.mxu0 0
        %7214 = vmatmul.mubr.bf16.gmra.mxu0 %v7100
        %v7215 = vpop.f32.mrf.mxu0
        %v7216 = vadd.f32 0.0, %v7215
        %v7217 = vpop.f32.mrf.mxu0
        %v7218 = vpop.f32.mrf.mxu0
        %v7219 = vadd.f32 0.0, %v7218
        %v7220 = vpop.f32.mrf.mxu0
        %7221 = vmatprep.mubr.bf16.mxu0 0
        %7222 = vmatmul.mubr.bf16.gmra.mxu0 %v7103
        %v7223 = vpop.f32.mrf.mxu0
        %v7224 = vadd.f32 0.0, %v7223
        %v7225 = vpop.f32.mrf.mxu0
        %v7226 = vpop.f32.mrf.mxu0
        %v7227 = vadd.f32 0.0, %v7226
        %v7228 = vpop.f32.mrf.mxu0
        %7229 = vmatprep.mubr.bf16.mxu0 0
        %7230 = vmatmul.mubr.bf16.gmra.mxu0 %v7106
        %v7231 = vpop.f32.mrf.mxu0
        %v7232 = vadd.f32 0.0, %v7231
        %v7233 = vpop.f32.mrf.mxu0
        %v7234 = vpop.f32.mrf.mxu0
        %v7235 = vadd.f32 0.0, %v7234
        %v7236 = vpop.f32.mrf.mxu0
        %7237 = vmatprep.mubr.bf16.mxu0 0
        %7238 = vmatmul.mubr.bf16.gmra.mxu0 %v7109
        %v7239 = vpop.f32.mrf.mxu0
        %v7240 = vadd.f32 0.0, %v7239
        %v7241 = vpop.f32.mrf.mxu0
        %v7242 = vpop.f32.mrf.mxu0
        %v7243 = vadd.f32 0.0, %v7242
        %v7244 = vpop.f32.mrf.mxu0
        %7245 = vmatprep.mubr.bf16.mxu0 0
        %7246 = vmatmul.mubr.bf16.gmra.mxu0 %v7112
        %v7247 = vpop.f32.mrf.mxu0
        %v7248 = vadd.f32 0.0, %v7247
        %v7249 = vpop.f32.mrf.mxu0
        %v7250 = vpop.f32.mrf.mxu0
        %v7251 = vadd.f32 0.0, %v7250
        %v7252 = vpop.f32.mrf.mxu0
        %7253 = vmatprep.mubr.bf16.mxu0 0
        %7254 = vmatmul.mubr.bf16.gmra.mxu0 %v7115
        %v7255 = vpop.f32.mrf.mxu0
        %v7256 = vadd.f32 0.0, %v7255
        %v7257 = vpop.f32.mrf.mxu0
        %v7258 = vpop.f32.mrf.mxu0
        %v7259 = vadd.f32 0.0, %v7258
        %v7260 = vpop.f32.mrf.mxu0
        %7261 = vmatprep.mubr.bf16.mxu0 0
        %7262 = vmatmul.mubr.bf16.gmra.mxu0 %v7118
        %v7263 = vpop.f32.mrf.mxu0
        %v7264 = vadd.f32 0.0, %v7263
        %v7265 = vpop.f32.mrf.mxu0
        %v7266 = vpop.f32.mrf.mxu0
        %v7267 = vadd.f32 0.0, %v7266
        %v7268 = vpop.f32.mrf.mxu0
        %7269 = vmatprep.mubr.bf16.mxu0 0
        %7270 = vmatmul.mubr.bf16.gmra.mxu0 %v7121
        %v7271 = vpop.f32.mrf.mxu0
        %v7272 = vadd.f32 0.0, %v7271
        %v7273 = vpop.f32.mrf.mxu0
        %v7274 = vpop.f32.mrf.mxu0
        %v7275 = vadd.f32 0.0, %v7274
        %v7276 = vpop.f32.mrf.mxu0
        %7277 = vmatprep.mubr.bf16.mxu0 0
        %7278 = vmatmul.mubr.bf16.gmra.mxu0 %v7124
        %v7279 = vpop.f32.mrf.mxu0
        %v7280 = vadd.f32 0.0, %v7279
        %v7281 = vpop.f32.mrf.mxu0
        %v7282 = vpop.f32.mrf.mxu0
        %v7283 = vadd.f32 0.0, %v7282
        %v7284 = vpop.f32.mrf.mxu0
        %7285 = vmatprep.mubr.bf16.mxu0 0
        %7286 = vmatmul.mubr.bf16.gmra.mxu0 %v7127
        %v7287 = vpop.f32.mrf.mxu0
        %v7288 = vadd.f32 0.0, %v7287
        %v7289 = vpop.f32.mrf.mxu0
        %v7290 = vpop.f32.mrf.mxu0
        %v7291 = vadd.f32 0.0, %v7290
        %v7292 = vpop.f32.mrf.mxu0
        %7293 = vmatprep.mubr.bf16.mxu0 0
        %7294 = vmatmul.mubr.bf16.gmra.mxu0 %v7130
        %v7295 = vpop.f32.mrf.mxu0
        %v7296 = vadd.f32 0.0, %v7295
        %v7297 = vpop.f32.mrf.mxu0
        %v7298 = vpop.f32.mrf.mxu0
        %v7299 = vadd.f32 0.0, %v7298
        %v7300 = vpop.f32.mrf.mxu0
        %7301 = vmatprep.mubr.bf16.mxu0 0
        %7302 = vmatmul.mubr.bf16.gmra.mxu0 %v7133
        %v7303 = vpop.f32.mrf.mxu0
        %v7304 = vadd.f32 0.0, %v7303
        %v7305 = vpop.f32.mrf.mxu0
        %v7306 = vpop.f32.mrf.mxu0
        %v7307 = vadd.f32 0.0, %v7306
        %v7308 = vpop.f32.mrf.mxu0
        %7309 = vmatprep.mubr.bf16.mxu0 0
        %7310 = vmatmul.mubr.bf16.gmra.mxu0 %v7136
        %v7311 = vpop.f32.mrf.mxu0
        %v7312 = vadd.f32 0.0, %v7311
        %v7313 = vpop.f32.mrf.mxu0
        %v7314 = vpop.f32.mrf.mxu0
        %v7315 = vadd.f32 0.0, %v7314
        %v7316 = vpop.f32.mrf.mxu0
        %7317 = vdwg.mxu0
        %v7318 = vadd.f32 %v6750, %v7176
        %v7319 = vadd.f32 %v6751, %v7179
        %v7320 = vadd.f32 %v6752, %v7184
        %v7321 = vadd.f32 %v6753, %v7187
        %v7322 = vadd.f32 %v6754, %v7192
        %v7323 = vadd.f32 %v6755, %v7195
        %v7324 = vadd.f32 %v6756, %v7200
        %v7325 = vadd.f32 %v6757, %v7203
        %v7326 = vadd.f32 %v6758, %v7208
        %v7327 = vadd.f32 %v6759, %v7211
        %v7328 = vadd.f32 %v6760, %v7216
        %v7329 = vadd.f32 %v6761, %v7219
        %v7330 = vadd.f32 %v6762, %v7224
        %v7331 = vadd.f32 %v6763, %v7227
        %v7332 = vadd.f32 %v6764, %v7232
        %v7333 = vadd.f32 %v6765, %v7235
        %v7334 = vadd.f32 %v6766, %v7240
        %v7335 = vadd.f32 %v6767, %v7243
        %v7336 = vadd.f32 %v6768, %v7248
        %v7337 = vadd.f32 %v6769, %v7251
        %v7338 = vadd.f32 %v6770, %v7256
        %v7339 = vadd.f32 %v6771, %v7259
        %v7340 = vadd.f32 %v6772, %v7264
        %v7341 = vadd.f32 %v6773, %v7267
        %v7342 = vadd.f32 %v6774, %v7272
        %v7343 = vadd.f32 %v6775, %v7275
        %v7344 = vadd.f32 %v6776, %v7280
        %v7345 = vadd.f32 %v6777, %v7283
        %v7346 = vadd.f32 %v6778, %v7288
        %v7347 = vadd.f32 %v6779, %v7291
        %v7348 = vadd.f32 %v6780, %v7296
        %v7349 = vadd.f32 %v6781, %v7299
        %v7350 = vadd.f32 %v6782, %v7304
        %v7351 = vadd.f32 %v6783, %v7307
        %v7352 = vadd.f32 %v6784, %v7312
        %v7353 = vadd.f32 %v6785, %v7315
        %v7354 = vld [vmem:[#allocation3 + $0x8] sm:$0xc]
        %s7355 = scalar_lea.vmem %s4, 20
        %v7356 = vld [vmem:[%s7355] sm:$0xf]
        %v7358 = vunpack.c.l.b16 %v7354
        %v7359 = vpack.c.b16 %v6863, %v7358
        %v7360 = vrot.slane %v7359, 2
        %v7361 = vrot.slane %v6900, 2
        %v7362 = vsel %vm2676, %v7360, %v7361
        %v7363 = vrot.slane %v6901, 2
        %v7364 = vsel %vm2676, %v7361, %v7363
        %v7365 = vrot.slane %v6902, 2
        %v7366 = vsel %vm2676, %v7363, %v7365
        %v7367 = vrot.slane %v6903, 2
        %v7368 = vsel %vm2676, %v7365, %v7367
        %v7369 = vrot.slane %v6904, 2
        %v7370 = vsel %vm2676, %v7367, %v7369
        %v7371 = vrot.slane %v6905, 2
        %v7372 = vsel %vm2676, %v7369, %v7371
        %v7373 = vrot.slane %v6906, 2
        %v7374 = vsel %vm2676, %v7371, %v7373
        %v7375 = vrot.slane %v6907, 2
        %v7376 = vsel %vm2676, %v7373, %v7375
        %v7377 = vrot.slane %v6908, 2
        %v7378 = vsel %vm2676, %v7375, %v7377
        %v7379 = vrot.slane %v6909, 2
        %v7380 = vsel %vm2676, %v7377, %v7379
        %v7381 = vrot.slane %v6910, 2
        %v7382 = vsel %vm2676, %v7379, %v7381
        %v7383 = vrot.slane %v6911, 2
        %v7384 = vsel %vm2676, %v7381, %v7383
        %v7385 = vrot.slane %v6912, 2
        %v7386 = vsel %vm2676, %v7383, %v7385
        %v7387 = vrot.slane %v6913, 2
        %v7388 = vsel %vm2676, %v7385, %v7387
        %v7389 = vrot.slane %v6914, 2
        %v7390 = vsel %vm2676, %v7387, %v7389
        %v7391 = vrot.slane %v6915, 2
        %v7392 = vsel %vm2676, %v7389, %v7391
        %v7393 = vrot.slane %v6916, 2
        %v7394 = vsel %vm2676, %v7391, %v7393
        %v7395 = vrot.slane %v6917, 2
        %v7396 = vsel %vm2676, %v7393, %v7395
        %v7398 = vsel %vm5586, %v7362, 0
        %v7401 = vsel %vm5586, %v7364, 0
        %v7404 = vsel %vm5586, %v7366, 0
        %v7407 = vsel %vm5586, %v7368, 0
        %v7410 = vsel %vm5586, %v7370, 0
        %v7413 = vsel %vm5586, %v7372, 0
        %v7416 = vsel %vm5586, %v7374, 0
        %v7419 = vsel %vm5586, %v7376, 0
        %v7422 = vsel %vm5586, %v7378, 0
        %v7425 = vsel %vm5586, %v7380, 0
        %v7428 = vsel %vm5586, %v7382, 0
        %v7431 = vsel %vm5586, %v7384, 0
        %v7434 = vsel %vm5586, %v7386, 0
        %v7437 = vsel %vm5586, %v7388, 0
        %v7440 = vsel %vm5586, %v7390, 0
        %v7443 = vsel %vm5586, %v7392, 0
        %v7446 = vsel %vm5586, %v7394, 0
        %v7449 = vsel %vm5586, %v7396, 0
        %v7452 = vsel %vm5641, %v7356, 0
        %7454 = vmatprep.subr.bf16.mxu0 0
        %7455 = vmatpush1.bf16.msra.mxu0 0
        %7456 = vmatprep.subr.bf16.mxu0 0
        %7457 = vmatpush1.bf16.msra.mxu0 0
        %7458 = vmatprep.subr.bf16.mxu0 0
        %7459 = vmatpush1.bf16.msra.mxu0 0
        %7460 = vmatprep.subr.bf16.mxu0 0
        %7461 = vmatpush1.bf16.msra.mxu0 0
        %7462 = vmatprep.subr.bf16.mxu0 0
        %7463 = vmatpush1.bf16.msra.mxu0 0
        %7464 = vmatprep.subr.bf16.mxu0 0
        %7465 = vmatpush1.bf16.msra.mxu0 0
        %7466 = vmatprep.subr.bf16.mxu0 0
        %7467 = vmatpush1.bf16.msra.mxu0 0
        %7468 = vmatprep.subr.bf16.mxu0 0
        %7469 = vmatpush1.bf16.msra.mxu0 %v7452
        %7470 = vmatprep.subr.bf16.mxu0 0
        %7471 = vmatpush2.bf16.msra.mxu0 0
        %7472 = vmatprep.subr.bf16.mxu0 0
        %7473 = vmatpush2.bf16.msra.mxu0 0
        %7474 = vmatprep.subr.bf16.mxu0 0
        %7475 = vmatpush2.bf16.msra.mxu0 0
        %7476 = vmatprep.subr.bf16.mxu0 0
        %7477 = vmatpush2.bf16.msra.mxu0 0
        %7478 = vmatprep.subr.bf16.mxu0 0
        %7479 = vmatpush2.bf16.msra.mxu0 0
        %7480 = vmatprep.subr.bf16.mxu0 0
        %7481 = vmatpush2.bf16.msra.mxu0 0
        %7482 = vmatprep.subr.bf16.mxu0 0
        %7483 = vmatpush2.bf16.msra.mxu0 0
        %7484 = vmatprep.subr.bf16.mxu0 0
        %7485 = vmatpush2.bf16.msra.mxu0 0
        %7486 = vmatprep.mubr.bf16.mxu0 0
        %7487 = vmatmul.mubr.bf16.gmra.mxu0 %v7398
        %v7488 = vpop.f32.mrf.mxu0
        %v7489 = vadd.f32 0.0, %v7488
        %v7490 = vpop.f32.mrf.mxu0
        %v7491 = vpop.f32.mrf.mxu0
        %v7492 = vadd.f32 0.0, %v7491
        %v7493 = vpop.f32.mrf.mxu0
        %7494 = vmatprep.mubr.bf16.mxu0 0
        %7495 = vmatmul.mubr.bf16.gmra.mxu0 %v7401
        %v7496 = vpop.f32.mrf.mxu0
        %v7497 = vadd.f32 0.0, %v7496
        %v7498 = vpop.f32.mrf.mxu0
        %v7499 = vpop.f32.mrf.mxu0
        %v7500 = vadd.f32 0.0, %v7499
        %v7501 = vpop.f32.mrf.mxu0
        %7502 = vmatprep.mubr.bf16.mxu0 0
        %7503 = vmatmul.mubr.bf16.gmra.mxu0 %v7404
        %v7504 = vpop.f32.mrf.mxu0
        %v7505 = vadd.f32 0.0, %v7504
        %v7506 = vpop.f32.mrf.mxu0
        %v7507 = vpop.f32.mrf.mxu0
        %v7508 = vadd.f32 0.0, %v7507
        %v7509 = vpop.f32.mrf.mxu0
        %7510 = vmatprep.mubr.bf16.mxu0 0
        %7511 = vmatmul.mubr.bf16.gmra.mxu0 %v7407
        %v7512 = vpop.f32.mrf.mxu0
        %v7513 = vadd.f32 0.0, %v7512
        %v7514 = vpop.f32.mrf.mxu0
        %v7515 = vpop.f32.mrf.mxu0
        %v7516 = vadd.f32 0.0, %v7515
        %v7517 = vpop.f32.mrf.mxu0
        %7518 = vmatprep.mubr.bf16.mxu0 0
        %7519 = vmatmul.mubr.bf16.gmra.mxu0 %v7410
        %v7520 = vpop.f32.mrf.mxu0
        %v7521 = vadd.f32 0.0, %v7520
        %v7522 = vpop.f32.mrf.mxu0
        %v7523 = vpop.f32.mrf.mxu0
        %v7524 = vadd.f32 0.0, %v7523
        %v7525 = vpop.f32.mrf.mxu0
        %7526 = vmatprep.mubr.bf16.mxu0 0
        %7527 = vmatmul.mubr.bf16.gmra.mxu0 %v7413
        %v7528 = vpop.f32.mrf.mxu0
        %v7529 = vadd.f32 0.0, %v7528
        %v7530 = vpop.f32.mrf.mxu0
        %v7531 = vpop.f32.mrf.mxu0
        %v7532 = vadd.f32 0.0, %v7531
        %v7533 = vpop.f32.mrf.mxu0
        %7534 = vmatprep.mubr.bf16.mxu0 0
        %7535 = vmatmul.mubr.bf16.gmra.mxu0 %v7416
        %v7536 = vpop.f32.mrf.mxu0
        %v7537 = vadd.f32 0.0, %v7536
        %v7538 = vpop.f32.mrf.mxu0
        %v7539 = vpop.f32.mrf.mxu0
        %v7540 = vadd.f32 0.0, %v7539
        %v7541 = vpop.f32.mrf.mxu0
        %7542 = vmatprep.mubr.bf16.mxu0 0
        %7543 = vmatmul.mubr.bf16.gmra.mxu0 %v7419
        %v7544 = vpop.f32.mrf.mxu0
        %v7545 = vadd.f32 0.0, %v7544
        %v7546 = vpop.f32.mrf.mxu0
        %v7547 = vpop.f32.mrf.mxu0
        %v7548 = vadd.f32 0.0, %v7547
        %v7549 = vpop.f32.mrf.mxu0
        %7550 = vmatprep.mubr.bf16.mxu0 0
        %7551 = vmatmul.mubr.bf16.gmra.mxu0 %v7422
        %v7552 = vpop.f32.mrf.mxu0
        %v7553 = vadd.f32 0.0, %v7552
        %v7554 = vpop.f32.mrf.mxu0
        %v7555 = vpop.f32.mrf.mxu0
        %v7556 = vadd.f32 0.0, %v7555
        %v7557 = vpop.f32.mrf.mxu0
        %7558 = vmatprep.mubr.bf16.mxu0 0
        %7559 = vmatmul.mubr.bf16.gmra.mxu0 %v7425
        %v7560 = vpop.f32.mrf.mxu0
        %v7561 = vadd.f32 0.0, %v7560
        %v7562 = vpop.f32.mrf.mxu0
        %v7563 = vpop.f32.mrf.mxu0
        %v7564 = vadd.f32 0.0, %v7563
        %v7565 = vpop.f32.mrf.mxu0
        %7566 = vmatprep.mubr.bf16.mxu0 0
        %7567 = vmatmul.mubr.bf16.gmra.mxu0 %v7428
        %v7568 = vpop.f32.mrf.mxu0
        %v7569 = vadd.f32 0.0, %v7568
        %v7570 = vpop.f32.mrf.mxu0
        %v7571 = vpop.f32.mrf.mxu0
        %v7572 = vadd.f32 0.0, %v7571
        %v7573 = vpop.f32.mrf.mxu0
        %7574 = vmatprep.mubr.bf16.mxu0 0
        %7575 = vmatmul.mubr.bf16.gmra.mxu0 %v7431
        %v7576 = vpop.f32.mrf.mxu0
        %v7577 = vadd.f32 0.0, %v7576
        %v7578 = vpop.f32.mrf.mxu0
        %v7579 = vpop.f32.mrf.mxu0
        %v7580 = vadd.f32 0.0, %v7579
        %v7581 = vpop.f32.mrf.mxu0
        %7582 = vmatprep.mubr.bf16.mxu0 0
        %7583 = vmatmul.mubr.bf16.gmra.mxu0 %v7434
        %v7584 = vpop.f32.mrf.mxu0
        %v7585 = vadd.f32 0.0, %v7584
        %v7586 = vpop.f32.mrf.mxu0
        %v7587 = vpop.f32.mrf.mxu0
        %v7588 = vadd.f32 0.0, %v7587
        %v7589 = vpop.f32.mrf.mxu0
        %7590 = vmatprep.mubr.bf16.mxu0 0
        %7591 = vmatmul.mubr.bf16.gmra.mxu0 %v7437
        %v7592 = vpop.f32.mrf.mxu0
        %v7593 = vadd.f32 0.0, %v7592
        %v7594 = vpop.f32.mrf.mxu0
        %v7595 = vpop.f32.mrf.mxu0
        %v7596 = vadd.f32 0.0, %v7595
        %v7597 = vpop.f32.mrf.mxu0
        %7598 = vmatprep.mubr.bf16.mxu0 0
        %7599 = vmatmul.mubr.bf16.gmra.mxu0 %v7440
        %v7600 = vpop.f32.mrf.mxu0
        %v7601 = vadd.f32 0.0, %v7600
        %v7602 = vpop.f32.mrf.mxu0
        %v7603 = vpop.f32.mrf.mxu0
        %v7604 = vadd.f32 0.0, %v7603
        %v7605 = vpop.f32.mrf.mxu0
        %7606 = vmatprep.mubr.bf16.mxu0 0
        %7607 = vmatmul.mubr.bf16.gmra.mxu0 %v7443
        %v7608 = vpop.f32.mrf.mxu0
        %v7609 = vadd.f32 0.0, %v7608
        %v7610 = vpop.f32.mrf.mxu0
        %v7611 = vpop.f32.mrf.mxu0
        %v7612 = vadd.f32 0.0, %v7611
        %v7613 = vpop.f32.mrf.mxu0
        %7614 = vmatprep.mubr.bf16.mxu0 0
        %7615 = vmatmul.mubr.bf16.gmra.mxu0 %v7446
        %v7616 = vpop.f32.mrf.mxu0
        %v7617 = vadd.f32 0.0, %v7616
        %v7618 = vpop.f32.mrf.mxu0
        %v7619 = vpop.f32.mrf.mxu0
        %v7620 = vadd.f32 0.0, %v7619
        %v7621 = vpop.f32.mrf.mxu0
        %7622 = vmatprep.mubr.bf16.mxu0 0
        %7623 = vmatmul.mubr.bf16.gmra.mxu0 %v7449
        %v7624 = vpop.f32.mrf.mxu0
        %v7625 = vadd.f32 0.0, %v7624
        %v7626 = vpop.f32.mrf.mxu0
        %v7627 = vpop.f32.mrf.mxu0
        %v7628 = vadd.f32 0.0, %v7627
        %v7629 = vpop.f32.mrf.mxu0
        %7630 = vdwg.mxu0
        %v7631 = vadd.f32 %v7318, %v7489
        %v7632 = vadd.f32 %v7319, %v7492
        %v7633 = vadd.f32 %v7320, %v7497
        %v7634 = vadd.f32 %v7321, %v7500
        %v7635 = vadd.f32 %v7322, %v7505
        %v7636 = vadd.f32 %v7323, %v7508
        %v7637 = vadd.f32 %v7324, %v7513
        %v7638 = vadd.f32 %v7325, %v7516
        %v7639 = vadd.f32 %v7326, %v7521
        %v7640 = vadd.f32 %v7327, %v7524
        %v7641 = vadd.f32 %v7328, %v7529
        %v7642 = vadd.f32 %v7329, %v7532
        %v7643 = vadd.f32 %v7330, %v7537
        %v7644 = vadd.f32 %v7331, %v7540
        %v7645 = vadd.f32 %v7332, %v7545
        %v7646 = vadd.f32 %v7333, %v7548
        %v7647 = vadd.f32 %v7334, %v7553
        %v7648 = vadd.f32 %v7335, %v7556
        %v7649 = vadd.f32 %v7336, %v7561
        %v7650 = vadd.f32 %v7337, %v7564
        %v7651 = vadd.f32 %v7338, %v7569
        %v7652 = vadd.f32 %v7339, %v7572
        %v7653 = vadd.f32 %v7340, %v7577
        %v7654 = vadd.f32 %v7341, %v7580
        %v7655 = vadd.f32 %v7342, %v7585
        %v7656 = vadd.f32 %v7343, %v7588
        %v7657 = vadd.f32 %v7344, %v7593
        %v7658 = vadd.f32 %v7345, %v7596
        %v7659 = vadd.f32 %v7346, %v7601
        %v7660 = vadd.f32 %v7347, %v7604
        %v7661 = vadd.f32 %v7348, %v7609
        %v7662 = vadd.f32 %v7349, %v7612
        %v7663 = vadd.f32 %v7350, %v7617
        %v7664 = vadd.f32 %v7351, %v7620
        %v7665 = vadd.f32 %v7352, %v7625
        %v7666 = vadd.f32 %v7353, %v7628
        %v7667 = vld [vmem:[#allocation3 + $0x10] sm:$0xc]
        %v7668 = vld [vmem:[#allocation3 + $0x14] sm:$0xf]
        %v7669 = vld [vmem:[#allocation3 + $0x18] sm:$0xf]
        %v7670 = vld [vmem:[#allocation3 + $0x1c] sm:$0xf]
        %v7671 = vld [vmem:[#allocation3 + $0x20] sm:$0xf]
        %v7672 = vld [vmem:[#allocation3 + $0x24] sm:$0xf]
        %v7673 = vld [vmem:[#allocation3 + $0x28] sm:$0xf]
        %v7674 = vld [vmem:[#allocation3 + $0x2c] sm:$0xf]
        %v7675 = vld [vmem:[#allocation3 + $0x30] sm:$0xf]
        %v7676 = vld [vmem:[#allocation3 + $0x34] sm:$0xf]
        %v7677 = vld [vmem:[#allocation3 + $0x38] sm:$0xf]
        %v7678 = vld [vmem:[#allocation3 + $0x3c] sm:$0xf]
        %v7679 = vld [vmem:[#allocation3 + $0x40] sm:$0xf]
        %v7680 = vld [vmem:[#allocation3 + $0x44] sm:$0xf]
        %v7681 = vld [vmem:[#allocation3 + $0x48] sm:$0xf]
        %v7682 = vld [vmem:[#allocation3 + $0x4c] sm:$0xf]
        %v7683 = vld [vmem:[#allocation3 + $0x50] sm:$0xf]
        %v7684 = vld [vmem:[#allocation3 + $0x54] sm:$0xf]
        %v7685 = vld [vmem:[#allocation3 + $0x58] sm:$0xf]
        %v7686 = vld [vmem:[#allocation3 + $0x5c] sm:$0xf]
        %v7687 = vld [vmem:[#allocation3 + $0x60] sm:$0xf]
        %v7688 = vld [vmem:[#allocation3 + $0x64] sm:$0xf]
        %v7689 = vld [vmem:[#allocation3 + $0x68] sm:$0xf]
        %v7690 = vld [vmem:[#allocation3 + $0x6c] sm:$0xf]
        %v7691 = vld [vmem:[#allocation3 + $0x70] sm:$0xf]
        %v7692 = vld [vmem:[#allocation3 + $0x74] sm:$0xf]
        %v7693 = vld [vmem:[#allocation3 + $0x78] sm:$0xf]
        %v7694 = vld [vmem:[#allocation3 + $0x7c] sm:$0xf]
        %v7695 = vld [vmem:[#allocation3 + $0x80] sm:$0xf]
        %v7696 = vld [vmem:[#allocation3 + $0x84] sm:$0xf]
        %v7697 = vld [vmem:[#allocation3 + $0x88] sm:$0xf]
        %v7698 = vld [vmem:[#allocation3 + $0x8c] sm:$0xf]
        %v7699 = vld [vmem:[#allocation3 + $0x90] sm:$0xf]
        %v7700 = vld [vmem:[#allocation3 + $0x94] sm:$0xf]
        %v7701 = vld [vmem:[#allocation3 + $0x98] sm:$0xf]
        %v7702 = vld [vmem:[#allocation3 + $0x9c] sm:$0xf]
        %v7703 = vld [vmem:[#allocation3 + $0xa0] sm:$0x1]
        %s7704 = scalar_lea.vmem %s4, 24
        %v7705 = vld [vmem:[%s7704] sm:$0xf]
        %v7743 = vunpack.c.l.b16 %v7667
        %v7744 = vunpack.c.l.b16 %v7668
        %v7745 = vunpack.c.l.b16 %v7669
        %v7746 = vunpack.c.l.b16 %v7670
        %v7747 = vunpack.c.l.b16 %v7671
        %v7748 = vunpack.c.l.b16 %v7672
        %v7749 = vunpack.c.l.b16 %v7673
        %v7750 = vunpack.c.l.b16 %v7674
        %v7751 = vunpack.c.l.b16 %v7675
        %v7752 = vunpack.c.l.b16 %v7676
        %v7753 = vunpack.c.l.b16 %v7677
        %v7754 = vunpack.c.l.b16 %v7678
        %v7755 = vunpack.c.l.b16 %v7679
        %v7756 = vunpack.c.l.b16 %v7680
        %v7757 = vunpack.c.l.b16 %v7681
        %v7758 = vunpack.c.l.b16 %v7682
        %v7759 = vunpack.c.l.b16 %v7683
        %v7760 = vunpack.c.l.b16 %v7684
        %v7761 = vunpack.c.l.b16 %v7685
        %v7762 = vunpack.c.l.b16 %v7686
        %v7763 = vunpack.c.l.b16 %v7687
        %v7764 = vunpack.c.l.b16 %v7688
        %v7765 = vunpack.c.l.b16 %v7689
        %v7766 = vunpack.c.l.b16 %v7690
        %v7767 = vunpack.c.l.b16 %v7691
        %v7768 = vunpack.c.l.b16 %v7692
        %v7769 = vunpack.c.l.b16 %v7693
        %v7770 = vunpack.c.l.b16 %v7694
        %v7771 = vunpack.c.l.b16 %v7695
        %v7772 = vunpack.c.l.b16 %v7696
        %v7773 = vunpack.c.l.b16 %v7697
        %v7774 = vunpack.c.l.b16 %v7698
        %v7775 = vunpack.c.l.b16 %v7699
        %v7776 = vunpack.c.l.b16 %v7700
        %v7777 = vunpack.c.l.b16 %v7701
        %v7778 = vunpack.c.l.b16 %v7702
        %v7779 = vunpack.c.l.b16 %v7703
        %v7780 = vpack.c.b16 %v7744, %v7743
        %v7781 = vpack.c.b16 %v7746, %v7745
        %v7782 = vpack.c.b16 %v7748, %v7747
        %v7783 = vpack.c.b16 %v7750, %v7749
        %v7784 = vpack.c.b16 %v7752, %v7751
        %v7785 = vpack.c.b16 %v7754, %v7753
        %v7786 = vpack.c.b16 %v7756, %v7755
        %v7787 = vpack.c.b16 %v7758, %v7757
        %v7788 = vpack.c.b16 %v7760, %v7759
        %v7789 = vpack.c.b16 %v7762, %v7761
        %v7790 = vpack.c.b16 %v7764, %v7763
        %v7791 = vpack.c.b16 %v7766, %v7765
        %v7792 = vpack.c.b16 %v7768, %v7767
        %v7793 = vpack.c.b16 %v7770, %v7769
        %v7794 = vpack.c.b16 %v7772, %v7771
        %v7795 = vpack.c.b16 %v7774, %v7773
        %v7796 = vpack.c.b16 %v7776, %v7775
        %v7797 = vpack.c.b16 %v7778, %v7777
        %v7798 = vpack.c.b16 %v7779, %v7779
        %v7799 = vrot.slane %v7780, 2
        %v7800 = vrot.slane %v7781, 2
        %v7801 = vsel %vm2676, %v7799, %v7800
        %v7802 = vrot.slane %v7782, 2
        %v7803 = vsel %vm2676, %v7800, %v7802
        %v7804 = vrot.slane %v7783, 2
        %v7805 = vsel %vm2676, %v7802, %v7804
        %v7806 = vrot.slane %v7784, 2
        %v7807 = vsel %vm2676, %v7804, %v7806
        %v7808 = vrot.slane %v7785, 2
        %v7809 = vsel %vm2676, %v7806, %v7808
        %v7810 = vrot.slane %v7786, 2
        %v7811 = vsel %vm2676, %v7808, %v7810
        %v7812 = vrot.slane %v7787, 2
        %v7813 = vsel %vm2676, %v7810, %v7812
        %v7814 = vrot.slane %v7788, 2
        %v7815 = vsel %vm2676, %v7812, %v7814
        %v7816 = vrot.slane %v7789, 2
        %v7817 = vsel %vm2676, %v7814, %v7816
        %v7818 = vrot.slane %v7790, 2
        %v7819 = vsel %vm2676, %v7816, %v7818
        %v7820 = vrot.slane %v7791, 2
        %v7821 = vsel %vm2676, %v7818, %v7820
        %v7822 = vrot.slane %v7792, 2
        %v7823 = vsel %vm2676, %v7820, %v7822
        %v7824 = vrot.slane %v7793, 2
        %v7825 = vsel %vm2676, %v7822, %v7824
        %v7826 = vrot.slane %v7794, 2
        %v7827 = vsel %vm2676, %v7824, %v7826
        %v7828 = vrot.slane %v7795, 2
        %v7829 = vsel %vm2676, %v7826, %v7828
        %v7830 = vrot.slane %v7796, 2
        %v7831 = vsel %vm2676, %v7828, %v7830
        %v7832 = vrot.slane %v7797, 2
        %v7833 = vsel %vm2676, %v7830, %v7832
        %v7834 = vrot.slane %v7798, 2
        %v7835 = vsel %vm2676, %v7832, %v7834
        %v7837 = vsel %vm5586, %v7801, 0
        %v7840 = vsel %vm5586, %v7803, 0
        %v7843 = vsel %vm5586, %v7805, 0
        %v7846 = vsel %vm5586, %v7807, 0
        %v7849 = vsel %vm5586, %v7809, 0
        %v7852 = vsel %vm5586, %v7811, 0
        %v7855 = vsel %vm5586, %v7813, 0
        %v7858 = vsel %vm5586, %v7815, 0
        %v7861 = vsel %vm5586, %v7817, 0
        %v7864 = vsel %vm5586, %v7819, 0
        %v7867 = vsel %vm5586, %v7821, 0
        %v7870 = vsel %vm5586, %v7823, 0
        %v7873 = vsel %vm5586, %v7825, 0
        %v7876 = vsel %vm5586, %v7827, 0
        %v7879 = vsel %vm5586, %v7829, 0
        %v7882 = vsel %vm5586, %v7831, 0
        %v7885 = vsel %vm5586, %v7833, 0
        %v7888 = vsel %vm5586, %v7835, 0
        %v7891 = vsel %vm5641, %v7705, 0
        %7893 = vmatprep.subr.bf16.mxu0 0
        %7894 = vmatpush1.bf16.msra.mxu0 0
        %7895 = vmatprep.subr.bf16.mxu0 0
        %7896 = vmatpush1.bf16.msra.mxu0 0
        %7897 = vmatprep.subr.bf16.mxu0 0
        %7898 = vmatpush1.bf16.msra.mxu0 0
        %7899 = vmatprep.subr.bf16.mxu0 0
        %7900 = vmatpush1.bf16.msra.mxu0 0
        %7901 = vmatprep.subr.bf16.mxu0 0
        %7902 = vmatpush1.bf16.msra.mxu0 0
        %7903 = vmatprep.subr.bf16.mxu0 0
        %7904 = vmatpush1.bf16.msra.mxu0 0
        %7905 = vmatprep.subr.bf16.mxu0 0
        %7906 = vmatpush1.bf16.msra.mxu0 0
        %7907 = vmatprep.subr.bf16.mxu0 0
        %7908 = vmatpush1.bf16.msra.mxu0 %v7891
        %7909 = vmatprep.subr.bf16.mxu0 0
        %7910 = vmatpush2.bf16.msra.mxu0 0
        %7911 = vmatprep.subr.bf16.mxu0 0
        %7912 = vmatpush2.bf16.msra.mxu0 0
        %7913 = vmatprep.subr.bf16.mxu0 0
        %7914 = vmatpush2.bf16.msra.mxu0 0
        %7915 = vmatprep.subr.bf16.mxu0 0
        %7916 = vmatpush2.bf16.msra.mxu0 0
        %7917 = vmatprep.subr.bf16.mxu0 0
        %7918 = vmatpush2.bf16.msra.mxu0 0
        %7919 = vmatprep.subr.bf16.mxu0 0
        %7920 = vmatpush2.bf16.msra.mxu0 0
        %7921 = vmatprep.subr.bf16.mxu0 0
        %7922 = vmatpush2.bf16.msra.mxu0 0
        %7923 = vmatprep.subr.bf16.mxu0 0
        %7924 = vmatpush2.bf16.msra.mxu0 0
        %7925 = vmatprep.mubr.bf16.mxu0 0
        %7926 = vmatmul.mubr.bf16.gmra.mxu0 %v7837
        %v7927 = vpop.f32.mrf.mxu0
        %v7928 = vadd.f32 0.0, %v7927
        %v7929 = vpop.f32.mrf.mxu0
        %v7930 = vpop.f32.mrf.mxu0
        %v7931 = vadd.f32 0.0, %v7930
        %v7932 = vpop.f32.mrf.mxu0
        %7933 = vmatprep.mubr.bf16.mxu0 0
        %7934 = vmatmul.mubr.bf16.gmra.mxu0 %v7840
        %v7935 = vpop.f32.mrf.mxu0
        %v7936 = vadd.f32 0.0, %v7935
        %v7937 = vpop.f32.mrf.mxu0
        %v7938 = vpop.f32.mrf.mxu0
        %v7939 = vadd.f32 0.0, %v7938
        %v7940 = vpop.f32.mrf.mxu0
        %7941 = vmatprep.mubr.bf16.mxu0 0
        %7942 = vmatmul.mubr.bf16.gmra.mxu0 %v7843
        %v7943 = vpop.f32.mrf.mxu0
        %v7944 = vadd.f32 0.0, %v7943
        %v7945 = vpop.f32.mrf.mxu0
        %v7946 = vpop.f32.mrf.mxu0
        %v7947 = vadd.f32 0.0, %v7946
        %v7948 = vpop.f32.mrf.mxu0
        %7949 = vmatprep.mubr.bf16.mxu0 0
        %7950 = vmatmul.mubr.bf16.gmra.mxu0 %v7846
        %v7951 = vpop.f32.mrf.mxu0
        %v7952 = vadd.f32 0.0, %v7951
        %v7953 = vpop.f32.mrf.mxu0
        %v7954 = vpop.f32.mrf.mxu0
        %v7955 = vadd.f32 0.0, %v7954
        %v7956 = vpop.f32.mrf.mxu0
        %7957 = vmatprep.mubr.bf16.mxu0 0
        %7958 = vmatmul.mubr.bf16.gmra.mxu0 %v7849
        %v7959 = vpop.f32.mrf.mxu0
        %v7960 = vadd.f32 0.0, %v7959
        %v7961 = vpop.f32.mrf.mxu0
        %v7962 = vpop.f32.mrf.mxu0
        %v7963 = vadd.f32 0.0, %v7962
        %v7964 = vpop.f32.mrf.mxu0
        %7965 = vmatprep.mubr.bf16.mxu0 0
        %7966 = vmatmul.mubr.bf16.gmra.mxu0 %v7852
        %v7967 = vpop.f32.mrf.mxu0
        %v7968 = vadd.f32 0.0, %v7967
        %v7969 = vpop.f32.mrf.mxu0
        %v7970 = vpop.f32.mrf.mxu0
        %v7971 = vadd.f32 0.0, %v7970
        %v7972 = vpop.f32.mrf.mxu0
        %7973 = vmatprep.mubr.bf16.mxu0 0
        %7974 = vmatmul.mubr.bf16.gmra.mxu0 %v7855
        %v7975 = vpop.f32.mrf.mxu0
        %v7976 = vadd.f32 0.0, %v7975
        %v7977 = vpop.f32.mrf.mxu0
        %v7978 = vpop.f32.mrf.mxu0
        %v7979 = vadd.f32 0.0, %v7978
        %v7980 = vpop.f32.mrf.mxu0
        %7981 = vmatprep.mubr.bf16.mxu0 0
        %7982 = vmatmul.mubr.bf16.gmra.mxu0 %v7858
        %v7983 = vpop.f32.mrf.mxu0
        %v7984 = vadd.f32 0.0, %v7983
        %v7985 = vpop.f32.mrf.mxu0
        %v7986 = vpop.f32.mrf.mxu0
        %v7987 = vadd.f32 0.0, %v7986
        %v7988 = vpop.f32.mrf.mxu0
        %7989 = vmatprep.mubr.bf16.mxu0 0
        %7990 = vmatmul.mubr.bf16.gmra.mxu0 %v7861
        %v7991 = vpop.f32.mrf.mxu0
        %v7992 = vadd.f32 0.0, %v7991
        %v7993 = vpop.f32.mrf.mxu0
        %v7994 = vpop.f32.mrf.mxu0
        %v7995 = vadd.f32 0.0, %v7994
        %v7996 = vpop.f32.mrf.mxu0
        %7997 = vmatprep.mubr.bf16.mxu0 0
        %7998 = vmatmul.mubr.bf16.gmra.mxu0 %v7864
        %v7999 = vpop.f32.mrf.mxu0
        %v8000 = vadd.f32 0.0, %v7999
        %v8001 = vpop.f32.mrf.mxu0
        %v8002 = vpop.f32.mrf.mxu0
        %v8003 = vadd.f32 0.0, %v8002
        %v8004 = vpop.f32.mrf.mxu0
        %8005 = vmatprep.mubr.bf16.mxu0 0
        %8006 = vmatmul.mubr.bf16.gmra.mxu0 %v7867
        %v8007 = vpop.f32.mrf.mxu0
        %v8008 = vadd.f32 0.0, %v8007
        %v8009 = vpop.f32.mrf.mxu0
        %v8010 = vpop.f32.mrf.mxu0
        %v8011 = vadd.f32 0.0, %v8010
        %v8012 = vpop.f32.mrf.mxu0
        %8013 = vmatprep.mubr.bf16.mxu0 0
        %8014 = vmatmul.mubr.bf16.gmra.mxu0 %v7870
        %v8015 = vpop.f32.mrf.mxu0
        %v8016 = vadd.f32 0.0, %v8015
        %v8017 = vpop.f32.mrf.mxu0
        %v8018 = vpop.f32.mrf.mxu0
        %v8019 = vadd.f32 0.0, %v8018
        %v8020 = vpop.f32.mrf.mxu0
        %8021 = vmatprep.mubr.bf16.mxu0 0
        %8022 = vmatmul.mubr.bf16.gmra.mxu0 %v7873
        %v8023 = vpop.f32.mrf.mxu0
        %v8024 = vadd.f32 0.0, %v8023
        %v8025 = vpop.f32.mrf.mxu0
        %v8026 = vpop.f32.mrf.mxu0
        %v8027 = vadd.f32 0.0, %v8026
        %v8028 = vpop.f32.mrf.mxu0
        %8029 = vmatprep.mubr.bf16.mxu0 0
        %8030 = vmatmul.mubr.bf16.gmra.mxu0 %v7876
        %v8031 = vpop.f32.mrf.mxu0
        %v8032 = vadd.f32 0.0, %v8031
        %v8033 = vpop.f32.mrf.mxu0
        %v8034 = vpop.f32.mrf.mxu0
        %v8035 = vadd.f32 0.0, %v8034
        %v8036 = vpop.f32.mrf.mxu0
        %8037 = vmatprep.mubr.bf16.mxu0 0
        %8038 = vmatmul.mubr.bf16.gmra.mxu0 %v7879
        %v8039 = vpop.f32.mrf.mxu0
        %v8040 = vadd.f32 0.0, %v8039
        %v8041 = vpop.f32.mrf.mxu0
        %v8042 = vpop.f32.mrf.mxu0
        %v8043 = vadd.f32 0.0, %v8042
        %v8044 = vpop.f32.mrf.mxu0
        %8045 = vmatprep.mubr.bf16.mxu0 0
        %8046 = vmatmul.mubr.bf16.gmra.mxu0 %v7882
        %v8047 = vpop.f32.mrf.mxu0
        %v8048 = vadd.f32 0.0, %v8047
        %v8049 = vpop.f32.mrf.mxu0
        %v8050 = vpop.f32.mrf.mxu0
        %v8051 = vadd.f32 0.0, %v8050
        %v8052 = vpop.f32.mrf.mxu0
        %8053 = vmatprep.mubr.bf16.mxu0 0
        %8054 = vmatmul.mubr.bf16.gmra.mxu0 %v7885
        %v8055 = vpop.f32.mrf.mxu0
        %v8056 = vadd.f32 0.0, %v8055
        %v8057 = vpop.f32.mrf.mxu0
        %v8058 = vpop.f32.mrf.mxu0
        %v8059 = vadd.f32 0.0, %v8058
        %v8060 = vpop.f32.mrf.mxu0
        %8061 = vmatprep.mubr.bf16.mxu0 0
        %8062 = vmatmul.mubr.bf16.gmra.mxu0 %v7888
        %v8063 = vpop.f32.mrf.mxu0
        %v8064 = vadd.f32 0.0, %v8063
        %v8065 = vpop.f32.mrf.mxu0
        %v8066 = vpop.f32.mrf.mxu0
        %v8067 = vadd.f32 0.0, %v8066
        %v8068 = vpop.f32.mrf.mxu0
        %8069 = vdwg.mxu0
        %v8070 = vadd.f32 %v7631, %v7928
        %v8071 = vadd.f32 %v7632, %v7931
        %v8072 = vadd.f32 %v7633, %v7936
        %v8073 = vadd.f32 %v7634, %v7939
        %v8074 = vadd.f32 %v7635, %v7944
        %v8075 = vadd.f32 %v7636, %v7947
        %v8076 = vadd.f32 %v7637, %v7952
        %v8077 = vadd.f32 %v7638, %v7955
        %v8078 = vadd.f32 %v7639, %v7960
        %v8079 = vadd.f32 %v7640, %v7963
        %v8080 = vadd.f32 %v7641, %v7968
        %v8081 = vadd.f32 %v7642, %v7971
        %v8082 = vadd.f32 %v7643, %v7976
        %v8083 = vadd.f32 %v7644, %v7979
        %v8084 = vadd.f32 %v7645, %v7984
        %v8085 = vadd.f32 %v7646, %v7987
        %v8086 = vadd.f32 %v7647, %v7992
        %v8087 = vadd.f32 %v7648, %v7995
        %v8088 = vadd.f32 %v7649, %v8000
        %v8089 = vadd.f32 %v7650, %v8003
        %v8090 = vadd.f32 %v7651, %v8008
        %v8091 = vadd.f32 %v7652, %v8011
        %v8092 = vadd.f32 %v7653, %v8016
        %v8093 = vadd.f32 %v7654, %v8019
        %v8094 = vadd.f32 %v7655, %v8024
        %v8095 = vadd.f32 %v7656, %v8027
        %v8096 = vadd.f32 %v7657, %v8032
        %v8097 = vadd.f32 %v7658, %v8035
        %v8098 = vadd.f32 %v7659, %v8040
        %v8099 = vadd.f32 %v7660, %v8043
        %v8100 = vadd.f32 %v7661, %v8048
        %v8101 = vadd.f32 %v7662, %v8051
        %v8102 = vadd.f32 %v7663, %v8056
        %v8103 = vadd.f32 %v7664, %v8059
        %v8104 = vadd.f32 %v7665, %v8064
        %v8105 = vadd.f32 %v7666, %v8067
        %v8106 = vld [vmem:[#allocation3 + $0xa0] sm:$0x3]
        %s8107 = scalar_lea.vmem %s4, 28
        %v8108 = vld [vmem:[%s8107] sm:$0xf]
        %v8110 = vunpack.c.l.b16 %v8106
        %v8111 = vpack.c.b16 %v8110, %v8110
        %v8113 = vshrl.u32 %v7780, 16
        %v8115 = vrot.slane %v8113, 2
        %v8116 = vshll.u32 %v7780, 16
        %v8118 = vrot.slane %v8116, 3
        %v8119 = vor.u32 %v8115, %v8118
        %v8121 = vshrl.u32 %v7781, 16
        %v8123 = vrot.slane %v8121, 2
        %v8124 = vshll.u32 %v7781, 16
        %v8126 = vrot.slane %v8124, 3
        %v8127 = vor.u32 %v8123, %v8126
        %v8128 = vsel %vm3429, %v8119, %v8127
        %v8130 = vshrl.u32 %v7782, 16
        %v8132 = vrot.slane %v8130, 2
        %v8133 = vshll.u32 %v7782, 16
        %v8135 = vrot.slane %v8133, 3
        %v8136 = vor.u32 %v8132, %v8135
        %v8137 = vsel %vm3429, %v8127, %v8136
        %v8139 = vshrl.u32 %v7783, 16
        %v8141 = vrot.slane %v8139, 2
        %v8142 = vshll.u32 %v7783, 16
        %v8144 = vrot.slane %v8142, 3
        %v8145 = vor.u32 %v8141, %v8144
        %v8146 = vsel %vm3429, %v8136, %v8145
        %v8148 = vshrl.u32 %v7784, 16
        %v8150 = vrot.slane %v8148, 2
        %v8151 = vshll.u32 %v7784, 16
        %v8153 = vrot.slane %v8151, 3
        %v8154 = vor.u32 %v8150, %v8153
        %v8155 = vsel %vm3429, %v8145, %v8154
        %v8157 = vshrl.u32 %v7785, 16
        %v8159 = vrot.slane %v8157, 2
        %v8160 = vshll.u32 %v7785, 16
        %v8162 = vrot.slane %v8160, 3
        %v8163 = vor.u32 %v8159, %v8162
        %v8164 = vsel %vm3429, %v8154, %v8163
        %v8166 = vshrl.u32 %v7786, 16
        %v8168 = vrot.slane %v8166, 2
        %v8169 = vshll.u32 %v7786, 16
        %v8171 = vrot.slane %v8169, 3
        %v8172 = vor.u32 %v8168, %v8171
        %v8173 = vsel %vm3429, %v8163, %v8172
        %v8175 = vshrl.u32 %v7787, 16
        %v8177 = vrot.slane %v8175, 2
        %v8178 = vshll.u32 %v7787, 16
        %v8180 = vrot.slane %v8178, 3
        %v8181 = vor.u32 %v8177, %v8180
        %v8182 = vsel %vm3429, %v8172, %v8181
        %v8184 = vshrl.u32 %v7788, 16
        %v8186 = vrot.slane %v8184, 2
        %v8187 = vshll.u32 %v7788, 16
        %v8189 = vrot.slane %v8187, 3
        %v8190 = vor.u32 %v8186, %v8189
        %v8191 = vsel %vm3429, %v8181, %v8190
        %v8193 = vshrl.u32 %v7789, 16
        %v8195 = vrot.slane %v8193, 2
        %v8196 = vshll.u32 %v7789, 16
        %v8198 = vrot.slane %v8196, 3
        %v8199 = vor.u32 %v8195, %v8198
        %v8200 = vsel %vm3429, %v8190, %v8199
        %v8202 = vshrl.u32 %v7790, 16
        %v8204 = vrot.slane %v8202, 2
        %v8205 = vshll.u32 %v7790, 16
        %v8207 = vrot.slane %v8205, 3
        %v8208 = vor.u32 %v8204, %v8207
        %v8209 = vsel %vm3429, %v8199, %v8208
        %v8211 = vshrl.u32 %v7791, 16
        %v8213 = vrot.slane %v8211, 2
        %v8214 = vshll.u32 %v7791, 16
        %v8216 = vrot.slane %v8214, 3
        %v8217 = vor.u32 %v8213, %v8216
        %v8218 = vsel %vm3429, %v8208, %v8217
        %v8220 = vshrl.u32 %v7792, 16
        %v8222 = vrot.slane %v8220, 2
        %v8223 = vshll.u32 %v7792, 16
        %v8225 = vrot.slane %v8223, 3
        %v8226 = vor.u32 %v8222, %v8225
        %v8227 = vsel %vm3429, %v8217, %v8226
        %v8229 = vshrl.u32 %v7793, 16
        %v8231 = vrot.slane %v8229, 2
        %v8232 = vshll.u32 %v7793, 16
        %v8234 = vrot.slane %v8232, 3
        %v8235 = vor.u32 %v8231, %v8234
        %v8236 = vsel %vm3429, %v8226, %v8235
        %v8238 = vshrl.u32 %v7794, 16
        %v8240 = vrot.slane %v8238, 2
        %v8241 = vshll.u32 %v7794, 16
        %v8243 = vrot.slane %v8241, 3
        %v8244 = vor.u32 %v8240, %v8243
        %v8245 = vsel %vm3429, %v8235, %v8244
        %v8247 = vshrl.u32 %v7795, 16
        %v8249 = vrot.slane %v8247, 2
        %v8250 = vshll.u32 %v7795, 16
        %v8252 = vrot.slane %v8250, 3
        %v8253 = vor.u32 %v8249, %v8252
        %v8254 = vsel %vm3429, %v8244, %v8253
        %v8256 = vshrl.u32 %v7796, 16
        %v8258 = vrot.slane %v8256, 2
        %v8259 = vshll.u32 %v7796, 16
        %v8261 = vrot.slane %v8259, 3
        %v8262 = vor.u32 %v8258, %v8261
        %v8263 = vsel %vm3429, %v8253, %v8262
        %v8265 = vshrl.u32 %v7797, 16
        %v8267 = vrot.slane %v8265, 2
        %v8268 = vshll.u32 %v7797, 16
        %v8270 = vrot.slane %v8268, 3
        %v8271 = vor.u32 %v8267, %v8270
        %v8272 = vsel %vm3429, %v8262, %v8271
        %v8274 = vshrl.u32 %v8111, 16
        %v8276 = vrot.slane %v8274, 2
        %v8277 = vshll.u32 %v8111, 16
        %v8279 = vrot.slane %v8277, 3
        %v8280 = vor.u32 %v8276, %v8279
        %v8281 = vsel %vm3429, %v8271, %v8280
        %v8283 = vsel %vm5586, %v8128, 0
        %v8286 = vsel %vm5586, %v8137, 0
        %v8289 = vsel %vm5586, %v8146, 0
        %v8292 = vsel %vm5586, %v8155, 0
        %v8295 = vsel %vm5586, %v8164, 0
        %v8298 = vsel %vm5586, %v8173, 0
        %v8301 = vsel %vm5586, %v8182, 0
        %v8304 = vsel %vm5586, %v8191, 0
        %v8307 = vsel %vm5586, %v8200, 0
        %v8310 = vsel %vm5586, %v8209, 0
        %v8313 = vsel %vm5586, %v8218, 0
        %v8316 = vsel %vm5586, %v8227, 0
        %v8319 = vsel %vm5586, %v8236, 0
        %v8322 = vsel %vm5586, %v8245, 0
        %v8325 = vsel %vm5586, %v8254, 0
        %v8328 = vsel %vm5586, %v8263, 0
        %v8331 = vsel %vm5586, %v8272, 0
        %v8334 = vsel %vm5586, %v8281, 0
        %v8337 = vsel %vm5641, %v8108, 0
        %8339 = vmatprep.subr.bf16.mxu0 0
        %8340 = vmatpush1.bf16.msra.mxu0 0
        %8341 = vmatprep.subr.bf16.mxu0 0
        %8342 = vmatpush1.bf16.msra.mxu0 0
        %8343 = vmatprep.subr.bf16.mxu0 0
        %8344 = vmatpush1.bf16.msra.mxu0 0
        %8345 = vmatprep.subr.bf16.mxu0 0
        %8346 = vmatpush1.bf16.msra.mxu0 0
        %8347 = vmatprep.subr.bf16.mxu0 0
        %8348 = vmatpush1.bf16.msra.mxu0 0
        %8349 = vmatprep.subr.bf16.mxu0 0
        %8350 = vmatpush1.bf16.msra.mxu0 0
        %8351 = vmatprep.subr.bf16.mxu0 0
        %8352 = vmatpush1.bf16.msra.mxu0 0
        %8353 = vmatprep.subr.bf16.mxu0 0
        %8354 = vmatpush1.bf16.msra.mxu0 %v8337
        %8355 = vmatprep.subr.bf16.mxu0 0
        %8356 = vmatpush2.bf16.msra.mxu0 0
        %8357 = vmatprep.subr.bf16.mxu0 0
        %8358 = vmatpush2.bf16.msra.mxu0 0
        %8359 = vmatprep.subr.bf16.mxu0 0
        %8360 = vmatpush2.bf16.msra.mxu0 0
        %8361 = vmatprep.subr.bf16.mxu0 0
        %8362 = vmatpush2.bf16.msra.mxu0 0
        %8363 = vmatprep.subr.bf16.mxu0 0
        %8364 = vmatpush2.bf16.msra.mxu0 0
        %8365 = vmatprep.subr.bf16.mxu0 0
        %8366 = vmatpush2.bf16.msra.mxu0 0
        %8367 = vmatprep.subr.bf16.mxu0 0
        %8368 = vmatpush2.bf16.msra.mxu0 0
        %8369 = vmatprep.subr.bf16.mxu0 0
        %8370 = vmatpush2.bf16.msra.mxu0 0
        %8371 = vmatprep.mubr.bf16.mxu0 0
        %8372 = vmatmul.mubr.bf16.gmra.mxu0 %v8283
        %v8373 = vpop.f32.mrf.mxu0
        %v8374 = vadd.f32 0.0, %v8373
        %v8375 = vpop.f32.mrf.mxu0
        %v8376 = vpop.f32.mrf.mxu0
        %v8377 = vadd.f32 0.0, %v8376
        %v8378 = vpop.f32.mrf.mxu0
        %8379 = vmatprep.mubr.bf16.mxu0 0
        %8380 = vmatmul.mubr.bf16.gmra.mxu0 %v8286
        %v8381 = vpop.f32.mrf.mxu0
        %v8382 = vadd.f32 0.0, %v8381
        %v8383 = vpop.f32.mrf.mxu0
        %v8384 = vpop.f32.mrf.mxu0
        %v8385 = vadd.f32 0.0, %v8384
        %v8386 = vpop.f32.mrf.mxu0
        %8387 = vmatprep.mubr.bf16.mxu0 0
        %8388 = vmatmul.mubr.bf16.gmra.mxu0 %v8289
        %v8389 = vpop.f32.mrf.mxu0
        %v8390 = vadd.f32 0.0, %v8389
        %v8391 = vpop.f32.mrf.mxu0
        %v8392 = vpop.f32.mrf.mxu0
        %v8393 = vadd.f32 0.0, %v8392
        %v8394 = vpop.f32.mrf.mxu0
        %8395 = vmatprep.mubr.bf16.mxu0 0
        %8396 = vmatmul.mubr.bf16.gmra.mxu0 %v8292
        %v8397 = vpop.f32.mrf.mxu0
        %v8398 = vadd.f32 0.0, %v8397
        %v8399 = vpop.f32.mrf.mxu0
        %v8400 = vpop.f32.mrf.mxu0
        %v8401 = vadd.f32 0.0, %v8400
        %v8402 = vpop.f32.mrf.mxu0
        %8403 = vmatprep.mubr.bf16.mxu0 0
        %8404 = vmatmul.mubr.bf16.gmra.mxu0 %v8295
        %v8405 = vpop.f32.mrf.mxu0
        %v8406 = vadd.f32 0.0, %v8405
        %v8407 = vpop.f32.mrf.mxu0
        %v8408 = vpop.f32.mrf.mxu0
        %v8409 = vadd.f32 0.0, %v8408
        %v8410 = vpop.f32.mrf.mxu0
        %8411 = vmatprep.mubr.bf16.mxu0 0
        %8412 = vmatmul.mubr.bf16.gmra.mxu0 %v8298
        %v8413 = vpop.f32.mrf.mxu0
        %v8414 = vadd.f32 0.0, %v8413
        %v8415 = vpop.f32.mrf.mxu0
        %v8416 = vpop.f32.mrf.mxu0
        %v8417 = vadd.f32 0.0, %v8416
        %v8418 = vpop.f32.mrf.mxu0
        %8419 = vmatprep.mubr.bf16.mxu0 0
        %8420 = vmatmul.mubr.bf16.gmra.mxu0 %v8301
        %v8421 = vpop.f32.mrf.mxu0
        %v8422 = vadd.f32 0.0, %v8421
        %v8423 = vpop.f32.mrf.mxu0
        %v8424 = vpop.f32.mrf.mxu0
        %v8425 = vadd.f32 0.0, %v8424
        %v8426 = vpop.f32.mrf.mxu0
        %8427 = vmatprep.mubr.bf16.mxu0 0
        %8428 = vmatmul.mubr.bf16.gmra.mxu0 %v8304
        %v8429 = vpop.f32.mrf.mxu0
        %v8430 = vadd.f32 0.0, %v8429
        %v8431 = vpop.f32.mrf.mxu0
        %v8432 = vpop.f32.mrf.mxu0
        %v8433 = vadd.f32 0.0, %v8432
        %v8434 = vpop.f32.mrf.mxu0
        %8435 = vmatprep.mubr.bf16.mxu0 0
        %8436 = vmatmul.mubr.bf16.gmra.mxu0 %v8307
        %v8437 = vpop.f32.mrf.mxu0
        %v8438 = vadd.f32 0.0, %v8437
        %v8439 = vpop.f32.mrf.mxu0
        %v8440 = vpop.f32.mrf.mxu0
        %v8441 = vadd.f32 0.0, %v8440
        %v8442 = vpop.f32.mrf.mxu0
        %8443 = vmatprep.mubr.bf16.mxu0 0
        %8444 = vmatmul.mubr.bf16.gmra.mxu0 %v8310
        %v8445 = vpop.f32.mrf.mxu0
        %v8446 = vadd.f32 0.0, %v8445
        %v8447 = vpop.f32.mrf.mxu0
        %v8448 = vpop.f32.mrf.mxu0
        %v8449 = vadd.f32 0.0, %v8448
        %v8450 = vpop.f32.mrf.mxu0
        %8451 = vmatprep.mubr.bf16.mxu0 0
        %8452 = vmatmul.mubr.bf16.gmra.mxu0 %v8313
        %v8453 = vpop.f32.mrf.mxu0
        %v8454 = vadd.f32 0.0, %v8453
        %v8455 = vpop.f32.mrf.mxu0
        %v8456 = vpop.f32.mrf.mxu0
        %v8457 = vadd.f32 0.0, %v8456
        %v8458 = vpop.f32.mrf.mxu0
        %8459 = vmatprep.mubr.bf16.mxu0 0
        %8460 = vmatmul.mubr.bf16.gmra.mxu0 %v8316
        %v8461 = vpop.f32.mrf.mxu0
        %v8462 = vadd.f32 0.0, %v8461
        %v8463 = vpop.f32.mrf.mxu0
        %v8464 = vpop.f32.mrf.mxu0
        %v8465 = vadd.f32 0.0, %v8464
        %v8466 = vpop.f32.mrf.mxu0
        %8467 = vmatprep.mubr.bf16.mxu0 0
        %8468 = vmatmul.mubr.bf16.gmra.mxu0 %v8319
        %v8469 = vpop.f32.mrf.mxu0
        %v8470 = vadd.f32 0.0, %v8469
        %v8471 = vpop.f32.mrf.mxu0
        %v8472 = vpop.f32.mrf.mxu0
        %v8473 = vadd.f32 0.0, %v8472
        %v8474 = vpop.f32.mrf.mxu0
        %8475 = vmatprep.mubr.bf16.mxu0 0
        %8476 = vmatmul.mubr.bf16.gmra.mxu0 %v8322
        %v8477 = vpop.f32.mrf.mxu0
        %v8478 = vadd.f32 0.0, %v8477
        %v8479 = vpop.f32.mrf.mxu0
        %v8480 = vpop.f32.mrf.mxu0
        %v8481 = vadd.f32 0.0, %v8480
        %v8482 = vpop.f32.mrf.mxu0
        %8483 = vmatprep.mubr.bf16.mxu0 0
        %8484 = vmatmul.mubr.bf16.gmra.mxu0 %v8325
        %v8485 = vpop.f32.mrf.mxu0
        %v8486 = vadd.f32 0.0, %v8485
        %v8487 = vpop.f32.mrf.mxu0
        %v8488 = vpop.f32.mrf.mxu0
        %v8489 = vadd.f32 0.0, %v8488
        %v8490 = vpop.f32.mrf.mxu0
        %8491 = vmatprep.mubr.bf16.mxu0 0
        %8492 = vmatmul.mubr.bf16.gmra.mxu0 %v8328
        %v8493 = vpop.f32.mrf.mxu0
        %v8494 = vadd.f32 0.0, %v8493
        %v8495 = vpop.f32.mrf.mxu0
        %v8496 = vpop.f32.mrf.mxu0
        %v8497 = vadd.f32 0.0, %v8496
        %v8498 = vpop.f32.mrf.mxu0
        %8499 = vmatprep.mubr.bf16.mxu0 0
        %8500 = vmatmul.mubr.bf16.gmra.mxu0 %v8331
        %v8501 = vpop.f32.mrf.mxu0
        %v8502 = vadd.f32 0.0, %v8501
        %v8503 = vpop.f32.mrf.mxu0
        %v8504 = vpop.f32.mrf.mxu0
        %v8505 = vadd.f32 0.0, %v8504
        %v8506 = vpop.f32.mrf.mxu0
        %8507 = vmatprep.mubr.bf16.mxu0 0
        %8508 = vmatmul.mubr.bf16.gmra.mxu0 %v8334
        %v8509 = vpop.f32.mrf.mxu0
        %v8510 = vadd.f32 0.0, %v8509
        %v8511 = vpop.f32.mrf.mxu0
        %v8512 = vpop.f32.mrf.mxu0
        %v8513 = vadd.f32 0.0, %v8512
        %v8514 = vpop.f32.mrf.mxu0
        %8515 = vdwg.mxu0
        %v8516 = vadd.f32 %v8070, %v8374
        %v8517 = vadd.f32 %v8071, %v8377
        %v8518 = vadd.f32 %v8072, %v8382
        %v8519 = vadd.f32 %v8073, %v8385
        %v8520 = vadd.f32 %v8074, %v8390
        %v8521 = vadd.f32 %v8075, %v8393
        %v8522 = vadd.f32 %v8076, %v8398
        %v8523 = vadd.f32 %v8077, %v8401
        %v8524 = vadd.f32 %v8078, %v8406
        %v8525 = vadd.f32 %v8079, %v8409
        %v8526 = vadd.f32 %v8080, %v8414
        %v8527 = vadd.f32 %v8081, %v8417
        %v8528 = vadd.f32 %v8082, %v8422
        %v8529 = vadd.f32 %v8083, %v8425
        %v8530 = vadd.f32 %v8084, %v8430
        %v8531 = vadd.f32 %v8085, %v8433
        %v8532 = vadd.f32 %v8086, %v8438
        %v8533 = vadd.f32 %v8087, %v8441
        %v8534 = vadd.f32 %v8088, %v8446
        %v8535 = vadd.f32 %v8089, %v8449
        %v8536 = vadd.f32 %v8090, %v8454
        %v8537 = vadd.f32 %v8091, %v8457
        %v8538 = vadd.f32 %v8092, %v8462
        %v8539 = vadd.f32 %v8093, %v8465
        %v8540 = vadd.f32 %v8094, %v8470
        %v8541 = vadd.f32 %v8095, %v8473
        %v8542 = vadd.f32 %v8096, %v8478
        %v8543 = vadd.f32 %v8097, %v8481
        %v8544 = vadd.f32 %v8098, %v8486
        %v8545 = vadd.f32 %v8099, %v8489
        %v8546 = vadd.f32 %v8100, %v8494
        %v8547 = vadd.f32 %v8101, %v8497
        %v8548 = vadd.f32 %v8102, %v8502
        %v8549 = vadd.f32 %v8103, %v8505
        %v8550 = vadd.f32 %v8104, %v8510
        %v8551 = vadd.f32 %v8105, %v8513
        %v8552 = vld [vmem:[#allocation3 + $0x10] sm:$0x8]
        %s8553 = scalar_lea.vmem %s4, 32
        %v8554 = vld [vmem:[%s8553] sm:$0xf]
        %v8556 = vunpack.c.l.b16 %v8552
        %v8557 = vpack.c.b16 %v7744, %v8556
        %v8558 = vrot.slane %v8557, 3
        %v8559 = vrot.slane %v7781, 3
        %v8560 = vsel %vm3876, %v8558, %v8559
        %v8561 = vrot.slane %v7782, 3
        %v8562 = vsel %vm3876, %v8559, %v8561
        %v8563 = vrot.slane %v7783, 3
        %v8564 = vsel %vm3876, %v8561, %v8563
        %v8565 = vrot.slane %v7784, 3
        %v8566 = vsel %vm3876, %v8563, %v8565
        %v8567 = vrot.slane %v7785, 3
        %v8568 = vsel %vm3876, %v8565, %v8567
        %v8569 = vrot.slane %v7786, 3
        %v8570 = vsel %vm3876, %v8567, %v8569
        %v8571 = vrot.slane %v7787, 3
        %v8572 = vsel %vm3876, %v8569, %v8571
        %v8573 = vrot.slane %v7788, 3
        %v8574 = vsel %vm3876, %v8571, %v8573
        %v8575 = vrot.slane %v7789, 3
        %v8576 = vsel %vm3876, %v8573, %v8575
        %v8577 = vrot.slane %v7790, 3
        %v8578 = vsel %vm3876, %v8575, %v8577
        %v8579 = vrot.slane %v7791, 3
        %v8580 = vsel %vm3876, %v8577, %v8579
        %v8581 = vrot.slane %v7792, 3
        %v8582 = vsel %vm3876, %v8579, %v8581
        %v8583 = vrot.slane %v7793, 3
        %v8584 = vsel %vm3876, %v8581, %v8583
        %v8585 = vrot.slane %v7794, 3
        %v8586 = vsel %vm3876, %v8583, %v8585
        %v8587 = vrot.slane %v7795, 3
        %v8588 = vsel %vm3876, %v8585, %v8587
        %v8589 = vrot.slane %v7796, 3
        %v8590 = vsel %vm3876, %v8587, %v8589
        %v8591 = vrot.slane %v7797, 3
        %v8592 = vsel %vm3876, %v8589, %v8591
        %v8593 = vrot.slane %v8111, 3
        %v8594 = vsel %vm3876, %v8591, %v8593
        %v8596 = vsel %vm5586, %v8560, 0
        %v8599 = vsel %vm5586, %v8562, 0
        %v8602 = vsel %vm5586, %v8564, 0
        %v8605 = vsel %vm5586, %v8566, 0
        %v8608 = vsel %vm5586, %v8568, 0
        %v8611 = vsel %vm5586, %v8570, 0
        %v8614 = vsel %vm5586, %v8572, 0
        %v8617 = vsel %vm5586, %v8574, 0
        %v8620 = vsel %vm5586, %v8576, 0
        %v8623 = vsel %vm5586, %v8578, 0
        %v8626 = vsel %vm5586, %v8580, 0
        %v8629 = vsel %vm5586, %v8582, 0
        %v8632 = vsel %vm5586, %v8584, 0
        %v8635 = vsel %vm5586, %v8586, 0
        %v8638 = vsel %vm5586, %v8588, 0
        %v8641 = vsel %vm5586, %v8590, 0
        %v8644 = vsel %vm5586, %v8592, 0
        %v8647 = vsel %vm5586, %v8594, 0
        %v8650 = vsel %vm5641, %v8554, 0
        %8652 = vmatprep.subr.bf16.mxu0 0
        %8653 = vmatpush1.bf16.msra.mxu0 0
        %8654 = vmatprep.subr.bf16.mxu0 0
        %8655 = vmatpush1.bf16.msra.mxu0 0
        %8656 = vmatprep.subr.bf16.mxu0 0
        %8657 = vmatpush1.bf16.msra.mxu0 0
        %8658 = vmatprep.subr.bf16.mxu0 0
        %8659 = vmatpush1.bf16.msra.mxu0 0
        %8660 = vmatprep.subr.bf16.mxu0 0
        %8661 = vmatpush1.bf16.msra.mxu0 0
        %8662 = vmatprep.subr.bf16.mxu0 0
        %8663 = vmatpush1.bf16.msra.mxu0 0
        %8664 = vmatprep.subr.bf16.mxu0 0
        %8665 = vmatpush1.bf16.msra.mxu0 0
        %8666 = vmatprep.subr.bf16.mxu0 0
        %8667 = vmatpush1.bf16.msra.mxu0 %v8650
        %8668 = vmatprep.subr.bf16.mxu0 0
        %8669 = vmatpush2.bf16.msra.mxu0 0
        %8670 = vmatprep.subr.bf16.mxu0 0
        %8671 = vmatpush2.bf16.msra.mxu0 0
        %8672 = vmatprep.subr.bf16.mxu0 0
        %8673 = vmatpush2.bf16.msra.mxu0 0
        %8674 = vmatprep.subr.bf16.mxu0 0
        %8675 = vmatpush2.bf16.msra.mxu0 0
        %8676 = vmatprep.subr.bf16.mxu0 0
        %8677 = vmatpush2.bf16.msra.mxu0 0
        %8678 = vmatprep.subr.bf16.mxu0 0
        %8679 = vmatpush2.bf16.msra.mxu0 0
        %8680 = vmatprep.subr.bf16.mxu0 0
        %8681 = vmatpush2.bf16.msra.mxu0 0
        %8682 = vmatprep.subr.bf16.mxu0 0
        %8683 = vmatpush2.bf16.msra.mxu0 0
        %8684 = vmatprep.mubr.bf16.mxu0 0
        %8685 = vmatmul.mubr.bf16.gmra.mxu0 %v8596
        %v8686 = vpop.f32.mrf.mxu0
        %v8687 = vadd.f32 0.0, %v8686
        %v8688 = vpop.f32.mrf.mxu0
        %v8689 = vpop.f32.mrf.mxu0
        %v8690 = vadd.f32 0.0, %v8689
        %v8691 = vpop.f32.mrf.mxu0
        %8692 = vmatprep.mubr.bf16.mxu0 0
        %8693 = vmatmul.mubr.bf16.gmra.mxu0 %v8599
        %v8694 = vpop.f32.mrf.mxu0
        %v8695 = vadd.f32 0.0, %v8694
        %v8696 = vpop.f32.mrf.mxu0
        %v8697 = vpop.f32.mrf.mxu0
        %v8698 = vadd.f32 0.0, %v8697
        %v8699 = vpop.f32.mrf.mxu0
        %8700 = vmatprep.mubr.bf16.mxu0 0
        %8701 = vmatmul.mubr.bf16.gmra.mxu0 %v8602
        %v8702 = vpop.f32.mrf.mxu0
        %v8703 = vadd.f32 0.0, %v8702
        %v8704 = vpop.f32.mrf.mxu0
        %v8705 = vpop.f32.mrf.mxu0
        %v8706 = vadd.f32 0.0, %v8705
        %v8707 = vpop.f32.mrf.mxu0
        %8708 = vmatprep.mubr.bf16.mxu0 0
        %8709 = vmatmul.mubr.bf16.gmra.mxu0 %v8605
        %v8710 = vpop.f32.mrf.mxu0
        %v8711 = vadd.f32 0.0, %v8710
        %v8712 = vpop.f32.mrf.mxu0
        %v8713 = vpop.f32.mrf.mxu0
        %v8714 = vadd.f32 0.0, %v8713
        %v8715 = vpop.f32.mrf.mxu0
        %8716 = vmatprep.mubr.bf16.mxu0 0
        %8717 = vmatmul.mubr.bf16.gmra.mxu0 %v8608
        %v8718 = vpop.f32.mrf.mxu0
        %v8719 = vadd.f32 0.0, %v8718
        %v8720 = vpop.f32.mrf.mxu0
        %v8721 = vpop.f32.mrf.mxu0
        %v8722 = vadd.f32 0.0, %v8721
        %v8723 = vpop.f32.mrf.mxu0
        %8724 = vmatprep.mubr.bf16.mxu0 0
        %8725 = vmatmul.mubr.bf16.gmra.mxu0 %v8611
        %v8726 = vpop.f32.mrf.mxu0
        %v8727 = vadd.f32 0.0, %v8726
        %v8728 = vpop.f32.mrf.mxu0
        %v8729 = vpop.f32.mrf.mxu0
        %v8730 = vadd.f32 0.0, %v8729
        %v8731 = vpop.f32.mrf.mxu0
        %8732 = vmatprep.mubr.bf16.mxu0 0
        %8733 = vmatmul.mubr.bf16.gmra.mxu0 %v8614
        %v8734 = vpop.f32.mrf.mxu0
        %v8735 = vadd.f32 0.0, %v8734
        %v8736 = vpop.f32.mrf.mxu0
        %v8737 = vpop.f32.mrf.mxu0
        %v8738 = vadd.f32 0.0, %v8737
        %v8739 = vpop.f32.mrf.mxu0
        %8740 = vmatprep.mubr.bf16.mxu0 0
        %8741 = vmatmul.mubr.bf16.gmra.mxu0 %v8617
        %v8742 = vpop.f32.mrf.mxu0
        %v8743 = vadd.f32 0.0, %v8742
        %v8744 = vpop.f32.mrf.mxu0
        %v8745 = vpop.f32.mrf.mxu0
        %v8746 = vadd.f32 0.0, %v8745
        %v8747 = vpop.f32.mrf.mxu0
        %8748 = vmatprep.mubr.bf16.mxu0 0
        %8749 = vmatmul.mubr.bf16.gmra.mxu0 %v8620
        %v8750 = vpop.f32.mrf.mxu0
        %v8751 = vadd.f32 0.0, %v8750
        %v8752 = vpop.f32.mrf.mxu0
        %v8753 = vpop.f32.mrf.mxu0
        %v8754 = vadd.f32 0.0, %v8753
        %v8755 = vpop.f32.mrf.mxu0
        %8756 = vmatprep.mubr.bf16.mxu0 0
        %8757 = vmatmul.mubr.bf16.gmra.mxu0 %v8623
        %v8758 = vpop.f32.mrf.mxu0
        %v8759 = vadd.f32 0.0, %v8758
        %v8760 = vpop.f32.mrf.mxu0
        %v8761 = vpop.f32.mrf.mxu0
        %v8762 = vadd.f32 0.0, %v8761
        %v8763 = vpop.f32.mrf.mxu0
        %8764 = vmatprep.mubr.bf16.mxu0 0
        %8765 = vmatmul.mubr.bf16.gmra.mxu0 %v8626
        %v8766 = vpop.f32.mrf.mxu0
        %v8767 = vadd.f32 0.0, %v8766
        %v8768 = vpop.f32.mrf.mxu0
        %v8769 = vpop.f32.mrf.mxu0
        %v8770 = vadd.f32 0.0, %v8769
        %v8771 = vpop.f32.mrf.mxu0
        %8772 = vmatprep.mubr.bf16.mxu0 0
        %8773 = vmatmul.mubr.bf16.gmra.mxu0 %v8629
        %v8774 = vpop.f32.mrf.mxu0
        %v8775 = vadd.f32 0.0, %v8774
        %v8776 = vpop.f32.mrf.mxu0
        %v8777 = vpop.f32.mrf.mxu0
        %v8778 = vadd.f32 0.0, %v8777
        %v8779 = vpop.f32.mrf.mxu0
        %8780 = vmatprep.mubr.bf16.mxu0 0
        %8781 = vmatmul.mubr.bf16.gmra.mxu0 %v8632
        %v8782 = vpop.f32.mrf.mxu0
        %v8783 = vadd.f32 0.0, %v8782
        %v8784 = vpop.f32.mrf.mxu0
        %v8785 = vpop.f32.mrf.mxu0
        %v8786 = vadd.f32 0.0, %v8785
        %v8787 = vpop.f32.mrf.mxu0
        %8788 = vmatprep.mubr.bf16.mxu0 0
        %8789 = vmatmul.mubr.bf16.gmra.mxu0 %v8635
        %v8790 = vpop.f32.mrf.mxu0
        %v8791 = vadd.f32 0.0, %v8790
        %v8792 = vpop.f32.mrf.mxu0
        %v8793 = vpop.f32.mrf.mxu0
        %v8794 = vadd.f32 0.0, %v8793
        %v8795 = vpop.f32.mrf.mxu0
        %8796 = vmatprep.mubr.bf16.mxu0 0
        %8797 = vmatmul.mubr.bf16.gmra.mxu0 %v8638
        %v8798 = vpop.f32.mrf.mxu0
        %v8799 = vadd.f32 0.0, %v8798
        %v8800 = vpop.f32.mrf.mxu0
        %v8801 = vpop.f32.mrf.mxu0
        %v8802 = vadd.f32 0.0, %v8801
        %v8803 = vpop.f32.mrf.mxu0
        %8804 = vmatprep.mubr.bf16.mxu0 0
        %8805 = vmatmul.mubr.bf16.gmra.mxu0 %v8641
        %v8806 = vpop.f32.mrf.mxu0
        %v8807 = vadd.f32 0.0, %v8806
        %v8808 = vpop.f32.mrf.mxu0
        %v8809 = vpop.f32.mrf.mxu0
        %v8810 = vadd.f32 0.0, %v8809
        %v8811 = vpop.f32.mrf.mxu0
        %8812 = vmatprep.mubr.bf16.mxu0 0
        %8813 = vmatmul.mubr.bf16.gmra.mxu0 %v8644
        %v8814 = vpop.f32.mrf.mxu0
        %v8815 = vadd.f32 0.0, %v8814
        %v8816 = vpop.f32.mrf.mxu0
        %v8817 = vpop.f32.mrf.mxu0
        %v8818 = vadd.f32 0.0, %v8817
        %v8819 = vpop.f32.mrf.mxu0
        %8820 = vmatprep.mubr.bf16.mxu0 0
        %8821 = vmatmul.mubr.bf16.gmra.mxu0 %v8647
        %v8822 = vpop.f32.mrf.mxu0
        %v8823 = vadd.f32 0.0, %v8822
        %v8824 = vpop.f32.mrf.mxu0
        %v8825 = vpop.f32.mrf.mxu0
        %v8826 = vadd.f32 0.0, %v8825
        %v8827 = vpop.f32.mrf.mxu0
        %8828 = vdwg.mxu0
        %v8829 = vadd.f32 %v8516, %v8687
        %v8830 = vadd.f32 %v8517, %v8690
        %v8831 = vadd.f32 %v8518, %v8695
        %v8832 = vadd.f32 %v8519, %v8698
        %v8833 = vadd.f32 %v8520, %v8703
        %v8834 = vadd.f32 %v8521, %v8706
        %v8835 = vadd.f32 %v8522, %v8711
        %v8836 = vadd.f32 %v8523, %v8714
        %v8837 = vadd.f32 %v8524, %v8719
        %v8838 = vadd.f32 %v8525, %v8722
        %v8839 = vadd.f32 %v8526, %v8727
        %v8840 = vadd.f32 %v8527, %v8730
        %v8841 = vadd.f32 %v8528, %v8735
        %v8842 = vadd.f32 %v8529, %v8738
        %v8843 = vadd.f32 %v8530, %v8743
        %v8844 = vadd.f32 %v8531, %v8746
        %v8845 = vadd.f32 %v8532, %v8751
        %v8846 = vadd.f32 %v8533, %v8754
        %v8847 = vadd.f32 %v8534, %v8759
        %v8848 = vadd.f32 %v8535, %v8762
        %v8849 = vadd.f32 %v8536, %v8767
        %v8850 = vadd.f32 %v8537, %v8770
        %v8851 = vadd.f32 %v8538, %v8775
        %v8852 = vadd.f32 %v8539, %v8778
        %v8853 = vadd.f32 %v8540, %v8783
        %v8854 = vadd.f32 %v8541, %v8786
        %v8855 = vadd.f32 %v8542, %v8791
        %v8856 = vadd.f32 %v8543, %v8794
        %v8857 = vadd.f32 %v8544, %v8799
        %v8858 = vadd.f32 %v8545, %v8802
        %v8859 = vadd.f32 %v8546, %v8807
        %v8860 = vadd.f32 %v8547, %v8810
        %v8861 = vadd.f32 %v8548, %v8815
        %v8862 = vadd.f32 %v8549, %v8818
        %v8863 = vadd.f32 %v8550, %v8823
        %v8864 = vadd.f32 %v8551, %v8826
        %v8865 = vld [vmem:[%s5] sm:$0x1]
        %v8867 = vlaneseq
        %v8868 = vshrl.u32 %v8867, 7
        %v8869 = vsub.s32 0, %v8868
        %v8870 = vrot.slane %v8865, %v8869
        %v8872 = vadd.f32 %v8829, %v8870
        %v8873 = vadd.f32 %v8830, %v8870
        %v8874 = vadd.f32 %v8831, %v8870
        %v8875 = vadd.f32 %v8832, %v8870
        %v8876 = vadd.f32 %v8833, %v8870
        %v8877 = vadd.f32 %v8834, %v8870
        %v8878 = vadd.f32 %v8835, %v8870
        %v8879 = vadd.f32 %v8836, %v8870
        %v8880 = vadd.f32 %v8837, %v8870
        %v8881 = vadd.f32 %v8838, %v8870
        %v8882 = vadd.f32 %v8839, %v8870
        %v8883 = vadd.f32 %v8840, %v8870
        %v8884 = vadd.f32 %v8841, %v8870
        %v8885 = vadd.f32 %v8842, %v8870
        %v8886 = vadd.f32 %v8843, %v8870
        %v8887 = vadd.f32 %v8844, %v8870
        %v8888 = vadd.f32 %v8845, %v8870
        %v8889 = vadd.f32 %v8846, %v8870
        %v8890 = vadd.f32 %v8847, %v8870
        %v8891 = vadd.f32 %v8848, %v8870
        %v8892 = vadd.f32 %v8849, %v8870
        %v8893 = vadd.f32 %v8850, %v8870
        %v8894 = vadd.f32 %v8851, %v8870
        %v8895 = vadd.f32 %v8852, %v8870
        %v8896 = vadd.f32 %v8853, %v8870
        %v8897 = vadd.f32 %v8854, %v8870
        %v8898 = vadd.f32 %v8855, %v8870
        %v8899 = vadd.f32 %v8856, %v8870
        %v8900 = vadd.f32 %v8857, %v8870
        %v8901 = vadd.f32 %v8858, %v8870
        %v8902 = vadd.f32 %v8859, %v8870
        %v8903 = vadd.f32 %v8860, %v8870
        %v8904 = vadd.f32 %v8861, %v8870
        %v8905 = vadd.f32 %v8862, %v8870
        %v8906 = vadd.f32 %v8863, %v8870
        %v8907 = vadd.f32 %v8864, %v8870
        %v8908 = vmax.f32 %v8872, 0.0
        %v8909 = vmax.f32 %v8873, 0.0
        %v8910 = vmax.f32 %v8874, 0.0
        %v8911 = vmax.f32 %v8875, 0.0
        %v8912 = vmax.f32 %v8876, 0.0
        %v8913 = vmax.f32 %v8877, 0.0
        %v8914 = vmax.f32 %v8878, 0.0
        %v8915 = vmax.f32 %v8879, 0.0
        %v8916 = vmax.f32 %v8880, 0.0
        %v8917 = vmax.f32 %v8881, 0.0
        %v8918 = vmax.f32 %v8882, 0.0
        %v8919 = vmax.f32 %v8883, 0.0
        %v8920 = vmax.f32 %v8884, 0.0
        %v8921 = vmax.f32 %v8885, 0.0
        %v8922 = vmax.f32 %v8886, 0.0
        %v8923 = vmax.f32 %v8887, 0.0
        %v8924 = vmax.f32 %v8888, 0.0
        %v8925 = vmax.f32 %v8889, 0.0
        %v8926 = vmax.f32 %v8890, 0.0
        %v8927 = vmax.f32 %v8891, 0.0
        %v8928 = vmax.f32 %v8892, 0.0
        %v8929 = vmax.f32 %v8893, 0.0
        %v8930 = vmax.f32 %v8894, 0.0
        %v8931 = vmax.f32 %v8895, 0.0
        %v8932 = vmax.f32 %v8896, 0.0
        %v8933 = vmax.f32 %v8897, 0.0
        %v8934 = vmax.f32 %v8898, 0.0
        %v8935 = vmax.f32 %v8899, 0.0
        %v8936 = vmax.f32 %v8900, 0.0
        %v8937 = vmax.f32 %v8901, 0.0
        %v8938 = vmax.f32 %v8902, 0.0
        %v8939 = vmax.f32 %v8903, 0.0
        %v8940 = vmax.f32 %v8904, 0.0
        %v8941 = vmax.f32 %v8905, 0.0
        %v8942 = vmax.f32 %v8906, 0.0
        %v8943 = vmax.f32 %v8907, 0.0
        %v8944 = vld [vmem:[%s6] sm:$0xff]
        %v8945 = vld [vmem:[%s6 + $0x8] sm:$0xf]
        %v8946 = vld [vmem:[%s6 + $0xc] sm:$0xff]
        %v8947 = vld [vmem:[%s6 + $0x14] sm:$0xf]
        %v8948 = vld [vmem:[%s6 + $0x18] sm:$0xff]
        %v8949 = vld [vmem:[%s6 + $0x20] sm:$0xf]
        %v8950 = vld [vmem:[%s6 + $0x24] sm:$0xff]
        %v8951 = vld [vmem:[%s6 + $0x2c] sm:$0xf]
        %v8952 = vld [vmem:[%s6 + $0x30] sm:$0xff]
        %v8953 = vld [vmem:[%s6 + $0x38] sm:$0xf]
        %v8954 = vld [vmem:[%s6 + $0x3c] sm:$0xff]
        %v8955 = vld [vmem:[%s6 + $0x44] sm:$0xf]
        %v8956 = vld [vmem:[%s6 + $0x48] sm:$0xff]
        %v8957 = vld [vmem:[%s6 + $0x50] sm:$0xf]
        %v8958 = vld [vmem:[%s6 + $0x54] sm:$0xff]
        %v8959 = vld [vmem:[%s6 + $0x5c] sm:$0xf]
        %v8960 = vld [vmem:[%s6 + $0x60] sm:$0xff]
        %v8961 = vld [vmem:[%s6 + $0x68] sm:$0xf]
        %v8962 = vld [vmem:[%s6 + $0x6c] sm:$0xff]
        %v8963 = vld [vmem:[%s6 + $0x74] sm:$0xf]
        %v8964 = vld [vmem:[%s6 + $0x78] sm:$0xff]
        %v8965 = vld [vmem:[%s6 + $0x80] sm:$0xf]
        %v8966 = vld [vmem:[%s6 + $0x84] sm:$0xff]
        %v8967 = vld [vmem:[%s6 + $0x8c] sm:$0xf]
        %v8968 = vld [vmem:[%s6 + $0x90] sm:$0x33]
        %v8969 = vld [vmem:[%s6 + $0x98] sm:$0x3]
        %v8970 = vpack.c.bf16 %v8909, %v8908
        %v8971 = vpack.c.bf16 %v8911, %v8910
        %v8972 = vpack.c.bf16 %v8913, %v8912
        %v8973 = vpack.c.bf16 %v8915, %v8914
        %v8974 = vpack.c.bf16 %v8917, %v8916
        %v8975 = vpack.c.bf16 %v8919, %v8918
        %v8976 = vpack.c.bf16 %v8921, %v8920
        %v8977 = vpack.c.bf16 %v8923, %v8922
        %v8978 = vpack.c.bf16 %v8925, %v8924
        %v8979 = vpack.c.bf16 %v8927, %v8926
        %v8980 = vpack.c.bf16 %v8929, %v8928
        %v8981 = vpack.c.bf16 %v8931, %v8930
        %v8982 = vpack.c.bf16 %v8933, %v8932
        %v8983 = vpack.c.bf16 %v8935, %v8934
        %v8984 = vpack.c.bf16 %v8937, %v8936
        %v8985 = vpack.c.bf16 %v8939, %v8938
        %v8986 = vpack.c.bf16 %v8941, %v8940
        %v8987 = vpack.c.bf16 %v8943, %v8942
        %v9014 = vunpack.c.l.b16 %v8944
        %v9015 = vunpack.c.h.b16 %v8944
        %v9016 = vunpack.c.l.b16 %v8945
        %v9017 = vunpack.c.l.b16 %v8946
        %v9018 = vunpack.c.h.b16 %v8946
        %v9019 = vunpack.c.l.b16 %v8947
        %v9020 = vunpack.c.l.b16 %v8948
        %v9021 = vunpack.c.h.b16 %v8948
        %v9022 = vunpack.c.l.b16 %v8949
        %v9023 = vunpack.c.l.b16 %v8950
        %v9024 = vunpack.c.h.b16 %v8950
        %v9025 = vunpack.c.l.b16 %v8951
        %v9026 = vunpack.c.l.b16 %v8952
        %v9027 = vunpack.c.h.b16 %v8952
        %v9028 = vunpack.c.l.b16 %v8953
        %v9029 = vunpack.c.l.b16 %v8954
        %v9030 = vunpack.c.h.b16 %v8954
        %v9031 = vunpack.c.l.b16 %v8955
        %v9032 = vunpack.c.l.b16 %v8956
        %v9033 = vunpack.c.h.b16 %v8956
        %v9034 = vunpack.c.l.b16 %v8957
        %v9035 = vunpack.c.l.b16 %v8958
        %v9036 = vunpack.c.h.b16 %v8958
        %v9037 = vunpack.c.l.b16 %v8959
        %v9038 = vunpack.c.l.b16 %v8960
        %v9039 = vunpack.c.h.b16 %v8960
        %v9040 = vunpack.c.l.b16 %v8961
        %v9041 = vunpack.c.l.b16 %v8962
        %v9042 = vunpack.c.h.b16 %v8962
        %v9043 = vunpack.c.l.b16 %v8963
        %v9044 = vunpack.c.l.b16 %v8964
        %v9045 = vunpack.c.h.b16 %v8964
        %v9046 = vunpack.c.l.b16 %v8965
        %v9047 = vunpack.c.l.b16 %v8966
        %v9048 = vunpack.c.h.b16 %v8966
        %v9049 = vunpack.c.l.b16 %v8967
        %v9050 = vunpack.c.l.b16 %v8968
        %v9051 = vunpack.c.h.b16 %v8968
        %v9052 = vunpack.c.l.b16 %v8969
        %v9053 = vpack.c.b16 %v9017, %v9014
        %v9054 = vpack.c.b16 %v9018, %v9015
        %v9055 = vpack.c.b16 %v9019, %v9016
        %v9056 = vpack.c.b16 %v9023, %v9020
        %v9057 = vpack.c.b16 %v9024, %v9021
        %v9058 = vpack.c.b16 %v9025, %v9022
        %v9059 = vpack.c.b16 %v9029, %v9026
        %v9060 = vpack.c.b16 %v9030, %v9027
        %v9061 = vpack.c.b16 %v9031, %v9028
        %v9062 = vpack.c.b16 %v9035, %v9032
        %v9063 = vpack.c.b16 %v9036, %v9033
        %v9064 = vpack.c.b16 %v9037, %v9034
        %v9065 = vpack.c.b16 %v9041, %v9038
        %v9066 = vpack.c.b16 %v9042, %v9039
        %v9067 = vpack.c.b16 %v9043, %v9040
        %v9068 = vpack.c.b16 %v9047, %v9044
        %v9069 = vpack.c.b16 %v9048, %v9045
        %v9070 = vpack.c.b16 %v9049, %v9046
        %v9071 = vpack.c.b16 %v9050, %v9050
        %v9072 = vpack.c.b16 %v9051, %v9051
        %v9073 = vpack.c.b16 %v9052, %v9052
        %v9089 = vsel %vm4637, %v9055, 0
        %v9092 = vsel %vm4637, %v9058, 0
        %v9095 = vsel %vm4637, %v9061, 0
        %v9098 = vsel %vm4637, %v9064, 0
        %v9101 = vsel %vm4637, %v9067, 0
        %v9104 = vsel %vm4637, %v9070, 0
        %v9107 = vsel %vm4637, %v9073, 0
        %v9110 = vsel %vm4701, %v8987, 0
        %9112 = vmatprep.subr.bf16.mxu0 0
        %9113 = vmatpush1.bf16.msra.mxu0 %v8977
        %9114 = vmatprep.subr.bf16.mxu0 0
        %9115 = vmatpush1.bf16.msra.mxu0 %v8976
        %9116 = vmatprep.subr.bf16.mxu0 0
        %9117 = vmatpush1.bf16.msra.mxu0 %v8975
        %9118 = vmatprep.subr.bf16.mxu0 0
        %9119 = vmatpush1.bf16.msra.mxu0 %v8974
        %9120 = vmatprep.subr.bf16.mxu0 0
        %9121 = vmatpush1.bf16.msra.mxu0 %v8973
        %9122 = vmatprep.subr.bf16.mxu0 0
        %9123 = vmatpush1.bf16.msra.mxu0 %v8972
        %9124 = vmatprep.subr.bf16.mxu0 0
        %9125 = vmatpush1.bf16.msra.mxu0 %v8971
        %9126 = vmatprep.subr.bf16.mxu0 0
        %9127 = vmatpush1.bf16.msra.mxu0 %v8970
        %9128 = vmatprep.subr.bf16.mxu0 0
        %9129 = vmatpush2.bf16.msra.mxu0 %v8985
        %9130 = vmatprep.subr.bf16.mxu0 0
        %9131 = vmatpush2.bf16.msra.mxu0 %v8984
        %9132 = vmatprep.subr.bf16.mxu0 0
        %9133 = vmatpush2.bf16.msra.mxu0 %v8983
        %9134 = vmatprep.subr.bf16.mxu0 0
        %9135 = vmatpush2.bf16.msra.mxu0 %v8982
        %9136 = vmatprep.subr.bf16.mxu0 0
        %9137 = vmatpush2.bf16.msra.mxu0 %v8981
        %9138 = vmatprep.subr.bf16.mxu0 0
        %9139 = vmatpush2.bf16.msra.mxu0 %v8980
        %9140 = vmatprep.subr.bf16.mxu0 0
        %9141 = vmatpush2.bf16.msra.mxu0 %v8979
        %9142 = vmatprep.subr.bf16.mxu0 0
        %9143 = vmatpush2.bf16.msra.mxu0 %v8978
        %9144 = vmatprep.mubr.bf16.mxu0 %v9054
        %9145 = vmatmul.mubr.bf16.gmra.mxu0 %v9053
        %v9146 = vpop.f32.mrf.mxu0
        %v9147 = vadd.f32 0.0, %v9146
        %v9148 = vpop.f32.mrf.mxu0
        %v9149 = vpop.f32.mrf.mxu0
        %v9150 = vadd.f32 0.0, %v9149
        %v9151 = vpop.f32.mrf.mxu0
        %9152 = vmatprep.mubr.bf16.mxu0 %v9057
        %9153 = vmatmul.mubr.bf16.gmra.mxu0 %v9056
        %v9154 = vpop.f32.mrf.mxu0
        %v9155 = vadd.f32 0.0, %v9154
        %v9156 = vpop.f32.mrf.mxu0
        %v9157 = vpop.f32.mrf.mxu0
        %v9158 = vadd.f32 0.0, %v9157
        %v9159 = vpop.f32.mrf.mxu0
        %9160 = vmatprep.mubr.bf16.mxu0 %v9060
        %9161 = vmatmul.mubr.bf16.gmra.mxu0 %v9059
        %v9162 = vpop.f32.mrf.mxu0
        %v9163 = vadd.f32 0.0, %v9162
        %v9164 = vpop.f32.mrf.mxu0
        %v9165 = vpop.f32.mrf.mxu0
        %v9166 = vadd.f32 0.0, %v9165
        %v9167 = vpop.f32.mrf.mxu0
        %9168 = vmatprep.mubr.bf16.mxu0 %v9063
        %9169 = vmatmul.mubr.bf16.gmra.mxu0 %v9062
        %v9170 = vpop.f32.mrf.mxu0
        %v9171 = vadd.f32 0.0, %v9170
        %v9172 = vpop.f32.mrf.mxu0
        %v9173 = vpop.f32.mrf.mxu0
        %v9174 = vadd.f32 0.0, %v9173
        %v9175 = vpop.f32.mrf.mxu0
        %9176 = vmatprep.mubr.bf16.mxu0 %v9066
        %9177 = vmatmul.mubr.bf16.gmra.mxu0 %v9065
        %v9178 = vpop.f32.mrf.mxu0
        %v9179 = vadd.f32 0.0, %v9178
        %v9180 = vpop.f32.mrf.mxu0
        %v9181 = vpop.f32.mrf.mxu0
        %v9182 = vadd.f32 0.0, %v9181
        %v9183 = vpop.f32.mrf.mxu0
        %9184 = vmatprep.mubr.bf16.mxu0 %v9069
        %9185 = vmatmul.mubr.bf16.gmra.mxu0 %v9068
        %v9186 = vpop.f32.mrf.mxu0
        %v9187 = vadd.f32 0.0, %v9186
        %v9188 = vpop.f32.mrf.mxu0
        %v9189 = vpop.f32.mrf.mxu0
        %v9190 = vadd.f32 0.0, %v9189
        %v9191 = vpop.f32.mrf.mxu0
        %9192 = vmatprep.mubr.bf16.mxu0 %v9072
        %9193 = vmatmul.mubr.bf16.gmra.mxu0 %v9071
        %v9194 = vpop.f32.mrf.mxu0
        %v9195 = vadd.f32 0.0, %v9194
        %v9196 = vpop.f32.mrf.mxu0
        %v9197 = vpop.f32.mrf.mxu0
        %v9198 = vpop.f32.mrf.mxu0
        %9199 = vdwg.mxu0
        %9200 = vmatprep.subr.bf16.mxu0 0
        %9201 = vmatpush1.bf16.msra.mxu0 0
        %9202 = vmatprep.subr.bf16.mxu0 0
        %9203 = vmatpush1.bf16.msra.mxu0 0
        %9204 = vmatprep.subr.bf16.mxu0 0
        %9205 = vmatpush1.bf16.msra.mxu0 0
        %9206 = vmatprep.subr.bf16.mxu0 0
        %9207 = vmatpush1.bf16.msra.mxu0 0
        %9208 = vmatprep.subr.bf16.mxu0 0
        %9209 = vmatpush1.bf16.msra.mxu0 0
        %9210 = vmatprep.subr.bf16.mxu0 0
        %9211 = vmatpush1.bf16.msra.mxu0 0
        %9212 = vmatprep.subr.bf16.mxu0 0
        %9213 = vmatpush1.bf16.msra.mxu0 %v9110
        %9214 = vmatprep.subr.bf16.mxu0 0
        %9215 = vmatpush1.bf16.msra.mxu0 %v8986
        %9216 = vmatprep.subr.bf16.mxu0 0
        %9217 = vmatpush2.bf16.msra.mxu0 0
        %9218 = vmatprep.subr.bf16.mxu0 0
        %9219 = vmatpush2.bf16.msra.mxu0 0
        %9220 = vmatprep.subr.bf16.mxu0 0
        %9221 = vmatpush2.bf16.msra.mxu0 0
        %9222 = vmatprep.subr.bf16.mxu0 0
        %9223 = vmatpush2.bf16.msra.mxu0 0
        %9224 = vmatprep.subr.bf16.mxu0 0
        %9225 = vmatpush2.bf16.msra.mxu0 0
        %9226 = vmatprep.subr.bf16.mxu0 0
        %9227 = vmatpush2.bf16.msra.mxu0 0
        %9228 = vmatprep.subr.bf16.mxu0 0
        %9229 = vmatpush2.bf16.msra.mxu0 0
        %9230 = vmatprep.subr.bf16.mxu0 0
        %9231 = vmatpush2.bf16.msra.mxu0 0
        %9232 = vmatprep.mubr.bf16.mxu0 0
        %9233 = vmatmul.mubr.bf16.gmra.mxu0 %v9089
        %v9234 = vpop.f32.mrf.mxu0
        %v9235 = vadd.f32 %v9147, %v9234
        %v9236 = vpop.f32.mrf.mxu0
        %v9237 = vpop.f32.mrf.mxu0
        %v9238 = vadd.f32 %v9150, %v9237
        %v9239 = vpop.f32.mrf.mxu0
        %9240 = vmatprep.mubr.bf16.mxu0 0
        %9241 = vmatmul.mubr.bf16.gmra.mxu0 %v9092
        %v9242 = vpop.f32.mrf.mxu0
        %v9243 = vadd.f32 %v9155, %v9242
        %v9244 = vpop.f32.mrf.mxu0
        %v9245 = vpop.f32.mrf.mxu0
        %v9246 = vadd.f32 %v9158, %v9245
        %v9247 = vpop.f32.mrf.mxu0
        %9248 = vmatprep.mubr.bf16.mxu0 0
        %9249 = vmatmul.mubr.bf16.gmra.mxu0 %v9095
        %v9250 = vpop.f32.mrf.mxu0
        %v9251 = vadd.f32 %v9163, %v9250
        %v9252 = vpop.f32.mrf.mxu0
        %v9253 = vpop.f32.mrf.mxu0
        %v9254 = vadd.f32 %v9166, %v9253
        %v9255 = vpop.f32.mrf.mxu0
        %9256 = vmatprep.mubr.bf16.mxu0 0
        %9257 = vmatmul.mubr.bf16.gmra.mxu0 %v9098
        %v9258 = vpop.f32.mrf.mxu0
        %v9259 = vadd.f32 %v9171, %v9258
        %v9260 = vpop.f32.mrf.mxu0
        %v9261 = vpop.f32.mrf.mxu0
        %v9262 = vadd.f32 %v9174, %v9261
        %v9263 = vpop.f32.mrf.mxu0
        %9264 = vmatprep.mubr.bf16.mxu0 0
        %9265 = vmatmul.mubr.bf16.gmra.mxu0 %v9101
        %v9266 = vpop.f32.mrf.mxu0
        %v9267 = vadd.f32 %v9179, %v9266
        %v9268 = vpop.f32.mrf.mxu0
        %v9269 = vpop.f32.mrf.mxu0
        %v9270 = vadd.f32 %v9182, %v9269
        %v9271 = vpop.f32.mrf.mxu0
        %9272 = vmatprep.mubr.bf16.mxu0 0
        %9273 = vmatmul.mubr.bf16.gmra.mxu0 %v9104
        %v9274 = vpop.f32.mrf.mxu0
        %v9275 = vadd.f32 %v9187, %v9274
        %v9276 = vpop.f32.mrf.mxu0
        %v9277 = vpop.f32.mrf.mxu0
        %v9278 = vadd.f32 %v9190, %v9277
        %v9279 = vpop.f32.mrf.mxu0
        %9280 = vmatprep.mubr.bf16.mxu0 0
        %9281 = vmatmul.mubr.bf16.gmra.mxu0 %v9107
        %v9282 = vpop.f32.mrf.mxu0
        %v9283 = vadd.f32 %v9195, %v9282
        %v9284 = vpop.f32.mrf.mxu0
        %v9285 = vpop.f32.mrf.mxu0
        %v9286 = vpop.f32.mrf.mxu0
        %9287 = vdwg.mxu0
        %v9288 = vpack.c.bf16 %v9238, %v9235
        %v9289 = vpack.c.bf16 %v9246, %v9243
        %v9290 = vpack.c.bf16 %v9254, %v9251
        %v9291 = vpack.c.bf16 %v9262, %v9259
        %v9292 = vpack.c.bf16 %v9270, %v9267
        %v9293 = vpack.c.bf16 %v9278, %v9275
        %v9294 = vpack.c.bf16 %v9283, %v9283
        %v9302 = vunpack.c.l.b16 %v9288
        %v9303 = vunpack.c.h.b16 %v9288
        %v9304 = vunpack.c.l.b16 %v9289
        %v9305 = vunpack.c.h.b16 %v9289
        %v9306 = vunpack.c.l.b16 %v9290
        %v9307 = vunpack.c.h.b16 %v9290
        %v9308 = vunpack.c.l.b16 %v9291
        %v9309 = vunpack.c.h.b16 %v9291
        %v9310 = vunpack.c.l.b16 %v9292
        %v9311 = vunpack.c.h.b16 %v9292
        %v9312 = vunpack.c.l.b16 %v9293
        %v9313 = vunpack.c.h.b16 %v9293
        %v9314 = vunpack.c.l.b16 %v9294
        %v9315 = vpack.c.b16 %v9302, %v9302
        %v9316 = vpack.c.b16 %v9303, %v9303
        %v9317 = vpack.c.b16 %v9304, %v9304
        %v9318 = vpack.c.b16 %v9305, %v9305
        %v9319 = vpack.c.b16 %v9306, %v9306
        %v9320 = vpack.c.b16 %v9307, %v9307
        %v9321 = vpack.c.b16 %v9308, %v9308
        %v9322 = vpack.c.b16 %v9309, %v9309
        %v9323 = vpack.c.b16 %v9310, %v9310
        %v9324 = vpack.c.b16 %v9311, %v9311
        %v9325 = vpack.c.b16 %v9312, %v9312
        %v9326 = vpack.c.b16 %v9313, %v9313
        %v9327 = vpack.c.b16 %v9314, %v9314
        %9341 = vst.msk [vmem:[#allocation4] sm:$0xf] %vm5270, %v9315
        %9342 = vst.msk [vmem:[#allocation4 + $0x4] sm:$0xf] %vm5270, %v9316
        %9343 = vst.msk [vmem:[#allocation4 + $0x8] sm:$0xf] %vm5270, %v9317
        %9344 = vst.msk [vmem:[#allocation4 + $0xc] sm:$0xf] %vm5270, %v9318
        %9345 = vst.msk [vmem:[#allocation4 + $0x10] sm:$0xf] %vm5270, %v9319
        %9346 = vst.msk [vmem:[#allocation4 + $0x14] sm:$0xf] %vm5270, %v9320
        %9347 = vst.msk [vmem:[#allocation4 + $0x18] sm:$0xf] %vm5270, %v9321
        %9348 = vst.msk [vmem:[#allocation4 + $0x1c] sm:$0xf] %vm5270, %v9322
        %9349 = vst.msk [vmem:[#allocation4 + $0x20] sm:$0xf] %vm5270, %v9323
        %9350 = vst.msk [vmem:[#allocation4 + $0x24] sm:$0xf] %vm5270, %v9324
        %9351 = vst.msk [vmem:[#allocation4 + $0x28] sm:$0xf] %vm5270, %v9325
        %9352 = vst.msk [vmem:[#allocation4 + $0x2c] sm:$0xf] %vm5270, %v9326
        %9353 = vst.msk [vmem:[#allocation4 + $0x30] sm:$0x3] %vm5311, %v9327
        %v9354 = vld [vmem:[#allocation4] sm:$0xf]
        %v9355 = vld [vmem:[#allocation4 + $0x4] sm:$0xf]
        %v9356 = vld [vmem:[#allocation4 + $0x8] sm:$0xf]
        %v9357 = vld [vmem:[#allocation4 + $0xc] sm:$0xf]
        %v9358 = vld [vmem:[#allocation4 + $0x10] sm:$0xf]
        %v9359 = vld [vmem:[#allocation4 + $0x14] sm:$0xf]
        %v9360 = vld [vmem:[#allocation4 + $0x18] sm:$0xf]
        %v9361 = vld [vmem:[#allocation4 + $0x1c] sm:$0xf]
        %v9362 = vld [vmem:[#allocation4 + $0x20] sm:$0xf]
        %v9363 = vld [vmem:[#allocation4 + $0x24] sm:$0x7]
        %v9364 = vld [vmem:[#allocation6] sm:$0xf]
        %v9365 = vld [vmem:[#allocation4 + $0x24] sm:$0xf]
        %s9366 = scalar_lea.vmem [#allocation6], 4
        %v9367 = vld [vmem:[%s9366] sm:$0xf]
        %v9378 = vunpack.c.l.b16 %v9354
        %v9379 = vunpack.c.l.b16 %v9355
        %v9380 = vunpack.c.l.b16 %v9356
        %v9381 = vunpack.c.l.b16 %v9357
        %v9382 = vunpack.c.l.b16 %v9358
        %v9383 = vunpack.c.l.b16 %v9359
        %v9384 = vunpack.c.l.b16 %v9360
        %v9385 = vunpack.c.l.b16 %v9361
        %v9386 = vunpack.c.l.b16 %v9362
        %v9387 = vunpack.c.l.b16 %v9365
        %v9388 = vpack.c.b16 %v9379, %v9378
        %v9389 = vpack.c.b16 %v9381, %v9380
        %v9390 = vpack.c.b16 %v9383, %v9382
        %v9391 = vpack.c.b16 %v9385, %v9384
        %v9392 = vpack.c.b16 %v9387, %v9386
        %v9394 = vshrl.u32 %v9388, 16
        %v9396 = vshll.u32 %v9388, 16
        %v9398 = vrot.slane %v9396, 1
        %v9399 = vor.u32 %v9394, %v9398
        %v9401 = vshll.u32 %v9389, 16
        %v9403 = vrot.slane %v9401, 1
        %v9404 = vsel %vm753, %v9399, %v9403
        %v9405 = vshrl.u32 %v9389, 16
        %v9407 = vor.u32 %v9405, %v9403
        %v9409 = vshll.u32 %v9390, 16
        %v9411 = vrot.slane %v9409, 1
        %v9412 = vsel %vm753, %v9407, %v9411
        %v9413 = vshrl.u32 %v9390, 16
        %v9415 = vor.u32 %v9413, %v9411
        %v9417 = vshll.u32 %v9391, 16
        %v9419 = vrot.slane %v9417, 1
        %v9420 = vsel %vm753, %v9415, %v9419
        %v9421 = vshrl.u32 %v9391, 16
        %v9423 = vor.u32 %v9421, %v9419
        %v9425 = vshll.u32 %v9392, 16
        %v9427 = vrot.slane %v9425, 1
        %v9428 = vsel %vm753, %v9423, %v9427
        %v9429 = vshrl.u32 %v9392, 16
        %v9431 = vor.u32 %v9429, %v9427
        %v9433 = vsel %vm5586, %v9404, 0
        %v9436 = vsel %vm5586, %v9412, 0
        %v9439 = vsel %vm5586, %v9420, 0
        %v9442 = vsel %vm5586, %v9428, 0
        %v9445 = vsel %vm5586, %v9431, 0
        %v9448 = vsel %vm5641, %v9367, 0
        %9450 = vmatprep.subr.bf16.mxu0 0
        %9451 = vmatpush1.bf16.msra.mxu0 0
        %9452 = vmatprep.subr.bf16.mxu0 0
        %9453 = vmatpush1.bf16.msra.mxu0 0
        %9454 = vmatprep.subr.bf16.mxu0 0
        %9455 = vmatpush1.bf16.msra.mxu0 0
        %9456 = vmatprep.subr.bf16.mxu0 0
        %9457 = vmatpush1.bf16.msra.mxu0 0
        %9458 = vmatprep.subr.bf16.mxu0 0
        %9459 = vmatpush1.bf16.msra.mxu0 0
        %9460 = vmatprep.subr.bf16.mxu0 0
        %9461 = vmatpush1.bf16.msra.mxu0 0
        %9462 = vmatprep.subr.bf16.mxu0 0
        %9463 = vmatpush1.bf16.msra.mxu0 0
        %9464 = vmatprep.subr.bf16.mxu0 0
        %9465 = vmatpush1.bf16.msra.mxu0 %v9448
        %9466 = vmatprep.subr.bf16.mxu0 0
        %9467 = vmatpush2.bf16.msra.mxu0 0
        %9468 = vmatprep.subr.bf16.mxu0 0
        %9469 = vmatpush2.bf16.msra.mxu0 0
        %9470 = vmatprep.subr.bf16.mxu0 0
        %9471 = vmatpush2.bf16.msra.mxu0 0
        %9472 = vmatprep.subr.bf16.mxu0 0
        %9473 = vmatpush2.bf16.msra.mxu0 0
        %9474 = vmatprep.subr.bf16.mxu0 0
        %9475 = vmatpush2.bf16.msra.mxu0 0
        %9476 = vmatprep.subr.bf16.mxu0 0
        %9477 = vmatpush2.bf16.msra.mxu0 0
        %9478 = vmatprep.subr.bf16.mxu0 0
        %9479 = vmatpush2.bf16.msra.mxu0 0
        %9480 = vmatprep.subr.bf16.mxu0 0
        %9481 = vmatpush2.bf16.msra.mxu0 0
        %9482 = vmatprep.mubr.bf16.mxu0 0
        %9483 = vmatmul.mubr.bf16.gmra.mxu0 %v9433
        %v9484 = vpop.f32.mrf.mxu0
        %v9485 = vadd.f32 0.0, %v9484
        %v9486 = vpop.f32.mrf.mxu0
        %v9487 = vpop.f32.mrf.mxu0
        %v9488 = vadd.f32 0.0, %v9487
        %v9489 = vpop.f32.mrf.mxu0
        %9490 = vmatprep.mubr.bf16.mxu0 0
        %9491 = vmatmul.mubr.bf16.gmra.mxu0 %v9436
        %v9492 = vpop.f32.mrf.mxu0
        %v9493 = vadd.f32 0.0, %v9492
        %v9494 = vpop.f32.mrf.mxu0
        %v9495 = vpop.f32.mrf.mxu0
        %v9496 = vadd.f32 0.0, %v9495
        %v9497 = vpop.f32.mrf.mxu0
        %9498 = vmatprep.mubr.bf16.mxu0 0
        %9499 = vmatmul.mubr.bf16.gmra.mxu0 %v9439
        %v9500 = vpop.f32.mrf.mxu0
        %v9501 = vadd.f32 0.0, %v9500
        %v9502 = vpop.f32.mrf.mxu0
        %v9503 = vpop.f32.mrf.mxu0
        %v9504 = vadd.f32 0.0, %v9503
        %v9505 = vpop.f32.mrf.mxu0
        %9506 = vmatprep.mubr.bf16.mxu0 0
        %9507 = vmatmul.mubr.bf16.gmra.mxu0 %v9442
        %v9508 = vpop.f32.mrf.mxu0
        %v9509 = vadd.f32 0.0, %v9508
        %v9510 = vpop.f32.mrf.mxu0
        %v9511 = vpop.f32.mrf.mxu0
        %v9512 = vadd.f32 0.0, %v9511
        %v9513 = vpop.f32.mrf.mxu0
        %9514 = vmatprep.mubr.bf16.mxu0 0
        %9515 = vmatmul.mubr.bf16.gmra.mxu0 %v9445
        %v9516 = vpop.f32.mrf.mxu0
        %v9517 = vadd.f32 0.0, %v9516
        %v9518 = vpop.f32.mrf.mxu0
        %v9519 = vpop.f32.mrf.mxu0
        %v9520 = vadd.f32 0.0, %v9519
        %v9521 = vpop.f32.mrf.mxu0
        %9522 = vdwg.mxu0
        %v9524 = vunpack.c.l.b16 %v9363
        %v9525 = vpack.c.b16 %v9524, %v9386
        %v9526 = vsel %vm5586, %v9388, 0
        %v9528 = vsel %vm5586, %v9389, 0
        %v9530 = vsel %vm5586, %v9390, 0
        %v9532 = vsel %vm5586, %v9391, 0
        %v9535 = vsel %vm5586, %v9525, 0
        %v9538 = vsel %vm5641, %v9364, 0
        %9540 = vmatprep.subr.bf16.mxu0 0
        %9541 = vmatpush1.bf16.msra.mxu0 0
        %9542 = vmatprep.subr.bf16.mxu0 0
        %9543 = vmatpush1.bf16.msra.mxu0 0
        %9544 = vmatprep.subr.bf16.mxu0 0
        %9545 = vmatpush1.bf16.msra.mxu0 0
        %9546 = vmatprep.subr.bf16.mxu0 0
        %9547 = vmatpush1.bf16.msra.mxu0 0
        %9548 = vmatprep.subr.bf16.mxu0 0
        %9549 = vmatpush1.bf16.msra.mxu0 0
        %9550 = vmatprep.subr.bf16.mxu0 0
        %9551 = vmatpush1.bf16.msra.mxu0 0
        %9552 = vmatprep.subr.bf16.mxu0 0
        %9553 = vmatpush1.bf16.msra.mxu0 0
        %9554 = vmatprep.subr.bf16.mxu0 0
        %9555 = vmatpush1.bf16.msra.mxu0 %v9538
        %9556 = vmatprep.subr.bf16.mxu0 0
        %9557 = vmatpush2.bf16.msra.mxu0 0
        %9558 = vmatprep.subr.bf16.mxu0 0
        %9559 = vmatpush2.bf16.msra.mxu0 0
        %9560 = vmatprep.subr.bf16.mxu0 0
        %9561 = vmatpush2.bf16.msra.mxu0 0
        %9562 = vmatprep.subr.bf16.mxu0 0
        %9563 = vmatpush2.bf16.msra.mxu0 0
        %9564 = vmatprep.subr.bf16.mxu0 0
        %9565 = vmatpush2.bf16.msra.mxu0 0
        %9566 = vmatprep.subr.bf16.mxu0 0
        %9567 = vmatpush2.bf16.msra.mxu0 0
        %9568 = vmatprep.subr.bf16.mxu0 0
        %9569 = vmatpush2.bf16.msra.mxu0 0
        %9570 = vmatprep.subr.bf16.mxu0 0
        %9571 = vmatpush2.bf16.msra.mxu0 0
        %9572 = vmatprep.mubr.bf16.mxu0 0
        %9573 = vmatmul.mubr.bf16.gmra.mxu0 %v9526
        %v9574 = vpop.f32.mrf.mxu0
        %v9575 = vadd.f32 %v9485, %v9574
        %v9576 = vpop.f32.mrf.mxu0
        %v9577 = vpop.f32.mrf.mxu0
        %v9578 = vadd.f32 %v9488, %v9577
        %v9579 = vpop.f32.mrf.mxu0
        %9580 = vmatprep.mubr.bf16.mxu0 0
        %9581 = vmatmul.mubr.bf16.gmra.mxu0 %v9528
        %v9582 = vpop.f32.mrf.mxu0
        %v9583 = vadd.f32 %v9493, %v9582
        %v9584 = vpop.f32.mrf.mxu0
        %v9585 = vpop.f32.mrf.mxu0
        %v9586 = vadd.f32 %v9496, %v9585
        %v9587 = vpop.f32.mrf.mxu0
        %9588 = vmatprep.mubr.bf16.mxu0 0
        %9589 = vmatmul.mubr.bf16.gmra.mxu0 %v9530
        %v9590 = vpop.f32.mrf.mxu0
        %v9591 = vadd.f32 %v9501, %v9590
        %v9592 = vpop.f32.mrf.mxu0
        %v9593 = vpop.f32.mrf.mxu0
        %v9594 = vadd.f32 %v9504, %v9593
        %v9595 = vpop.f32.mrf.mxu0
        %9596 = vmatprep.mubr.bf16.mxu0 0
        %9597 = vmatmul.mubr.bf16.gmra.mxu0 %v9532
        %v9598 = vpop.f32.mrf.mxu0
        %v9599 = vadd.f32 %v9509, %v9598
        %v9600 = vpop.f32.mrf.mxu0
        %v9601 = vpop.f32.mrf.mxu0
        %v9602 = vadd.f32 %v9512, %v9601
        %v9603 = vpop.f32.mrf.mxu0
        %9604 = vmatprep.mubr.bf16.mxu0 0
        %9605 = vmatmul.mubr.bf16.gmra.mxu0 %v9535
        %v9606 = vpop.f32.mrf.mxu0
        %v9607 = vadd.f32 %v9517, %v9606
        %v9608 = vpop.f32.mrf.mxu0
        %v9609 = vpop.f32.mrf.mxu0
        %v9610 = vadd.f32 %v9520, %v9609
        %v9611 = vpop.f32.mrf.mxu0
        %9612 = vdwg.mxu0
        %v9613 = vld [vmem:[#allocation4] sm:$0xe]
        %s9614 = scalar_lea.vmem [#allocation6], 8
        %v9615 = vld [vmem:[%s9614] sm:$0xf]
        %v9617 = vunpack.c.l.b16 %v9613
        %v9618 = vpack.c.b16 %v9379, %v9617
        %v9619 = vrot.slane %v9618, 1
        %v9620 = vrot.slane %v9389, 1
        %v9621 = vsel %vm1362, %v9619, %v9620
        %v9622 = vrot.slane %v9390, 1
        %v9623 = vsel %vm1362, %v9620, %v9622
        %v9624 = vrot.slane %v9391, 1
        %v9625 = vsel %vm1362, %v9622, %v9624
        %v9626 = vrot.slane %v9392, 1
        %v9627 = vsel %vm1362, %v9624, %v9626
        %v9629 = vsel %vm5586, %v9621, 0
        %v9632 = vsel %vm5586, %v9623, 0
        %v9635 = vsel %vm5586, %v9625, 0
        %v9638 = vsel %vm5586, %v9627, 0
        %v9641 = vsel %vm5586, %v9626, 0
        %v9644 = vsel %vm5641, %v9615, 0
        %9646 = vmatprep.subr.bf16.mxu0 0
        %9647 = vmatpush1.bf16.msra.mxu0 0
        %9648 = vmatprep.subr.bf16.mxu0 0
        %9649 = vmatpush1.bf16.msra.mxu0 0
        %9650 = vmatprep.subr.bf16.mxu0 0
        %9651 = vmatpush1.bf16.msra.mxu0 0
        %9652 = vmatprep.subr.bf16.mxu0 0
        %9653 = vmatpush1.bf16.msra.mxu0 0
        %9654 = vmatprep.subr.bf16.mxu0 0
        %9655 = vmatpush1.bf16.msra.mxu0 0
        %9656 = vmatprep.subr.bf16.mxu0 0
        %9657 = vmatpush1.bf16.msra.mxu0 0
        %9658 = vmatprep.subr.bf16.mxu0 0
        %9659 = vmatpush1.bf16.msra.mxu0 0
        %9660 = vmatprep.subr.bf16.mxu0 0
        %9661 = vmatpush1.bf16.msra.mxu0 %v9644
        %9662 = vmatprep.subr.bf16.mxu0 0
        %9663 = vmatpush2.bf16.msra.mxu0 0
        %9664 = vmatprep.subr.bf16.mxu0 0
        %9665 = vmatpush2.bf16.msra.mxu0 0
        %9666 = vmatprep.subr.bf16.mxu0 0
        %9667 = vmatpush2.bf16.msra.mxu0 0
        %9668 = vmatprep.subr.bf16.mxu0 0
        %9669 = vmatpush2.bf16.msra.mxu0 0
        %9670 = vmatprep.subr.bf16.mxu0 0
        %9671 = vmatpush2.bf16.msra.mxu0 0
        %9672 = vmatprep.subr.bf16.mxu0 0
        %9673 = vmatpush2.bf16.msra.mxu0 0
        %9674 = vmatprep.subr.bf16.mxu0 0
        %9675 = vmatpush2.bf16.msra.mxu0 0
        %9676 = vmatprep.subr.bf16.mxu0 0
        %9677 = vmatpush2.bf16.msra.mxu0 0
        %9678 = vmatprep.mubr.bf16.mxu0 0
        %9679 = vmatmul.mubr.bf16.gmra.mxu0 %v9629
        %v9680 = vpop.f32.mrf.mxu0
        %v9681 = vadd.f32 0.0, %v9680
        %v9682 = vpop.f32.mrf.mxu0
        %v9683 = vpop.f32.mrf.mxu0
        %v9684 = vadd.f32 0.0, %v9683
        %v9685 = vpop.f32.mrf.mxu0
        %9686 = vmatprep.mubr.bf16.mxu0 0
        %9687 = vmatmul.mubr.bf16.gmra.mxu0 %v9632
        %v9688 = vpop.f32.mrf.mxu0
        %v9689 = vadd.f32 0.0, %v9688
        %v9690 = vpop.f32.mrf.mxu0
        %v9691 = vpop.f32.mrf.mxu0
        %v9692 = vadd.f32 0.0, %v9691
        %v9693 = vpop.f32.mrf.mxu0
        %9694 = vmatprep.mubr.bf16.mxu0 0
        %9695 = vmatmul.mubr.bf16.gmra.mxu0 %v9635
        %v9696 = vpop.f32.mrf.mxu0
        %v9697 = vadd.f32 0.0, %v9696
        %v9698 = vpop.f32.mrf.mxu0
        %v9699 = vpop.f32.mrf.mxu0
        %v9700 = vadd.f32 0.0, %v9699
        %v9701 = vpop.f32.mrf.mxu0
        %9702 = vmatprep.mubr.bf16.mxu0 0
        %9703 = vmatmul.mubr.bf16.gmra.mxu0 %v9638
        %v9704 = vpop.f32.mrf.mxu0
        %v9705 = vadd.f32 0.0, %v9704
        %v9706 = vpop.f32.mrf.mxu0
        %v9707 = vpop.f32.mrf.mxu0
        %v9708 = vadd.f32 0.0, %v9707
        %v9709 = vpop.f32.mrf.mxu0
        %9710 = vmatprep.mubr.bf16.mxu0 0
        %9711 = vmatmul.mubr.bf16.gmra.mxu0 %v9641
        %v9712 = vpop.f32.mrf.mxu0
        %v9713 = vadd.f32 0.0, %v9712
        %v9714 = vpop.f32.mrf.mxu0
        %v9715 = vpop.f32.mrf.mxu0
        %v9716 = vadd.f32 0.0, %v9715
        %v9717 = vpop.f32.mrf.mxu0
        %9718 = vdwg.mxu0
        %v9719 = vadd.f32 %v9575, %v9681
        %v9720 = vadd.f32 %v9578, %v9684
        %v9721 = vadd.f32 %v9583, %v9689
        %v9722 = vadd.f32 %v9586, %v9692
        %v9723 = vadd.f32 %v9591, %v9697
        %v9724 = vadd.f32 %v9594, %v9700
        %v9725 = vadd.f32 %v9599, %v9705
        %v9726 = vadd.f32 %v9602, %v9708
        %v9727 = vadd.f32 %v9607, %v9713
        %v9728 = vadd.f32 %v9610, %v9716
        %v9729 = vld [vmem:[#allocation4 + $0x4] sm:$0xe]
        %v9730 = vld [vmem:[#allocation4 + $0x8] sm:$0xf]
        %v9731 = vld [vmem:[#allocation4 + $0xc] sm:$0xf]
        %v9732 = vld [vmem:[#allocation4 + $0x10] sm:$0xf]
        %v9733 = vld [vmem:[#allocation4 + $0x14] sm:$0xf]
        %v9734 = vld [vmem:[#allocation4 + $0x18] sm:$0xf]
        %v9735 = vld [vmem:[#allocation4 + $0x1c] sm:$0xf]
        %v9736 = vld [vmem:[#allocation4 + $0x20] sm:$0xf]
        %v9737 = vld [vmem:[#allocation4 + $0x24] sm:$0xf]
        %v9738 = vld [vmem:[#allocation4 + $0x28] sm:$0xf]
        %s9739 = scalar_lea.vmem [#allocation6], 12
        %v9740 = vld [vmem:[%s9739] sm:$0xf]
        %v9751 = vunpack.c.l.b16 %v9729
        %v9752 = vunpack.c.l.b16 %v9730
        %v9753 = vunpack.c.l.b16 %v9731
        %v9754 = vunpack.c.l.b16 %v9732
        %v9755 = vunpack.c.l.b16 %v9733
        %v9756 = vunpack.c.l.b16 %v9734
        %v9757 = vunpack.c.l.b16 %v9735
        %v9758 = vunpack.c.l.b16 %v9736
        %v9759 = vunpack.c.l.b16 %v9737
        %v9760 = vunpack.c.l.b16 %v9738
        %v9761 = vpack.c.b16 %v9752, %v9751
        %v9762 = vpack.c.b16 %v9754, %v9753
        %v9763 = vpack.c.b16 %v9756, %v9755
        %v9764 = vpack.c.b16 %v9758, %v9757
        %v9765 = vpack.c.b16 %v9760, %v9759
        %v9766 = vrot.slane %v9761, 1
        %v9767 = vrot.slane %v9762, 1
        %v9768 = vsel %vm1362, %v9766, %v9767
        %v9769 = vrot.slane %v9763, 1
        %v9770 = vsel %vm1362, %v9767, %v9769
        %v9771 = vrot.slane %v9764, 1
        %v9772 = vsel %vm1362, %v9769, %v9771
        %v9773 = vrot.slane %v9765, 1
        %v9774 = vsel %vm1362, %v9771, %v9773
        %v9776 = vsel %vm5586, %v9768, 0
        %v9779 = vsel %vm5586, %v9770, 0
        %v9782 = vsel %vm5586, %v9772, 0
        %v9785 = vsel %vm5586, %v9774, 0
        %v9788 = vsel %vm5586, %v9773, 0
        %v9791 = vsel %vm5641, %v9740, 0
        %9793 = vmatprep.subr.bf16.mxu0 0
        %9794 = vmatpush1.bf16.msra.mxu0 0
        %9795 = vmatprep.subr.bf16.mxu0 0
        %9796 = vmatpush1.bf16.msra.mxu0 0
        %9797 = vmatprep.subr.bf16.mxu0 0
        %9798 = vmatpush1.bf16.msra.mxu0 0
        %9799 = vmatprep.subr.bf16.mxu0 0
        %9800 = vmatpush1.bf16.msra.mxu0 0
        %9801 = vmatprep.subr.bf16.mxu0 0
        %9802 = vmatpush1.bf16.msra.mxu0 0
        %9803 = vmatprep.subr.bf16.mxu0 0
        %9804 = vmatpush1.bf16.msra.mxu0 0
        %9805 = vmatprep.subr.bf16.mxu0 0
        %9806 = vmatpush1.bf16.msra.mxu0 0
        %9807 = vmatprep.subr.bf16.mxu0 0
        %9808 = vmatpush1.bf16.msra.mxu0 %v9791
        %9809 = vmatprep.subr.bf16.mxu0 0
        %9810 = vmatpush2.bf16.msra.mxu0 0
        %9811 = vmatprep.subr.bf16.mxu0 0
        %9812 = vmatpush2.bf16.msra.mxu0 0
        %9813 = vmatprep.subr.bf16.mxu0 0
        %9814 = vmatpush2.bf16.msra.mxu0 0
        %9815 = vmatprep.subr.bf16.mxu0 0
        %9816 = vmatpush2.bf16.msra.mxu0 0
        %9817 = vmatprep.subr.bf16.mxu0 0
        %9818 = vmatpush2.bf16.msra.mxu0 0
        %9819 = vmatprep.subr.bf16.mxu0 0
        %9820 = vmatpush2.bf16.msra.mxu0 0
        %9821 = vmatprep.subr.bf16.mxu0 0
        %9822 = vmatpush2.bf16.msra.mxu0 0
        %9823 = vmatprep.subr.bf16.mxu0 0
        %9824 = vmatpush2.bf16.msra.mxu0 0
        %9825 = vmatprep.mubr.bf16.mxu0 0
        %9826 = vmatmul.mubr.bf16.gmra.mxu0 %v9776
        %v9827 = vpop.f32.mrf.mxu0
        %v9828 = vadd.f32 0.0, %v9827
        %v9829 = vpop.f32.mrf.mxu0
        %v9830 = vpop.f32.mrf.mxu0
        %v9831 = vadd.f32 0.0, %v9830
        %v9832 = vpop.f32.mrf.mxu0
        %9833 = vmatprep.mubr.bf16.mxu0 0
        %9834 = vmatmul.mubr.bf16.gmra.mxu0 %v9779
        %v9835 = vpop.f32.mrf.mxu0
        %v9836 = vadd.f32 0.0, %v9835
        %v9837 = vpop.f32.mrf.mxu0
        %v9838 = vpop.f32.mrf.mxu0
        %v9839 = vadd.f32 0.0, %v9838
        %v9840 = vpop.f32.mrf.mxu0
        %9841 = vmatprep.mubr.bf16.mxu0 0
        %9842 = vmatmul.mubr.bf16.gmra.mxu0 %v9782
        %v9843 = vpop.f32.mrf.mxu0
        %v9844 = vadd.f32 0.0, %v9843
        %v9845 = vpop.f32.mrf.mxu0
        %v9846 = vpop.f32.mrf.mxu0
        %v9847 = vadd.f32 0.0, %v9846
        %v9848 = vpop.f32.mrf.mxu0
        %9849 = vmatprep.mubr.bf16.mxu0 0
        %9850 = vmatmul.mubr.bf16.gmra.mxu0 %v9785
        %v9851 = vpop.f32.mrf.mxu0
        %v9852 = vadd.f32 0.0, %v9851
        %v9853 = vpop.f32.mrf.mxu0
        %v9854 = vpop.f32.mrf.mxu0
        %v9855 = vadd.f32 0.0, %v9854
        %v9856 = vpop.f32.mrf.mxu0
        %9857 = vmatprep.mubr.bf16.mxu0 0
        %9858 = vmatmul.mubr.bf16.gmra.mxu0 %v9788
        %v9859 = vpop.f32.mrf.mxu0
        %v9860 = vadd.f32 0.0, %v9859
        %v9861 = vpop.f32.mrf.mxu0
        %v9862 = vpop.f32.mrf.mxu0
        %v9863 = vadd.f32 0.0, %v9862
        %v9864 = vpop.f32.mrf.mxu0
        %9865 = vdwg.mxu0
        %v9866 = vadd.f32 %v9719, %v9828
        %v9867 = vadd.f32 %v9720, %v9831
        %v9868 = vadd.f32 %v9721, %v9836
        %v9869 = vadd.f32 %v9722, %v9839
        %v9870 = vadd.f32 %v9723, %v9844
        %v9871 = vadd.f32 %v9724, %v9847
        %v9872 = vadd.f32 %v9725, %v9852
        %v9873 = vadd.f32 %v9726, %v9855
        %v9874 = vadd.f32 %v9727, %v9860
        %v9875 = vadd.f32 %v9728, %v9863
        %v9876 = vld [vmem:[#allocation4 + $0x4] sm:$0xe]
        %v9877 = vld [vmem:[#allocation4 + $0x8] sm:$0xf]
        %v9878 = vld [vmem:[#allocation4 + $0xc] sm:$0xf]
        %v9879 = vld [vmem:[#allocation4 + $0x10] sm:$0xf]
        %v9880 = vld [vmem:[#allocation4 + $0x14] sm:$0xf]
        %v9881 = vld [vmem:[#allocation4 + $0x18] sm:$0xf]
        %v9882 = vld [vmem:[#allocation4 + $0x1c] sm:$0xf]
        %v9883 = vld [vmem:[#allocation4 + $0x20] sm:$0xf]
        %v9884 = vld [vmem:[#allocation4 + $0x24] sm:$0xf]
        %v9885 = vld [vmem:[#allocation4 + $0x28] sm:$0xf]
        %v9886 = vld [vmem:[#allocation4 + $0x2c] sm:$0x1]
        %s9887 = scalar_lea.vmem [#allocation6], 16
        %v9888 = vld [vmem:[%s9887] sm:$0xf]
        %v9900 = vunpack.c.l.b16 %v9876
        %v9901 = vunpack.c.l.b16 %v9877
        %v9902 = vunpack.c.l.b16 %v9878
        %v9903 = vunpack.c.l.b16 %v9879
        %v9904 = vunpack.c.l.b16 %v9880
        %v9905 = vunpack.c.l.b16 %v9881
        %v9906 = vunpack.c.l.b16 %v9882
        %v9907 = vunpack.c.l.b16 %v9883
        %v9908 = vunpack.c.l.b16 %v9884
        %v9909 = vunpack.c.l.b16 %v9885
        %v9910 = vunpack.c.l.b16 %v9886
        %v9911 = vpack.c.b16 %v9901, %v9900
        %v9912 = vpack.c.b16 %v9903, %v9902
        %v9913 = vpack.c.b16 %v9905, %v9904
        %v9914 = vpack.c.b16 %v9907, %v9906
        %v9915 = vpack.c.b16 %v9909, %v9908
        %v9916 = vpack.c.b16 %v9910, %v9910
        %v9918 = vshrl.u32 %v9911, 16
        %v9920 = vrot.slane %v9918, 1
        %v9921 = vshll.u32 %v9911, 16
        %v9923 = vrot.slane %v9921, 2
        %v9924 = vor.u32 %v9920, %v9923
        %v9926 = vshrl.u32 %v9912, 16
        %v9928 = vrot.slane %v9926, 1
        %v9929 = vshll.u32 %v9912, 16
        %v9931 = vrot.slane %v9929, 2
        %v9932 = vor.u32 %v9928, %v9931
        %v9933 = vsel %vm2233, %v9924, %v9932
        %v9935 = vshrl.u32 %v9913, 16
        %v9937 = vrot.slane %v9935, 1
        %v9938 = vshll.u32 %v9913, 16
        %v9940 = vrot.slane %v9938, 2
        %v9941 = vor.u32 %v9937, %v9940
        %v9942 = vsel %vm2233, %v9932, %v9941
        %v9944 = vshrl.u32 %v9914, 16
        %v9946 = vrot.slane %v9944, 1
        %v9947 = vshll.u32 %v9914, 16
        %v9949 = vrot.slane %v9947, 2
        %v9950 = vor.u32 %v9946, %v9949
        %v9951 = vsel %vm2233, %v9941, %v9950
        %v9953 = vshrl.u32 %v9915, 16
        %v9955 = vrot.slane %v9953, 1
        %v9956 = vshll.u32 %v9915, 16
        %v9958 = vrot.slane %v9956, 2
        %v9959 = vor.u32 %v9955, %v9958
        %v9960 = vsel %vm2233, %v9950, %v9959
        %v9962 = vshll.u32 %v9916, 16
        %v9964 = vrot.slane %v9962, 2
        %v9965 = vsel %vm2233, %v9959, %v9964
        %v9967 = vsel %vm5586, %v9933, 0
        %v9970 = vsel %vm5586, %v9942, 0
        %v9973 = vsel %vm5586, %v9951, 0
        %v9976 = vsel %vm5586, %v9960, 0
        %v9979 = vsel %vm5586, %v9965, 0
        %v9982 = vsel %vm5641, %v9888, 0
        %9984 = vmatprep.subr.bf16.mxu0 0
        %9985 = vmatpush1.bf16.msra.mxu0 0
        %9986 = vmatprep.subr.bf16.mxu0 0
        %9987 = vmatpush1.bf16.msra.mxu0 0
        %9988 = vmatprep.subr.bf16.mxu0 0
        %9989 = vmatpush1.bf16.msra.mxu0 0
        %9990 = vmatprep.subr.bf16.mxu0 0
        %9991 = vmatpush1.bf16.msra.mxu0 0
        %9992 = vmatprep.subr.bf16.mxu0 0
        %9993 = vmatpush1.bf16.msra.mxu0 0
        %9994 = vmatprep.subr.bf16.mxu0 0
        %9995 = vmatpush1.bf16.msra.mxu0 0
        %9996 = vmatprep.subr.bf16.mxu0 0
        %9997 = vmatpush1.bf16.msra.mxu0 0
        %9998 = vmatprep.subr.bf16.mxu0 0
        %9999 = vmatpush1.bf16.msra.mxu0 %v9982
        %10000 = vmatprep.subr.bf16.mxu0 0
        %10001 = vmatpush2.bf16.msra.mxu0 0
        %10002 = vmatprep.subr.bf16.mxu0 0
        %10003 = vmatpush2.bf16.msra.mxu0 0
        %10004 = vmatprep.subr.bf16.mxu0 0
        %10005 = vmatpush2.bf16.msra.mxu0 0
        %10006 = vmatprep.subr.bf16.mxu0 0
        %10007 = vmatpush2.bf16.msra.mxu0 0
        %10008 = vmatprep.subr.bf16.mxu0 0
        %10009 = vmatpush2.bf16.msra.mxu0 0
        %10010 = vmatprep.subr.bf16.mxu0 0
        %10011 = vmatpush2.bf16.msra.mxu0 0
        %10012 = vmatprep.subr.bf16.mxu0 0
        %10013 = vmatpush2.bf16.msra.mxu0 0
        %10014 = vmatprep.subr.bf16.mxu0 0
        %10015 = vmatpush2.bf16.msra.mxu0 0
        %10016 = vmatprep.mubr.bf16.mxu0 0
        %10017 = vmatmul.mubr.bf16.gmra.mxu0 %v9967
        %v10018 = vpop.f32.mrf.mxu0
        %v10019 = vadd.f32 0.0, %v10018
        %v10020 = vpop.f32.mrf.mxu0
        %v10021 = vpop.f32.mrf.mxu0
        %v10022 = vadd.f32 0.0, %v10021
        %v10023 = vpop.f32.mrf.mxu0
        %10024 = vmatprep.mubr.bf16.mxu0 0
        %10025 = vmatmul.mubr.bf16.gmra.mxu0 %v9970
        %v10026 = vpop.f32.mrf.mxu0
        %v10027 = vadd.f32 0.0, %v10026
        %v10028 = vpop.f32.mrf.mxu0
        %v10029 = vpop.f32.mrf.mxu0
        %v10030 = vadd.f32 0.0, %v10029
        %v10031 = vpop.f32.mrf.mxu0
        %10032 = vmatprep.mubr.bf16.mxu0 0
        %10033 = vmatmul.mubr.bf16.gmra.mxu0 %v9973
        %v10034 = vpop.f32.mrf.mxu0
        %v10035 = vadd.f32 0.0, %v10034
        %v10036 = vpop.f32.mrf.mxu0
        %v10037 = vpop.f32.mrf.mxu0
        %v10038 = vadd.f32 0.0, %v10037
        %v10039 = vpop.f32.mrf.mxu0
        %10040 = vmatprep.mubr.bf16.mxu0 0
        %10041 = vmatmul.mubr.bf16.gmra.mxu0 %v9976
        %v10042 = vpop.f32.mrf.mxu0
        %v10043 = vadd.f32 0.0, %v10042
        %v10044 = vpop.f32.mrf.mxu0
        %v10045 = vpop.f32.mrf.mxu0
        %v10046 = vadd.f32 0.0, %v10045
        %v10047 = vpop.f32.mrf.mxu0
        %10048 = vmatprep.mubr.bf16.mxu0 0
        %10049 = vmatmul.mubr.bf16.gmra.mxu0 %v9979
        %v10050 = vpop.f32.mrf.mxu0
        %v10051 = vadd.f32 0.0, %v10050
        %v10052 = vpop.f32.mrf.mxu0
        %v10053 = vpop.f32.mrf.mxu0
        %v10054 = vadd.f32 0.0, %v10053
        %v10055 = vpop.f32.mrf.mxu0
        %10056 = vdwg.mxu0
        %v10057 = vadd.f32 %v9866, %v10019
        %v10058 = vadd.f32 %v9867, %v10022
        %v10059 = vadd.f32 %v9868, %v10027
        %v10060 = vadd.f32 %v9869, %v10030
        %v10061 = vadd.f32 %v9870, %v10035
        %v10062 = vadd.f32 %v9871, %v10038
        %v10063 = vadd.f32 %v9872, %v10043
        %v10064 = vadd.f32 %v9873, %v10046
        %v10065 = vadd.f32 %v9874, %v10051
        %v10066 = vadd.f32 %v9875, %v10054
        %v10067 = vld [vmem:[#allocation4 + $0x4] sm:$0xc]
        %s10068 = scalar_lea.vmem [#allocation6], 20
        %v10069 = vld [vmem:[%s10068] sm:$0xf]
        %v10071 = vunpack.c.l.b16 %v10067
        %v10072 = vpack.c.b16 %v9901, %v10071
        %v10073 = vrot.slane %v10072, 2
        %v10074 = vrot.slane %v9912, 2
        %v10075 = vsel %vm2676, %v10073, %v10074
        %v10076 = vrot.slane %v9913, 2
        %v10077 = vsel %vm2676, %v10074, %v10076
        %v10078 = vrot.slane %v9914, 2
        %v10079 = vsel %vm2676, %v10076, %v10078
        %v10080 = vrot.slane %v9915, 2
        %v10081 = vsel %vm2676, %v10078, %v10080
        %v10082 = vrot.slane %v9916, 2
        %v10083 = vsel %vm2676, %v10080, %v10082
        %v10085 = vsel %vm5586, %v10075, 0
        %v10088 = vsel %vm5586, %v10077, 0
        %v10091 = vsel %vm5586, %v10079, 0
        %v10094 = vsel %vm5586, %v10081, 0
        %v10097 = vsel %vm5586, %v10083, 0
        %v10100 = vsel %vm5641, %v10069, 0
        %10102 = vmatprep.subr.bf16.mxu0 0
        %10103 = vmatpush1.bf16.msra.mxu0 0
        %10104 = vmatprep.subr.bf16.mxu0 0
        %10105 = vmatpush1.bf16.msra.mxu0 0
        %10106 = vmatprep.subr.bf16.mxu0 0
        %10107 = vmatpush1.bf16.msra.mxu0 0
        %10108 = vmatprep.subr.bf16.mxu0 0
        %10109 = vmatpush1.bf16.msra.mxu0 0
        %10110 = vmatprep.subr.bf16.mxu0 0
        %10111 = vmatpush1.bf16.msra.mxu0 0
        %10112 = vmatprep.subr.bf16.mxu0 0
        %10113 = vmatpush1.bf16.msra.mxu0 0
        %10114 = vmatprep.subr.bf16.mxu0 0
        %10115 = vmatpush1.bf16.msra.mxu0 0
        %10116 = vmatprep.subr.bf16.mxu0 0
        %10117 = vmatpush1.bf16.msra.mxu0 %v10100
        %10118 = vmatprep.subr.bf16.mxu0 0
        %10119 = vmatpush2.bf16.msra.mxu0 0
        %10120 = vmatprep.subr.bf16.mxu0 0
        %10121 = vmatpush2.bf16.msra.mxu0 0
        %10122 = vmatprep.subr.bf16.mxu0 0
        %10123 = vmatpush2.bf16.msra.mxu0 0
        %10124 = vmatprep.subr.bf16.mxu0 0
        %10125 = vmatpush2.bf16.msra.mxu0 0
        %10126 = vmatprep.subr.bf16.mxu0 0
        %10127 = vmatpush2.bf16.msra.mxu0 0
        %10128 = vmatprep.subr.bf16.mxu0 0
        %10129 = vmatpush2.bf16.msra.mxu0 0
        %10130 = vmatprep.subr.bf16.mxu0 0
        %10131 = vmatpush2.bf16.msra.mxu0 0
        %10132 = vmatprep.subr.bf16.mxu0 0
        %10133 = vmatpush2.bf16.msra.mxu0 0
        %10134 = vmatprep.mubr.bf16.mxu0 0
        %10135 = vmatmul.mubr.bf16.gmra.mxu0 %v10085
        %v10136 = vpop.f32.mrf.mxu0
        %v10137 = vadd.f32 0.0, %v10136
        %v10138 = vpop.f32.mrf.mxu0
        %v10139 = vpop.f32.mrf.mxu0
        %v10140 = vadd.f32 0.0, %v10139
        %v10141 = vpop.f32.mrf.mxu0
        %10142 = vmatprep.mubr.bf16.mxu0 0
        %10143 = vmatmul.mubr.bf16.gmra.mxu0 %v10088
        %v10144 = vpop.f32.mrf.mxu0
        %v10145 = vadd.f32 0.0, %v10144
        %v10146 = vpop.f32.mrf.mxu0
        %v10147 = vpop.f32.mrf.mxu0
        %v10148 = vadd.f32 0.0, %v10147
        %v10149 = vpop.f32.mrf.mxu0
        %10150 = vmatprep.mubr.bf16.mxu0 0
        %10151 = vmatmul.mubr.bf16.gmra.mxu0 %v10091
        %v10152 = vpop.f32.mrf.mxu0
        %v10153 = vadd.f32 0.0, %v10152
        %v10154 = vpop.f32.mrf.mxu0
        %v10155 = vpop.f32.mrf.mxu0
        %v10156 = vadd.f32 0.0, %v10155
        %v10157 = vpop.f32.mrf.mxu0
        %10158 = vmatprep.mubr.bf16.mxu0 0
        %10159 = vmatmul.mubr.bf16.gmra.mxu0 %v10094
        %v10160 = vpop.f32.mrf.mxu0
        %v10161 = vadd.f32 0.0, %v10160
        %v10162 = vpop.f32.mrf.mxu0
        %v10163 = vpop.f32.mrf.mxu0
        %v10164 = vadd.f32 0.0, %v10163
        %v10165 = vpop.f32.mrf.mxu0
        %10166 = vmatprep.mubr.bf16.mxu0 0
        %10167 = vmatmul.mubr.bf16.gmra.mxu0 %v10097
        %v10168 = vpop.f32.mrf.mxu0
        %v10169 = vadd.f32 0.0, %v10168
        %v10170 = vpop.f32.mrf.mxu0
        %v10171 = vpop.f32.mrf.mxu0
        %v10172 = vadd.f32 0.0, %v10171
        %v10173 = vpop.f32.mrf.mxu0
        %10174 = vdwg.mxu0
        %v10175 = vadd.f32 %v10057, %v10137
        %v10176 = vadd.f32 %v10058, %v10140
        %v10177 = vadd.f32 %v10059, %v10145
        %v10178 = vadd.f32 %v10060, %v10148
        %v10179 = vadd.f32 %v10061, %v10153
        %v10180 = vadd.f32 %v10062, %v10156
        %v10181 = vadd.f32 %v10063, %v10161
        %v10182 = vadd.f32 %v10064, %v10164
        %v10183 = vadd.f32 %v10065, %v10169
        %v10184 = vadd.f32 %v10066, %v10172
        %v10185 = vld [vmem:[#allocation4 + $0x8] sm:$0xc]
        %v10186 = vld [vmem:[#allocation4 + $0xc] sm:$0xf]
        %v10187 = vld [vmem:[#allocation4 + $0x10] sm:$0xf]
        %v10188 = vld [vmem:[#allocation4 + $0x14] sm:$0xf]
        %v10189 = vld [vmem:[#allocation4 + $0x18] sm:$0xf]
        %v10190 = vld [vmem:[#allocation4 + $0x1c] sm:$0xf]
        %v10191 = vld [vmem:[#allocation4 + $0x20] sm:$0xf]
        %v10192 = vld [vmem:[#allocation4 + $0x24] sm:$0xf]
        %v10193 = vld [vmem:[#allocation4 + $0x28] sm:$0xf]
        %v10194 = vld [vmem:[#allocation4 + $0x2c] sm:$0xf]
        %v10195 = vld [vmem:[#allocation4 + $0x30] sm:$0x1]
        %s10196 = scalar_lea.vmem [#allocation6], 24
        %v10197 = vld [vmem:[%s10196] sm:$0xf]
        %v10209 = vunpack.c.l.b16 %v10185
        %v10210 = vunpack.c.l.b16 %v10186
        %v10211 = vunpack.c.l.b16 %v10187
        %v10212 = vunpack.c.l.b16 %v10188
        %v10213 = vunpack.c.l.b16 %v10189
        %v10214 = vunpack.c.l.b16 %v10190
        %v10215 = vunpack.c.l.b16 %v10191
        %v10216 = vunpack.c.l.b16 %v10192
        %v10217 = vunpack.c.l.b16 %v10193
        %v10218 = vunpack.c.l.b16 %v10194
        %v10219 = vunpack.c.l.b16 %v10195
        %v10220 = vpack.c.b16 %v10210, %v10209
        %v10221 = vpack.c.b16 %v10212, %v10211
        %v10222 = vpack.c.b16 %v10214, %v10213
        %v10223 = vpack.c.b16 %v10216, %v10215
        %v10224 = vpack.c.b16 %v10218, %v10217
        %v10225 = vpack.c.b16 %v10219, %v10219
        %v10226 = vrot.slane %v10220, 2
        %v10227 = vrot.slane %v10221, 2
        %v10228 = vsel %vm2676, %v10226, %v10227
        %v10229 = vrot.slane %v10222, 2
        %v10230 = vsel %vm2676, %v10227, %v10229
        %v10231 = vrot.slane %v10223, 2
        %v10232 = vsel %vm2676, %v10229, %v10231
        %v10233 = vrot.slane %v10224, 2
        %v10234 = vsel %vm2676, %v10231, %v10233
        %v10235 = vrot.slane %v10225, 2
        %v10236 = vsel %vm2676, %v10233, %v10235
        %v10238 = vsel %vm5586, %v10228, 0
        %v10241 = vsel %vm5586, %v10230, 0
        %v10244 = vsel %vm5586, %v10232, 0
        %v10247 = vsel %vm5586, %v10234, 0
        %v10250 = vsel %vm5586, %v10236, 0
        %v10253 = vsel %vm5641, %v10197, 0
        %10255 = vmatprep.subr.bf16.mxu0 0
        %10256 = vmatpush1.bf16.msra.mxu0 0
        %10257 = vmatprep.subr.bf16.mxu0 0
        %10258 = vmatpush1.bf16.msra.mxu0 0
        %10259 = vmatprep.subr.bf16.mxu0 0
        %10260 = vmatpush1.bf16.msra.mxu0 0
        %10261 = vmatprep.subr.bf16.mxu0 0
        %10262 = vmatpush1.bf16.msra.mxu0 0
        %10263 = vmatprep.subr.bf16.mxu0 0
        %10264 = vmatpush1.bf16.msra.mxu0 0
        %10265 = vmatprep.subr.bf16.mxu0 0
        %10266 = vmatpush1.bf16.msra.mxu0 0
        %10267 = vmatprep.subr.bf16.mxu0 0
        %10268 = vmatpush1.bf16.msra.mxu0 0
        %10269 = vmatprep.subr.bf16.mxu0 0
        %10270 = vmatpush1.bf16.msra.mxu0 %v10253
        %10271 = vmatprep.subr.bf16.mxu0 0
        %10272 = vmatpush2.bf16.msra.mxu0 0
        %10273 = vmatprep.subr.bf16.mxu0 0
        %10274 = vmatpush2.bf16.msra.mxu0 0
        %10275 = vmatprep.subr.bf16.mxu0 0
        %10276 = vmatpush2.bf16.msra.mxu0 0
        %10277 = vmatprep.subr.bf16.mxu0 0
        %10278 = vmatpush2.bf16.msra.mxu0 0
        %10279 = vmatprep.subr.bf16.mxu0 0
        %10280 = vmatpush2.bf16.msra.mxu0 0
        %10281 = vmatprep.subr.bf16.mxu0 0
        %10282 = vmatpush2.bf16.msra.mxu0 0
        %10283 = vmatprep.subr.bf16.mxu0 0
        %10284 = vmatpush2.bf16.msra.mxu0 0
        %10285 = vmatprep.subr.bf16.mxu0 0
        %10286 = vmatpush2.bf16.msra.mxu0 0
        %10287 = vmatprep.mubr.bf16.mxu0 0
        %10288 = vmatmul.mubr.bf16.gmra.mxu0 %v10238
        %v10289 = vpop.f32.mrf.mxu0
        %v10290 = vadd.f32 0.0, %v10289
        %v10291 = vpop.f32.mrf.mxu0
        %v10292 = vpop.f32.mrf.mxu0
        %v10293 = vadd.f32 0.0, %v10292
        %v10294 = vpop.f32.mrf.mxu0
        %10295 = vmatprep.mubr.bf16.mxu0 0
        %10296 = vmatmul.mubr.bf16.gmra.mxu0 %v10241
        %v10297 = vpop.f32.mrf.mxu0
        %v10298 = vadd.f32 0.0, %v10297
        %v10299 = vpop.f32.mrf.mxu0
        %v10300 = vpop.f32.mrf.mxu0
        %v10301 = vadd.f32 0.0, %v10300
        %v10302 = vpop.f32.mrf.mxu0
        %10303 = vmatprep.mubr.bf16.mxu0 0
        %10304 = vmatmul.mubr.bf16.gmra.mxu0 %v10244
        %v10305 = vpop.f32.mrf.mxu0
        %v10306 = vadd.f32 0.0, %v10305
        %v10307 = vpop.f32.mrf.mxu0
        %v10308 = vpop.f32.mrf.mxu0
        %v10309 = vadd.f32 0.0, %v10308
        %v10310 = vpop.f32.mrf.mxu0
        %10311 = vmatprep.mubr.bf16.mxu0 0
        %10312 = vmatmul.mubr.bf16.gmra.mxu0 %v10247
        %v10313 = vpop.f32.mrf.mxu0
        %v10314 = vadd.f32 0.0, %v10313
        %v10315 = vpop.f32.mrf.mxu0
        %v10316 = vpop.f32.mrf.mxu0
        %v10317 = vadd.f32 0.0, %v10316
        %v10318 = vpop.f32.mrf.mxu0
        %10319 = vmatprep.mubr.bf16.mxu0 0
        %10320 = vmatmul.mubr.bf16.gmra.mxu0 %v10250
        %v10321 = vpop.f32.mrf.mxu0
        %v10322 = vadd.f32 0.0, %v10321
        %v10323 = vpop.f32.mrf.mxu0
        %v10324 = vpop.f32.mrf.mxu0
        %v10325 = vadd.f32 0.0, %v10324
        %v10326 = vpop.f32.mrf.mxu0
        %10327 = vdwg.mxu0
        %v10328 = vadd.f32 %v10175, %v10290
        %v10329 = vadd.f32 %v10176, %v10293
        %v10330 = vadd.f32 %v10177, %v10298
        %v10331 = vadd.f32 %v10178, %v10301
        %v10332 = vadd.f32 %v10179, %v10306
        %v10333 = vadd.f32 %v10180, %v10309
        %v10334 = vadd.f32 %v10181, %v10314
        %v10335 = vadd.f32 %v10182, %v10317
        %v10336 = vadd.f32 %v10183, %v10322
        %v10337 = vadd.f32 %v10184, %v10325
        %v10338 = vld [vmem:[#allocation4 + $0x30] sm:$0x3]
        %s10339 = scalar_lea.vmem [#allocation6], 28
        %v10340 = vld [vmem:[%s10339] sm:$0xf]
        %v10342 = vunpack.c.l.b16 %v10338
        %v10343 = vpack.c.b16 %v10342, %v10342
        %v10345 = vshrl.u32 %v10220, 16
        %v10347 = vrot.slane %v10345, 2
        %v10348 = vshll.u32 %v10220, 16
        %v10350 = vrot.slane %v10348, 3
        %v10351 = vor.u32 %v10347, %v10350
        %v10353 = vshrl.u32 %v10221, 16
        %v10355 = vrot.slane %v10353, 2
        %v10356 = vshll.u32 %v10221, 16
        %v10358 = vrot.slane %v10356, 3
        %v10359 = vor.u32 %v10355, %v10358
        %v10360 = vsel %vm3429, %v10351, %v10359
        %v10362 = vshrl.u32 %v10222, 16
        %v10364 = vrot.slane %v10362, 2
        %v10365 = vshll.u32 %v10222, 16
        %v10367 = vrot.slane %v10365, 3
        %v10368 = vor.u32 %v10364, %v10367
        %v10369 = vsel %vm3429, %v10359, %v10368
        %v10371 = vshrl.u32 %v10223, 16
        %v10373 = vrot.slane %v10371, 2
        %v10374 = vshll.u32 %v10223, 16
        %v10376 = vrot.slane %v10374, 3
        %v10377 = vor.u32 %v10373, %v10376
        %v10378 = vsel %vm3429, %v10368, %v10377
        %v10380 = vshrl.u32 %v10224, 16
        %v10382 = vrot.slane %v10380, 2
        %v10383 = vshll.u32 %v10224, 16
        %v10385 = vrot.slane %v10383, 3
        %v10386 = vor.u32 %v10382, %v10385
        %v10387 = vsel %vm3429, %v10377, %v10386
        %v10389 = vshrl.u32 %v10343, 16
        %v10391 = vrot.slane %v10389, 2
        %v10392 = vshll.u32 %v10343, 16
        %v10394 = vrot.slane %v10392, 3
        %v10395 = vor.u32 %v10391, %v10394
        %v10396 = vsel %vm3429, %v10386, %v10395
        %v10398 = vsel %vm5586, %v10360, 0
        %v10401 = vsel %vm5586, %v10369, 0
        %v10404 = vsel %vm5586, %v10378, 0
        %v10407 = vsel %vm5586, %v10387, 0
        %v10410 = vsel %vm5586, %v10396, 0
        %v10413 = vsel %vm5641, %v10340, 0
        %10415 = vmatprep.subr.bf16.mxu0 0
        %10416 = vmatpush1.bf16.msra.mxu0 0
        %10417 = vmatprep.subr.bf16.mxu0 0
        %10418 = vmatpush1.bf16.msra.mxu0 0
        %10419 = vmatprep.subr.bf16.mxu0 0
        %10420 = vmatpush1.bf16.msra.mxu0 0
        %10421 = vmatprep.subr.bf16.mxu0 0
        %10422 = vmatpush1.bf16.msra.mxu0 0
        %10423 = vmatprep.subr.bf16.mxu0 0
        %10424 = vmatpush1.bf16.msra.mxu0 0
        %10425 = vmatprep.subr.bf16.mxu0 0
        %10426 = vmatpush1.bf16.msra.mxu0 0
        %10427 = vmatprep.subr.bf16.mxu0 0
        %10428 = vmatpush1.bf16.msra.mxu0 0
        %10429 = vmatprep.subr.bf16.mxu0 0
        %10430 = vmatpush1.bf16.msra.mxu0 %v10413
        %10431 = vmatprep.subr.bf16.mxu0 0
        %10432 = vmatpush2.bf16.msra.mxu0 0
        %10433 = vmatprep.subr.bf16.mxu0 0
        %10434 = vmatpush2.bf16.msra.mxu0 0
        %10435 = vmatprep.subr.bf16.mxu0 0
        %10436 = vmatpush2.bf16.msra.mxu0 0
        %10437 = vmatprep.subr.bf16.mxu0 0
        %10438 = vmatpush2.bf16.msra.mxu0 0
        %10439 = vmatprep.subr.bf16.mxu0 0
        %10440 = vmatpush2.bf16.msra.mxu0 0
        %10441 = vmatprep.subr.bf16.mxu0 0
        %10442 = vmatpush2.bf16.msra.mxu0 0
        %10443 = vmatprep.subr.bf16.mxu0 0
        %10444 = vmatpush2.bf16.msra.mxu0 0
        %10445 = vmatprep.subr.bf16.mxu0 0
        %10446 = vmatpush2.bf16.msra.mxu0 0
        %10447 = vmatprep.mubr.bf16.mxu0 0
        %10448 = vmatmul.mubr.bf16.gmra.mxu0 %v10398
        %v10449 = vpop.f32.mrf.mxu0
        %v10450 = vadd.f32 0.0, %v10449
        %v10451 = vpop.f32.mrf.mxu0
        %v10452 = vpop.f32.mrf.mxu0
        %v10453 = vadd.f32 0.0, %v10452
        %v10454 = vpop.f32.mrf.mxu0
        %10455 = vmatprep.mubr.bf16.mxu0 0
        %10456 = vmatmul.mubr.bf16.gmra.mxu0 %v10401
        %v10457 = vpop.f32.mrf.mxu0
        %v10458 = vadd.f32 0.0, %v10457
        %v10459 = vpop.f32.mrf.mxu0
        %v10460 = vpop.f32.mrf.mxu0
        %v10461 = vadd.f32 0.0, %v10460
        %v10462 = vpop.f32.mrf.mxu0
        %10463 = vmatprep.mubr.bf16.mxu0 0
        %10464 = vmatmul.mubr.bf16.gmra.mxu0 %v10404
        %v10465 = vpop.f32.mrf.mxu0
        %v10466 = vadd.f32 0.0, %v10465
        %v10467 = vpop.f32.mrf.mxu0
        %v10468 = vpop.f32.mrf.mxu0
        %v10469 = vadd.f32 0.0, %v10468
        %v10470 = vpop.f32.mrf.mxu0
        %10471 = vmatprep.mubr.bf16.mxu0 0
        %10472 = vmatmul.mubr.bf16.gmra.mxu0 %v10407
        %v10473 = vpop.f32.mrf.mxu0
        %v10474 = vadd.f32 0.0, %v10473
        %v10475 = vpop.f32.mrf.mxu0
        %v10476 = vpop.f32.mrf.mxu0
        %v10477 = vadd.f32 0.0, %v10476
        %v10478 = vpop.f32.mrf.mxu0
        %10479 = vmatprep.mubr.bf16.mxu0 0
        %10480 = vmatmul.mubr.bf16.gmra.mxu0 %v10410
        %v10481 = vpop.f32.mrf.mxu0
        %v10482 = vadd.f32 0.0, %v10481
        %v10483 = vpop.f32.mrf.mxu0
        %v10484 = vpop.f32.mrf.mxu0
        %v10485 = vadd.f32 0.0, %v10484
        %v10486 = vpop.f32.mrf.mxu0
        %10487 = vdwg.mxu0
        %v10488 = vadd.f32 %v10328, %v10450
        %v10489 = vadd.f32 %v10329, %v10453
        %v10490 = vadd.f32 %v10330, %v10458
        %v10491 = vadd.f32 %v10331, %v10461
        %v10492 = vadd.f32 %v10332, %v10466
        %v10493 = vadd.f32 %v10333, %v10469
        %v10494 = vadd.f32 %v10334, %v10474
        %v10495 = vadd.f32 %v10335, %v10477
        %v10496 = vadd.f32 %v10336, %v10482
        %v10497 = vadd.f32 %v10337, %v10485
        %v10498 = vld [vmem:[#allocation4 + $0x8] sm:$0x8]
        %s10499 = scalar_lea.vmem [#allocation6], 32
        %v10500 = vld [vmem:[%s10499] sm:$0xf]
        %v10502 = vunpack.c.l.b16 %v10498
        %v10503 = vpack.c.b16 %v10210, %v10502
        %v10504 = vrot.slane %v10503, 3
        %v10505 = vrot.slane %v10221, 3
        %v10506 = vsel %vm3876, %v10504, %v10505
        %v10507 = vrot.slane %v10222, 3
        %v10508 = vsel %vm3876, %v10505, %v10507
        %v10509 = vrot.slane %v10223, 3
        %v10510 = vsel %vm3876, %v10507, %v10509
        %v10511 = vrot.slane %v10224, 3
        %v10512 = vsel %vm3876, %v10509, %v10511
        %v10513 = vrot.slane %v10343, 3
        %v10514 = vsel %vm3876, %v10511, %v10513
        %v10516 = vsel %vm5586, %v10506, 0
        %v10519 = vsel %vm5586, %v10508, 0
        %v10522 = vsel %vm5586, %v10510, 0
        %v10525 = vsel %vm5586, %v10512, 0
        %v10528 = vsel %vm5586, %v10514, 0
        %v10531 = vsel %vm5641, %v10500, 0
        %10533 = vmatprep.subr.bf16.mxu0 0
        %10534 = vmatpush1.bf16.msra.mxu0 0
        %10535 = vmatprep.subr.bf16.mxu0 0
        %10536 = vmatpush1.bf16.msra.mxu0 0
        %10537 = vmatprep.subr.bf16.mxu0 0
        %10538 = vmatpush1.bf16.msra.mxu0 0
        %10539 = vmatprep.subr.bf16.mxu0 0
        %10540 = vmatpush1.bf16.msra.mxu0 0
        %10541 = vmatprep.subr.bf16.mxu0 0
        %10542 = vmatpush1.bf16.msra.mxu0 0
        %10543 = vmatprep.subr.bf16.mxu0 0
        %10544 = vmatpush1.bf16.msra.mxu0 0
        %10545 = vmatprep.subr.bf16.mxu0 0
        %10546 = vmatpush1.bf16.msra.mxu0 0
        %10547 = vmatprep.subr.bf16.mxu0 0
        %10548 = vmatpush1.bf16.msra.mxu0 %v10531
        %10549 = vmatprep.subr.bf16.mxu0 0
        %10550 = vmatpush2.bf16.msra.mxu0 0
        %10551 = vmatprep.subr.bf16.mxu0 0
        %10552 = vmatpush2.bf16.msra.mxu0 0
        %10553 = vmatprep.subr.bf16.mxu0 0
        %10554 = vmatpush2.bf16.msra.mxu0 0
        %10555 = vmatprep.subr.bf16.mxu0 0
        %10556 = vmatpush2.bf16.msra.mxu0 0
        %10557 = vmatprep.subr.bf16.mxu0 0
        %10558 = vmatpush2.bf16.msra.mxu0 0
        %10559 = vmatprep.subr.bf16.mxu0 0
        %10560 = vmatpush2.bf16.msra.mxu0 0
        %10561 = vmatprep.subr.bf16.mxu0 0
        %10562 = vmatpush2.bf16.msra.mxu0 0
        %10563 = vmatprep.subr.bf16.mxu0 0
        %10564 = vmatpush2.bf16.msra.mxu0 0
        %10565 = vmatprep.mubr.bf16.mxu0 0
        %10566 = vmatmul.mubr.bf16.gmra.mxu0 %v10516
        %v10567 = vpop.f32.mrf.mxu0
        %v10568 = vadd.f32 0.0, %v10567
        %v10569 = vpop.f32.mrf.mxu0
        %v10570 = vpop.f32.mrf.mxu0
        %v10571 = vadd.f32 0.0, %v10570
        %v10572 = vpop.f32.mrf.mxu0
        %10573 = vmatprep.mubr.bf16.mxu0 0
        %10574 = vmatmul.mubr.bf16.gmra.mxu0 %v10519
        %v10575 = vpop.f32.mrf.mxu0
        %v10576 = vadd.f32 0.0, %v10575
        %v10577 = vpop.f32.mrf.mxu0
        %v10578 = vpop.f32.mrf.mxu0
        %v10579 = vadd.f32 0.0, %v10578
        %v10580 = vpop.f32.mrf.mxu0
        %10581 = vmatprep.mubr.bf16.mxu0 0
        %10582 = vmatmul.mubr.bf16.gmra.mxu0 %v10522
        %v10583 = vpop.f32.mrf.mxu0
        %v10584 = vadd.f32 0.0, %v10583
        %v10585 = vpop.f32.mrf.mxu0
        %v10586 = vpop.f32.mrf.mxu0
        %v10587 = vadd.f32 0.0, %v10586
        %v10588 = vpop.f32.mrf.mxu0
        %10589 = vmatprep.mubr.bf16.mxu0 0
        %10590 = vmatmul.mubr.bf16.gmra.mxu0 %v10525
        %v10591 = vpop.f32.mrf.mxu0
        %v10592 = vadd.f32 0.0, %v10591
        %v10593 = vpop.f32.mrf.mxu0
        %v10594 = vpop.f32.mrf.mxu0
        %v10595 = vadd.f32 0.0, %v10594
        %v10596 = vpop.f32.mrf.mxu0
        %10597 = vmatprep.mubr.bf16.mxu0 0
        %10598 = vmatmul.mubr.bf16.gmra.mxu0 %v10528
        %v10599 = vpop.f32.mrf.mxu0
        %v10600 = vadd.f32 0.0, %v10599
        %v10601 = vpop.f32.mrf.mxu0
        %v10602 = vpop.f32.mrf.mxu0
        %v10603 = vadd.f32 0.0, %v10602
        %v10604 = vpop.f32.mrf.mxu0
        %10605 = vdwg.mxu0
        %v10606 = vadd.f32 %v10488, %v10568
        %v10607 = vadd.f32 %v10489, %v10571
        %v10608 = vadd.f32 %v10490, %v10576
        %v10609 = vadd.f32 %v10491, %v10579
        %v10610 = vadd.f32 %v10492, %v10584
        %v10611 = vadd.f32 %v10493, %v10587
        %v10612 = vadd.f32 %v10494, %v10592
        %v10613 = vadd.f32 %v10495, %v10595
        %v10614 = vadd.f32 %v10496, %v10600
        %v10615 = vadd.f32 %v10497, %v10603
        %v10616 = vld [vmem:[%s8] sm:$0x1]
        %v10618 = vlaneseq
        %v10619 = vshrl.u32 %v10618, 7
        %v10620 = vsub.s32 0, %v10619
        %v10621 = vrot.slane %v10616, %v10620
        %v10623 = vadd.f32 %v10606, %v10621
        %v10624 = vadd.f32 %v10607, %v10621
        %v10625 = vadd.f32 %v10608, %v10621
        %v10626 = vadd.f32 %v10609, %v10621
        %v10627 = vadd.f32 %v10610, %v10621
        %v10628 = vadd.f32 %v10611, %v10621
        %v10629 = vadd.f32 %v10612, %v10621
        %v10630 = vadd.f32 %v10613, %v10621
        %v10631 = vadd.f32 %v10614, %v10621
        %v10632 = vadd.f32 %v10615, %v10621
        %v10633 = vmax.f32 %v10623, 0.0
        %v10634 = vmax.f32 %v10624, 0.0
        %v10635 = vmax.f32 %v10625, 0.0
        %v10636 = vmax.f32 %v10626, 0.0
        %v10637 = vmax.f32 %v10627, 0.0
        %v10638 = vmax.f32 %v10628, 0.0
        %v10639 = vmax.f32 %v10629, 0.0
        %v10640 = vmax.f32 %v10630, 0.0
        %v10641 = vmax.f32 %v10631, 0.0
        %v10642 = vmax.f32 %v10632, 0.0
        %v10643 = vld [vmem:[%s9] sm:$0xf]
        %v10644 = vld [vmem:[%s9 + $0x4] sm:$0xf]
        %v10645 = vpack.c.bf16 %v10634, %v10633
        %v10646 = vpack.c.bf16 %v10636, %v10635
        %v10647 = vpack.c.bf16 %v10638, %v10637
        %v10648 = vpack.c.bf16 %v10640, %v10639
        %v10649 = vpack.c.bf16 %v10642, %v10641
        %v10652 = vunpack.c.l.b16 %v10643
        %v10653 = vunpack.c.l.b16 %v10644
        %v10654 = vpack.c.b16 %v10653, %v10652
        %vm10655 = vcmask 637952
        %v10657 = vsel %vm10655, %v10654, 0
        %v10660 = vsel %vm4701, %v10649, 0
        %10662 = vmatprep.subr.bf16.mxu0 0
        %10663 = vmatpush1.bf16.msra.mxu0 0
        %10664 = vmatprep.subr.bf16.mxu0 0
        %10665 = vmatpush1.bf16.msra.mxu0 0
        %10666 = vmatprep.subr.bf16.mxu0 0
        %10667 = vmatpush1.bf16.msra.mxu0 0
        %10668 = vmatprep.subr.bf16.mxu0 0
        %10669 = vmatpush1.bf16.msra.mxu0 %v10660
        %10670 = vmatprep.subr.bf16.mxu0 0
        %10671 = vmatpush1.bf16.msra.mxu0 %v10648
        %10672 = vmatprep.subr.bf16.mxu0 0
        %10673 = vmatpush1.bf16.msra.mxu0 %v10647
        %10674 = vmatprep.subr.bf16.mxu0 0
        %10675 = vmatpush1.bf16.msra.mxu0 %v10646
        %10676 = vmatprep.subr.bf16.mxu0 0
        %10677 = vmatpush1.bf16.msra.mxu0 %v10645
        %10678 = vmatprep.subr.bf16.mxu0 0
        %10679 = vmatpush2.bf16.msra.mxu0 0
        %10680 = vmatprep.subr.bf16.mxu0 0
        %10681 = vmatpush2.bf16.msra.mxu0 0
        %10682 = vmatprep.subr.bf16.mxu0 0
        %10683 = vmatpush2.bf16.msra.mxu0 0
        %10684 = vmatprep.subr.bf16.mxu0 0
        %10685 = vmatpush2.bf16.msra.mxu0 0
        %10686 = vmatprep.subr.bf16.mxu0 0
        %10687 = vmatpush2.bf16.msra.mxu0 0
        %10688 = vmatprep.subr.bf16.mxu0 0
        %10689 = vmatpush2.bf16.msra.mxu0 0
        %10690 = vmatprep.subr.bf16.mxu0 0
        %10691 = vmatpush2.bf16.msra.mxu0 0
        %10692 = vmatprep.subr.bf16.mxu0 0
        %10693 = vmatpush2.bf16.msra.mxu0 0
        %10694 = vmatprep.mubr.bf16.mxu0 0
        %10695 = vmatmul.mubr.bf16.gmra.mxu0 %v10657
        %v10696 = vpop.f32.mrf.mxu0
        %v10697 = vadd.f32 0.0, %v10696
        %v10698 = vpop.f32.mrf.mxu0
        %v10699 = vpop.f32.mrf.mxu0
        %v10700 = vadd.f32 0.0, %v10699
        %v10701 = vpop.f32.mrf.mxu0
        %10702 = vdwg.mxu0
        %v10703 = vpack.c.bf16 %v10700, %v10697
        %v10705 = vunpack.c.l.b16 %v10703
        %v10706 = vunpack.c.h.b16 %v10703
        %v10707 = vpack.c.b16 %v10705, %v10705
        %v10708 = vpack.c.b16 %v10706, %v10706
        %vm10711 = vcmask 125952
        %10712 = vst.msk [vmem:[#allocation5] sm:$0xf] %vm10711, %v10707
        %10713 = vst.msk [vmem:[#allocation5 + $0x4] sm:$0xf] %vm10711, %v10708
        %v10714 = vld [vmem:[#allocation5] sm:$0x1]
        %v10715 = vld [vmem:[#allocation9] sm:$0xff]
        %v10716 = vld [vmem:[#allocation9 + $0x8] sm:$0xff]
        %s10717 = scalar_lea.vmem [#allocation9], 16
        %v10718 = vld [vmem:[%s10717] sm:$0xff]
        %v10719 = vld [vmem:[%s10717 + $0x8] sm:$0xff]
        %v10721 = vunpack.c.l.b16 %v10714
        %v10722 = vpack.c.b16 %v10721, %v10721
        %v10724 = vshrl.u32 %v10722, 16
        %v10728 = vunpack.c.l.b16 %v10718
        %v10729 = vunpack.c.h.b16 %v10718
        %v10730 = vunpack.c.l.b16 %v10719
        %v10731 = vunpack.c.h.b16 %v10719
        %v10732 = vpack.c.b16 %v10730, %v10728
        %v10733 = vpack.c.b16 %v10731, %v10729
        %vm10736 = vcmask 130048
        %v10738 = vsel %vm10736, %v10724, 0
        %10740 = vmatprep.subr.bf16.mxu0 0
        %10741 = vmatpush1.bf16.msra.mxu0 0
        %10742 = vmatprep.subr.bf16.mxu0 0
        %10743 = vmatpush1.bf16.msra.mxu0 0
        %10744 = vmatprep.subr.bf16.mxu0 0
        %10745 = vmatpush1.bf16.msra.mxu0 0
        %10746 = vmatprep.subr.bf16.mxu0 0
        %10747 = vmatpush1.bf16.msra.mxu0 0
        %10748 = vmatprep.subr.bf16.mxu0 0
        %10749 = vmatpush1.bf16.msra.mxu0 0
        %10750 = vmatprep.subr.bf16.mxu0 0
        %10751 = vmatpush1.bf16.msra.mxu0 0
        %10752 = vmatprep.subr.bf16.mxu0 0
        %10753 = vmatpush1.bf16.msra.mxu0 0
        %10754 = vmatprep.subr.bf16.mxu0 %v10733
        %10755 = vmatpush1.bf16.msra.mxu0 %v10732
        %10756 = vmatprep.subr.bf16.mxu0 0
        %10757 = vmatpush2.bf16.msra.mxu0 0
        %10758 = vmatprep.subr.bf16.mxu0 0
        %10759 = vmatpush2.bf16.msra.mxu0 0
        %10760 = vmatprep.subr.bf16.mxu0 0
        %10761 = vmatpush2.bf16.msra.mxu0 0
        %10762 = vmatprep.subr.bf16.mxu0 0
        %10763 = vmatpush2.bf16.msra.mxu0 0
        %10764 = vmatprep.subr.bf16.mxu0 0
        %10765 = vmatpush2.bf16.msra.mxu0 0
        %10766 = vmatprep.subr.bf16.mxu0 0
        %10767 = vmatpush2.bf16.msra.mxu0 0
        %10768 = vmatprep.subr.bf16.mxu0 0
        %10769 = vmatpush2.bf16.msra.mxu0 0
        %10770 = vmatprep.subr.bf16.mxu0 0
        %10771 = vmatpush2.bf16.msra.mxu0 0
        %10772 = vmatprep.mubr.bf16.mxu0 0
        %10773 = vmatmul.mubr.bf16.gmra.mxu0 %v10738
        %v10774 = vpop.f32.mrf.mxu0
        %v10775 = vadd.f32 0.0, %v10774
        %v10776 = vpop.f32.mrf.mxu0
        %v10777 = vadd.f32 0.0, %v10776
        %v10778 = vpop.f32.mrf.mxu0
        %v10779 = vpop.f32.mrf.mxu0
        %10780 = vdwg.mxu0
        %v10783 = vunpack.c.l.b16 %v10715
        %v10784 = vunpack.c.h.b16 %v10715
        %v10785 = vunpack.c.l.b16 %v10716
        %v10786 = vunpack.c.h.b16 %v10716
        %v10787 = vpack.c.b16 %v10785, %v10783
        %v10788 = vpack.c.b16 %v10786, %v10784
        %v10792 = vsel %vm10736, %v10714, 0
        %10794 = vmatprep.subr.bf16.mxu0 0
        %10795 = vmatpush1.bf16.msra.mxu0 0
        %10796 = vmatprep.subr.bf16.mxu0 0
        %10797 = vmatpush1.bf16.msra.mxu0 0
        %10798 = vmatprep.subr.bf16.mxu0 0
        %10799 = vmatpush1.bf16.msra.mxu0 0
        %10800 = vmatprep.subr.bf16.mxu0 0
        %10801 = vmatpush1.bf16.msra.mxu0 0
        %10802 = vmatprep.subr.bf16.mxu0 0
        %10803 = vmatpush1.bf16.msra.mxu0 0
        %10804 = vmatprep.subr.bf16.mxu0 0
        %10805 = vmatpush1.bf16.msra.mxu0 0
        %10806 = vmatprep.subr.bf16.mxu0 0
        %10807 = vmatpush1.bf16.msra.mxu0 0
        %10808 = vmatprep.subr.bf16.mxu0 %v10788
        %10809 = vmatpush1.bf16.msra.mxu0 %v10787
        %10810 = vmatprep.subr.bf16.mxu0 0
        %10811 = vmatpush2.bf16.msra.mxu0 0
        %10812 = vmatprep.subr.bf16.mxu0 0
        %10813 = vmatpush2.bf16.msra.mxu0 0
        %10814 = vmatprep.subr.bf16.mxu0 0
        %10815 = vmatpush2.bf16.msra.mxu0 0
        %10816 = vmatprep.subr.bf16.mxu0 0
        %10817 = vmatpush2.bf16.msra.mxu0 0
        %10818 = vmatprep.subr.bf16.mxu0 0
        %10819 = vmatpush2.bf16.msra.mxu0 0
        %10820 = vmatprep.subr.bf16.mxu0 0
        %10821 = vmatpush2.bf16.msra.mxu0 0
        %10822 = vmatprep.subr.bf16.mxu0 0
        %10823 = vmatpush2.bf16.msra.mxu0 0
        %10824 = vmatprep.subr.bf16.mxu0 0
        %10825 = vmatpush2.bf16.msra.mxu0 0
        %10826 = vmatprep.mubr.bf16.mxu0 0
        %10827 = vmatmul.mubr.bf16.gmra.mxu0 %v10792
        %v10828 = vpop.f32.mrf.mxu0
        %v10829 = vadd.f32 %v10775, %v10828
        %v10830 = vpop.f32.mrf.mxu0
        %v10831 = vadd.f32 %v10777, %v10830
        %v10832 = vpop.f32.mrf.mxu0
        %v10833 = vpop.f32.mrf.mxu0
        %10834 = vdwg.mxu0
        %v10835 = vld [vmem:[#allocation5] sm:$0x2]
        %s10836 = scalar_lea.vmem [#allocation9], 32
        %v10837 = vld [vmem:[%s10836] sm:$0xff]
        %v10838 = vld [vmem:[%s10836 + $0x8] sm:$0xff]
        %v10840 = vunpack.c.l.b16 %v10835
        %v10841 = vpack.c.b16 %v10840, %v10840
        %v10842 = vrot.slane %v10841, 1
        %v10845 = vunpack.c.l.b16 %v10837
        %v10846 = vunpack.c.h.b16 %v10837
        %v10847 = vunpack.c.l.b16 %v10838
        %v10848 = vunpack.c.h.b16 %v10838
        %v10849 = vpack.c.b16 %v10847, %v10845
        %v10850 = vpack.c.b16 %v10848, %v10846
        %v10854 = vsel %vm10736, %v10842, 0
        %10856 = vmatprep.subr.bf16.mxu0 0
        %10857 = vmatpush1.bf16.msra.mxu0 0
        %10858 = vmatprep.subr.bf16.mxu0 0
        %10859 = vmatpush1.bf16.msra.mxu0 0
        %10860 = vmatprep.subr.bf16.mxu0 0
        %10861 = vmatpush1.bf16.msra.mxu0 0
        %10862 = vmatprep.subr.bf16.mxu0 0
        %10863 = vmatpush1.bf16.msra.mxu0 0
        %10864 = vmatprep.subr.bf16.mxu0 0
        %10865 = vmatpush1.bf16.msra.mxu0 0
        %10866 = vmatprep.subr.bf16.mxu0 0
        %10867 = vmatpush1.bf16.msra.mxu0 0
        %10868 = vmatprep.subr.bf16.mxu0 0
        %10869 = vmatpush1.bf16.msra.mxu0 0
        %10870 = vmatprep.subr.bf16.mxu0 %v10850
        %10871 = vmatpush1.bf16.msra.mxu0 %v10849
        %10872 = vmatprep.subr.bf16.mxu0 0
        %10873 = vmatpush2.bf16.msra.mxu0 0
        %10874 = vmatprep.subr.bf16.mxu0 0
        %10875 = vmatpush2.bf16.msra.mxu0 0
        %10876 = vmatprep.subr.bf16.mxu0 0
        %10877 = vmatpush2.bf16.msra.mxu0 0
        %10878 = vmatprep.subr.bf16.mxu0 0
        %10879 = vmatpush2.bf16.msra.mxu0 0
        %10880 = vmatprep.subr.bf16.mxu0 0
        %10881 = vmatpush2.bf16.msra.mxu0 0
        %10882 = vmatprep.subr.bf16.mxu0 0
        %10883 = vmatpush2.bf16.msra.mxu0 0
        %10884 = vmatprep.subr.bf16.mxu0 0
        %10885 = vmatpush2.bf16.msra.mxu0 0
        %10886 = vmatprep.subr.bf16.mxu0 0
        %10887 = vmatpush2.bf16.msra.mxu0 0
        %10888 = vmatprep.mubr.bf16.mxu0 0
        %10889 = vmatmul.mubr.bf16.gmra.mxu0 %v10854
        %v10890 = vpop.f32.mrf.mxu0
        %v10891 = vadd.f32 0.0, %v10890
        %v10892 = vpop.f32.mrf.mxu0
        %v10893 = vadd.f32 0.0, %v10892
        %v10894 = vpop.f32.mrf.mxu0
        %v10895 = vpop.f32.mrf.mxu0
        %10896 = vdwg.mxu0
        %v10897 = vadd.f32 %v10829, %v10891
        %v10898 = vadd.f32 %v10831, %v10893
        %s10899 = scalar_lea.vmem [#allocation9], 48
        %v10900 = vld [vmem:[%s10899] sm:$0xff]
        %v10901 = vld [vmem:[%s10899 + $0x8] sm:$0xff]
        %v10903 = vshrl.u32 %v10841, 16
        %v10905 = vrot.slane %v10903, 1
        %v10908 = vunpack.c.l.b16 %v10900
        %v10909 = vunpack.c.h.b16 %v10900
        %v10910 = vunpack.c.l.b16 %v10901
        %v10911 = vunpack.c.h.b16 %v10901
        %v10912 = vpack.c.b16 %v10910, %v10908
        %v10913 = vpack.c.b16 %v10911, %v10909
        %v10917 = vsel %vm10736, %v10905, 0
        %10919 = vmatprep.subr.bf16.mxu0 0
        %10920 = vmatpush1.bf16.msra.mxu0 0
        %10921 = vmatprep.subr.bf16.mxu0 0
        %10922 = vmatpush1.bf16.msra.mxu0 0
        %10923 = vmatprep.subr.bf16.mxu0 0
        %10924 = vmatpush1.bf16.msra.mxu0 0
        %10925 = vmatprep.subr.bf16.mxu0 0
        %10926 = vmatpush1.bf16.msra.mxu0 0
        %10927 = vmatprep.subr.bf16.mxu0 0
        %10928 = vmatpush1.bf16.msra.mxu0 0
        %10929 = vmatprep.subr.bf16.mxu0 0
        %10930 = vmatpush1.bf16.msra.mxu0 0
        %10931 = vmatprep.subr.bf16.mxu0 0
        %10932 = vmatpush1.bf16.msra.mxu0 0
        %10933 = vmatprep.subr.bf16.mxu0 %v10913
        %10934 = vmatpush1.bf16.msra.mxu0 %v10912
        %10935 = vmatprep.subr.bf16.mxu0 0
        %10936 = vmatpush2.bf16.msra.mxu0 0
        %10937 = vmatprep.subr.bf16.mxu0 0
        %10938 = vmatpush2.bf16.msra.mxu0 0
        %10939 = vmatprep.subr.bf16.mxu0 0
        %10940 = vmatpush2.bf16.msra.mxu0 0
        %10941 = vmatprep.subr.bf16.mxu0 0
        %10942 = vmatpush2.bf16.msra.mxu0 0
        %10943 = vmatprep.subr.bf16.mxu0 0
        %10944 = vmatpush2.bf16.msra.mxu0 0
        %10945 = vmatprep.subr.bf16.mxu0 0
        %10946 = vmatpush2.bf16.msra.mxu0 0
        %10947 = vmatprep.subr.bf16.mxu0 0
        %10948 = vmatpush2.bf16.msra.mxu0 0
        %10949 = vmatprep.subr.bf16.mxu0 0
        %10950 = vmatpush2.bf16.msra.mxu0 0
        %10951 = vmatprep.mubr.bf16.mxu0 0
        %10952 = vmatmul.mubr.bf16.gmra.mxu0 %v10917
        %v10953 = vpop.f32.mrf.mxu0
        %v10954 = vadd.f32 0.0, %v10953
        %v10955 = vpop.f32.mrf.mxu0
        %v10956 = vadd.f32 0.0, %v10955
        %v10957 = vpop.f32.mrf.mxu0
        %v10958 = vpop.f32.mrf.mxu0
        %10959 = vdwg.mxu0
        %v10960 = vadd.f32 %v10897, %v10954
        %v10961 = vadd.f32 %v10898, %v10956
        %v10962 = vld [vmem:[#allocation5] sm:$0x4]
        %s10963 = scalar_lea.vmem [#allocation9], 64
        %v10964 = vld [vmem:[%s10963] sm:$0xff]
        %v10965 = vld [vmem:[%s10963 + $0x8] sm:$0xff]
        %v10967 = vunpack.c.l.b16 %v10962
        %v10968 = vpack.c.b16 %v10967, %v10967
        %v10969 = vrot.slane %v10968, 2
        %v10972 = vunpack.c.l.b16 %v10964
        %v10973 = vunpack.c.h.b16 %v10964
        %v10974 = vunpack.c.l.b16 %v10965
        %v10975 = vunpack.c.h.b16 %v10965
        %v10976 = vpack.c.b16 %v10974, %v10972
        %v10977 = vpack.c.b16 %v10975, %v10973
        %v10981 = vsel %vm10736, %v10969, 0
        %10983 = vmatprep.subr.bf16.mxu0 0
        %10984 = vmatpush1.bf16.msra.mxu0 0
        %10985 = vmatprep.subr.bf16.mxu0 0
        %10986 = vmatpush1.bf16.msra.mxu0 0
        %10987 = vmatprep.subr.bf16.mxu0 0
        %10988 = vmatpush1.bf16.msra.mxu0 0
        %10989 = vmatprep.subr.bf16.mxu0 0
        %10990 = vmatpush1.bf16.msra.mxu0 0
        %10991 = vmatprep.subr.bf16.mxu0 0
        %10992 = vmatpush1.bf16.msra.mxu0 0
        %10993 = vmatprep.subr.bf16.mxu0 0
        %10994 = vmatpush1.bf16.msra.mxu0 0
        %10995 = vmatprep.subr.bf16.mxu0 0
        %10996 = vmatpush1.bf16.msra.mxu0 0
        %10997 = vmatprep.subr.bf16.mxu0 %v10977
        %10998 = vmatpush1.bf16.msra.mxu0 %v10976
        %10999 = vmatprep.subr.bf16.mxu0 0
        %11000 = vmatpush2.bf16.msra.mxu0 0
        %11001 = vmatprep.subr.bf16.mxu0 0
        %11002 = vmatpush2.bf16.msra.mxu0 0
        %11003 = vmatprep.subr.bf16.mxu0 0
        %11004 = vmatpush2.bf16.msra.mxu0 0
        %11005 = vmatprep.subr.bf16.mxu0 0
        %11006 = vmatpush2.bf16.msra.mxu0 0
        %11007 = vmatprep.subr.bf16.mxu0 0
        %11008 = vmatpush2.bf16.msra.mxu0 0
        %11009 = vmatprep.subr.bf16.mxu0 0
        %11010 = vmatpush2.bf16.msra.mxu0 0
        %11011 = vmatprep.subr.bf16.mxu0 0
        %11012 = vmatpush2.bf16.msra.mxu0 0
        %11013 = vmatprep.subr.bf16.mxu0 0
        %11014 = vmatpush2.bf16.msra.mxu0 0
        %11015 = vmatprep.mubr.bf16.mxu0 0
        %11016 = vmatmul.mubr.bf16.gmra.mxu0 %v10981
        %v11017 = vpop.f32.mrf.mxu0
        %v11018 = vadd.f32 0.0, %v11017
        %v11019 = vpop.f32.mrf.mxu0
        %v11020 = vadd.f32 0.0, %v11019
        %v11021 = vpop.f32.mrf.mxu0
        %v11022 = vpop.f32.mrf.mxu0
        %11023 = vdwg.mxu0
        %v11024 = vadd.f32 %v10960, %v11018
        %v11025 = vadd.f32 %v10961, %v11020
        %s11026 = scalar_lea.vmem [#allocation9], 80
        %v11027 = vld [vmem:[%s11026] sm:$0xff]
        %v11028 = vld [vmem:[%s11026 + $0x8] sm:$0xff]
        %v11030 = vshrl.u32 %v10968, 16
        %v11032 = vrot.slane %v11030, 2
        %v11035 = vunpack.c.l.b16 %v11027
        %v11036 = vunpack.c.h.b16 %v11027
        %v11037 = vunpack.c.l.b16 %v11028
        %v11038 = vunpack.c.h.b16 %v11028
        %v11039 = vpack.c.b16 %v11037, %v11035
        %v11040 = vpack.c.b16 %v11038, %v11036
        %v11044 = vsel %vm10736, %v11032, 0
        %11046 = vmatprep.subr.bf16.mxu0 0
        %11047 = vmatpush1.bf16.msra.mxu0 0
        %11048 = vmatprep.subr.bf16.mxu0 0
        %11049 = vmatpush1.bf16.msra.mxu0 0
        %11050 = vmatprep.subr.bf16.mxu0 0
        %11051 = vmatpush1.bf16.msra.mxu0 0
        %11052 = vmatprep.subr.bf16.mxu0 0
        %11053 = vmatpush1.bf16.msra.mxu0 0
        %11054 = vmatprep.subr.bf16.mxu0 0
        %11055 = vmatpush1.bf16.msra.mxu0 0
        %11056 = vmatprep.subr.bf16.mxu0 0
        %11057 = vmatpush1.bf16.msra.mxu0 0
        %11058 = vmatprep.subr.bf16.mxu0 0
        %11059 = vmatpush1.bf16.msra.mxu0 0
        %11060 = vmatprep.subr.bf16.mxu0 %v11040
        %11061 = vmatpush1.bf16.msra.mxu0 %v11039
        %11062 = vmatprep.subr.bf16.mxu0 0
        %11063 = vmatpush2.bf16.msra.mxu0 0
        %11064 = vmatprep.subr.bf16.mxu0 0
        %11065 = vmatpush2.bf16.msra.mxu0 0
        %11066 = vmatprep.subr.bf16.mxu0 0
        %11067 = vmatpush2.bf16.msra.mxu0 0
        %11068 = vmatprep.subr.bf16.mxu0 0
        %11069 = vmatpush2.bf16.msra.mxu0 0
        %11070 = vmatprep.subr.bf16.mxu0 0
        %11071 = vmatpush2.bf16.msra.mxu0 0
        %11072 = vmatprep.subr.bf16.mxu0 0
        %11073 = vmatpush2.bf16.msra.mxu0 0
        %11074 = vmatprep.subr.bf16.mxu0 0
        %11075 = vmatpush2.bf16.msra.mxu0 0
        %11076 = vmatprep.subr.bf16.mxu0 0
        %11077 = vmatpush2.bf16.msra.mxu0 0
        %11078 = vmatprep.mubr.bf16.mxu0 0
        %11079 = vmatmul.mubr.bf16.gmra.mxu0 %v11044
        %v11080 = vpop.f32.mrf.mxu0
        %v11081 = vadd.f32 0.0, %v11080
        %v11082 = vpop.f32.mrf.mxu0
        %v11083 = vadd.f32 0.0, %v11082
        %v11084 = vpop.f32.mrf.mxu0
        %v11085 = vpop.f32.mrf.mxu0
        %11086 = vdwg.mxu0
        %v11087 = vadd.f32 %v11024, %v11081
        %v11088 = vadd.f32 %v11025, %v11083
        %v11089 = vld [vmem:[#allocation5] sm:$0x8]
        %s11090 = scalar_lea.vmem [#allocation9], 96
        %v11091 = vld [vmem:[%s11090] sm:$0xff]
        %v11092 = vld [vmem:[%s11090 + $0x8] sm:$0xff]
        %v11094 = vunpack.c.l.b16 %v11089
        %v11095 = vpack.c.b16 %v11094, %v11094
        %v11096 = vrot.slane %v11095, 3
        %v11099 = vunpack.c.l.b16 %v11091
        %v11100 = vunpack.c.h.b16 %v11091
        %v11101 = vunpack.c.l.b16 %v11092
        %v11102 = vunpack.c.h.b16 %v11092
        %v11103 = vpack.c.b16 %v11101, %v11099
        %v11104 = vpack.c.b16 %v11102, %v11100
        %v11108 = vsel %vm10736, %v11096, 0
        %11110 = vmatprep.subr.bf16.mxu0 0
        %11111 = vmatpush1.bf16.msra.mxu0 0
        %11112 = vmatprep.subr.bf16.mxu0 0
        %11113 = vmatpush1.bf16.msra.mxu0 0
        %11114 = vmatprep.subr.bf16.mxu0 0
        %11115 = vmatpush1.bf16.msra.mxu0 0
        %11116 = vmatprep.subr.bf16.mxu0 0
        %11117 = vmatpush1.bf16.msra.mxu0 0
        %11118 = vmatprep.subr.bf16.mxu0 0
        %11119 = vmatpush1.bf16.msra.mxu0 0
        %11120 = vmatprep.subr.bf16.mxu0 0
        %11121 = vmatpush1.bf16.msra.mxu0 0
        %11122 = vmatprep.subr.bf16.mxu0 0
        %11123 = vmatpush1.bf16.msra.mxu0 0
        %11124 = vmatprep.subr.bf16.mxu0 %v11104
        %11125 = vmatpush1.bf16.msra.mxu0 %v11103
        %11126 = vmatprep.subr.bf16.mxu0 0
        %11127 = vmatpush2.bf16.msra.mxu0 0
        %11128 = vmatprep.subr.bf16.mxu0 0
        %11129 = vmatpush2.bf16.msra.mxu0 0
        %11130 = vmatprep.subr.bf16.mxu0 0
        %11131 = vmatpush2.bf16.msra.mxu0 0
        %11132 = vmatprep.subr.bf16.mxu0 0
        %11133 = vmatpush2.bf16.msra.mxu0 0
        %11134 = vmatprep.subr.bf16.mxu0 0
        %11135 = vmatpush2.bf16.msra.mxu0 0
        %11136 = vmatprep.subr.bf16.mxu0 0
        %11137 = vmatpush2.bf16.msra.mxu0 0
        %11138 = vmatprep.subr.bf16.mxu0 0
        %11139 = vmatpush2.bf16.msra.mxu0 0
        %11140 = vmatprep.subr.bf16.mxu0 0
        %11141 = vmatpush2.bf16.msra.mxu0 0
        %11142 = vmatprep.mubr.bf16.mxu0 0
        %11143 = vmatmul.mubr.bf16.gmra.mxu0 %v11108
        %v11144 = vpop.f32.mrf.mxu0
        %v11145 = vadd.f32 0.0, %v11144
        %v11146 = vpop.f32.mrf.mxu0
        %v11147 = vadd.f32 0.0, %v11146
        %v11148 = vpop.f32.mrf.mxu0
        %v11149 = vpop.f32.mrf.mxu0
        %11150 = vdwg.mxu0
        %v11151 = vadd.f32 %v11087, %v11145
        %v11152 = vadd.f32 %v11088, %v11147
        %s11153 = scalar_lea.vmem [#allocation9], 112
        %v11154 = vld [vmem:[%s11153] sm:$0xff]
        %v11155 = vld [vmem:[%s11153 + $0x8] sm:$0xff]
        %v11157 = vshrl.u32 %v11095, 16
        %v11159 = vrot.slane %v11157, 3
        %v11162 = vunpack.c.l.b16 %v11154
        %v11163 = vunpack.c.h.b16 %v11154
        %v11164 = vunpack.c.l.b16 %v11155
        %v11165 = vunpack.c.h.b16 %v11155
        %v11166 = vpack.c.b16 %v11164, %v11162
        %v11167 = vpack.c.b16 %v11165, %v11163
        %v11171 = vsel %vm10736, %v11159, 0
        %11173 = vmatprep.subr.bf16.mxu0 0
        %11174 = vmatpush1.bf16.msra.mxu0 0
        %11175 = vmatprep.subr.bf16.mxu0 0
        %11176 = vmatpush1.bf16.msra.mxu0 0
        %11177 = vmatprep.subr.bf16.mxu0 0
        %11178 = vmatpush1.bf16.msra.mxu0 0
        %11179 = vmatprep.subr.bf16.mxu0 0
        %11180 = vmatpush1.bf16.msra.mxu0 0
        %11181 = vmatprep.subr.bf16.mxu0 0
        %11182 = vmatpush1.bf16.msra.mxu0 0
        %11183 = vmatprep.subr.bf16.mxu0 0
        %11184 = vmatpush1.bf16.msra.mxu0 0
        %11185 = vmatprep.subr.bf16.mxu0 0
        %11186 = vmatpush1.bf16.msra.mxu0 0
        %11187 = vmatprep.subr.bf16.mxu0 %v11167
        %11188 = vmatpush1.bf16.msra.mxu0 %v11166
        %11189 = vmatprep.subr.bf16.mxu0 0
        %11190 = vmatpush2.bf16.msra.mxu0 0
        %11191 = vmatprep.subr.bf16.mxu0 0
        %11192 = vmatpush2.bf16.msra.mxu0 0
        %11193 = vmatprep.subr.bf16.mxu0 0
        %11194 = vmatpush2.bf16.msra.mxu0 0
        %11195 = vmatprep.subr.bf16.mxu0 0
        %11196 = vmatpush2.bf16.msra.mxu0 0
        %11197 = vmatprep.subr.bf16.mxu0 0
        %11198 = vmatpush2.bf16.msra.mxu0 0
        %11199 = vmatprep.subr.bf16.mxu0 0
        %11200 = vmatpush2.bf16.msra.mxu0 0
        %11201 = vmatprep.subr.bf16.mxu0 0
        %11202 = vmatpush2.bf16.msra.mxu0 0
        %11203 = vmatprep.subr.bf16.mxu0 0
        %11204 = vmatpush2.bf16.msra.mxu0 0
        %11205 = vmatprep.mubr.bf16.mxu0 0
        %11206 = vmatmul.mubr.bf16.gmra.mxu0 %v11171
        %v11207 = vpop.f32.mrf.mxu0
        %v11208 = vadd.f32 0.0, %v11207
        %v11209 = vpop.f32.mrf.mxu0
        %v11210 = vadd.f32 0.0, %v11209
        %v11211 = vpop.f32.mrf.mxu0
        %v11212 = vpop.f32.mrf.mxu0
        %11213 = vdwg.mxu0
        %v11214 = vadd.f32 %v11151, %v11208
        %v11215 = vadd.f32 %v11152, %v11210
        %v11216 = vld [vmem:[#allocation5 + $0x4] sm:$0x1]
        %s11217 = scalar_lea.vmem [#allocation9], 128
        %v11218 = vld [vmem:[%s11217] sm:$0xff]
        %v11219 = vld [vmem:[%s11217 + $0x8] sm:$0xff]
        %v11222 = vunpack.c.l.b16 %v11218
        %v11223 = vunpack.c.h.b16 %v11218
        %v11224 = vunpack.c.l.b16 %v11219
        %v11225 = vunpack.c.h.b16 %v11219
        %v11226 = vpack.c.b16 %v11224, %v11222
        %v11227 = vpack.c.b16 %v11225, %v11223
        %v11231 = vsel %vm10736, %v11216, 0
        %11233 = vmatprep.subr.bf16.mxu0 0
        %11234 = vmatpush1.bf16.msra.mxu0 0
        %11235 = vmatprep.subr.bf16.mxu0 0
        %11236 = vmatpush1.bf16.msra.mxu0 0
        %11237 = vmatprep.subr.bf16.mxu0 0
        %11238 = vmatpush1.bf16.msra.mxu0 0
        %11239 = vmatprep.subr.bf16.mxu0 0
        %11240 = vmatpush1.bf16.msra.mxu0 0
        %11241 = vmatprep.subr.bf16.mxu0 0
        %11242 = vmatpush1.bf16.msra.mxu0 0
        %11243 = vmatprep.subr.bf16.mxu0 0
        %11244 = vmatpush1.bf16.msra.mxu0 0
        %11245 = vmatprep.subr.bf16.mxu0 0
        %11246 = vmatpush1.bf16.msra.mxu0 0
        %11247 = vmatprep.subr.bf16.mxu0 %v11227
        %11248 = vmatpush1.bf16.msra.mxu0 %v11226
        %11249 = vmatprep.subr.bf16.mxu0 0
        %11250 = vmatpush2.bf16.msra.mxu0 0
        %11251 = vmatprep.subr.bf16.mxu0 0
        %11252 = vmatpush2.bf16.msra.mxu0 0
        %11253 = vmatprep.subr.bf16.mxu0 0
        %11254 = vmatpush2.bf16.msra.mxu0 0
        %11255 = vmatprep.subr.bf16.mxu0 0
        %11256 = vmatpush2.bf16.msra.mxu0 0
        %11257 = vmatprep.subr.bf16.mxu0 0
        %11258 = vmatpush2.bf16.msra.mxu0 0
        %11259 = vmatprep.subr.bf16.mxu0 0
        %11260 = vmatpush2.bf16.msra.mxu0 0
        %11261 = vmatprep.subr.bf16.mxu0 0
        %11262 = vmatpush2.bf16.msra.mxu0 0
        %11263 = vmatprep.subr.bf16.mxu0 0
        %11264 = vmatpush2.bf16.msra.mxu0 0
        %11265 = vmatprep.mubr.bf16.mxu0 0
        %11266 = vmatmul.mubr.bf16.gmra.mxu0 %v11231
        %v11267 = vpop.f32.mrf.mxu0
        %v11268 = vadd.f32 0.0, %v11267
        %v11269 = vpop.f32.mrf.mxu0
        %v11270 = vadd.f32 0.0, %v11269
        %v11271 = vpop.f32.mrf.mxu0
        %v11272 = vpop.f32.mrf.mxu0
        %11273 = vdwg.mxu0
        %v11274 = vadd.f32 %v11214, %v11268
        %v11275 = vadd.f32 %v11215, %v11270
        %s11276 = scalar_lea.vmem [#allocation9], 144
        %v11277 = vld [vmem:[%s11276] sm:$0xff]
        %v11278 = vld [vmem:[%s11276 + $0x8] sm:$0xff]
        %v11280 = vunpack.c.l.b16 %v11216
        %v11281 = vpack.c.b16 %v11280, %v11280
        %v11283 = vshrl.u32 %v11281, 16
        %v11287 = vunpack.c.l.b16 %v11277
        %v11288 = vunpack.c.h.b16 %v11277
        %v11289 = vunpack.c.l.b16 %v11278
        %v11290 = vunpack.c.h.b16 %v11278
        %v11291 = vpack.c.b16 %v11289, %v11287
        %v11292 = vpack.c.b16 %v11290, %v11288
        %v11296 = vsel %vm10736, %v11283, 0
        %11298 = vmatprep.subr.bf16.mxu0 0
        %11299 = vmatpush1.bf16.msra.mxu0 0
        %11300 = vmatprep.subr.bf16.mxu0 0
        %11301 = vmatpush1.bf16.msra.mxu0 0
        %11302 = vmatprep.subr.bf16.mxu0 0
        %11303 = vmatpush1.bf16.msra.mxu0 0
        %11304 = vmatprep.subr.bf16.mxu0 0
        %11305 = vmatpush1.bf16.msra.mxu0 0
        %11306 = vmatprep.subr.bf16.mxu0 0
        %11307 = vmatpush1.bf16.msra.mxu0 0
        %11308 = vmatprep.subr.bf16.mxu0 0
        %11309 = vmatpush1.bf16.msra.mxu0 0
        %11310 = vmatprep.subr.bf16.mxu0 0
        %11311 = vmatpush1.bf16.msra.mxu0 0
        %11312 = vmatprep.subr.bf16.mxu0 %v11292
        %11313 = vmatpush1.bf16.msra.mxu0 %v11291
        %11314 = vmatprep.subr.bf16.mxu0 0
        %11315 = vmatpush2.bf16.msra.mxu0 0
        %11316 = vmatprep.subr.bf16.mxu0 0
        %11317 = vmatpush2.bf16.msra.mxu0 0
        %11318 = vmatprep.subr.bf16.mxu0 0
        %11319 = vmatpush2.bf16.msra.mxu0 0
        %11320 = vmatprep.subr.bf16.mxu0 0
        %11321 = vmatpush2.bf16.msra.mxu0 0
        %11322 = vmatprep.subr.bf16.mxu0 0
        %11323 = vmatpush2.bf16.msra.mxu0 0
        %11324 = vmatprep.subr.bf16.mxu0 0
        %11325 = vmatpush2.bf16.msra.mxu0 0
        %11326 = vmatprep.subr.bf16.mxu0 0
        %11327 = vmatpush2.bf16.msra.mxu0 0
        %11328 = vmatprep.subr.bf16.mxu0 0
        %11329 = vmatpush2.bf16.msra.mxu0 0
        %11330 = vmatprep.mubr.bf16.mxu0 0
        %11331 = vmatmul.mubr.bf16.gmra.mxu0 %v11296
        %v11332 = vpop.f32.mrf.mxu0
        %v11333 = vadd.f32 0.0, %v11332
        %v11334 = vpop.f32.mrf.mxu0
        %v11335 = vadd.f32 0.0, %v11334
        %v11336 = vpop.f32.mrf.mxu0
        %v11337 = vpop.f32.mrf.mxu0
        %11338 = vdwg.mxu0
        %v11339 = vadd.f32 %v11274, %v11333
        %v11340 = vadd.f32 %v11275, %v11335
        %v11341 = vld [vmem:[#allocation5 + $0x4] sm:$0x2]
        %s11342 = scalar_lea.vmem [#allocation9], 160
        %v11343 = vld [vmem:[%s11342] sm:$0xff]
        %v11344 = vld [vmem:[%s11342 + $0x8] sm:$0xff]
        %v11346 = vunpack.c.l.b16 %v11341
        %v11347 = vpack.c.b16 %v11346, %v11346
        %v11348 = vrot.slane %v11347, 1
        %v11351 = vunpack.c.l.b16 %v11343
        %v11352 = vunpack.c.h.b16 %v11343
        %v11353 = vunpack.c.l.b16 %v11344
        %v11354 = vunpack.c.h.b16 %v11344
        %v11355 = vpack.c.b16 %v11353, %v11351
        %v11356 = vpack.c.b16 %v11354, %v11352
        %v11360 = vsel %vm10736, %v11348, 0
        %11362 = vmatprep.subr.bf16.mxu0 0
        %11363 = vmatpush1.bf16.msra.mxu0 0
        %11364 = vmatprep.subr.bf16.mxu0 0
        %11365 = vmatpush1.bf16.msra.mxu0 0
        %11366 = vmatprep.subr.bf16.mxu0 0
        %11367 = vmatpush1.bf16.msra.mxu0 0
        %11368 = vmatprep.subr.bf16.mxu0 0
        %11369 = vmatpush1.bf16.msra.mxu0 0
        %11370 = vmatprep.subr.bf16.mxu0 0
        %11371 = vmatpush1.bf16.msra.mxu0 0
        %11372 = vmatprep.subr.bf16.mxu0 0
        %11373 = vmatpush1.bf16.msra.mxu0 0
        %11374 = vmatprep.subr.bf16.mxu0 0
        %11375 = vmatpush1.bf16.msra.mxu0 0
        %11376 = vmatprep.subr.bf16.mxu0 %v11356
        %11377 = vmatpush1.bf16.msra.mxu0 %v11355
        %11378 = vmatprep.subr.bf16.mxu0 0
        %11379 = vmatpush2.bf16.msra.mxu0 0
        %11380 = vmatprep.subr.bf16.mxu0 0
        %11381 = vmatpush2.bf16.msra.mxu0 0
        %11382 = vmatprep.subr.bf16.mxu0 0
        %11383 = vmatpush2.bf16.msra.mxu0 0
        %11384 = vmatprep.subr.bf16.mxu0 0
        %11385 = vmatpush2.bf16.msra.mxu0 0
        %11386 = vmatprep.subr.bf16.mxu0 0
        %11387 = vmatpush2.bf16.msra.mxu0 0
        %11388 = vmatprep.subr.bf16.mxu0 0
        %11389 = vmatpush2.bf16.msra.mxu0 0
        %11390 = vmatprep.subr.bf16.mxu0 0
        %11391 = vmatpush2.bf16.msra.mxu0 0
        %11392 = vmatprep.subr.bf16.mxu0 0
        %11393 = vmatpush2.bf16.msra.mxu0 0
        %11394 = vmatprep.mubr.bf16.mxu0 0
        %11395 = vmatmul.mubr.bf16.gmra.mxu0 %v11360
        %v11396 = vpop.f32.mrf.mxu0
        %v11397 = vadd.f32 0.0, %v11396
        %v11398 = vpop.f32.mrf.mxu0
        %v11399 = vadd.f32 0.0, %v11398
        %v11400 = vpop.f32.mrf.mxu0
        %v11401 = vpop.f32.mrf.mxu0
        %11402 = vdwg.mxu0
        %v11403 = vadd.f32 %v11339, %v11397
        %v11404 = vadd.f32 %v11340, %v11399
        %s11405 = scalar_lea.vmem [#allocation9], 176
        %v11406 = vld [vmem:[%s11405] sm:$0xff]
        %v11407 = vld [vmem:[%s11405 + $0x8] sm:$0xff]
        %v11409 = vshrl.u32 %v11347, 16
        %v11411 = vrot.slane %v11409, 1
        %v11414 = vunpack.c.l.b16 %v11406
        %v11415 = vunpack.c.h.b16 %v11406
        %v11416 = vunpack.c.l.b16 %v11407
        %v11417 = vunpack.c.h.b16 %v11407
        %v11418 = vpack.c.b16 %v11416, %v11414
        %v11419 = vpack.c.b16 %v11417, %v11415
        %v11423 = vsel %vm10736, %v11411, 0
        %11425 = vmatprep.subr.bf16.mxu0 0
        %11426 = vmatpush1.bf16.msra.mxu0 0
        %11427 = vmatprep.subr.bf16.mxu0 0
        %11428 = vmatpush1.bf16.msra.mxu0 0
        %11429 = vmatprep.subr.bf16.mxu0 0
        %11430 = vmatpush1.bf16.msra.mxu0 0
        %11431 = vmatprep.subr.bf16.mxu0 0
        %11432 = vmatpush1.bf16.msra.mxu0 0
        %11433 = vmatprep.subr.bf16.mxu0 0
        %11434 = vmatpush1.bf16.msra.mxu0 0
        %11435 = vmatprep.subr.bf16.mxu0 0
        %11436 = vmatpush1.bf16.msra.mxu0 0
        %11437 = vmatprep.subr.bf16.mxu0 0
        %11438 = vmatpush1.bf16.msra.mxu0 0
        %11439 = vmatprep.subr.bf16.mxu0 %v11419
        %11440 = vmatpush1.bf16.msra.mxu0 %v11418
        %11441 = vmatprep.subr.bf16.mxu0 0
        %11442 = vmatpush2.bf16.msra.mxu0 0
        %11443 = vmatprep.subr.bf16.mxu0 0
        %11444 = vmatpush2.bf16.msra.mxu0 0
        %11445 = vmatprep.subr.bf16.mxu0 0
        %11446 = vmatpush2.bf16.msra.mxu0 0
        %11447 = vmatprep.subr.bf16.mxu0 0
        %11448 = vmatpush2.bf16.msra.mxu0 0
        %11449 = vmatprep.subr.bf16.mxu0 0
        %11450 = vmatpush2.bf16.msra.mxu0 0
        %11451 = vmatprep.subr.bf16.mxu0 0
        %11452 = vmatpush2.bf16.msra.mxu0 0
        %11453 = vmatprep.subr.bf16.mxu0 0
        %11454 = vmatpush2.bf16.msra.mxu0 0
        %11455 = vmatprep.subr.bf16.mxu0 0
        %11456 = vmatpush2.bf16.msra.mxu0 0
        %11457 = vmatprep.mubr.bf16.mxu0 0
        %11458 = vmatmul.mubr.bf16.gmra.mxu0 %v11423
        %v11459 = vpop.f32.mrf.mxu0
        %v11460 = vadd.f32 0.0, %v11459
        %v11461 = vpop.f32.mrf.mxu0
        %v11462 = vadd.f32 0.0, %v11461
        %v11463 = vpop.f32.mrf.mxu0
        %v11464 = vpop.f32.mrf.mxu0
        %11465 = vdwg.mxu0
        %v11466 = vadd.f32 %v11403, %v11460
        %v11467 = vadd.f32 %v11404, %v11462
        %v11468 = vld [vmem:[#allocation5 + $0x4] sm:$0x4]
        %s11469 = scalar_lea.vmem [#allocation9], 192
        %v11470 = vld [vmem:[%s11469] sm:$0xff]
        %v11471 = vld [vmem:[%s11469 + $0x8] sm:$0xff]
        %v11473 = vunpack.c.l.b16 %v11468
        %v11474 = vpack.c.b16 %v11473, %v11473
        %v11475 = vrot.slane %v11474, 2
        %v11478 = vunpack.c.l.b16 %v11470
        %v11479 = vunpack.c.h.b16 %v11470
        %v11480 = vunpack.c.l.b16 %v11471
        %v11481 = vunpack.c.h.b16 %v11471
        %v11482 = vpack.c.b16 %v11480, %v11478
        %v11483 = vpack.c.b16 %v11481, %v11479
        %v11487 = vsel %vm10736, %v11475, 0
        %11489 = vmatprep.subr.bf16.mxu0 0
        %11490 = vmatpush1.bf16.msra.mxu0 0
        %11491 = vmatprep.subr.bf16.mxu0 0
        %11492 = vmatpush1.bf16.msra.mxu0 0
        %11493 = vmatprep.subr.bf16.mxu0 0
        %11494 = vmatpush1.bf16.msra.mxu0 0
        %11495 = vmatprep.subr.bf16.mxu0 0
        %11496 = vmatpush1.bf16.msra.mxu0 0
        %11497 = vmatprep.subr.bf16.mxu0 0
        %11498 = vmatpush1.bf16.msra.mxu0 0
        %11499 = vmatprep.subr.bf16.mxu0 0
        %11500 = vmatpush1.bf16.msra.mxu0 0
        %11501 = vmatprep.subr.bf16.mxu0 0
        %11502 = vmatpush1.bf16.msra.mxu0 0
        %11503 = vmatprep.subr.bf16.mxu0 %v11483
        %11504 = vmatpush1.bf16.msra.mxu0 %v11482
        %11505 = vmatprep.subr.bf16.mxu0 0
        %11506 = vmatpush2.bf16.msra.mxu0 0
        %11507 = vmatprep.subr.bf16.mxu0 0
        %11508 = vmatpush2.bf16.msra.mxu0 0
        %11509 = vmatprep.subr.bf16.mxu0 0
        %11510 = vmatpush2.bf16.msra.mxu0 0
        %11511 = vmatprep.subr.bf16.mxu0 0
        %11512 = vmatpush2.bf16.msra.mxu0 0
        %11513 = vmatprep.subr.bf16.mxu0 0
        %11514 = vmatpush2.bf16.msra.mxu0 0
        %11515 = vmatprep.subr.bf16.mxu0 0
        %11516 = vmatpush2.bf16.msra.mxu0 0
        %11517 = vmatprep.subr.bf16.mxu0 0
        %11518 = vmatpush2.bf16.msra.mxu0 0
        %11519 = vmatprep.subr.bf16.mxu0 0
        %11520 = vmatpush2.bf16.msra.mxu0 0
        %11521 = vmatprep.mubr.bf16.mxu0 0
        %11522 = vmatmul.mubr.bf16.gmra.mxu0 %v11487
        %v11523 = vpop.f32.mrf.mxu0
        %v11524 = vadd.f32 0.0, %v11523
        %v11525 = vpop.f32.mrf.mxu0
        %v11526 = vadd.f32 0.0, %v11525
        %v11527 = vpop.f32.mrf.mxu0
        %v11528 = vpop.f32.mrf.mxu0
        %11529 = vdwg.mxu0
        %v11530 = vadd.f32 %v11466, %v11524
        %v11531 = vadd.f32 %v11467, %v11526
        %s11532 = scalar_lea.vmem [#allocation9], 208
        %v11533 = vld [vmem:[%s11532] sm:$0xff]
        %v11534 = vld [vmem:[%s11532 + $0x8] sm:$0xff]
        %v11536 = vshrl.u32 %v11474, 16
        %v11538 = vrot.slane %v11536, 2
        %v11541 = vunpack.c.l.b16 %v11533
        %v11542 = vunpack.c.h.b16 %v11533
        %v11543 = vunpack.c.l.b16 %v11534
        %v11544 = vunpack.c.h.b16 %v11534
        %v11545 = vpack.c.b16 %v11543, %v11541
        %v11546 = vpack.c.b16 %v11544, %v11542
        %v11550 = vsel %vm10736, %v11538, 0
        %11552 = vmatprep.subr.bf16.mxu0 0
        %11553 = vmatpush1.bf16.msra.mxu0 0
        %11554 = vmatprep.subr.bf16.mxu0 0
        %11555 = vmatpush1.bf16.msra.mxu0 0
        %11556 = vmatprep.subr.bf16.mxu0 0
        %11557 = vmatpush1.bf16.msra.mxu0 0
        %11558 = vmatprep.subr.bf16.mxu0 0
        %11559 = vmatpush1.bf16.msra.mxu0 0
        %11560 = vmatprep.subr.bf16.mxu0 0
        %11561 = vmatpush1.bf16.msra.mxu0 0
        %11562 = vmatprep.subr.bf16.mxu0 0
        %11563 = vmatpush1.bf16.msra.mxu0 0
        %11564 = vmatprep.subr.bf16.mxu0 0
        %11565 = vmatpush1.bf16.msra.mxu0 0
        %11566 = vmatprep.subr.bf16.mxu0 %v11546
        %11567 = vmatpush1.bf16.msra.mxu0 %v11545
        %11568 = vmatprep.subr.bf16.mxu0 0
        %11569 = vmatpush2.bf16.msra.mxu0 0
        %11570 = vmatprep.subr.bf16.mxu0 0
        %11571 = vmatpush2.bf16.msra.mxu0 0
        %11572 = vmatprep.subr.bf16.mxu0 0
        %11573 = vmatpush2.bf16.msra.mxu0 0
        %11574 = vmatprep.subr.bf16.mxu0 0
        %11575 = vmatpush2.bf16.msra.mxu0 0
        %11576 = vmatprep.subr.bf16.mxu0 0
        %11577 = vmatpush2.bf16.msra.mxu0 0
        %11578 = vmatprep.subr.bf16.mxu0 0
        %11579 = vmatpush2.bf16.msra.mxu0 0
        %11580 = vmatprep.subr.bf16.mxu0 0
        %11581 = vmatpush2.bf16.msra.mxu0 0
        %11582 = vmatprep.subr.bf16.mxu0 0
        %11583 = vmatpush2.bf16.msra.mxu0 0
        %11584 = vmatprep.mubr.bf16.mxu0 0
        %11585 = vmatmul.mubr.bf16.gmra.mxu0 %v11550
        %v11586 = vpop.f32.mrf.mxu0
        %v11587 = vadd.f32 0.0, %v11586
        %v11588 = vpop.f32.mrf.mxu0
        %v11589 = vadd.f32 0.0, %v11588
        %v11590 = vpop.f32.mrf.mxu0
        %v11591 = vpop.f32.mrf.mxu0
        %11592 = vdwg.mxu0
        %v11593 = vadd.f32 %v11530, %v11587
        %v11594 = vadd.f32 %v11531, %v11589
        %v11595 = vld [vmem:[#allocation5 + $0x4] sm:$0x8]
        %s11596 = scalar_lea.vmem [#allocation9], 224
        %v11597 = vld [vmem:[%s11596] sm:$0xff]
        %v11598 = vld [vmem:[%s11596 + $0x8] sm:$0xff]
        %v11600 = vunpack.c.l.b16 %v11595
        %v11601 = vpack.c.b16 %v11600, %v11600
        %v11602 = vrot.slane %v11601, 3
        %v11605 = vunpack.c.l.b16 %v11597
        %v11606 = vunpack.c.h.b16 %v11597
        %v11607 = vunpack.c.l.b16 %v11598
        %v11608 = vunpack.c.h.b16 %v11598
        %v11609 = vpack.c.b16 %v11607, %v11605
        %v11610 = vpack.c.b16 %v11608, %v11606
        %v11614 = vsel %vm10736, %v11602, 0
        %11616 = vmatprep.subr.bf16.mxu0 0
        %11617 = vmatpush1.bf16.msra.mxu0 0
        %11618 = vmatprep.subr.bf16.mxu0 0
        %11619 = vmatpush1.bf16.msra.mxu0 0
        %11620 = vmatprep.subr.bf16.mxu0 0
        %11621 = vmatpush1.bf16.msra.mxu0 0
        %11622 = vmatprep.subr.bf16.mxu0 0
        %11623 = vmatpush1.bf16.msra.mxu0 0
        %11624 = vmatprep.subr.bf16.mxu0 0
        %11625 = vmatpush1.bf16.msra.mxu0 0
        %11626 = vmatprep.subr.bf16.mxu0 0
        %11627 = vmatpush1.bf16.msra.mxu0 0
        %11628 = vmatprep.subr.bf16.mxu0 0
        %11629 = vmatpush1.bf16.msra.mxu0 0
        %11630 = vmatprep.subr.bf16.mxu0 %v11610
        %11631 = vmatpush1.bf16.msra.mxu0 %v11609
        %11632 = vmatprep.subr.bf16.mxu0 0
        %11633 = vmatpush2.bf16.msra.mxu0 0
        %11634 = vmatprep.subr.bf16.mxu0 0
        %11635 = vmatpush2.bf16.msra.mxu0 0
        %11636 = vmatprep.subr.bf16.mxu0 0
        %11637 = vmatpush2.bf16.msra.mxu0 0
        %11638 = vmatprep.subr.bf16.mxu0 0
        %11639 = vmatpush2.bf16.msra.mxu0 0
        %11640 = vmatprep.subr.bf16.mxu0 0
        %11641 = vmatpush2.bf16.msra.mxu0 0
        %11642 = vmatprep.subr.bf16.mxu0 0
        %11643 = vmatpush2.bf16.msra.mxu0 0
        %11644 = vmatprep.subr.bf16.mxu0 0
        %11645 = vmatpush2.bf16.msra.mxu0 0
        %11646 = vmatprep.subr.bf16.mxu0 0
        %11647 = vmatpush2.bf16.msra.mxu0 0
        %11648 = vmatprep.mubr.bf16.mxu0 0
        %11649 = vmatmul.mubr.bf16.gmra.mxu0 %v11614
        %v11650 = vpop.f32.mrf.mxu0
        %v11651 = vadd.f32 0.0, %v11650
        %v11652 = vpop.f32.mrf.mxu0
        %v11653 = vadd.f32 0.0, %v11652
        %v11654 = vpop.f32.mrf.mxu0
        %v11655 = vpop.f32.mrf.mxu0
        %11656 = vdwg.mxu0
        %v11657 = vadd.f32 %v11593, %v11651
        %v11658 = vadd.f32 %v11594, %v11653
        %s11659 = scalar_lea.vmem [#allocation9], 240
        %v11660 = vld [vmem:[%s11659] sm:$0xff]
        %v11661 = vld [vmem:[%s11659 + $0x8] sm:$0xff]
        %v11663 = vshrl.u32 %v11601, 16
        %v11665 = vrot.slane %v11663, 3
        %v11668 = vunpack.c.l.b16 %v11660
        %v11669 = vunpack.c.h.b16 %v11660
        %v11670 = vunpack.c.l.b16 %v11661
        %v11671 = vunpack.c.h.b16 %v11661
        %v11672 = vpack.c.b16 %v11670, %v11668
        %v11673 = vpack.c.b16 %v11671, %v11669
        %v11677 = vsel %vm10736, %v11665, 0
        %11679 = vmatprep.subr.bf16.mxu0 0
        %11680 = vmatpush1.bf16.msra.mxu0 0
        %11681 = vmatprep.subr.bf16.mxu0 0
        %11682 = vmatpush1.bf16.msra.mxu0 0
        %11683 = vmatprep.subr.bf16.mxu0 0
        %11684 = vmatpush1.bf16.msra.mxu0 0
        %11685 = vmatprep.subr.bf16.mxu0 0
        %11686 = vmatpush1.bf16.msra.mxu0 0
        %11687 = vmatprep.subr.bf16.mxu0 0
        %11688 = vmatpush1.bf16.msra.mxu0 0
        %11689 = vmatprep.subr.bf16.mxu0 0
        %11690 = vmatpush1.bf16.msra.mxu0 0
        %11691 = vmatprep.subr.bf16.mxu0 0
        %11692 = vmatpush1.bf16.msra.mxu0 0
        %11693 = vmatprep.subr.bf16.mxu0 %v11673
        %11694 = vmatpush1.bf16.msra.mxu0 %v11672
        %11695 = vmatprep.subr.bf16.mxu0 0
        %11696 = vmatpush2.bf16.msra.mxu0 0
        %11697 = vmatprep.subr.bf16.mxu0 0
        %11698 = vmatpush2.bf16.msra.mxu0 0
        %11699 = vmatprep.subr.bf16.mxu0 0
        %11700 = vmatpush2.bf16.msra.mxu0 0
        %11701 = vmatprep.subr.bf16.mxu0 0
        %11702 = vmatpush2.bf16.msra.mxu0 0
        %11703 = vmatprep.subr.bf16.mxu0 0
        %11704 = vmatpush2.bf16.msra.mxu0 0
        %11705 = vmatprep.subr.bf16.mxu0 0
        %11706 = vmatpush2.bf16.msra.mxu0 0
        %11707 = vmatprep.subr.bf16.mxu0 0
        %11708 = vmatpush2.bf16.msra.mxu0 0
        %11709 = vmatprep.subr.bf16.mxu0 0
        %11710 = vmatpush2.bf16.msra.mxu0 0
        %11711 = vmatprep.mubr.bf16.mxu0 0
        %11712 = vmatmul.mubr.bf16.gmra.mxu0 %v11677
        %v11713 = vpop.f32.mrf.mxu0
        %v11714 = vadd.f32 0.0, %v11713
        %v11715 = vpop.f32.mrf.mxu0
        %v11716 = vadd.f32 0.0, %v11715
        %v11717 = vpop.f32.mrf.mxu0
        %v11718 = vpop.f32.mrf.mxu0
        %11719 = vdwg.mxu0
        %v11720 = vadd.f32 %v11657, %v11714
        %v11721 = vadd.f32 %v11658, %v11716
        %v11722 = vld [vmem:[%s11] sm:$0x3]
        %v11724 = vlaneseq
        %v11725 = vshrl.u32 %v11724, 7
        %v11726 = vsub.s32 0, %v11725
        %v11727 = vrot.slane %v11722, %v11726
        %v11728 = vlaneseq
        %v11729 = vshrl.u32 %v11728, 7
        %v11730 = vsub.s32 1, %v11729
        %v11731 = vrot.slane %v11722, %v11730
        %v11734 = vadd.f32 %v11720, %v11727
        %v11735 = vadd.f32 %v11721, %v11731
        %v11736 = vmul.f32 %v11735, 0.5
        %v11737 = vmul.f32 %v11736, 1.442695
        %v11738 = vpow.pop %v11737
        %v11739 = vld [vmem:[%s12] sm:$0x1]
        %v11740 = vmul.f32 %v11738, %v11739
        %v11741 = vadd.f32 %v11734, %v11740
        %11742 = vst [vmem:[%s520] sm:$0x1] %v11741
        %11743 = vst [vmem:[%s526] sm:$0x1] %v11734
        %11744 = vst [vmem:[%s532] sm:$0x1] %v11735
        %s11745 = sand.u32 %s321, 1
        %s11746 = scalar_lea.sflag [#allocation8], %s11745
        %s11747 = sand.u32 %s321, 1
        %s11748 = scalar_lea.vmem [#allocation11], %s11747
        %s11749 = sand.u32 %s35, 1
        %s11750 = scalar_lea.sflag [#allocation13], %s11749
        %s11751 = sand.u32 %s347, 1
        %s11752 = scalar_lea.vmem [#allocation12], %s11751
        %s11753 = sand.u32 %s35, 1
        %s11754 = scalar_lea.sflag [#allocation13], %s11753
        %s11755 = sand.u32 %s373, 1
        %s11756 = scalar_lea.vmem [#allocation14], %s11755
        // Predicated region
        $region81: #{forward.1} parent=71 // pred_check
          %p11757 = pneg %p331
        $region82: #{forward.1} parent=71 // pred_check_branch
          %11759 = sbr.rel (%p11757) target = $region84
        $region83: #{forward.1} parent=71 // pred_region
          %s11761 = ssub.s32 16, 16
          %11762 = vsyncadd %s11746, %s11761
          %s11763 = smul.addr %s35, 16
          %s11764 = scalar_lea.hbm %s13, %s11763
          %s11766 = sshll.u32 %s11748, 4
          %s11767 = int_to_ptr.vmem [resolvable:$true] %s11766
          %11769 = dma.vmem_to_hbm [thread:$0]  %s11767, 16, %s11764, %s11746
        $region84: #{forward.1} parent=71 // pred_fallthru
          _
        // Predicated region
        $region85: #{forward.1} parent=71 // pred_check
          %p11770 = pneg %p357
        $region86: #{forward.1} parent=71 // pred_check_branch
          %11772 = sbr.rel (%p11770) target = $region88
        $region87: #{forward.1} parent=71 // pred_region
          %s11774 = ssub.s32 16, 16
          %11775 = vsyncadd %s11750, %s11774
          %s11776 = smul.addr %s35, 16
          %s11777 = scalar_lea.hbm %s14, %s11776
          %s11779 = sshll.u32 %s11752, 4
          %s11780 = int_to_ptr.vmem [resolvable:$true] %s11779
          %11782 = dma.vmem_to_hbm [thread:$0]  %s11780, 16, %s11777, %s11750
        $region88: #{forward.1} parent=71 // pred_fallthru
          _
        // Predicated region
        $region89: #{forward.1} parent=71 // pred_check
          %p11783 = pneg %p383
        $region90: #{forward.1} parent=71 // pred_check_branch
          %11785 = sbr.rel (%p11783) target = $region92
        $region91: #{forward.1} parent=71 // pred_region
          %s11787 = ssub.s32 16, 16
          %11788 = vsyncadd %s11754, %s11787
          %s11789 = smul.addr %s35, 16
          %s11790 = scalar_lea.hbm %s15, %s11789
          %s11792 = sshll.u32 %s11756, 4
          %s11793 = int_to_ptr.vmem [resolvable:$true] %s11792
          %11795 = dma.vmem_to_hbm [thread:$0]  %s11793, 16, %s11790, %s11754
        $region92: #{forward.1} parent=71 // pred_fallthru
          _
      $region72: #{forward.1} parent=5 // pred_fallthru
        _
      %p11796 = scmp.le.s32.totalorder 2, %s30
      // Predicated region
      $region93: #{forward.1} parent=5 // pred_check
        %p11797 = pneg %p11796
      $region94: #{forward.1} parent=5 // pred_check_branch
        %11799 = sbr.rel (%p11797) target = $region96
      $region95: #{forward.1} parent=5 // pred_region
        %s11800 = ssub.s32 %s30, 2
        // Predicated region
        $region97: #{forward.1} parent=95 // pred_check
          %p11801 = pneg %p337
        $region98: #{forward.1} parent=95 // pred_check_branch
          %11803 = sbr.rel (%p11801) target = $region100
        $region99: #{forward.1} parent=95 // pred_region
          %s11804 = sand.u32 %s322, 1
          %s11805 = scalar_lea.sflag [#allocation8], %s11804
          %s11806 = sand.u32 %s322, 1
          %s11807 = scalar_lea.vmem [#allocation11], %s11806
          %11808 = dma.done %s11805, 16
        $region100: #{forward.1} parent=95 // pred_fallthru
          _
        // Predicated region
        $region101: #{forward.1} parent=95 // pred_check
          %p11809 = pneg %p363
        $region102: #{forward.1} parent=95 // pred_check_branch
          %11811 = sbr.rel (%p11809) target = $region104
        $region103: #{forward.1} parent=95 // pred_region
          %s11812 = sand.u32 %s36, 1
          %s11813 = scalar_lea.sflag [#allocation13], %s11812
          %s11814 = sand.u32 %s348, 1
          %s11815 = scalar_lea.vmem [#allocation12], %s11814
          %11816 = dma.done %s11813, 16
        $region104: #{forward.1} parent=95 // pred_fallthru
          _
        // Predicated region
        $region105: #{forward.1} parent=95 // pred_check
          %p11817 = pneg %p389
        $region106: #{forward.1} parent=95 // pred_check_branch
          %11819 = sbr.rel (%p11817) target = $region108
        $region107: #{forward.1} parent=95 // pred_region
          %s11820 = sand.u32 %s36, 1
          %s11821 = scalar_lea.sflag [#allocation13], %s11820
          %s11822 = sand.u32 %s374, 1
          %s11823 = scalar_lea.vmem [#allocation14], %s11822
          %11824 = dma.done %s11821, 16
        $region108: #{forward.1} parent=95 // pred_fallthru
          _
      $region96: #{forward.1} parent=5 // pred_fallthru
        _
    $region6: #{forward.1} parent=1 // loop_footer
      %s34 = sadd.s32 1, %s30
    $region7: #{forward.1} parent=1 // loop_footer_branch
      %29 = sbr.rel target = $region3
    $region8: #{forward.1} parent=1 // loop_exit
      _
    %11825 = vsyncpa [#allocation7], 1
    %s11826 = scalar_lea.sflag [#allocation7], 1
    %11827 = vsyncpa %s11826, 1
    %11828 = vsyncpa [#allocation10], 1
    %11829 = vsyncpa [#allocation8], 1
    %s11830 = scalar_lea.sflag [#allocation8], 1
    %11831 = vsyncpa %s11830, 1
    %11832 = vsyncpa [#allocation13], 1
    %s11833 = scalar_lea.sflag [#allocation13], 1
    %11834 = vsyncpa %s11833, 1

</llo_original>
